<compile_context>
chip_gen: v6e
topology: v6e:2x2x1
jax: 0.10.0
libtpu: 0.0.40
codegen_flags: <defaults>
</compile_context>

<pallas_src>
import functools

import jax
import jax.numpy as jnp
from jax import lax
from jax.experimental import pallas as pl
from jax.experimental.pallas import tpu as pltpu


# ----------------------------------------------------------------------------
# Pallas kernels: fused  Y = relu?(X @ W + b)   (bf16 in, f32 accumulate)
# ----------------------------------------------------------------------------
def _gemm_bias_kernel(x_ref, w_ref, b_ref, o_ref, *, apply_relu):
    """Single-K-block variant: no accumulator scratch, no pl.when."""
    out = jnp.dot(x_ref[...], w_ref[...], preferred_element_type=jnp.float32)
    out = out + b_ref[...]                       # (1, tn) broadcasts over rows
    if apply_relu:
        out = jnp.maximum(out, 0.0)
    o_ref[...] = out.astype(o_ref.dtype)


def _gemm_bias_acc_kernel(x_ref, w_ref, b_ref, o_ref, acc_ref, *, apply_relu):
    """K-reduction variant with f32 VMEM accumulator."""
    @pl.when(pl.program_id(2) == 0)
    def _():
        acc_ref[...] = jnp.zeros_like(acc_ref)

    acc_ref[...] += jnp.dot(x_ref[...], w_ref[...],
                            preferred_element_type=jnp.float32)

    @pl.when(pl.program_id(2) == pl.num_programs(2) - 1)
    def _():
        out = acc_ref[...] + b_ref[...]
        if apply_relu:
            out = jnp.maximum(out, 0.0)
        o_ref[...] = out.astype(o_ref.dtype)


def _round_up(x, m):
    return ((x + m - 1) // m) * m


def _pick_tile(dim_padded, max_tile, align):
    """Largest multiple of `align` that is <= max_tile and divides dim_padded."""
    best = align
    t = align
    while t <= min(max_tile, dim_padded):
        if dim_padded % t == 0:
            best = t
        t += align
    return best


def matmul_bias(x, wp, bp, *, relu, out_dtype=jnp.bfloat16):
    """Y = relu?(x @ wp + bp).

    x:  (M, K)  activation (any float dtype, cast to bf16 here).
    wp: (Kp, Np) weight, PRE-padded to 128-multiples, bf16 (from prepare_params).
    bp: (1, Np)  bias,   PRE-padded, f32.
    Returns (Mp, Np) in `out_dtype`; caller slices back to logical size.
    """
    M, K = x.shape
    Kp, Np = wp.shape
    assert K <= Kp and Kp % 128 == 0 and Np % 128 == 0

    # bf16 X packs 16 rows per sublane group -> round M to 16.
    Mp = _round_up(max(M, 16), 16)
    tm = min(Mp, 512)
    Mp = _round_up(Mp, tm)
    tn = _pick_tile(Np, 512, 128)       # <=512: lane-dense, leaves >=2 N tiles
    tk = _pick_tile(Kp, 4096, 128)      # whole K in one block when it fits

    out_bytes = jnp.dtype(out_dtype).itemsize

    def vmem_est(tk_, tn_):
        return (2 * (tm * tk_ + tk_ * tn_) * 2     # double-buffered bf16 inputs
                + 2 * tm * tn_ * out_bytes         # double-buffered output
                + tm * tn_ * 4                     # f32 accumulator (worst case)
                + 4 * tn_ * 4)                     # bias

    budget = 24 * 1024 * 1024                      # safe on v5e/v6e/v7x
    while vmem_est(tk, tn) > budget and tk > 128:
        tk = _pick_tile(Kp, tk - 128, 128)
    while vmem_est(tk, tn) > budget and tn > 128:
        tn = _pick_tile(Np, tn - 128, 128)

    xb = x.astype(jnp.bfloat16)
    if Mp != M or Kp != K:
        xb = jnp.pad(xb, ((0, Mp - M), (0, Kp - K)))   # activation pad only

    kg = Kp // tk
    gm, gn = Mp // tm, Np // tn
    vmem_limit = int(min(48 * 1024 * 1024,
                         max(vmem_est(tk, tn) + (4 << 20), 16 << 20)))

    cost = pl.CostEstimate(
        flops=2 * Mp * Np * Kp,
        transcendentals=0,
        bytes_accessed=(Mp * Kp + Kp * Np) * 2 + Mp * Np * out_bytes + Np * 4,
    )

    if kg == 1:
        out = pl.pallas_call(
            functools.partial(_gemm_bias_kernel, apply_relu=relu),
            out_shape=jax.ShapeDtypeStruct((Mp, Np), out_dtype),
            grid_spec=pltpu.PrefetchScalarGridSpec(
                num_scalar_prefetch=0,
                grid=(gm, gn),
                in_specs=[
                    pl.BlockSpec((tm, tk), lambda i, j: (i, 0)),
                    pl.BlockSpec((tk, tn), lambda i, j: (0, j)),
                    pl.BlockSpec((1, tn), lambda i, j: (0, j)),
                ],
                out_specs=pl.BlockSpec((tm, tn), lambda i, j: (i, j)),
            ),
            compiler_params=pltpu.CompilerParams(
                dimension_semantics=("parallel", "parallel"),
                vmem_limit_bytes=vmem_limit,
            ),
            cost_estimate=cost,
        )(xb, wp, bp)
    else:
        out = pl.pallas_call(
            functools.partial(_gemm_bias_acc_kernel, apply_relu=relu),
            out_shape=jax.ShapeDtypeStruct((Mp, Np), out_dtype),
            grid_spec=pltpu.PrefetchScalarGridSpec(
                num_scalar_prefetch=0,
                grid=(gm, gn, kg),
                in_specs=[
                    pl.BlockSpec((tm, tk), lambda i, j, k: (i, k)),
                    pl.BlockSpec((tk, tn), lambda i, j, k: (k, j)),
                    pl.BlockSpec((1, tn), lambda i, j, k: (0, j)),
                ],
                out_specs=pl.BlockSpec((tm, tn), lambda i, j, k: (i, j)),
                scratch_shapes=[pltpu.VMEM((tm, tn), jnp.float32)],
            ),
            compiler_params=pltpu.CompilerParams(
                dimension_semantics=("parallel", "parallel", "arbitrary"),
                vmem_limit_bytes=vmem_limit,
            ),
            cost_estimate=cost,
        )(xb, wp, bp)
    return out


# ----------------------------------------------------------------------------
# NHWC 3x3-tap im2col glue (pure indexing / padding; no FLOPs)
# ----------------------------------------------------------------------------
def _patches_3x3_nhwc(x, H, W):
    """x: (B, H+2, W+2, C) padded NHWC -> (B*H*W, 9*C), K ordered (ty, tx, c)."""
    B = x.shape[0]
    C = x.shape[-1]
    cols = []
    for ty in (0, 1, 2):
        for tx in (0, 1, 2):
            cols.append(x[:, ty:ty + H, tx:tx + W, :])
    p = jnp.concatenate(cols, axis=-1)             # (B, H, W, 9*C)
    return p.reshape(B * H * W, 9 * C)


def conv_transpose2d_nhwc(x, wp, bp, cout, *, relu):
    """ConvTranspose2d(k=4,s=2,p=1) as ONE fused GEMM (all 4 output phases).

    x: (B,H,W,Cin) NHWC.  wp: pre-padded fused weight (>=9*Cin, >=4*Cout).
    Output: (B, 2H, 2W, cout) bf16.
    """
    B, H, W, _ = x.shape
    xpad = jnp.pad(x, ((0, 0), (1, 1), (1, 1), (0, 0)))
    patches = _patches_3x3_nhwc(xpad, H, W)                  # (B*H*W, 9*Cin)
    y = matmul_bias(patches, wp, bp, relu=relu, out_dtype=jnp.bfloat16)
    y = y[:B * H * W, :4 * cout]                             # strip padding
    y = y.reshape(B, H, W, 2, 2, cout)                       # (b, m, n, r, c, ch)
    y = y.transpose(0, 1, 3, 2, 4, 5).reshape(B, 2 * H, 2 * W, cout)
    return y


def conv2d_3x3_nhwc(x, wp, bp, cout, *, relu, out_dtype):
    """Conv2d(k=3,s=1,p=1).  x: (B,H,W,Cin) NHWC -> (B,H,W,cout)."""
    B, H, W, _ = x.shape
    xpad = jnp.pad(x, ((0, 0), (1, 1), (1, 1), (0, 0)))
    patches = _patches_3x3_nhwc(xpad, H, W)
    y = matmul_bias(patches, wp, bp, relu=relu, out_dtype=out_dtype)
    return y[:B * H * W, :cout].reshape(B, H, W, cout)


# ----------------------------------------------------------------------------
# Decoder (parameter prep + forward)
# ----------------------------------------------------------------------------
def _ct_in_size(out_size, padding, dilation, kernel_size, stride, output_padding):
    return (out_size + 2 * padding - dilation * (kernel_size - 1)
            - output_padding - 1) // stride + 1


def _conv_in_size(out_size, padding, dilation, kernel_size, stride):
    return (out_size - 1) * stride - 2 * padding + dilation * (kernel_size - 1) + 1


def compute_base_size(output_shape):
    s1 = _conv_in_size(output_shape[-1], 1, 1, 3, 1)
    s2 = _ct_in_size(s1, 1, 1, 4, 2, 0)
    s3 = _ct_in_size(s2, 1, 1, 4, 2, 0)
    s4 = _ct_in_size(s3, 1, 1, 4, 2, 0)
    return s4


def init_params(key, latent_dim, base_size):
    ks = jax.random.split(key, 10)
    scale = 0.05
    return {
        # nn.Linear(latent_dim, 256*bs*bs): weight (out, in), bias (out,)
        "fc_w": scale * jax.random.normal(ks[0], (256 * base_size * base_size, latent_dim), jnp.float32),
        "fc_b": scale * jax.random.normal(ks[1], (256 * base_size * base_size,), jnp.float32),
        # ConvTranspose2d weights: (Cin, Cout, 4, 4)
        "ct1_w": scale * jax.random.normal(ks[2], (256, 128, 4, 4), jnp.float32),
        "ct1_b": scale * jax.random.normal(ks[3], (128,), jnp.float32),
        "ct2_w": scale * jax.random.normal(ks[4], (128, 64, 4, 4), jnp.float32),
        "ct2_b": scale * jax.random.normal(ks[5], (64,), jnp.float32),
        "ct3_w": scale * jax.random.normal(ks[6], (64, 32, 4, 4), jnp.float32),
        "ct3_b": scale * jax.random.normal(ks[7], (32,), jnp.float32),
        # Conv2d weight: (Cout, Cin, 3, 3)
        "cv_w": scale * jax.random.normal(ks[8], (3, 32, 3, 3), jnp.float32),
        "cv_b": scale * jax.random.normal(ks[9], (3,), jnp.float32),
    }


def prepare_params(params, base_size):
    """One-time weight rearrangement into GEMM-ready, PRE-PADDED bf16 matrices."""
    bs = base_size
    prep = {}

    def pad_wb(w_mat, b_vec):
        K, N = w_mat.shape
        Kp, Np = _round_up(K, 128), _round_up(N, 128)
        wp = jnp.zeros((Kp, Np), jnp.bfloat16).at[:K, :N].set(w_mat.astype(jnp.bfloat16))
        bp = jnp.zeros((1, Np), jnp.float32).at[0, :N].set(b_vec.astype(jnp.float32))
        return wp, bp

    # fc: reorder output units from (C, y, x) to NHWC (y, x, C) so the GEMM
    # output reshapes directly into channels-last layout.
    fc_w = params["fc_w"].reshape(256, bs, bs, -1).transpose(1, 2, 0, 3)
    fc_w = fc_w.reshape(bs * bs * 256, -1).T                   # (latent, bs*bs*256)
    fc_b = params["fc_b"].reshape(256, bs, bs).transpose(1, 2, 0).reshape(-1)
    prep["fc_w"], prep["fc_b"] = pad_wb(fc_w, fc_b)

    # ConvTranspose2d(4,2,1): fused 4-phase weight over the 3x3 tap window of
    # the 1-padded input.  Output pixel (2m+r, 2n+c); tap (ty,tx) reads input
    # (m-1+ty, n-1+tx).  Valid (phase, tap) -> kernel index:
    #   r==0: ty=0 -> ky=3, ty=1 -> ky=1;   r==1: ty=1 -> ky=2, ty=2 -> ky=0
    # (same mapping for columns / kx).  Non-participating taps are zero.
    k_of = {(0, 0): 3, (0, 1): 1, (1, 1): 2, (1, 2): 0}
    for name in ("ct1", "ct2", "ct3"):
        w = params[name + "_w"]                    # (Cin, Cout, 4, 4)
        b = params[name + "_b"]
        cin, cout = w.shape[0], w.shape[1]
        wf = jnp.zeros((9 * cin, 4 * cout), jnp.float32)
        for r in (0, 1):
            for c in (0, 1):
                for ty in (0, 1, 2):
                    if (r, ty) not in k_of:
                        continue
                    ky = k_of[(r, ty)]
                    for tx in (0, 1, 2):
                        if (c, tx) not in k_of:
                            continue
                        kx = k_of[(c, tx)]
                        tap = ty * 3 + tx
                        ph = 2 * r + c
                        wf = wf.at[tap * cin:(tap + 1) * cin,
                                   ph * cout:(ph + 1) * cout].set(w[:, :, ky, kx])
        bf = jnp.tile(b, 4)                        # phase-major bias
        prep[name + "_w"], prep[name + "_b"] = pad_wb(wf, bf)

    # Final Conv2d(3x3): (Cout, Cin, kh, kw) -> (kh*kw*Cin, Cout)
    cw = params["cv_w"]
    cw_mat = cw.transpose(2, 3, 1, 0).reshape(9 * cw.shape[1], cw.shape[0])
    prep["cv_w"], prep["cv_b"] = pad_wb(cw_mat, params["cv_b"])
    return prep


def decoder_forward(z, prep, base_size):
    B = z.shape[0]
    bs = base_size
    # fc; the Sequential's leading ReLU is fused into the fc GEMM epilogue.
    h = matmul_bias(z, prep["fc_w"], prep["fc_b"], relu=True,
                    out_dtype=jnp.bfloat16)
    h = h[:B, :bs * bs * 256]
    x = h.reshape(B, bs, bs, 256)                                    # NHWC
    x = conv_transpose2d_nhwc(x, prep["ct1_w"], prep["ct1_b"], 128, relu=True)
    x = conv_transpose2d_nhwc(x, prep["ct2_w"], prep["ct2_b"], 64, relu=True)
    x = conv_transpose2d_nhwc(x, prep["ct3_w"], prep["ct3_b"], 32, relu=True)
    x = conv2d_3x3_nhwc(x, prep["cv_w"], prep["cv_b"], 3, relu=False,
                        out_dtype=jnp.float32)
    # TODO(synk): fold the final channel slice + NCHW permutation into the last
    # kernel's out_spec instead of this XLA transpose.
    return x.transpose(0, 3, 1, 2)                                   # -> NCHW


# ----------------------------------------------------------------------------
# Pure-JAX reference (lax convs, same bf16-in / f32-accumulate precision)
# ----------------------------------------------------------------------------
def decoder_reference(z, params, base_size):
    B = z.shape[0]
    bf, f32 = jnp.bfloat16, jnp.float32
    h = jnp.dot(z.astype(bf), params["fc_w"].T.astype(bf),
                preferred_element_type=f32)
    h = jnp.maximum(h + params["fc_b"], 0.0)
    x = h.reshape(B, 256, base_size, base_size)
    for wk, bk in (("ct1_w", "ct1_b"), ("ct2_w", "ct2_b"), ("ct3_w", "ct3_b")):
        w, b = params[wk], params[bk]
        rhs = jnp.flip(w, (2, 3)).transpose(1, 0, 2, 3)            # (Cout,Cin,4,4)
        x = lax.conv_general_dilated(
            x.astype(bf), rhs.astype(bf), window_strides=(1, 1),
            padding=((2, 2), (2, 2)), lhs_dilation=(2, 2),
            dimension_numbers=("NCHW", "OIHW", "NCHW"),
            preferred_element_type=f32)
        x = jnp.maximum(x + b[None, :, None, None], 0.0)
    x = lax.conv_general_dilated(
        x.astype(bf), params["cv_w"].astype(bf), window_strides=(1, 1),
        padding=((1, 1), (1, 1)), dimension_numbers=("NCHW", "OIHW", "NCHW"),
        preferred_element_type=f32)
    return x + params["cv_b"][None, :, None, None]


if __name__ == "__main__":
    latent_dim = 8
    output_shape = (3, 16, 16)          # small output; base_size -> 2
    batch = 2

    base_size = compute_base_size(output_shape)     # = 2

    key = jax.random.PRNGKey(0)
    kz, kp = jax.random.split(key)
    z = jax.random.normal(kz, (batch, latent_dim), jnp.float32)
    params = init_params(kp, latent_dim, base_size)
    prep = prepare_params(params, base_size)        # one-time weight prep

    fwd = jax.jit(decoder_forward, static_argnums=2)
    out = jax.block_until_ready(fwd(z, prep, base_size))
    assert out.shape == (batch, 3, output_shape[-1], output_shape[-1]), out.shape

    ref = jax.block_until_ready(decoder_reference(z, params, base_size))
    max_err = float(jnp.max(jnp.abs(out - ref)))
    assert jnp.allclose(out, ref, atol=2e-3, rtol=2e-2), max_err

    print("KERNEL_OK")
</pallas_src>

<mosaic_0001>
module attributes {stable_mosaic.version = 11 : i64} {
  func.func @_gemm_bias_kernel(%arg0: i32, %arg1: i32, %arg2: memref<16x128xbf16, #tpu.memory_space<vmem>>, %arg3: memref<128x512xbf16, #tpu.memory_space<vmem>>, %arg4: memref<1x512xf32, #tpu.memory_space<vmem>>, %arg5: memref<16x512xbf16, #tpu.memory_space<vmem>>) attributes {dimension_semantics = [#tpu.dimension_semantics<parallel>, #tpu.dimension_semantics<parallel>], iteration_bounds = array<i64: 1, 2>, scalar_prefetch = 0 : i64, scratch_operands = 0 : i64, tpu.core_type = #tpu.core_type<tc>, window_params = [{transform_indices = @transform_0, window_bounds = array<i64: 16, 128>}, {transform_indices = @transform_1, window_bounds = array<i64: 128, 512>}, {transform_indices = @transform_2, window_bounds = array<i64: 1, 512>}, {transform_indices = @transform_3, window_bounds = array<i64: 16, 512>}]} {
    %c0 = arith.constant 0 : index
    %c0_0 = arith.constant 0 : index
    %0 = vector.load %arg2[%c0, %c0_0] : memref<16x128xbf16, #tpu.memory_space<vmem>>, vector<16x128xbf16>
    %c0_1 = arith.constant 0 : index
    %c0_2 = arith.constant 0 : index
    %1 = vector.load %arg3[%c0_1, %c0_2] : memref<128x512xbf16, #tpu.memory_space<vmem>>, vector<128x512xbf16>
    %cst = arith.constant dense<0.000000e+00> : vector<16x512xf32>
    %2 = tpu.matmul %0, %1, %cst {dimension_numbers = #tpu.dot_dimension_numbers<[1], [0], [0], [1], [0, 0, 1, 1], [], []>} : vector<16x128xbf16>, vector<128x512xbf16>, vector<16x512xf32> -> vector<16x512xf32>
    %c0_3 = arith.constant 0 : index
    %c0_4 = arith.constant 0 : index
    %3 = vector.load %arg4[%c0_3, %c0_4] : memref<1x512xf32, #tpu.memory_space<vmem>>, vector<1x512xf32>
    %4 = vector.broadcast %3 : vector<1x512xf32> to vector<16x512xf32>
    %5 = arith.addf %2, %4 : vector<16x512xf32>
    %cst_5 = arith.constant 0.000000e+00 : f32
    %6 = vector.broadcast %cst_5 : f32 to vector<16x512xf32>
    %7 = arith.maximumf %5, %6 : vector<16x512xf32>
    %8 = arith.truncf %7 : vector<16x512xf32> to vector<16x512xbf16>
    %c0_6 = arith.constant 0 : index
    %c0_7 = arith.constant 0 : index
    %9 = vector.load %arg5[%c0_6, %c0_7] : memref<16x512xbf16, #tpu.memory_space<vmem>>, vector<16x512xbf16>
    tpu.vector_store %arg5[%c0_6, %c0_7], %8 {strides = array<i32>} : memref<16x512xbf16, #tpu.memory_space<vmem>>, vector<16x512xbf16>,
    return
  }
  func.func @transform_0(%arg0: i32, %arg1: i32) -> (i32, i32) {
    %c0_i32 = arith.constant 0 : i32
    %c0_i32_0 = arith.constant 0 : i32
    return %arg0, %c0_i32 : i32, i32
  }
  func.func @transform_1(%arg0: i32, %arg1: i32) -> (i32, i32) {
    %c0_i32 = arith.constant 0 : i32
    %c0_i32_0 = arith.constant 0 : i32
    return %c0_i32, %arg1 : i32, i32
  }
  func.func @transform_2(%arg0: i32, %arg1: i32) -> (i32, i32) {
    %c0_i32 = arith.constant 0 : i32
    %c0_i32_0 = arith.constant 0 : i32
    return %c0_i32, %arg1 : i32, i32
  }
  func.func @transform_3(%arg0: i32, %arg1: i32) -> (i32, i32) {
    %c0_i32 = arith.constant 0 : i32
    return %arg0, %arg1 : i32, i32
  }
}

module attributes {stable_mosaic.version = 11 : i64} {
  func.func @_gemm_bias_kernel(%arg0: i32, %arg1: i32, %arg2: memref<16x2304xbf16, #tpu.memory_space<vmem>>, %arg3: memref<2304x512xbf16, #tpu.memory_space<vmem>>, %arg4: memref<1x512xf32, #tpu.memory_space<vmem>>, %arg5: memref<16x512xbf16, #tpu.memory_space<vmem>>) attributes {dimension_semantics = [#tpu.dimension_semantics<parallel>, #tpu.dimension_semantics<parallel>], iteration_bounds = array<i64: 1, 1>, scalar_prefetch = 0 : i64, scratch_operands = 0 : i64, tpu.core_type = #tpu.core_type<tc>, window_params = [{transform_indices = @transform_0, window_bounds = array<i64: 16, 2304>}, {transform_indices = @transform_1, window_bounds = array<i64: 2304, 512>}, {transform_indices = @transform_2, window_bounds = array<i64: 1, 512>}, {transform_indices = @transform_3, window_bounds = array<i64: 16, 512>}]} {
    %c0 = arith.constant 0 : index
    %c0_0 = arith.constant 0 : index
    %0 = vector.load %arg2[%c0, %c0_0] : memref<16x2304xbf16, #tpu.memory_space<vmem>>, vector<16x2304xbf16>
    %c0_1 = arith.constant 0 : index
    %c0_2 = arith.constant 0 : index
    %1 = vector.load %arg3[%c0_1, %c0_2] : memref<2304x512xbf16, #tpu.memory_space<vmem>>, vector<2304x512xbf16>
    %cst = arith.constant dense<0.000000e+00> : vector<16x512xf32>
    %2 = tpu.matmul %0, %1, %cst {dimension_numbers = #tpu.dot_dimension_numbers<[1], [0], [0], [1], [0, 0, 1, 1], [], []>} : vector<16x2304xbf16>, vector<2304x512xbf16>, vector<16x512xf32> -> vector<16x512xf32>
    %c0_3 = arith.constant 0 : index
    %c0_4 = arith.constant 0 : index
    %3 = vector.load %arg4[%c0_3, %c0_4] : memref<1x512xf32, #tpu.memory_space<vmem>>, vector<1x512xf32>
    %4 = vector.broadcast %3 : vector<1x512xf32> to vector<16x512xf32>
    %5 = arith.addf %2, %4 : vector<16x512xf32>
    %cst_5 = arith.constant 0.000000e+00 : f32
    %6 = vector.broadcast %cst_5 : f32 to vector<16x512xf32>
    %7 = arith.maximumf %5, %6 : vector<16x512xf32>
    %8 = arith.truncf %7 : vector<16x512xf32> to vector<16x512xbf16>
    %c0_6 = arith.constant 0 : index
    %c0_7 = arith.constant 0 : index
    %9 = vector.load %arg5[%c0_6, %c0_7] : memref<16x512xbf16, #tpu.memory_space<vmem>>, vector<16x512xbf16>
    tpu.vector_store %arg5[%c0_6, %c0_7], %8 {strides = array<i32>} : memref<16x512xbf16, #tpu.memory_space<vmem>>, vector<16x512xbf16>,
    return
  }
  func.func @transform_0(%arg0: i32, %arg1: i32) -> (i32, i32) {
    %c0_i32 = arith.constant 0 : i32
    %c0_i32_0 = arith.constant 0 : i32
    return %arg0, %c0_i32 : i32, i32
  }
  func.func @transform_1(%arg0: i32, %arg1: i32) -> (i32, i32) {
    %c0_i32 = arith.constant 0 : i32
    %c0_i32_0 = arith.constant 0 : i32
    return %c0_i32, %arg1 : i32, i32
  }
  func.func @transform_2(%arg0: i32, %arg1: i32) -> (i32, i32) {
    %c0_i32 = arith.constant 0 : i32
    %c0_i32_0 = arith.constant 0 : i32
    return %c0_i32, %arg1 : i32, i32
  }
  func.func @transform_3(%arg0: i32, %arg1: i32) -> (i32, i32) {
    %c0_i32 = arith.constant 0 : i32
    return %arg0, %arg1 : i32, i32
  }
}

module attributes {stable_mosaic.version = 11 : i64} {
  func.func @_gemm_bias_kernel(%arg0: i32, %arg1: i32, %arg2: memref<32x1152xbf16, #tpu.memory_space<vmem>>, %arg3: memref<1152x256xbf16, #tpu.memory_space<vmem>>, %arg4: memref<1x256xf32, #tpu.memory_space<vmem>>, %arg5: memref<32x256xbf16, #tpu.memory_space<vmem>>) attributes {dimension_semantics = [#tpu.dimension_semantics<parallel>, #tpu.dimension_semantics<parallel>], iteration_bounds = array<i64: 1, 1>, scalar_prefetch = 0 : i64, scratch_operands = 0 : i64, tpu.core_type = #tpu.core_type<tc>, window_params = [{transform_indices = @transform_0, window_bounds = array<i64: 32, 1152>}, {transform_indices = @transform_1, window_bounds = array<i64: 1152, 256>}, {transform_indices = @transform_2, window_bounds = array<i64: 1, 256>}, {transform_indices = @transform_3, window_bounds = array<i64: 32, 256>}]} {
    %c0 = arith.constant 0 : index
    %c0_0 = arith.constant 0 : index
    %0 = vector.load %arg2[%c0, %c0_0] : memref<32x1152xbf16, #tpu.memory_space<vmem>>, vector<32x1152xbf16>
    %c0_1 = arith.constant 0 : index
    %c0_2 = arith.constant 0 : index
    %1 = vector.load %arg3[%c0_1, %c0_2] : memref<1152x256xbf16, #tpu.memory_space<vmem>>, vector<1152x256xbf16>
    %cst = arith.constant dense<0.000000e+00> : vector<32x256xf32>
    %2 = tpu.matmul %0, %1, %cst {dimension_numbers = #tpu.dot_dimension_numbers<[1], [0], [0], [1], [0, 0, 1, 1], [], []>} : vector<32x1152xbf16>, vector<1152x256xbf16>, vector<32x256xf32> -> vector<32x256xf32>
    %c0_3 = arith.constant 0 : index
    %c0_4 = arith.constant 0 : index
    %3 = vector.load %arg4[%c0_3, %c0_4] : memref<1x256xf32, #tpu.memory_space<vmem>>, vector<1x256xf32>
    %4 = vector.broadcast %3 : vector<1x256xf32> to vector<32x256xf32>
    %5 = arith.addf %2, %4 : vector<32x256xf32>
    %cst_5 = arith.constant 0.000000e+00 : f32
    %6 = vector.broadcast %cst_5 : f32 to vector<32x256xf32>
    %7 = arith.maximumf %5, %6 : vector<32x256xf32>
    %8 = arith.truncf %7 : vector<32x256xf32> to vector<32x256xbf16>
    %c0_6 = arith.constant 0 : index
    %c0_7 = arith.constant 0 : index
    %9 = vector.load %arg5[%c0_6, %c0_7] : memref<32x256xbf16, #tpu.memory_space<vmem>>, vector<32x256xbf16>
    tpu.vector_store %arg5[%c0_6, %c0_7], %8 {strides = array<i32>} : memref<32x256xbf16, #tpu.memory_space<vmem>>, vector<32x256xbf16>,
    return
  }
  func.func @transform_0(%arg0: i32, %arg1: i32) -> (i32, i32) {
    %c0_i32 = arith.constant 0 : i32
    %c0_i32_0 = arith.constant 0 : i32
    return %arg0, %c0_i32 : i32, i32
  }
  func.func @transform_1(%arg0: i32, %arg1: i32) -> (i32, i32) {
    %c0_i32 = arith.constant 0 : i32
    %c0_i32_0 = arith.constant 0 : i32
    return %c0_i32, %arg1 : i32, i32
  }
  func.func @transform_2(%arg0: i32, %arg1: i32) -> (i32, i32) {
    %c0_i32 = arith.constant 0 : i32
    %c0_i32_0 = arith.constant 0 : i32
    return %c0_i32, %arg1 : i32, i32
  }
  func.func @transform_3(%arg0: i32, %arg1: i32) -> (i32, i32) {
    %c0_i32 = arith.constant 0 : i32
    return %arg0, %arg1 : i32, i32
  }
}

module attributes {stable_mosaic.version = 11 : i64} {
  func.func @_gemm_bias_kernel(%arg0: i32, %arg1: i32, %arg2: memref<128x640xbf16, #tpu.memory_space<vmem>>, %arg3: memref<640x128xbf16, #tpu.memory_space<vmem>>, %arg4: memref<1x128xf32, #tpu.memory_space<vmem>>, %arg5: memref<128x128xbf16, #tpu.memory_space<vmem>>) attributes {dimension_semantics = [#tpu.dimension_semantics<parallel>, #tpu.dimension_semantics<parallel>], iteration_bounds = array<i64: 1, 1>, scalar_prefetch = 0 : i64, scratch_operands = 0 : i64, tpu.core_type = #tpu.core_type<tc>, window_params = [{transform_indices = @transform_0, window_bounds = array<i64: 128, 640>}, {transform_indices = @transform_1, window_bounds = array<i64: 640, 128>}, {transform_indices = @transform_2, window_bounds = array<i64: 1, 128>}, {transform_indices = @transform_3, window_bounds = array<i64: 128, 128>}]} {
    %c0 = arith.constant 0 : index
    %c0_0 = arith.constant 0 : index
    %0 = vector.load %arg2[%c0, %c0_0] : memref<128x640xbf16, #tpu.memory_space<vmem>>, vector<128x640xbf16>
    %c0_1 = arith.constant 0 : index
    %c0_2 = arith.constant 0 : index
    %1 = vector.load %arg3[%c0_1, %c0_2] : memref<640x128xbf16, #tpu.memory_space<vmem>>, vector<640x128xbf16>
    %cst = arith.constant dense<0.000000e+00> : vector<128x128xf32>
    %2 = tpu.matmul %0, %1, %cst {dimension_numbers = #tpu.dot_dimension_numbers<[1], [0], [0], [1], [0, 0, 1, 1], [], []>} : vector<128x640xbf16>, vector<640x128xbf16>, vector<128x128xf32> -> vector<128x128xf32>
    %c0_3 = arith.constant 0 : index
    %c0_4 = arith.constant 0 : index
    %3 = vector.load %arg4[%c0_3, %c0_4] : memref<1x128xf32, #tpu.memory_space<vmem>>, vector<1x128xf32>
    %4 = vector.broadcast %3 : vector<1x128xf32> to vector<128x128xf32>
    %5 = arith.addf %2, %4 : vector<128x128xf32>
    %cst_5 = arith.constant 0.000000e+00 : f32
    %6 = vector.broadcast %cst_5 : f32 to vector<128x128xf32>
    %7 = arith.maximumf %5, %6 : vector<128x128xf32>
    %8 = arith.truncf %7 : vector<128x128xf32> to vector<128x128xbf16>
    %c0_6 = arith.constant 0 : index
    %c0_7 = arith.constant 0 : index
    %9 = vector.load %arg5[%c0_6, %c0_7] : memref<128x128xbf16, #tpu.memory_space<vmem>>, vector<128x128xbf16>
    tpu.vector_store %arg5[%c0_6, %c0_7], %8 {strides = array<i32>} : memref<128x128xbf16, #tpu.memory_space<vmem>>, vector<128x128xbf16>,
    return
  }
  func.func @transform_0(%arg0: i32, %arg1: i32) -> (i32, i32) {
    %c0_i32 = arith.constant 0 : i32
    %c0_i32_0 = arith.constant 0 : i32
    return %arg0, %c0_i32 : i32, i32
  }
  func.func @transform_1(%arg0: i32, %arg1: i32) -> (i32, i32) {
    %c0_i32 = arith.constant 0 : i32
    %c0_i32_0 = arith.constant 0 : i32
    return %c0_i32, %arg1 : i32, i32
  }
  func.func @transform_2(%arg0: i32, %arg1: i32) -> (i32, i32) {
    %c0_i32 = arith.constant 0 : i32
    %c0_i32_0 = arith.constant 0 : i32
    return %c0_i32, %arg1 : i32, i32
  }
  func.func @transform_3(%arg0: i32, %arg1: i32) -> (i32, i32) {
    %c0_i32 = arith.constant 0 : i32
    return %arg0, %arg1 : i32, i32
  }
}

module attributes {stable_mosaic.version = 11 : i64} {
  func.func @_gemm_bias_kernel(%arg0: i32, %arg1: i32, %arg2: memref<512x384xbf16, #tpu.memory_space<vmem>>, %arg3: memref<384x128xbf16, #tpu.memory_space<vmem>>, %arg4: memref<1x128xf32, #tpu.memory_space<vmem>>, %arg5: memref<512x128xf32, #tpu.memory_space<vmem>>) attributes {dimension_semantics = [#tpu.dimension_semantics<parallel>, #tpu.dimension_semantics<parallel>], iteration_bounds = array<i64: 1, 1>, scalar_prefetch = 0 : i64, scratch_operands = 0 : i64, tpu.core_type = #tpu.core_type<tc>, window_params = [{transform_indices = @transform_0, window_bounds = array<i64: 512, 384>}, {transform_indices = @transform_1, window_bounds = array<i64: 384, 128>}, {transform_indices = @transform_2, window_bounds = array<i64: 1, 128>}, {transform_indices = @transform_3, window_bounds = array<i64: 512, 128>}]} {
    %c0 = arith.constant 0 : index
    %c0_0 = arith.constant 0 : index
    %0 = vector.load %arg2[%c0, %c0_0] : memref<512x384xbf16, #tpu.memory_space<vmem>>, vector<512x384xbf16>
    %c0_1 = arith.constant 0 : index
    %c0_2 = arith.constant 0 : index
    %1 = vector.load %arg3[%c0_1, %c0_2] : memref<384x128xbf16, #tpu.memory_space<vmem>>, vector<384x128xbf16>
    %cst = arith.constant dense<0.000000e+00> : vector<512x128xf32>
    %2 = tpu.matmul %0, %1, %cst {dimension_numbers = #tpu.dot_dimension_numbers<[1], [0], [0], [1], [0, 0, 1, 1], [], []>} : vector<512x384xbf16>, vector<384x128xbf16>, vector<512x128xf32> -> vector<512x128xf32>
    %c0_3 = arith.constant 0 : index
    %c0_4 = arith.constant 0 : index
    %3 = vector.load %arg4[%c0_3, %c0_4] : memref<1x128xf32, #tpu.memory_space<vmem>>, vector<1x128xf32>
    %4 = vector.broadcast %3 : vector<1x128xf32> to vector<512x128xf32>
    %5 = arith.addf %2, %4 : vector<512x128xf32>
    %c0_5 = arith.constant 0 : index
    %c0_6 = arith.constant 0 : index
    %6 = vector.load %arg5[%c0_5, %c0_6] : memref<512x128xf32, #tpu.memory_space<vmem>>, vector<512x128xf32>
    tpu.vector_store %arg5[%c0_5, %c0_6], %5 {strides = array<i32>} : memref<512x128xf32, #tpu.memory_space<vmem>>, vector<512x128xf32>,
    return
  }
  func.func @transform_0(%arg0: i32, %arg1: i32) -> (i32, i32) {
    %c0_i32 = arith.constant 0 : i32
    %c0_i32_0 = arith.constant 0 : i32
    return %arg0, %c0_i32 : i32, i32
  }
  func.func @transform_1(%arg0: i32, %arg1: i32) -> (i32, i32) {
    %c0_i32 = arith.constant 0 : i32
    %c0_i32_0 = arith.constant 0 : i32
    return %c0_i32, %arg1 : i32, i32
  }
  func.func @transform_2(%arg0: i32, %arg1: i32) -> (i32, i32) {
    %c0_i32 = arith.constant 0 : i32
    %c0_i32_0 = arith.constant 0 : i32
    return %c0_i32, %arg1 : i32, i32
  }
  func.func @transform_3(%arg0: i32, %arg1: i32) -> (i32, i32) {
    %c0_i32 = arith.constant 0 : i32
    return %arg0, %arg1 : i32, i32
  }
}

</mosaic_0001>

<llo_original>
// kernel: decoder_forward.5
$region0: #{decoder_forward.5}
  #allocation0 [shape = 'u32[]', space=smem, size = 0x4, offset = 0x4, fixed_abs, tag = 'smem constant byte address 0x4 - core index']
  #allocation1 [shape = 'u32[144,128]{1,0:T(1,128)}', space=vmem, size = 0x12000, scoped, tag = 'internal scratch']
  %s0 = inlined_call_operand.vmem [shape: bf16[16,128], index: 0, kind: input, shape index: {}]
  %s1 = inlined_call_operand.hbm [shape: bf16[128,1024], index: 1, kind: input, shape index: {}]
  %s2 = inlined_call_operand.hbm [shape: f32[1,1024], index: 2, kind: input, shape index: {}]
  %s3 = inlined_call_operand.vmem [shape: bf16[16,1024], index: 3, kind: output, shape index: {}]
  %s4 = sld [smem:[#allocation0]]
  $region72: #{decoder_forward.5} parent=0
    _
  %s6 = ssub.s32 1, %s4
  %s7 = scalar_select 0, %s6, %s4
  $region1: #{decoder_forward.5} parent=0
    #allocation2 [shape = 'u8[262144]{0}', space=vmem, size = 0x40000, scoped, tag = 'input window, operand 1']
    #allocation3 [shape = 's32[2]{0}', space=sflag, size = 0x8, scoped, tag = 'scoped memory for decoder_forward.5']
    #allocation4 [shape = 'u8[4096]{0}', space=vmem, size = 0x1000, scoped, tag = 'input window, operand 2']
    #allocation5 [shape = 's32[2]{0}', space=sflag, size = 0x8, scoped, tag = 'scoped memory for decoder_forward.5']
    #allocation6 [shape = 'u8[32768]{0}', space=vmem, size = 0x8000, scoped, tag = 'output window, operand 0']
    %8 = vsyncpa [#allocation3], 0
    %s9 = scalar_lea.sflag [#allocation3], 1
    %10 = vsyncpa %s9, 0
    %11 = vsyncpa [#allocation5], 0
    %s12 = scalar_lea.sflag [#allocation5], 1
    %13 = vsyncpa %s12, 0
    loop: start=0, step=1, limit=4
    $region2: #{decoder_forward.5} parent=1 // loop_pre_header
      _
    $region3: #{decoder_forward.5} parent=1 // loop_header
      %s15 = sphi 0, %s19
      %p16 = scmp.ge.s32.totalorder %s15, 4
      %s22 = sphi 0, %s34
      %s23 = sphi 0, %s30
      %s24 = sphi 0, %s22
      %s25 = sphi 0, %s23
      %s26 = sphi 0, %s24
      %s27 = sphi 0, %s25
      %s37 = sphi 0, %s39
      %s40 = sphi 0, %s37
      %s41 = sphi 0, %s40
      %s57 = sphi 0, %s41
      %s63 = sphi 0, %s65
      %s66 = sphi 0, %s63
      %s67 = sphi 0, %s66
      %s83 = sphi 0, %s67
      %s89 = sphi 0, %s91
      %s92 = sphi 0, %s89
      %s93 = sphi 0, %s92
      %s109 = sphi 0, %s93
      %s117 = sphi 0, %s119
      %s120 = sphi 0, %s117
      %s121 = sphi 0, %s120
      %s137 = sphi 0, %s121
    $region4: #{decoder_forward.5} parent=1 // loop_header_branch
      %18 = sbr.rel (%p16) target = $region8
    $region5: #{decoder_forward.5} parent=1 // loop_body
      %s20 = ssub.s32 %s15, 1
      %s21 = ssub.s32 %s15, 2
      %s28 = sadd.s32 1, %s23
      %p29 = scmp.ge.s32.totalorder %s28, 2
      %s30 = scalar_select %p29, 0, %s28
      %s31 = sadd.s32 1, %s22
      %s32 = scalar_select %p29, %s31, %s22
      %p33 = scmp.ge.s32.totalorder %s32, 1
      %s34 = scalar_select %p33, 0, %s32
      %s35 = ssub.s32 %s22, %s34
      %p36 = scmp.eq.s32.totalorder %s35, 0
      %s38 = sadd.s32 %s37, 1
      %s39 = scalar_select %p36, %s37, %s38
      %p42 = pneg %p36
      %p43 = scmp.eq.s32.totalorder %s15, 1
      %p44 = por %p42, %p43
      %p45 = scmp.ne.s32.totalorder %s37, %s40
      %p46 = scmp.eq.s32.totalorder %s15, 0
      %p47 = por %p45, %p46
      %p48 = scmp.ne.s32.totalorder %s37, %s40
      %p49 = scmp.eq.s32.totalorder %s20, 1
      %p50 = por %p48, %p49
      %p51 = scmp.ne.s32.totalorder %s40, %s41
      %p52 = scmp.eq.s32.totalorder %s20, 0
      %p53 = por %p51, %p52
      %p54 = scmp.ne.s32.totalorder %s40, %s41
      %p55 = scmp.eq.s32.totalorder %s21, 1
      %p56 = por %p54, %p55
      %p58 = scmp.ne.s32.totalorder %s41, %s57
      %p59 = scmp.eq.s32.totalorder %s21, 0
      %p60 = por %p58, %p59
      %s61 = ssub.s32 %s23, %s30
      %p62 = scmp.eq.s32.totalorder %s61, 0
      %s64 = sadd.s32 %s63, 1
      %s65 = scalar_select %p62, %s63, %s64
      %p68 = pneg %p62
      %p69 = scmp.eq.s32.totalorder %s15, 1
      %p70 = por %p68, %p69
      %p71 = scmp.ne.s32.totalorder %s63, %s66
      %p72 = scmp.eq.s32.totalorder %s15, 0
      %p73 = por %p71, %p72
      %p74 = scmp.ne.s32.totalorder %s63, %s66
      %p75 = scmp.eq.s32.totalorder %s20, 1
      %p76 = por %p74, %p75
      %p77 = scmp.ne.s32.totalorder %s66, %s67
      %p78 = scmp.eq.s32.totalorder %s20, 0
      %p79 = por %p77, %p78
      %p80 = scmp.ne.s32.totalorder %s66, %s67
      %p81 = scmp.eq.s32.totalorder %s21, 1
      %p82 = por %p80, %p81
      %p84 = scmp.ne.s32.totalorder %s67, %s83
      %p85 = scmp.eq.s32.totalorder %s21, 0
      %p86 = por %p84, %p85
      %s87 = ssub.s32 %s23, %s30
      %p88 = scmp.eq.s32.totalorder %s87, 0
      %s90 = sadd.s32 %s89, 1
      %s91 = scalar_select %p88, %s89, %s90
      %p94 = pneg %p88
      %p95 = scmp.eq.s32.totalorder %s15, 1
      %p96 = por %p94, %p95
      %p97 = scmp.ne.s32.totalorder %s89, %s92
      %p98 = scmp.eq.s32.totalorder %s15, 0
      %p99 = por %p97, %p98
      %p100 = scmp.ne.s32.totalorder %s89, %s92
      %p101 = scmp.eq.s32.totalorder %s20, 1
      %p102 = por %p100, %p101
      %p103 = scmp.ne.s32.totalorder %s92, %s93
      %p104 = scmp.eq.s32.totalorder %s20, 0
      %p105 = por %p103, %p104
      %p106 = scmp.ne.s32.totalorder %s92, %s93
      %p107 = scmp.eq.s32.totalorder %s21, 1
      %p108 = por %p106, %p107
      %p110 = scmp.ne.s32.totalorder %s93, %s109
      %p111 = scmp.eq.s32.totalorder %s21, 0
      %p112 = por %p110, %p111
      %s113 = ssub.s32 %s22, %s34
      %s114 = ssub.s32 %s23, %s30
      %s115 = sor.u32 %s113, %s114
      %p116 = scmp.eq.s32.totalorder %s115, 0
      %s118 = sadd.s32 %s117, 1
      %s119 = scalar_select %p116, %s117, %s118
      %p122 = pneg %p116
      %p123 = scmp.eq.s32.totalorder %s15, 1
      %p124 = por %p122, %p123
      %p125 = scmp.ne.s32.totalorder %s117, %s120
      %p126 = scmp.eq.s32.totalorder %s15, 0
      %p127 = por %p125, %p126
      %p128 = scmp.ne.s32.totalorder %s117, %s120
      %p129 = scmp.eq.s32.totalorder %s20, 1
      %p130 = por %p128, %p129
      %p131 = scmp.ne.s32.totalorder %s120, %s121
      %p132 = scmp.eq.s32.totalorder %s20, 0
      %p133 = por %p131, %p132
      %p134 = scmp.ne.s32.totalorder %s120, %s121
      %p135 = scmp.eq.s32.totalorder %s21, 1
      %p136 = por %p134, %p135
      %p138 = scmp.ne.s32.totalorder %s121, %s137
      %p139 = scmp.eq.s32.totalorder %s21, 0
      %p140 = por %p138, %p139
      %p141 = scmp.le.s32.totalorder 1, %s15
      %p142 = scmp.lt.s32.totalorder %s15, 3
      %p143 = pnand %p141, %p142
      %p144 = pneg %p143
      // Predicated region
      $region9: #{decoder_forward.5} parent=5 // pred_check
        _
      $region10: #{decoder_forward.5} parent=5 // pred_check_branch
        %146 = sbr.rel (%p143) target = $region12
      $region11: #{decoder_forward.5} parent=5 // pred_region
        %s147 = ssub.s32 %s15, 1
        // Predicated region
        $region13: #{decoder_forward.5} parent=11 // pred_check
          %p148 = pneg %p53
        $region14: #{decoder_forward.5} parent=11 // pred_check_branch
          %150 = sbr.rel (%p148) target = $region16
        $region15: #{decoder_forward.5} parent=11 // pred_region
          %s151 = smul.u32 2, %s24
          %p152 = scmp.lt.s32.totalorder %s151, 1
          %s153 = scalar_select %p152, %s151, 1
          %s154 = smul.addr %s153, 4
          %s155 = scalar_lea.vmem %s0, %s154
          %s156 = smul.u32 2, %s24
        $region16: #{decoder_forward.5} parent=11 // pred_fallthru
          _
      $region12: #{decoder_forward.5} parent=5 // pred_fallthru
        _
      %p157 = scmp.lt.s32.totalorder %s15, 2
      // Predicated region
      $region17: #{decoder_forward.5} parent=5 // pred_check
        %p158 = pneg %p157
      $region18: #{decoder_forward.5} parent=5 // pred_check_branch
        %160 = sbr.rel (%p158) target = $region20
      $region19: #{decoder_forward.5} parent=5 // pred_region
        // Predicated region
        $region21: #{decoder_forward.5} parent=19 // pred_check
          %p161 = pneg %p73
        $region22: #{decoder_forward.5} parent=19 // pred_check_branch
          %163 = sbr.rel (%p161) target = $region24
        $region23: #{decoder_forward.5} parent=19 // pred_region
          %s164 = sand.u32 %s63, 1
          %s165 = scalar_lea.sflag [#allocation3], %s164
          %s166 = sand.u32 %s63, 1
          %s167 = smul.addr %s166, 256
          %s168 = scalar_lea.vmem [#allocation2], %s167
          %s169 = smul.u32 4, %s23
          %s171 = ssub.s32 4096, 4096
          %172 = vsyncadd %s165, %s171
          %s173 = smul.addr %s169, 64
          %s174 = scalar_lea.hbm %s1, %s173
          %s175 = sshll.u32 %s168, 4
          %s176 = int_to_ptr.vmem [resolvable:$true] %s175
          %181 = dma.hbm_to_vmem [thread:$0]  %s174, 4096, %s176, %s165, 512, 256, 16
        $region24: #{decoder_forward.5} parent=19 // pred_fallthru
          _
        // Predicated region
        $region25: #{decoder_forward.5} parent=19 // pred_check
          %p182 = pneg %p99
        $region26: #{decoder_forward.5} parent=19 // pred_check_branch
          %184 = sbr.rel (%p182) target = $region28
        $region27: #{decoder_forward.5} parent=19 // pred_region
          %s185 = sand.u32 %s89, 1
          %s186 = scalar_lea.sflag [#allocation5], %s185
          %s187 = sand.u32 %s89, 1
          %s188 = smul.addr %s187, 4
          %s189 = scalar_lea.vmem [#allocation4], %s188
          %s190 = smul.u32 4, %s23
          %s192 = ssub.s32 64, 64
          %193 = vsyncadd %s186, %s192
          %s194 = smul.addr %s190, 16
          %s195 = scalar_lea.hbm %s2, %s194
          %s197 = sshll.u32 %s189, 4
          %s198 = int_to_ptr.vmem [resolvable:$true] %s197
          %200 = dma.hbm_to_vmem [thread:$0]  %s195, 64, %s198, %s186
        $region28: #{decoder_forward.5} parent=19 // pred_fallthru
          _
      $region20: #{decoder_forward.5} parent=5 // pred_fallthru
        _
      %p201 = scmp.le.s32.totalorder 1, %s15
      %p202 = scmp.lt.s32.totalorder %s15, 3
      %p203 = pnand %p201, %p202
      %p204 = pneg %p203
      // Predicated region
      $region29: #{decoder_forward.5} parent=5 // pred_check
        _
      $region30: #{decoder_forward.5} parent=5 // pred_check_branch
        %206 = sbr.rel (%p203) target = $region32
      $region31: #{decoder_forward.5} parent=5 // pred_region
        %s207 = ssub.s32 %s15, 1
        %s208 = sand.u32 %s66, 1
        %s209 = scalar_lea.sflag [#allocation3], %s208
        %s210 = sand.u32 %s66, 1
        %s211 = smul.addr %s210, 256
        %s212 = scalar_lea.vmem [#allocation2], %s211
        // Predicated region
        $region33: #{decoder_forward.5} parent=31 // pred_check
          %p213 = pneg %p79
        $region34: #{decoder_forward.5} parent=31 // pred_check_branch
          %215 = sbr.rel (%p213) target = $region36
        $region35: #{decoder_forward.5} parent=31 // pred_region
          %216 = dma.done %s209, 4096
        $region36: #{decoder_forward.5} parent=31 // pred_fallthru
          _
        %s217 = sand.u32 %s92, 1
        %s218 = scalar_lea.sflag [#allocation5], %s217
        %s219 = sand.u32 %s92, 1
        %s220 = smul.addr %s219, 4
        %s221 = scalar_lea.vmem [#allocation4], %s220
        // Predicated region
        $region37: #{decoder_forward.5} parent=31 // pred_check
          %p222 = pneg %p105
        $region38: #{decoder_forward.5} parent=31 // pred_check_branch
          %224 = sbr.rel (%p222) target = $region40
        $region39: #{decoder_forward.5} parent=31 // pred_region
          %225 = dma.done %s218, 64
        $region40: #{decoder_forward.5} parent=31 // pred_fallthru
          _
        %s226 = smul.u32 2, %s24
        %p227 = scmp.lt.s32.totalorder %s226, 1
        %s228 = scalar_select %p227, %s226, 1
        %s229 = smul.addr %s228, 4
        %s230 = scalar_lea.vmem %s0, %s229
        %p231 = pneg %p53
        %p232 = pneg %p50
        %s233 = sand.u32 %s66, 1
        %s234 = scalar_lea.sflag [#allocation3], %s233
        %s235 = sand.u32 %s66, 1
        %s236 = smul.addr %s235, 256
        %s237 = scalar_lea.vmem [#allocation2], %s236
        %p238 = pneg %p79
        %p239 = pneg %p76
        %s240 = sand.u32 %s92, 1
        %s241 = scalar_lea.sflag [#allocation5], %s240
        %s242 = sand.u32 %s92, 1
        %s243 = smul.addr %s242, 4
        %s244 = scalar_lea.vmem [#allocation4], %s243
        %p245 = pneg %p105
        %p246 = pneg %p102
        %p247 = pneg %p133
        %p248 = pneg %p130
        %s249 = sand.u32 %s120, 1
        %s250 = sand.u32 %s120, 1
        %s251 = smul.addr %s250, 32
        %s252 = scalar_lea.vmem [#allocation6], %s251
        %s253 = smul.u32 2, %s24
        %p254 = scmp.lt.s32.totalorder %s253, 1
        %s255 = scalar_select %p254, %s253, 1
        %s256 = smul.addr %s255, 4
        %s257 = scalar_lea.vmem %s0, %s256
        %s258 = smul.u32 2, %s24
        %s259 = smul.u32 4, %s25
        %s260 = smul.u32 4, %s25
        %s261 = smul.u32 2, %s24
        %s262 = smul.u32 4, %s25
        %v264 = vld [vmem:[%s257] sm:$0xf]
        %v265 = vld [vmem:[%s257 + $0x4] sm:$0xf]
        %v266 = vld [vmem:[%s212] sm:$0xff]
        %v267 = vld [vmem:[%s212 + $0x8] sm:$0xff]
        %v268 = vld [vmem:[%s212 + $0x10] sm:$0xff]
        %v269 = vld [vmem:[%s212 + $0x18] sm:$0xff]
        %v270 = vld [vmem:[%s212 + $0x20] sm:$0xff]
        %v271 = vld [vmem:[%s212 + $0x28] sm:$0xff]
        %v272 = vld [vmem:[%s212 + $0x30] sm:$0xff]
        %v273 = vld [vmem:[%s212 + $0x38] sm:$0xff]
        %v274 = vld [vmem:[%s212 + $0x40] sm:$0xff]
        %v275 = vld [vmem:[%s212 + $0x48] sm:$0xff]
        %v276 = vld [vmem:[%s212 + $0x50] sm:$0xff]
        %v277 = vld [vmem:[%s212 + $0x58] sm:$0xff]
        %v278 = vld [vmem:[%s212 + $0x60] sm:$0xff]
        %v279 = vld [vmem:[%s212 + $0x68] sm:$0xff]
        %v280 = vld [vmem:[%s212 + $0x70] sm:$0xff]
        %v281 = vld [vmem:[%s212 + $0x78] sm:$0xff]
        %v282 = vld [vmem:[%s212 + $0x80] sm:$0xff]
        %v283 = vld [vmem:[%s212 + $0x88] sm:$0xff]
        %v284 = vld [vmem:[%s212 + $0x90] sm:$0xff]
        %v285 = vld [vmem:[%s212 + $0x98] sm:$0xff]
        %v286 = vld [vmem:[%s212 + $0xa0] sm:$0xff]
        %v287 = vld [vmem:[%s212 + $0xa8] sm:$0xff]
        %v288 = vld [vmem:[%s212 + $0xb0] sm:$0xff]
        %v289 = vld [vmem:[%s212 + $0xb8] sm:$0xff]
        %v290 = vld [vmem:[%s212 + $0xc0] sm:$0xff]
        %v291 = vld [vmem:[%s212 + $0xc8] sm:$0xff]
        %v292 = vld [vmem:[%s212 + $0xd0] sm:$0xff]
        %v293 = vld [vmem:[%s212 + $0xd8] sm:$0xff]
        %v294 = vld [vmem:[%s212 + $0xe0] sm:$0xff]
        %v295 = vld [vmem:[%s212 + $0xe8] sm:$0xff]
        %v296 = vld [vmem:[%s212 + $0xf0] sm:$0xff]
        %v297 = vld [vmem:[%s212 + $0xf8] sm:$0xff]
        %v298 = vld [vmem:[%s221] sm:$0xf]
        %v300 = vlaneseq
        %v301 = vshrl.u32 %v300, 7
        %v302 = vsub.s32 0, %v301
        %v303 = vrot.slane %v298, %v302
        %v304 = vlaneseq
        %v305 = vshrl.u32 %v304, 7
        %v306 = vsub.s32 1, %v305
        %v307 = vrot.slane %v298, %v306
        %v308 = vlaneseq
        %v309 = vshrl.u32 %v308, 7
        %v310 = vsub.s32 2, %v309
        %v311 = vrot.slane %v298, %v310
        %v312 = vlaneseq
        %v313 = vshrl.u32 %v312, 7
        %v314 = vsub.s32 3, %v313
        %v315 = vrot.slane %v298, %v314
        %v322 = vunpack.c.l.b16 %v264
        %v323 = vunpack.c.l.b16 %v265
        %v324 = vpack.c.b16 %v323, %v322
        %v358 = vunpack.c.l.b16 %v266
        %v359 = vunpack.c.h.b16 %v266
        %v360 = vunpack.c.l.b16 %v267
        %v361 = vunpack.c.h.b16 %v267
        %v362 = vunpack.c.l.b16 %v268
        %v363 = vunpack.c.h.b16 %v268
        %v364 = vunpack.c.l.b16 %v269
        %v365 = vunpack.c.h.b16 %v269
        %v366 = vunpack.c.l.b16 %v270
        %v367 = vunpack.c.h.b16 %v270
        %v368 = vunpack.c.l.b16 %v271
        %v369 = vunpack.c.h.b16 %v271
        %v370 = vunpack.c.l.b16 %v272
        %v371 = vunpack.c.h.b16 %v272
        %v372 = vunpack.c.l.b16 %v273
        %v373 = vunpack.c.h.b16 %v273
        %v374 = vunpack.c.l.b16 %v274
        %v375 = vunpack.c.h.b16 %v274
        %v376 = vunpack.c.l.b16 %v275
        %v377 = vunpack.c.h.b16 %v275
        %v378 = vunpack.c.l.b16 %v276
        %v379 = vunpack.c.h.b16 %v276
        %v380 = vunpack.c.l.b16 %v277
        %v381 = vunpack.c.h.b16 %v277
        %v382 = vunpack.c.l.b16 %v278
        %v383 = vunpack.c.h.b16 %v278
        %v384 = vunpack.c.l.b16 %v279
        %v385 = vunpack.c.h.b16 %v279
        %v386 = vunpack.c.l.b16 %v280
        %v387 = vunpack.c.h.b16 %v280
        %v388 = vunpack.c.l.b16 %v281
        %v389 = vunpack.c.h.b16 %v281
        %v390 = vunpack.c.l.b16 %v282
        %v391 = vunpack.c.h.b16 %v282
        %v392 = vunpack.c.l.b16 %v283
        %v393 = vunpack.c.h.b16 %v283
        %v394 = vunpack.c.l.b16 %v284
        %v395 = vunpack.c.h.b16 %v284
        %v396 = vunpack.c.l.b16 %v285
        %v397 = vunpack.c.h.b16 %v285
        %v398 = vunpack.c.l.b16 %v286
        %v399 = vunpack.c.h.b16 %v286
        %v400 = vunpack.c.l.b16 %v287
        %v401 = vunpack.c.h.b16 %v287
        %v402 = vunpack.c.l.b16 %v288
        %v403 = vunpack.c.h.b16 %v288
        %v404 = vunpack.c.l.b16 %v289
        %v405 = vunpack.c.h.b16 %v289
        %v406 = vunpack.c.l.b16 %v290
        %v407 = vunpack.c.h.b16 %v290
        %v408 = vunpack.c.l.b16 %v291
        %v409 = vunpack.c.h.b16 %v291
        %v410 = vunpack.c.l.b16 %v292
        %v411 = vunpack.c.h.b16 %v292
        %v412 = vunpack.c.l.b16 %v293
        %v413 = vunpack.c.h.b16 %v293
        %v414 = vunpack.c.l.b16 %v294
        %v415 = vunpack.c.h.b16 %v294
        %v416 = vunpack.c.l.b16 %v295
        %v417 = vunpack.c.h.b16 %v295
        %v418 = vunpack.c.l.b16 %v296
        %v419 = vunpack.c.h.b16 %v296
        %v420 = vunpack.c.l.b16 %v297
        %v421 = vunpack.c.h.b16 %v297
        %v422 = vpack.c.b16 %v362, %v358
        %v423 = vpack.c.b16 %v363, %v359
        %v424 = vpack.c.b16 %v364, %v360
        %v425 = vpack.c.b16 %v365, %v361
        %v426 = vpack.c.b16 %v370, %v366
        %v427 = vpack.c.b16 %v371, %v367
        %v428 = vpack.c.b16 %v372, %v368
        %v429 = vpack.c.b16 %v373, %v369
        %v430 = vpack.c.b16 %v378, %v374
        %v431 = vpack.c.b16 %v379, %v375
        %v432 = vpack.c.b16 %v380, %v376
        %v433 = vpack.c.b16 %v381, %v377
        %v434 = vpack.c.b16 %v386, %v382
        %v435 = vpack.c.b16 %v387, %v383
        %v436 = vpack.c.b16 %v388, %v384
        %v437 = vpack.c.b16 %v389, %v385
        %v438 = vpack.c.b16 %v394, %v390
        %v439 = vpack.c.b16 %v395, %v391
        %v440 = vpack.c.b16 %v396, %v392
        %v441 = vpack.c.b16 %v397, %v393
        %v442 = vpack.c.b16 %v402, %v398
        %v443 = vpack.c.b16 %v403, %v399
        %v444 = vpack.c.b16 %v404, %v400
        %v445 = vpack.c.b16 %v405, %v401
        %v446 = vpack.c.b16 %v410, %v406
        %v447 = vpack.c.b16 %v411, %v407
        %v448 = vpack.c.b16 %v412, %v408
        %v449 = vpack.c.b16 %v413, %v409
        %v450 = vpack.c.b16 %v418, %v414
        %v451 = vpack.c.b16 %v419, %v415
        %v452 = vpack.c.b16 %v420, %v416
        %v453 = vpack.c.b16 %v421, %v417
        %486 = vmatprep.subr.bf16.mxu0 %v451
        %487 = vmatpush1.bf16.msra.mxu0 %v450
        %488 = vmatprep.subr.bf16.mxu0 %v447
        %489 = vmatpush1.bf16.msra.mxu0 %v446
        %490 = vmatprep.subr.bf16.mxu0 %v443
        %491 = vmatpush1.bf16.msra.mxu0 %v442
        %492 = vmatprep.subr.bf16.mxu0 %v439
        %493 = vmatpush1.bf16.msra.mxu0 %v438
        %494 = vmatprep.subr.bf16.mxu0 %v435
        %495 = vmatpush1.bf16.msra.mxu0 %v434
        %496 = vmatprep.subr.bf16.mxu0 %v431
        %497 = vmatpush1.bf16.msra.mxu0 %v430
        %498 = vmatprep.subr.bf16.mxu0 %v427
        %499 = vmatpush1.bf16.msra.mxu0 %v426
        %500 = vmatprep.subr.bf16.mxu0 %v423
        %501 = vmatpush1.bf16.msra.mxu0 %v422
        %502 = vmatprep.subr.bf16.mxu0 0
        %503 = vmatpush2.bf16.msra.mxu0 0
        %504 = vmatprep.subr.bf16.mxu0 0
        %505 = vmatpush2.bf16.msra.mxu0 0
        %506 = vmatprep.subr.bf16.mxu0 0
        %507 = vmatpush2.bf16.msra.mxu0 0
        %508 = vmatprep.subr.bf16.mxu0 0
        %509 = vmatpush2.bf16.msra.mxu0 0
        %510 = vmatprep.subr.bf16.mxu0 0
        %511 = vmatpush2.bf16.msra.mxu0 0
        %512 = vmatprep.subr.bf16.mxu0 0
        %513 = vmatpush2.bf16.msra.mxu0 0
        %514 = vmatprep.subr.bf16.mxu0 0
        %515 = vmatpush2.bf16.msra.mxu0 0
        %516 = vmatprep.subr.bf16.mxu0 0
        %517 = vmatpush2.bf16.msra.mxu0 0
        %518 = vmatprep.mubr.bf16.mxu0 0
        %519 = vmatmul.mubr.bf16.gmra.mxu0 %v324
        %v520 = vpop.f32.mrf.mxu0
        %v521 = vadd.f32 %v303, %v520
        %v522 = vpop.f32.mrf.mxu0
        %v523 = vadd.f32 %v307, %v522
        %v524 = vpop.f32.mrf.mxu0
        %v525 = vadd.f32 %v303, %v524
        %v526 = vpop.f32.mrf.mxu0
        %v527 = vadd.f32 %v307, %v526
        %528 = vdwg.mxu0
        %529 = vmatprep.subr.bf16.mxu0 %v453
        %530 = vmatpush1.bf16.msra.mxu0 %v452
        %531 = vmatprep.subr.bf16.mxu0 %v449
        %532 = vmatpush1.bf16.msra.mxu0 %v448
        %533 = vmatprep.subr.bf16.mxu0 %v445
        %534 = vmatpush1.bf16.msra.mxu0 %v444
        %535 = vmatprep.subr.bf16.mxu0 %v441
        %536 = vmatpush1.bf16.msra.mxu0 %v440
        %537 = vmatprep.subr.bf16.mxu0 %v437
        %538 = vmatpush1.bf16.msra.mxu0 %v436
        %539 = vmatprep.subr.bf16.mxu0 %v433
        %540 = vmatpush1.bf16.msra.mxu0 %v432
        %541 = vmatprep.subr.bf16.mxu0 %v429
        %542 = vmatpush1.bf16.msra.mxu0 %v428
        %543 = vmatprep.subr.bf16.mxu0 %v425
        %544 = vmatpush1.bf16.msra.mxu0 %v424
        %545 = vmatprep.subr.bf16.mxu0 0
        %546 = vmatpush2.bf16.msra.mxu0 0
        %547 = vmatprep.subr.bf16.mxu0 0
        %548 = vmatpush2.bf16.msra.mxu0 0
        %549 = vmatprep.subr.bf16.mxu0 0
        %550 = vmatpush2.bf16.msra.mxu0 0
        %551 = vmatprep.subr.bf16.mxu0 0
        %552 = vmatpush2.bf16.msra.mxu0 0
        %553 = vmatprep.subr.bf16.mxu0 0
        %554 = vmatpush2.bf16.msra.mxu0 0
        %555 = vmatprep.subr.bf16.mxu0 0
        %556 = vmatpush2.bf16.msra.mxu0 0
        %557 = vmatprep.subr.bf16.mxu0 0
        %558 = vmatpush2.bf16.msra.mxu0 0
        %559 = vmatprep.subr.bf16.mxu0 0
        %560 = vmatpush2.bf16.msra.mxu0 0
        %561 = vmatprep.mubr.bf16.mxu0 0
        %562 = vmatmul.mubr.bf16.gmra.mxu0 %v324
        %v563 = vpop.f32.mrf.mxu0
        %v564 = vadd.f32 %v311, %v563
        %v565 = vpop.f32.mrf.mxu0
        %v566 = vadd.f32 %v315, %v565
        %v567 = vpop.f32.mrf.mxu0
        %v568 = vadd.f32 %v311, %v567
        %v569 = vpop.f32.mrf.mxu0
        %v570 = vadd.f32 %v315, %v569
        %571 = vdwg.mxu0
        %v572 = vmax.f32 %v521, 0.0
        %v573 = vmax.f32 %v523, 0.0
        %v574 = vmax.f32 %v564, 0.0
        %v575 = vmax.f32 %v566, 0.0
        %v576 = vmax.f32 %v525, 0.0
        %v577 = vmax.f32 %v527, 0.0
        %v578 = vmax.f32 %v568, 0.0
        %v579 = vmax.f32 %v570, 0.0
        %v580 = vpack.c.bf16 %v576, %v572
        %v581 = vpack.c.bf16 %v577, %v573
        %v582 = vpack.c.bf16 %v578, %v574
        %v583 = vpack.c.bf16 %v579, %v575
        %v588 = vunpack.c.l.b16 %v580
        %v589 = vunpack.c.l.b16 %v581
        %v590 = vunpack.c.l.b16 %v582
        %v591 = vunpack.c.l.b16 %v583
        %v592 = vunpack.c.h.b16 %v580
        %v593 = vunpack.c.h.b16 %v581
        %v594 = vunpack.c.h.b16 %v582
        %v595 = vunpack.c.h.b16 %v583
        %v596 = vpack.c.b16 %v589, %v588
        %v597 = vpack.c.b16 %v591, %v590
        %v598 = vpack.c.b16 %v593, %v592
        %v599 = vpack.c.b16 %v595, %v594
        %604 = vst [vmem:[%s252] sm:$0xff] %v596
        %605 = vst [vmem:[%s252 + $0x8] sm:$0xff] %v597
        %606 = vst [vmem:[%s252 + $0x10] sm:$0xff] %v598
        %607 = vst [vmem:[%s252 + $0x18] sm:$0xff] %v599
        %s608 = sand.u32 %s120, 1
        %s609 = sand.u32 %s120, 1
        %s610 = smul.addr %s609, 32
        %s611 = scalar_lea.vmem [#allocation6], %s610
        // Predicated region
        $region41: #{decoder_forward.5} parent=31 // pred_check
          %p612 = pneg %p130
        $region42: #{decoder_forward.5} parent=31 // pred_check_branch
          %614 = sbr.rel (%p612) target = $region44
        $region43: #{decoder_forward.5} parent=31 // pred_region
          %s615 = smul.u32 2, %s24
          %s616 = smul.u32 4, %s25
          %s617 = smul.addr %s615, 8
          %s618 = sadd.s32 %s616, %s617
          %s619 = smul.addr %s618, 4
          %s620 = scalar_lea.vmem %s3, %s619
          // Predicated region
          $region45: #{decoder_forward.5} parent=43 // pred_check
            _
          $region46: #{decoder_forward.5} parent=43 // pred_check_branch
            %622 = sbr.rel (0) target = $region48
          $region47: #{decoder_forward.5} parent=43 // pred_region
            // Predicated region
            $region49: #{decoder_forward.5} parent=47 // pred_check
              _
            $region50: #{decoder_forward.5} parent=47 // pred_check_branch
              %624 = sbr.rel (0) target = $region52
            $region51: #{decoder_forward.5} parent=47 // pred_region
              loop: start=0, step=1, limit=1
              $region53: #{decoder_forward.5} parent=51 // loop_pre_header
                _
              $region54: #{decoder_forward.5} parent=51 // loop_header
                %s626 = sphi 0, %s630
                %p627 = scmp.ge.s32.totalorder %s626, 1
                %s631 = sphi %s611, %s611
                %s632 = sphi %s620, %s620
              $region55: #{decoder_forward.5} parent=51 // loop_header_branch
                %629 = sbr.rel (%p627) target = $region59
              $region56: #{decoder_forward.5} parent=51 // loop_body
                %v633 = vld [vmem:[%s631] sm:$0xff]
                %634 = vst [vmem:[%s632] sm:$0xff] %v633
                %v635 = vld [vmem:[%s631 + $0x8] sm:$0xff]
                %636 = vst [vmem:[%s632 + $0x8] sm:$0xff] %v635
                %v637 = vld [vmem:[%s631 + $0x10] sm:$0xff]
                %638 = vst [vmem:[%s632 + $0x20] sm:$0xff] %v637
                %v639 = vld [vmem:[%s631 + $0x18] sm:$0xff]
                %640 = vst [vmem:[%s632 + $0x28] sm:$0xff] %v639
              $region57: #{decoder_forward.5} parent=51 // loop_footer
                %s630 = sadd.s32 1, %s626
              $region58: #{decoder_forward.5} parent=51 // loop_footer_branch
                %625 = sbr.rel target = $region54
              $region59: #{decoder_forward.5} parent=51 // loop_exit
                _
            $region52: #{decoder_forward.5} parent=47 // pred_fallthru
              _
            // Predicated region
            $region60: #{decoder_forward.5} parent=47 // pred_check
              _
            $region61: #{decoder_forward.5} parent=47 // pred_check_branch
              %642 = sbr.rel target = $region63
            $region62: #{decoder_forward.5} parent=47 // pred_region
              _
            $region63: #{decoder_forward.5} parent=47 // pred_fallthru
              _
          $region48: #{decoder_forward.5} parent=43 // pred_fallthru
            _
          %643 = vnop
        $region44: #{decoder_forward.5} parent=31 // pred_fallthru
          _
      $region32: #{decoder_forward.5} parent=5 // pred_fallthru
        _
      %p644 = scmp.le.s32.totalorder 2, %s15
      // Predicated region
      $region64: #{decoder_forward.5} parent=5 // pred_check
        %p645 = pneg %p644
      $region65: #{decoder_forward.5} parent=5 // pred_check_branch
        %647 = sbr.rel (%p645) target = $region67
      $region66: #{decoder_forward.5} parent=5 // pred_region
        %s648 = ssub.s32 %s15, 2
        // Predicated region
        $region68: #{decoder_forward.5} parent=66 // pred_check
          %p649 = pneg %p136
        $region69: #{decoder_forward.5} parent=66 // pred_check_branch
          %651 = sbr.rel (%p649) target = $region71
        $region70: #{decoder_forward.5} parent=66 // pred_region
          %s652 = sand.u32 %s121, 1
          %s653 = sand.u32 %s121, 1
          %s654 = smul.addr %s653, 32
          %s655 = scalar_lea.vmem [#allocation6], %s654
        $region71: #{decoder_forward.5} parent=66 // pred_fallthru
          _
      $region67: #{decoder_forward.5} parent=5 // pred_fallthru
        _
    $region6: #{decoder_forward.5} parent=1 // loop_footer
      %s19 = sadd.s32 1, %s15
    $region7: #{decoder_forward.5} parent=1 // loop_footer_branch
      %14 = sbr.rel target = $region3
    $region8: #{decoder_forward.5} parent=1 // loop_exit
      _
    %656 = vsyncpa [#allocation3], 1
    %s657 = scalar_lea.sflag [#allocation3], 1
    %658 = vsyncpa %s657, 1
    %659 = vsyncpa [#allocation5], 1
    %s660 = scalar_lea.sflag [#allocation5], 1
    %661 = vsyncpa %s660, 1

// kernel: decoder_forward.7
$region0: #{decoder_forward.7}
  #allocation0 [shape = 'u32[]', space=smem, size = 0x4, offset = 0x4, fixed_abs, tag = 'smem constant byte address 0x4 - core index']
  #allocation1 [shape = 'u32[144,128]{1,0:T(1,128)}', space=vmem, size = 0x12000, scoped, tag = 'internal scratch']
  %s0 = inlined_call_operand.vmem [shape: bf16[32,1152], index: 0, kind: input, shape index: {}]
  %s1 = inlined_call_operand.vmem [shape: bf16[1152,256], index: 1, kind: input, shape index: {}]
  %s2 = inlined_call_operand.vmem [shape: f32[1,256], index: 2, kind: input, shape index: {}]
  %s3 = inlined_call_operand.vmem [shape: bf16[32,256], index: 3, kind: output, shape index: {}]
  %s4 = sld [smem:[#allocation0]]
  $region22: #{decoder_forward.7} parent=0
    _
  %s6 = ssub.s32 1, %s4
  %s7 = scalar_select 0, %s6, %s4
  // Predicated region
  $region2: #{decoder_forward.7} parent=0 // pred_check
    _
  $region3: #{decoder_forward.7} parent=0 // pred_check_branch
    %9 = sbr.rel (0) target = $region5
  $region4: #{decoder_forward.7} parent=0 // pred_region
    _
  $region5: #{decoder_forward.7} parent=0 // pred_fallthru
    _
  // Predicated region
  $region6: #{decoder_forward.7} parent=0 // pred_check
    _
  $region7: #{decoder_forward.7} parent=0 // pred_check_branch
    %11 = sbr.rel (0) target = $region9
  $region8: #{decoder_forward.7} parent=0 // pred_region
    _
  $region9: #{decoder_forward.7} parent=0 // pred_fallthru
    _
  // Predicated region
  $region10: #{decoder_forward.7} parent=0 // pred_check
    _
  $region11: #{decoder_forward.7} parent=0 // pred_check_branch
    %13 = sbr.rel (0) target = $region13
  $region12: #{decoder_forward.7} parent=0 // pred_region
    _
  $region13: #{decoder_forward.7} parent=0 // pred_fallthru
    _
  %v15 = vld [vmem:[%s0] sm:$0xff]
  %v16 = vld [vmem:[%s0 + $0x8] sm:$0xff]
  %v17 = vld [vmem:[%s0 + $0x10] sm:$0xff]
  %v18 = vld [vmem:[%s0 + $0x18] sm:$0xff]
  %v19 = vld [vmem:[%s0 + $0x20] sm:$0xf]
  %v20 = vld [vmem:[%s0 + $0x24] sm:$0xff]
  %v21 = vld [vmem:[%s0 + $0x2c] sm:$0xff]
  %v22 = vld [vmem:[%s0 + $0x34] sm:$0xff]
  %v23 = vld [vmem:[%s0 + $0x3c] sm:$0xff]
  %v24 = vld [vmem:[%s0 + $0x44] sm:$0xf]
  %v25 = vld [vmem:[%s0 + $0x48] sm:$0xff]
  %v26 = vld [vmem:[%s0 + $0x50] sm:$0xff]
  %v27 = vld [vmem:[%s0 + $0x58] sm:$0xff]
  %v28 = vld [vmem:[%s0 + $0x60] sm:$0xff]
  %v29 = vld [vmem:[%s0 + $0x68] sm:$0xf]
  %v30 = vld [vmem:[%s0 + $0x6c] sm:$0xff]
  %v31 = vld [vmem:[%s0 + $0x74] sm:$0xff]
  %v32 = vld [vmem:[%s0 + $0x7c] sm:$0xff]
  %v33 = vld [vmem:[%s0 + $0x84] sm:$0xff]
  %v34 = vld [vmem:[%s0 + $0x8c] sm:$0xf]
  %v35 = vld [vmem:[%s1] sm:$0xff]
  %v36 = vld [vmem:[%s1 + $0x8] sm:$0xff]
  %v37 = vld [vmem:[%s1 + $0x10] sm:$0xff]
  %v38 = vld [vmem:[%s1 + $0x18] sm:$0xff]
  %v39 = vld [vmem:[%s1 + $0x20] sm:$0xff]
  %v40 = vld [vmem:[%s1 + $0x28] sm:$0xff]
  %v41 = vld [vmem:[%s1 + $0x30] sm:$0xff]
  %v42 = vld [vmem:[%s1 + $0x38] sm:$0xff]
  %v43 = vld [vmem:[%s1 + $0x40] sm:$0xff]
  %v44 = vld [vmem:[%s1 + $0x48] sm:$0xff]
  %v45 = vld [vmem:[%s1 + $0x50] sm:$0xff]
  %v46 = vld [vmem:[%s1 + $0x58] sm:$0xff]
  %v47 = vld [vmem:[%s1 + $0x60] sm:$0xff]
  %v48 = vld [vmem:[%s1 + $0x68] sm:$0xff]
  %v49 = vld [vmem:[%s1 + $0x70] sm:$0xff]
  %v50 = vld [vmem:[%s1 + $0x78] sm:$0xff]
  %v51 = vld [vmem:[%s1 + $0x80] sm:$0xff]
  %v52 = vld [vmem:[%s1 + $0x88] sm:$0xff]
  %v53 = vld [vmem:[%s1 + $0x90] sm:$0xff]
  %v54 = vld [vmem:[%s1 + $0x98] sm:$0xff]
  %v55 = vld [vmem:[%s1 + $0xa0] sm:$0xff]
  %v56 = vld [vmem:[%s1 + $0xa8] sm:$0xff]
  %v57 = vld [vmem:[%s1 + $0xb0] sm:$0xff]
  %v58 = vld [vmem:[%s1 + $0xb8] sm:$0xff]
  %v59 = vld [vmem:[%s1 + $0xc0] sm:$0xff]
  %v60 = vld [vmem:[%s1 + $0xc8] sm:$0xff]
  %v61 = vld [vmem:[%s1 + $0xd0] sm:$0xff]
  %v62 = vld [vmem:[%s1 + $0xd8] sm:$0xff]
  %v63 = vld [vmem:[%s1 + $0xe0] sm:$0xff]
  %v64 = vld [vmem:[%s1 + $0xe8] sm:$0xff]
  %v65 = vld [vmem:[%s1 + $0xf0] sm:$0xff]
  %v66 = vld [vmem:[%s1 + $0xf8] sm:$0xff]
  %v67 = vld [vmem:[%s1 + $0x100] sm:$0xff]
  %v68 = vld [vmem:[%s1 + $0x108] sm:$0xff]
  %v69 = vld [vmem:[%s1 + $0x110] sm:$0xff]
  %v70 = vld [vmem:[%s1 + $0x118] sm:$0xff]
  %v71 = vld [vmem:[%s1 + $0x120] sm:$0xff]
  %v72 = vld [vmem:[%s1 + $0x128] sm:$0xff]
  %v73 = vld [vmem:[%s1 + $0x130] sm:$0xff]
  %v74 = vld [vmem:[%s1 + $0x138] sm:$0xff]
  %v75 = vld [vmem:[%s1 + $0x140] sm:$0xff]
  %v76 = vld [vmem:[%s1 + $0x148] sm:$0xff]
  %v77 = vld [vmem:[%s1 + $0x150] sm:$0xff]
  %v78 = vld [vmem:[%s1 + $0x158] sm:$0xff]
  %v79 = vld [vmem:[%s1 + $0x160] sm:$0xff]
  %v80 = vld [vmem:[%s1 + $0x168] sm:$0xff]
  %v81 = vld [vmem:[%s1 + $0x170] sm:$0xff]
  %v82 = vld [vmem:[%s1 + $0x178] sm:$0xff]
  %v83 = vld [vmem:[%s1 + $0x180] sm:$0xff]
  %v84 = vld [vmem:[%s1 + $0x188] sm:$0xff]
  %v85 = vld [vmem:[%s1 + $0x190] sm:$0xff]
  %v86 = vld [vmem:[%s1 + $0x198] sm:$0xff]
  %v87 = vld [vmem:[%s1 + $0x1a0] sm:$0xff]
  %v88 = vld [vmem:[%s1 + $0x1a8] sm:$0xff]
  %v89 = vld [vmem:[%s1 + $0x1b0] sm:$0xff]
  %v90 = vld [vmem:[%s1 + $0x1b8] sm:$0xff]
  %v91 = vld [vmem:[%s1 + $0x1c0] sm:$0xff]
  %v92 = vld [vmem:[%s1 + $0x1c8] sm:$0xff]
  %v93 = vld [vmem:[%s1 + $0x1d0] sm:$0xff]
  %v94 = vld [vmem:[%s1 + $0x1d8] sm:$0xff]
  %v95 = vld [vmem:[%s1 + $0x1e0] sm:$0xff]
  %v96 = vld [vmem:[%s1 + $0x1e8] sm:$0xff]
  %v97 = vld [vmem:[%s1 + $0x1f0] sm:$0xff]
  %v98 = vld [vmem:[%s1 + $0x1f8] sm:$0xff]
  %v99 = vld [vmem:[%s1 + $0x200] sm:$0xff]
  %v100 = vld [vmem:[%s1 + $0x208] sm:$0xff]
  %v101 = vld [vmem:[%s1 + $0x210] sm:$0xff]
  %v102 = vld [vmem:[%s1 + $0x218] sm:$0xff]
  %v103 = vld [vmem:[%s1 + $0x220] sm:$0xff]
  %v104 = vld [vmem:[%s1 + $0x228] sm:$0xff]
  %v105 = vld [vmem:[%s1 + $0x230] sm:$0xff]
  %v106 = vld [vmem:[%s1 + $0x238] sm:$0xff]
  %v107 = vld [vmem:[%s1 + $0x240] sm:$0xff]
  %v108 = vld [vmem:[%s1 + $0x248] sm:$0xff]
  %v109 = vld [vmem:[%s1 + $0x250] sm:$0xff]
  %v110 = vld [vmem:[%s1 + $0x258] sm:$0xff]
  %v111 = vld [vmem:[%s1 + $0x260] sm:$0xff]
  %v112 = vld [vmem:[%s1 + $0x268] sm:$0xff]
  %v113 = vld [vmem:[%s1 + $0x270] sm:$0xff]
  %v114 = vld [vmem:[%s1 + $0x278] sm:$0xff]
  %v115 = vld [vmem:[%s1 + $0x280] sm:$0xff]
  %v116 = vld [vmem:[%s1 + $0x288] sm:$0xff]
  %v117 = vld [vmem:[%s1 + $0x290] sm:$0xff]
  %v118 = vld [vmem:[%s1 + $0x298] sm:$0xff]
  %v119 = vld [vmem:[%s1 + $0x2a0] sm:$0xff]
  %v120 = vld [vmem:[%s1 + $0x2a8] sm:$0xff]
  %v121 = vld [vmem:[%s1 + $0x2b0] sm:$0xff]
  %v122 = vld [vmem:[%s1 + $0x2b8] sm:$0xff]
  %v123 = vld [vmem:[%s1 + $0x2c0] sm:$0xff]
  %v124 = vld [vmem:[%s1 + $0x2c8] sm:$0xff]
  %v125 = vld [vmem:[%s1 + $0x2d0] sm:$0xff]
  %v126 = vld [vmem:[%s1 + $0x2d8] sm:$0xff]
  %v127 = vld [vmem:[%s1 + $0x2e0] sm:$0xff]
  %v128 = vld [vmem:[%s1 + $0x2e8] sm:$0xff]
  %v129 = vld [vmem:[%s1 + $0x2f0] sm:$0xff]
  %v130 = vld [vmem:[%s1 + $0x2f8] sm:$0xff]
  %v131 = vld [vmem:[%s1 + $0x300] sm:$0xff]
  %v132 = vld [vmem:[%s1 + $0x308] sm:$0xff]
  %v133 = vld [vmem:[%s1 + $0x310] sm:$0xff]
  %v134 = vld [vmem:[%s1 + $0x318] sm:$0xff]
  %v135 = vld [vmem:[%s1 + $0x320] sm:$0xff]
  %v136 = vld [vmem:[%s1 + $0x328] sm:$0xff]
  %v137 = vld [vmem:[%s1 + $0x330] sm:$0xff]
  %v138 = vld [vmem:[%s1 + $0x338] sm:$0xff]
  %v139 = vld [vmem:[%s1 + $0x340] sm:$0xff]
  %v140 = vld [vmem:[%s1 + $0x348] sm:$0xff]
  %v141 = vld [vmem:[%s1 + $0x350] sm:$0xff]
  %v142 = vld [vmem:[%s1 + $0x358] sm:$0xff]
  %v143 = vld [vmem:[%s1 + $0x360] sm:$0xff]
  %v144 = vld [vmem:[%s1 + $0x368] sm:$0xff]
  %v145 = vld [vmem:[%s1 + $0x370] sm:$0xff]
  %v146 = vld [vmem:[%s1 + $0x378] sm:$0xff]
  %v147 = vld [vmem:[%s1 + $0x380] sm:$0xff]
  %v148 = vld [vmem:[%s1 + $0x388] sm:$0xff]
  %v149 = vld [vmem:[%s1 + $0x390] sm:$0xff]
  %v150 = vld [vmem:[%s1 + $0x398] sm:$0xff]
  %v151 = vld [vmem:[%s1 + $0x3a0] sm:$0xff]
  %v152 = vld [vmem:[%s1 + $0x3a8] sm:$0xff]
  %v153 = vld [vmem:[%s1 + $0x3b0] sm:$0xff]
  %v154 = vld [vmem:[%s1 + $0x3b8] sm:$0xff]
  %v155 = vld [vmem:[%s1 + $0x3c0] sm:$0xff]
  %v156 = vld [vmem:[%s1 + $0x3c8] sm:$0xff]
  %v157 = vld [vmem:[%s1 + $0x3d0] sm:$0xff]
  %v158 = vld [vmem:[%s1 + $0x3d8] sm:$0xff]
  %v159 = vld [vmem:[%s1 + $0x3e0] sm:$0xff]
  %v160 = vld [vmem:[%s1 + $0x3e8] sm:$0xff]
  %v161 = vld [vmem:[%s1 + $0x3f0] sm:$0xff]
  %v162 = vld [vmem:[%s1 + $0x3f8] sm:$0xff]
  %v163 = vld [vmem:[%s1 + $0x400] sm:$0xff]
  %v164 = vld [vmem:[%s1 + $0x408] sm:$0xff]
  %v165 = vld [vmem:[%s1 + $0x410] sm:$0xff]
  %v166 = vld [vmem:[%s1 + $0x418] sm:$0xff]
  %v167 = vld [vmem:[%s1 + $0x420] sm:$0xff]
  %v168 = vld [vmem:[%s1 + $0x428] sm:$0xff]
  %v169 = vld [vmem:[%s1 + $0x430] sm:$0xff]
  %v170 = vld [vmem:[%s1 + $0x438] sm:$0xff]
  %v171 = vld [vmem:[%s1 + $0x440] sm:$0xff]
  %v172 = vld [vmem:[%s1 + $0x448] sm:$0xff]
  %v173 = vld [vmem:[%s1 + $0x450] sm:$0xff]
  %v174 = vld [vmem:[%s1 + $0x458] sm:$0xff]
  %v175 = vld [vmem:[%s1 + $0x460] sm:$0xff]
  %v176 = vld [vmem:[%s1 + $0x468] sm:$0xff]
  %v177 = vld [vmem:[%s1 + $0x470] sm:$0xff]
  %v178 = vld [vmem:[%s1 + $0x478] sm:$0xff]
  %v179 = vld [vmem:[%s2] sm:$0x3]
  %v181 = vlaneseq
  %v182 = vshrl.u32 %v181, 7
  %v183 = vsub.s32 0, %v182
  %v184 = vrot.slane %v179, %v183
  %v185 = vlaneseq
  %v186 = vshrl.u32 %v185, 7
  %v187 = vsub.s32 1, %v186
  %v188 = vrot.slane %v179, %v187
  %v211 = vunpack.c.l.b16 %v15
  %v212 = vunpack.c.h.b16 %v15
  %v213 = vunpack.c.l.b16 %v16
  %v214 = vunpack.c.h.b16 %v16
  %v215 = vunpack.c.l.b16 %v17
  %v216 = vunpack.c.h.b16 %v17
  %v217 = vunpack.c.l.b16 %v18
  %v218 = vunpack.c.h.b16 %v18
  %v219 = vunpack.c.l.b16 %v19
  %v220 = vunpack.c.l.b16 %v20
  %v221 = vunpack.c.h.b16 %v20
  %v222 = vunpack.c.l.b16 %v21
  %v223 = vunpack.c.h.b16 %v21
  %v224 = vunpack.c.l.b16 %v22
  %v225 = vunpack.c.h.b16 %v22
  %v226 = vunpack.c.l.b16 %v23
  %v227 = vunpack.c.h.b16 %v23
  %v228 = vunpack.c.l.b16 %v24
  %v229 = vunpack.c.l.b16 %v25
  %v230 = vunpack.c.h.b16 %v25
  %v231 = vunpack.c.l.b16 %v26
  %v232 = vunpack.c.h.b16 %v26
  %v233 = vunpack.c.l.b16 %v27
  %v234 = vunpack.c.h.b16 %v27
  %v235 = vunpack.c.l.b16 %v28
  %v236 = vunpack.c.h.b16 %v28
  %v237 = vunpack.c.l.b16 %v29
  %v238 = vunpack.c.l.b16 %v30
  %v239 = vunpack.c.h.b16 %v30
  %v240 = vunpack.c.l.b16 %v31
  %v241 = vunpack.c.h.b16 %v31
  %v242 = vunpack.c.l.b16 %v32
  %v243 = vunpack.c.h.b16 %v32
  %v244 = vunpack.c.l.b16 %v33
  %v245 = vunpack.c.h.b16 %v33
  %v246 = vunpack.c.l.b16 %v34
  %v247 = vpack.c.b16 %v220, %v211
  %v248 = vpack.c.b16 %v221, %v212
  %v249 = vpack.c.b16 %v222, %v213
  %v250 = vpack.c.b16 %v223, %v214
  %v251 = vpack.c.b16 %v224, %v215
  %v252 = vpack.c.b16 %v225, %v216
  %v253 = vpack.c.b16 %v226, %v217
  %v254 = vpack.c.b16 %v227, %v218
  %v255 = vpack.c.b16 %v228, %v219
  %v256 = vpack.c.b16 %v238, %v229
  %v257 = vpack.c.b16 %v239, %v230
  %v258 = vpack.c.b16 %v240, %v231
  %v259 = vpack.c.b16 %v241, %v232
  %v260 = vpack.c.b16 %v242, %v233
  %v261 = vpack.c.b16 %v243, %v234
  %v262 = vpack.c.b16 %v244, %v235
  %v263 = vpack.c.b16 %v245, %v236
  %v264 = vpack.c.b16 %v246, %v237
  %v427 = vunpack.c.l.b16 %v35
  %v428 = vunpack.c.h.b16 %v35
  %v429 = vunpack.c.l.b16 %v36
  %v430 = vunpack.c.h.b16 %v36
  %v431 = vunpack.c.l.b16 %v37
  %v432 = vunpack.c.h.b16 %v37
  %v433 = vunpack.c.l.b16 %v38
  %v434 = vunpack.c.h.b16 %v38
  %v435 = vunpack.c.l.b16 %v39
  %v436 = vunpack.c.h.b16 %v39
  %v437 = vunpack.c.l.b16 %v40
  %v438 = vunpack.c.h.b16 %v40
  %v439 = vunpack.c.l.b16 %v41
  %v440 = vunpack.c.h.b16 %v41
  %v441 = vunpack.c.l.b16 %v42
  %v442 = vunpack.c.h.b16 %v42
  %v443 = vunpack.c.l.b16 %v43
  %v444 = vunpack.c.h.b16 %v43
  %v445 = vunpack.c.l.b16 %v44
  %v446 = vunpack.c.h.b16 %v44
  %v447 = vunpack.c.l.b16 %v45
  %v448 = vunpack.c.h.b16 %v45
  %v449 = vunpack.c.l.b16 %v46
  %v450 = vunpack.c.h.b16 %v46
  %v451 = vunpack.c.l.b16 %v47
  %v452 = vunpack.c.h.b16 %v47
  %v453 = vunpack.c.l.b16 %v48
  %v454 = vunpack.c.h.b16 %v48
  %v455 = vunpack.c.l.b16 %v49
  %v456 = vunpack.c.h.b16 %v49
  %v457 = vunpack.c.l.b16 %v50
  %v458 = vunpack.c.h.b16 %v50
  %v459 = vunpack.c.l.b16 %v51
  %v460 = vunpack.c.h.b16 %v51
  %v461 = vunpack.c.l.b16 %v52
  %v462 = vunpack.c.h.b16 %v52
  %v463 = vunpack.c.l.b16 %v53
  %v464 = vunpack.c.h.b16 %v53
  %v465 = vunpack.c.l.b16 %v54
  %v466 = vunpack.c.h.b16 %v54
  %v467 = vunpack.c.l.b16 %v55
  %v468 = vunpack.c.h.b16 %v55
  %v469 = vunpack.c.l.b16 %v56
  %v470 = vunpack.c.h.b16 %v56
  %v471 = vunpack.c.l.b16 %v57
  %v472 = vunpack.c.h.b16 %v57
  %v473 = vunpack.c.l.b16 %v58
  %v474 = vunpack.c.h.b16 %v58
  %v475 = vunpack.c.l.b16 %v59
  %v476 = vunpack.c.h.b16 %v59
  %v477 = vunpack.c.l.b16 %v60
  %v478 = vunpack.c.h.b16 %v60
  %v479 = vunpack.c.l.b16 %v61
  %v480 = vunpack.c.h.b16 %v61
  %v481 = vunpack.c.l.b16 %v62
  %v482 = vunpack.c.h.b16 %v62
  %v483 = vunpack.c.l.b16 %v63
  %v484 = vunpack.c.h.b16 %v63
  %v485 = vunpack.c.l.b16 %v64
  %v486 = vunpack.c.h.b16 %v64
  %v487 = vunpack.c.l.b16 %v65
  %v488 = vunpack.c.h.b16 %v65
  %v489 = vunpack.c.l.b16 %v66
  %v490 = vunpack.c.h.b16 %v66
  %v491 = vunpack.c.l.b16 %v67
  %v492 = vunpack.c.h.b16 %v67
  %v493 = vunpack.c.l.b16 %v68
  %v494 = vunpack.c.h.b16 %v68
  %v495 = vunpack.c.l.b16 %v69
  %v496 = vunpack.c.h.b16 %v69
  %v497 = vunpack.c.l.b16 %v70
  %v498 = vunpack.c.h.b16 %v70
  %v499 = vunpack.c.l.b16 %v71
  %v500 = vunpack.c.h.b16 %v71
  %v501 = vunpack.c.l.b16 %v72
  %v502 = vunpack.c.h.b16 %v72
  %v503 = vunpack.c.l.b16 %v73
  %v504 = vunpack.c.h.b16 %v73
  %v505 = vunpack.c.l.b16 %v74
  %v506 = vunpack.c.h.b16 %v74
  %v507 = vunpack.c.l.b16 %v75
  %v508 = vunpack.c.h.b16 %v75
  %v509 = vunpack.c.l.b16 %v76
  %v510 = vunpack.c.h.b16 %v76
  %v511 = vunpack.c.l.b16 %v77
  %v512 = vunpack.c.h.b16 %v77
  %v513 = vunpack.c.l.b16 %v78
  %v514 = vunpack.c.h.b16 %v78
  %v515 = vunpack.c.l.b16 %v79
  %v516 = vunpack.c.h.b16 %v79
  %v517 = vunpack.c.l.b16 %v80
  %v518 = vunpack.c.h.b16 %v80
  %v519 = vunpack.c.l.b16 %v81
  %v520 = vunpack.c.h.b16 %v81
  %v521 = vunpack.c.l.b16 %v82
  %v522 = vunpack.c.h.b16 %v82
  %v523 = vunpack.c.l.b16 %v83
  %v524 = vunpack.c.h.b16 %v83
  %v525 = vunpack.c.l.b16 %v84
  %v526 = vunpack.c.h.b16 %v84
  %v527 = vunpack.c.l.b16 %v85
  %v528 = vunpack.c.h.b16 %v85
  %v529 = vunpack.c.l.b16 %v86
  %v530 = vunpack.c.h.b16 %v86
  %v531 = vunpack.c.l.b16 %v87
  %v532 = vunpack.c.h.b16 %v87
  %v533 = vunpack.c.l.b16 %v88
  %v534 = vunpack.c.h.b16 %v88
  %v535 = vunpack.c.l.b16 %v89
  %v536 = vunpack.c.h.b16 %v89
  %v537 = vunpack.c.l.b16 %v90
  %v538 = vunpack.c.h.b16 %v90
  %v539 = vunpack.c.l.b16 %v91
  %v540 = vunpack.c.h.b16 %v91
  %v541 = vunpack.c.l.b16 %v92
  %v542 = vunpack.c.h.b16 %v92
  %v543 = vunpack.c.l.b16 %v93
  %v544 = vunpack.c.h.b16 %v93
  %v545 = vunpack.c.l.b16 %v94
  %v546 = vunpack.c.h.b16 %v94
  %v547 = vunpack.c.l.b16 %v95
  %v548 = vunpack.c.h.b16 %v95
  %v549 = vunpack.c.l.b16 %v96
  %v550 = vunpack.c.h.b16 %v96
  %v551 = vunpack.c.l.b16 %v97
  %v552 = vunpack.c.h.b16 %v97
  %v553 = vunpack.c.l.b16 %v98
  %v554 = vunpack.c.h.b16 %v98
  %v555 = vunpack.c.l.b16 %v99
  %v556 = vunpack.c.h.b16 %v99
  %v557 = vunpack.c.l.b16 %v100
  %v558 = vunpack.c.h.b16 %v100
  %v559 = vunpack.c.l.b16 %v101
  %v560 = vunpack.c.h.b16 %v101
  %v561 = vunpack.c.l.b16 %v102
  %v562 = vunpack.c.h.b16 %v102
  %v563 = vunpack.c.l.b16 %v103
  %v564 = vunpack.c.h.b16 %v103
  %v565 = vunpack.c.l.b16 %v104
  %v566 = vunpack.c.h.b16 %v104
  %v567 = vunpack.c.l.b16 %v105
  %v568 = vunpack.c.h.b16 %v105
  %v569 = vunpack.c.l.b16 %v106
  %v570 = vunpack.c.h.b16 %v106
  %v571 = vunpack.c.l.b16 %v107
  %v572 = vunpack.c.h.b16 %v107
  %v573 = vunpack.c.l.b16 %v108
  %v574 = vunpack.c.h.b16 %v108
  %v575 = vunpack.c.l.b16 %v109
  %v576 = vunpack.c.h.b16 %v109
  %v577 = vunpack.c.l.b16 %v110
  %v578 = vunpack.c.h.b16 %v110
  %v579 = vunpack.c.l.b16 %v111
  %v580 = vunpack.c.h.b16 %v111
  %v581 = vunpack.c.l.b16 %v112
  %v582 = vunpack.c.h.b16 %v112
  %v583 = vunpack.c.l.b16 %v113
  %v584 = vunpack.c.h.b16 %v113
  %v585 = vunpack.c.l.b16 %v114
  %v586 = vunpack.c.h.b16 %v114
  %v587 = vunpack.c.l.b16 %v115
  %v588 = vunpack.c.h.b16 %v115
  %v589 = vunpack.c.l.b16 %v116
  %v590 = vunpack.c.h.b16 %v116
  %v591 = vunpack.c.l.b16 %v117
  %v592 = vunpack.c.h.b16 %v117
  %v593 = vunpack.c.l.b16 %v118
  %v594 = vunpack.c.h.b16 %v118
  %v595 = vunpack.c.l.b16 %v119
  %v596 = vunpack.c.h.b16 %v119
  %v597 = vunpack.c.l.b16 %v120
  %v598 = vunpack.c.h.b16 %v120
  %v599 = vunpack.c.l.b16 %v121
  %v600 = vunpack.c.h.b16 %v121
  %v601 = vunpack.c.l.b16 %v122
  %v602 = vunpack.c.h.b16 %v122
  %v603 = vunpack.c.l.b16 %v123
  %v604 = vunpack.c.h.b16 %v123
  %v605 = vunpack.c.l.b16 %v124
  %v606 = vunpack.c.h.b16 %v124
  %v607 = vunpack.c.l.b16 %v125
  %v608 = vunpack.c.h.b16 %v125
  %v609 = vunpack.c.l.b16 %v126
  %v610 = vunpack.c.h.b16 %v126
  %v611 = vunpack.c.l.b16 %v127
  %v612 = vunpack.c.h.b16 %v127
  %v613 = vunpack.c.l.b16 %v128
  %v614 = vunpack.c.h.b16 %v128
  %v615 = vunpack.c.l.b16 %v129
  %v616 = vunpack.c.h.b16 %v129
  %v617 = vunpack.c.l.b16 %v130
  %v618 = vunpack.c.h.b16 %v130
  %v619 = vunpack.c.l.b16 %v131
  %v620 = vunpack.c.h.b16 %v131
  %v621 = vunpack.c.l.b16 %v132
  %v622 = vunpack.c.h.b16 %v132
  %v623 = vunpack.c.l.b16 %v133
  %v624 = vunpack.c.h.b16 %v133
  %v625 = vunpack.c.l.b16 %v134
  %v626 = vunpack.c.h.b16 %v134
  %v627 = vunpack.c.l.b16 %v135
  %v628 = vunpack.c.h.b16 %v135
  %v629 = vunpack.c.l.b16 %v136
  %v630 = vunpack.c.h.b16 %v136
  %v631 = vunpack.c.l.b16 %v137
  %v632 = vunpack.c.h.b16 %v137
  %v633 = vunpack.c.l.b16 %v138
  %v634 = vunpack.c.h.b16 %v138
  %v635 = vunpack.c.l.b16 %v139
  %v636 = vunpack.c.h.b16 %v139
  %v637 = vunpack.c.l.b16 %v140
  %v638 = vunpack.c.h.b16 %v140
  %v639 = vunpack.c.l.b16 %v141
  %v640 = vunpack.c.h.b16 %v141
  %v641 = vunpack.c.l.b16 %v142
  %v642 = vunpack.c.h.b16 %v142
  %v643 = vunpack.c.l.b16 %v143
  %v644 = vunpack.c.h.b16 %v143
  %v645 = vunpack.c.l.b16 %v144
  %v646 = vunpack.c.h.b16 %v144
  %v647 = vunpack.c.l.b16 %v145
  %v648 = vunpack.c.h.b16 %v145
  %v649 = vunpack.c.l.b16 %v146
  %v650 = vunpack.c.h.b16 %v146
  %v651 = vunpack.c.l.b16 %v147
  %v652 = vunpack.c.h.b16 %v147
  %v653 = vunpack.c.l.b16 %v148
  %v654 = vunpack.c.h.b16 %v148
  %v655 = vunpack.c.l.b16 %v149
  %v656 = vunpack.c.h.b16 %v149
  %v657 = vunpack.c.l.b16 %v150
  %v658 = vunpack.c.h.b16 %v150
  %v659 = vunpack.c.l.b16 %v151
  %v660 = vunpack.c.h.b16 %v151
  %v661 = vunpack.c.l.b16 %v152
  %v662 = vunpack.c.h.b16 %v152
  %v663 = vunpack.c.l.b16 %v153
  %v664 = vunpack.c.h.b16 %v153
  %v665 = vunpack.c.l.b16 %v154
  %v666 = vunpack.c.h.b16 %v154
  %v667 = vunpack.c.l.b16 %v155
  %v668 = vunpack.c.h.b16 %v155
  %v669 = vunpack.c.l.b16 %v156
  %v670 = vunpack.c.h.b16 %v156
  %v671 = vunpack.c.l.b16 %v157
  %v672 = vunpack.c.h.b16 %v157
  %v673 = vunpack.c.l.b16 %v158
  %v674 = vunpack.c.h.b16 %v158
  %v675 = vunpack.c.l.b16 %v159
  %v676 = vunpack.c.h.b16 %v159
  %v677 = vunpack.c.l.b16 %v160
  %v678 = vunpack.c.h.b16 %v160
  %v679 = vunpack.c.l.b16 %v161
  %v680 = vunpack.c.h.b16 %v161
  %v681 = vunpack.c.l.b16 %v162
  %v682 = vunpack.c.h.b16 %v162
  %v683 = vunpack.c.l.b16 %v163
  %v684 = vunpack.c.h.b16 %v163
  %v685 = vunpack.c.l.b16 %v164
  %v686 = vunpack.c.h.b16 %v164
  %v687 = vunpack.c.l.b16 %v165
  %v688 = vunpack.c.h.b16 %v165
  %v689 = vunpack.c.l.b16 %v166
  %v690 = vunpack.c.h.b16 %v166
  %v691 = vunpack.c.l.b16 %v167
  %v692 = vunpack.c.h.b16 %v167
  %v693 = vunpack.c.l.b16 %v168
  %v694 = vunpack.c.h.b16 %v168
  %v695 = vunpack.c.l.b16 %v169
  %v696 = vunpack.c.h.b16 %v169
  %v697 = vunpack.c.l.b16 %v170
  %v698 = vunpack.c.h.b16 %v170
  %v699 = vunpack.c.l.b16 %v171
  %v700 = vunpack.c.h.b16 %v171
  %v701 = vunpack.c.l.b16 %v172
  %v702 = vunpack.c.h.b16 %v172
  %v703 = vunpack.c.l.b16 %v173
  %v704 = vunpack.c.h.b16 %v173
  %v705 = vunpack.c.l.b16 %v174
  %v706 = vunpack.c.h.b16 %v174
  %v707 = vunpack.c.l.b16 %v175
  %v708 = vunpack.c.h.b16 %v175
  %v709 = vunpack.c.l.b16 %v176
  %v710 = vunpack.c.h.b16 %v176
  %v711 = vunpack.c.l.b16 %v177
  %v712 = vunpack.c.h.b16 %v177
  %v713 = vunpack.c.l.b16 %v178
  %v714 = vunpack.c.h.b16 %v178
  %v715 = vpack.c.b16 %v429, %v427
  %v716 = vpack.c.b16 %v430, %v428
  %v717 = vpack.c.b16 %v433, %v431
  %v718 = vpack.c.b16 %v434, %v432
  %v719 = vpack.c.b16 %v437, %v435
  %v720 = vpack.c.b16 %v438, %v436
  %v721 = vpack.c.b16 %v441, %v439
  %v722 = vpack.c.b16 %v442, %v440
  %v723 = vpack.c.b16 %v445, %v443
  %v724 = vpack.c.b16 %v446, %v444
  %v725 = vpack.c.b16 %v449, %v447
  %v726 = vpack.c.b16 %v450, %v448
  %v727 = vpack.c.b16 %v453, %v451
  %v728 = vpack.c.b16 %v454, %v452
  %v729 = vpack.c.b16 %v457, %v455
  %v730 = vpack.c.b16 %v458, %v456
  %v731 = vpack.c.b16 %v461, %v459
  %v732 = vpack.c.b16 %v462, %v460
  %v733 = vpack.c.b16 %v465, %v463
  %v734 = vpack.c.b16 %v466, %v464
  %v735 = vpack.c.b16 %v469, %v467
  %v736 = vpack.c.b16 %v470, %v468
  %v737 = vpack.c.b16 %v473, %v471
  %v738 = vpack.c.b16 %v474, %v472
  %v739 = vpack.c.b16 %v477, %v475
  %v740 = vpack.c.b16 %v478, %v476
  %v741 = vpack.c.b16 %v481, %v479
  %v742 = vpack.c.b16 %v482, %v480
  %v743 = vpack.c.b16 %v485, %v483
  %v744 = vpack.c.b16 %v486, %v484
  %v745 = vpack.c.b16 %v489, %v487
  %v746 = vpack.c.b16 %v490, %v488
  %v747 = vpack.c.b16 %v493, %v491
  %v748 = vpack.c.b16 %v494, %v492
  %v749 = vpack.c.b16 %v497, %v495
  %v750 = vpack.c.b16 %v498, %v496
  %v751 = vpack.c.b16 %v501, %v499
  %v752 = vpack.c.b16 %v502, %v500
  %v753 = vpack.c.b16 %v505, %v503
  %v754 = vpack.c.b16 %v506, %v504
  %v755 = vpack.c.b16 %v509, %v507
  %v756 = vpack.c.b16 %v510, %v508
  %v757 = vpack.c.b16 %v513, %v511
  %v758 = vpack.c.b16 %v514, %v512
  %v759 = vpack.c.b16 %v517, %v515
  %v760 = vpack.c.b16 %v518, %v516
  %v761 = vpack.c.b16 %v521, %v519
  %v762 = vpack.c.b16 %v522, %v520
  %v763 = vpack.c.b16 %v525, %v523
  %v764 = vpack.c.b16 %v526, %v524
  %v765 = vpack.c.b16 %v529, %v527
  %v766 = vpack.c.b16 %v530, %v528
  %v767 = vpack.c.b16 %v533, %v531
  %v768 = vpack.c.b16 %v534, %v532
  %v769 = vpack.c.b16 %v537, %v535
  %v770 = vpack.c.b16 %v538, %v536
  %v771 = vpack.c.b16 %v541, %v539
  %v772 = vpack.c.b16 %v542, %v540
  %v773 = vpack.c.b16 %v545, %v543
  %v774 = vpack.c.b16 %v546, %v544
  %v775 = vpack.c.b16 %v549, %v547
  %v776 = vpack.c.b16 %v550, %v548
  %v777 = vpack.c.b16 %v553, %v551
  %v778 = vpack.c.b16 %v554, %v552
  %v779 = vpack.c.b16 %v557, %v555
  %v780 = vpack.c.b16 %v558, %v556
  %v781 = vpack.c.b16 %v561, %v559
  %v782 = vpack.c.b16 %v562, %v560
  %v783 = vpack.c.b16 %v565, %v563
  %v784 = vpack.c.b16 %v566, %v564
  %v785 = vpack.c.b16 %v569, %v567
  %v786 = vpack.c.b16 %v570, %v568
  %v787 = vpack.c.b16 %v573, %v571
  %v788 = vpack.c.b16 %v574, %v572
  %v789 = vpack.c.b16 %v577, %v575
  %v790 = vpack.c.b16 %v578, %v576
  %v791 = vpack.c.b16 %v581, %v579
  %v792 = vpack.c.b16 %v582, %v580
  %v793 = vpack.c.b16 %v585, %v583
  %v794 = vpack.c.b16 %v586, %v584
  %v795 = vpack.c.b16 %v589, %v587
  %v796 = vpack.c.b16 %v590, %v588
  %v797 = vpack.c.b16 %v593, %v591
  %v798 = vpack.c.b16 %v594, %v592
  %v799 = vpack.c.b16 %v597, %v595
  %v800 = vpack.c.b16 %v598, %v596
  %v801 = vpack.c.b16 %v601, %v599
  %v802 = vpack.c.b16 %v602, %v600
  %v803 = vpack.c.b16 %v605, %v603
  %v804 = vpack.c.b16 %v606, %v604
  %v805 = vpack.c.b16 %v609, %v607
  %v806 = vpack.c.b16 %v610, %v608
  %v807 = vpack.c.b16 %v613, %v611
  %v808 = vpack.c.b16 %v614, %v612
  %v809 = vpack.c.b16 %v617, %v615
  %v810 = vpack.c.b16 %v618, %v616
  %v811 = vpack.c.b16 %v621, %v619
  %v812 = vpack.c.b16 %v622, %v620
  %v813 = vpack.c.b16 %v625, %v623
  %v814 = vpack.c.b16 %v626, %v624
  %v815 = vpack.c.b16 %v629, %v627
  %v816 = vpack.c.b16 %v630, %v628
  %v817 = vpack.c.b16 %v633, %v631
  %v818 = vpack.c.b16 %v634, %v632
  %v819 = vpack.c.b16 %v637, %v635
  %v820 = vpack.c.b16 %v638, %v636
  %v821 = vpack.c.b16 %v641, %v639
  %v822 = vpack.c.b16 %v642, %v640
  %v823 = vpack.c.b16 %v645, %v643
  %v824 = vpack.c.b16 %v646, %v644
  %v825 = vpack.c.b16 %v649, %v647
  %v826 = vpack.c.b16 %v650, %v648
  %v827 = vpack.c.b16 %v653, %v651
  %v828 = vpack.c.b16 %v654, %v652
  %v829 = vpack.c.b16 %v657, %v655
  %v830 = vpack.c.b16 %v658, %v656
  %v831 = vpack.c.b16 %v661, %v659
  %v832 = vpack.c.b16 %v662, %v660
  %v833 = vpack.c.b16 %v665, %v663
  %v834 = vpack.c.b16 %v666, %v664
  %v835 = vpack.c.b16 %v669, %v667
  %v836 = vpack.c.b16 %v670, %v668
  %v837 = vpack.c.b16 %v673, %v671
  %v838 = vpack.c.b16 %v674, %v672
  %v839 = vpack.c.b16 %v677, %v675
  %v840 = vpack.c.b16 %v678, %v676
  %v841 = vpack.c.b16 %v681, %v679
  %v842 = vpack.c.b16 %v682, %v680
  %v843 = vpack.c.b16 %v685, %v683
  %v844 = vpack.c.b16 %v686, %v684
  %v845 = vpack.c.b16 %v689, %v687
  %v846 = vpack.c.b16 %v690, %v688
  %v847 = vpack.c.b16 %v693, %v691
  %v848 = vpack.c.b16 %v694, %v692
  %v849 = vpack.c.b16 %v697, %v695
  %v850 = vpack.c.b16 %v698, %v696
  %v851 = vpack.c.b16 %v701, %v699
  %v852 = vpack.c.b16 %v702, %v700
  %v853 = vpack.c.b16 %v705, %v703
  %v854 = vpack.c.b16 %v706, %v704
  %v855 = vpack.c.b16 %v709, %v707
  %v856 = vpack.c.b16 %v710, %v708
  %v857 = vpack.c.b16 %v713, %v711
  %v858 = vpack.c.b16 %v714, %v712
  %1003 = vmatprep.subr.bf16.mxu0 %v730
  %1004 = vmatpush1.bf16.msra.mxu0 %v729
  %1005 = vmatprep.subr.bf16.mxu0 %v728
  %1006 = vmatpush1.bf16.msra.mxu0 %v727
  %1007 = vmatprep.subr.bf16.mxu0 %v726
  %1008 = vmatpush1.bf16.msra.mxu0 %v725
  %1009 = vmatprep.subr.bf16.mxu0 %v724
  %1010 = vmatpush1.bf16.msra.mxu0 %v723
  %1011 = vmatprep.subr.bf16.mxu0 %v722
  %1012 = vmatpush1.bf16.msra.mxu0 %v721
  %1013 = vmatprep.subr.bf16.mxu0 %v720
  %1014 = vmatpush1.bf16.msra.mxu0 %v719
  %1015 = vmatprep.subr.bf16.mxu0 %v718
  %1016 = vmatpush1.bf16.msra.mxu0 %v717
  %1017 = vmatprep.subr.bf16.mxu0 %v716
  %1018 = vmatpush1.bf16.msra.mxu0 %v715
  %1019 = vmatprep.subr.bf16.mxu0 %v746
  %1020 = vmatpush2.bf16.msra.mxu0 %v745
  %1021 = vmatprep.subr.bf16.mxu0 %v744
  %1022 = vmatpush2.bf16.msra.mxu0 %v743
  %1023 = vmatprep.subr.bf16.mxu0 %v742
  %1024 = vmatpush2.bf16.msra.mxu0 %v741
  %1025 = vmatprep.subr.bf16.mxu0 %v740
  %1026 = vmatpush2.bf16.msra.mxu0 %v739
  %1027 = vmatprep.subr.bf16.mxu0 %v738
  %1028 = vmatpush2.bf16.msra.mxu0 %v737
  %1029 = vmatprep.subr.bf16.mxu0 %v736
  %1030 = vmatpush2.bf16.msra.mxu0 %v735
  %1031 = vmatprep.subr.bf16.mxu0 %v734
  %1032 = vmatpush2.bf16.msra.mxu0 %v733
  %1033 = vmatprep.subr.bf16.mxu0 %v732
  %1034 = vmatpush2.bf16.msra.mxu0 %v731
  %1035 = vmatprep.mubr.bf16.mxu0 %v248
  %1036 = vmatmul.mubr.bf16.gmra.mxu0 %v247
  %v1037 = vpop.f32.mrf.mxu0
  %v1038 = vadd.f32 %v184, %v1037
  %v1039 = vpop.f32.mrf.mxu0
  %v1040 = vadd.f32 %v188, %v1039
  %v1041 = vpop.f32.mrf.mxu0
  %v1042 = vadd.f32 %v184, %v1041
  %v1043 = vpop.f32.mrf.mxu0
  %v1044 = vadd.f32 %v188, %v1043
  %1045 = vmatprep.mubr.bf16.mxu0 %v257
  %1046 = vmatmul.mubr.bf16.gmra.mxu0 %v256
  %v1047 = vpop.f32.mrf.mxu0
  %v1048 = vadd.f32 %v184, %v1047
  %v1049 = vpop.f32.mrf.mxu0
  %v1050 = vadd.f32 %v188, %v1049
  %v1051 = vpop.f32.mrf.mxu0
  %v1052 = vadd.f32 %v184, %v1051
  %v1053 = vpop.f32.mrf.mxu0
  %v1054 = vadd.f32 %v188, %v1053
  %1055 = vdwg.mxu0
  %1056 = vmatprep.subr.bf16.mxu0 %v762
  %1057 = vmatpush1.bf16.msra.mxu0 %v761
  %1058 = vmatprep.subr.bf16.mxu0 %v760
  %1059 = vmatpush1.bf16.msra.mxu0 %v759
  %1060 = vmatprep.subr.bf16.mxu0 %v758
  %1061 = vmatpush1.bf16.msra.mxu0 %v757
  %1062 = vmatprep.subr.bf16.mxu0 %v756
  %1063 = vmatpush1.bf16.msra.mxu0 %v755
  %1064 = vmatprep.subr.bf16.mxu0 %v754
  %1065 = vmatpush1.bf16.msra.mxu0 %v753
  %1066 = vmatprep.subr.bf16.mxu0 %v752
  %1067 = vmatpush1.bf16.msra.mxu0 %v751
  %1068 = vmatprep.subr.bf16.mxu0 %v750
  %1069 = vmatpush1.bf16.msra.mxu0 %v749
  %1070 = vmatprep.subr.bf16.mxu0 %v748
  %1071 = vmatpush1.bf16.msra.mxu0 %v747
  %1072 = vmatprep.subr.bf16.mxu0 %v778
  %1073 = vmatpush2.bf16.msra.mxu0 %v777
  %1074 = vmatprep.subr.bf16.mxu0 %v776
  %1075 = vmatpush2.bf16.msra.mxu0 %v775
  %1076 = vmatprep.subr.bf16.mxu0 %v774
  %1077 = vmatpush2.bf16.msra.mxu0 %v773
  %1078 = vmatprep.subr.bf16.mxu0 %v772
  %1079 = vmatpush2.bf16.msra.mxu0 %v771
  %1080 = vmatprep.subr.bf16.mxu0 %v770
  %1081 = vmatpush2.bf16.msra.mxu0 %v769
  %1082 = vmatprep.subr.bf16.mxu0 %v768
  %1083 = vmatpush2.bf16.msra.mxu0 %v767
  %1084 = vmatprep.subr.bf16.mxu0 %v766
  %1085 = vmatpush2.bf16.msra.mxu0 %v765
  %1086 = vmatprep.subr.bf16.mxu0 %v764
  %1087 = vmatpush2.bf16.msra.mxu0 %v763
  %1088 = vmatprep.mubr.bf16.mxu0 %v250
  %1089 = vmatmul.mubr.bf16.gmra.mxu0 %v249
  %v1090 = vpop.f32.mrf.mxu0
  %v1091 = vadd.f32 %v1038, %v1090
  %v1092 = vpop.f32.mrf.mxu0
  %v1093 = vadd.f32 %v1040, %v1092
  %v1094 = vpop.f32.mrf.mxu0
  %v1095 = vadd.f32 %v1042, %v1094
  %v1096 = vpop.f32.mrf.mxu0
  %v1097 = vadd.f32 %v1044, %v1096
  %1098 = vmatprep.mubr.bf16.mxu0 %v259
  %1099 = vmatmul.mubr.bf16.gmra.mxu0 %v258
  %v1100 = vpop.f32.mrf.mxu0
  %v1101 = vadd.f32 %v1048, %v1100
  %v1102 = vpop.f32.mrf.mxu0
  %v1103 = vadd.f32 %v1050, %v1102
  %v1104 = vpop.f32.mrf.mxu0
  %v1105 = vadd.f32 %v1052, %v1104
  %v1106 = vpop.f32.mrf.mxu0
  %v1107 = vadd.f32 %v1054, %v1106
  %1108 = vdwg.mxu0
  %1109 = vmatprep.subr.bf16.mxu0 %v794
  %1110 = vmatpush1.bf16.msra.mxu0 %v793
  %1111 = vmatprep.subr.bf16.mxu0 %v792
  %1112 = vmatpush1.bf16.msra.mxu0 %v791
  %1113 = vmatprep.subr.bf16.mxu0 %v790
  %1114 = vmatpush1.bf16.msra.mxu0 %v789
  %1115 = vmatprep.subr.bf16.mxu0 %v788
  %1116 = vmatpush1.bf16.msra.mxu0 %v787
  %1117 = vmatprep.subr.bf16.mxu0 %v786
  %1118 = vmatpush1.bf16.msra.mxu0 %v785
  %1119 = vmatprep.subr.bf16.mxu0 %v784
  %1120 = vmatpush1.bf16.msra.mxu0 %v783
  %1121 = vmatprep.subr.bf16.mxu0 %v782
  %1122 = vmatpush1.bf16.msra.mxu0 %v781
  %1123 = vmatprep.subr.bf16.mxu0 %v780
  %1124 = vmatpush1.bf16.msra.mxu0 %v779
  %1125 = vmatprep.subr.bf16.mxu0 %v810
  %1126 = vmatpush2.bf16.msra.mxu0 %v809
  %1127 = vmatprep.subr.bf16.mxu0 %v808
  %1128 = vmatpush2.bf16.msra.mxu0 %v807
  %1129 = vmatprep.subr.bf16.mxu0 %v806
  %1130 = vmatpush2.bf16.msra.mxu0 %v805
  %1131 = vmatprep.subr.bf16.mxu0 %v804
  %1132 = vmatpush2.bf16.msra.mxu0 %v803
  %1133 = vmatprep.subr.bf16.mxu0 %v802
  %1134 = vmatpush2.bf16.msra.mxu0 %v801
  %1135 = vmatprep.subr.bf16.mxu0 %v800
  %1136 = vmatpush2.bf16.msra.mxu0 %v799
  %1137 = vmatprep.subr.bf16.mxu0 %v798
  %1138 = vmatpush2.bf16.msra.mxu0 %v797
  %1139 = vmatprep.subr.bf16.mxu0 %v796
  %1140 = vmatpush2.bf16.msra.mxu0 %v795
  %1141 = vmatprep.mubr.bf16.mxu0 %v252
  %1142 = vmatmul.mubr.bf16.gmra.mxu0 %v251
  %v1143 = vpop.f32.mrf.mxu0
  %v1144 = vadd.f32 %v1091, %v1143
  %v1145 = vpop.f32.mrf.mxu0
  %v1146 = vadd.f32 %v1093, %v1145
  %v1147 = vpop.f32.mrf.mxu0
  %v1148 = vadd.f32 %v1095, %v1147
  %v1149 = vpop.f32.mrf.mxu0
  %v1150 = vadd.f32 %v1097, %v1149
  %1151 = vmatprep.mubr.bf16.mxu0 %v261
  %1152 = vmatmul.mubr.bf16.gmra.mxu0 %v260
  %v1153 = vpop.f32.mrf.mxu0
  %v1154 = vadd.f32 %v1101, %v1153
  %v1155 = vpop.f32.mrf.mxu0
  %v1156 = vadd.f32 %v1103, %v1155
  %v1157 = vpop.f32.mrf.mxu0
  %v1158 = vadd.f32 %v1105, %v1157
  %v1159 = vpop.f32.mrf.mxu0
  %v1160 = vadd.f32 %v1107, %v1159
  %1161 = vdwg.mxu0
  %1162 = vmatprep.subr.bf16.mxu0 %v826
  %1163 = vmatpush1.bf16.msra.mxu0 %v825
  %1164 = vmatprep.subr.bf16.mxu0 %v824
  %1165 = vmatpush1.bf16.msra.mxu0 %v823
  %1166 = vmatprep.subr.bf16.mxu0 %v822
  %1167 = vmatpush1.bf16.msra.mxu0 %v821
  %1168 = vmatprep.subr.bf16.mxu0 %v820
  %1169 = vmatpush1.bf16.msra.mxu0 %v819
  %1170 = vmatprep.subr.bf16.mxu0 %v818
  %1171 = vmatpush1.bf16.msra.mxu0 %v817
  %1172 = vmatprep.subr.bf16.mxu0 %v816
  %1173 = vmatpush1.bf16.msra.mxu0 %v815
  %1174 = vmatprep.subr.bf16.mxu0 %v814
  %1175 = vmatpush1.bf16.msra.mxu0 %v813
  %1176 = vmatprep.subr.bf16.mxu0 %v812
  %1177 = vmatpush1.bf16.msra.mxu0 %v811
  %1178 = vmatprep.subr.bf16.mxu0 %v842
  %1179 = vmatpush2.bf16.msra.mxu0 %v841
  %1180 = vmatprep.subr.bf16.mxu0 %v840
  %1181 = vmatpush2.bf16.msra.mxu0 %v839
  %1182 = vmatprep.subr.bf16.mxu0 %v838
  %1183 = vmatpush2.bf16.msra.mxu0 %v837
  %1184 = vmatprep.subr.bf16.mxu0 %v836
  %1185 = vmatpush2.bf16.msra.mxu0 %v835
  %1186 = vmatprep.subr.bf16.mxu0 %v834
  %1187 = vmatpush2.bf16.msra.mxu0 %v833
  %1188 = vmatprep.subr.bf16.mxu0 %v832
  %1189 = vmatpush2.bf16.msra.mxu0 %v831
  %1190 = vmatprep.subr.bf16.mxu0 %v830
  %1191 = vmatpush2.bf16.msra.mxu0 %v829
  %1192 = vmatprep.subr.bf16.mxu0 %v828
  %1193 = vmatpush2.bf16.msra.mxu0 %v827
  %1194 = vmatprep.mubr.bf16.mxu0 %v254
  %1195 = vmatmul.mubr.bf16.gmra.mxu0 %v253
  %v1196 = vpop.f32.mrf.mxu0
  %v1197 = vadd.f32 %v1144, %v1196
  %v1198 = vpop.f32.mrf.mxu0
  %v1199 = vadd.f32 %v1146, %v1198
  %v1200 = vpop.f32.mrf.mxu0
  %v1201 = vadd.f32 %v1148, %v1200
  %v1202 = vpop.f32.mrf.mxu0
  %v1203 = vadd.f32 %v1150, %v1202
  %1204 = vmatprep.mubr.bf16.mxu0 %v263
  %1205 = vmatmul.mubr.bf16.gmra.mxu0 %v262
  %v1206 = vpop.f32.mrf.mxu0
  %v1207 = vadd.f32 %v1154, %v1206
  %v1208 = vpop.f32.mrf.mxu0
  %v1209 = vadd.f32 %v1156, %v1208
  %v1210 = vpop.f32.mrf.mxu0
  %v1211 = vadd.f32 %v1158, %v1210
  %v1212 = vpop.f32.mrf.mxu0
  %v1213 = vadd.f32 %v1160, %v1212
  %1214 = vdwg.mxu0
  %1215 = vmatprep.subr.bf16.mxu0 %v858
  %1216 = vmatpush1.bf16.msra.mxu0 %v857
  %1217 = vmatprep.subr.bf16.mxu0 %v856
  %1218 = vmatpush1.bf16.msra.mxu0 %v855
  %1219 = vmatprep.subr.bf16.mxu0 %v854
  %1220 = vmatpush1.bf16.msra.mxu0 %v853
  %1221 = vmatprep.subr.bf16.mxu0 %v852
  %1222 = vmatpush1.bf16.msra.mxu0 %v851
  %1223 = vmatprep.subr.bf16.mxu0 %v850
  %1224 = vmatpush1.bf16.msra.mxu0 %v849
  %1225 = vmatprep.subr.bf16.mxu0 %v848
  %1226 = vmatpush1.bf16.msra.mxu0 %v847
  %1227 = vmatprep.subr.bf16.mxu0 %v846
  %1228 = vmatpush1.bf16.msra.mxu0 %v845
  %1229 = vmatprep.subr.bf16.mxu0 %v844
  %1230 = vmatpush1.bf16.msra.mxu0 %v843
  %1231 = vmatprep.subr.bf16.mxu0 0
  %1232 = vmatpush2.bf16.msra.mxu0 0
  %1233 = vmatprep.subr.bf16.mxu0 0
  %1234 = vmatpush2.bf16.msra.mxu0 0
  %1235 = vmatprep.subr.bf16.mxu0 0
  %1236 = vmatpush2.bf16.msra.mxu0 0
  %1237 = vmatprep.subr.bf16.mxu0 0
  %1238 = vmatpush2.bf16.msra.mxu0 0
  %1239 = vmatprep.subr.bf16.mxu0 0
  %1240 = vmatpush2.bf16.msra.mxu0 0
  %1241 = vmatprep.subr.bf16.mxu0 0
  %1242 = vmatpush2.bf16.msra.mxu0 0
  %1243 = vmatprep.subr.bf16.mxu0 0
  %1244 = vmatpush2.bf16.msra.mxu0 0
  %1245 = vmatprep.subr.bf16.mxu0 0
  %1246 = vmatpush2.bf16.msra.mxu0 0
  %1247 = vmatprep.mubr.bf16.mxu0 0
  %1248 = vmatmul.mubr.bf16.gmra.mxu0 %v255
  %v1249 = vpop.f32.mrf.mxu0
  %v1250 = vadd.f32 %v1197, %v1249
  %v1251 = vpop.f32.mrf.mxu0
  %v1252 = vadd.f32 %v1199, %v1251
  %v1253 = vpop.f32.mrf.mxu0
  %v1254 = vadd.f32 %v1201, %v1253
  %v1255 = vpop.f32.mrf.mxu0
  %v1256 = vadd.f32 %v1203, %v1255
  %1257 = vmatprep.mubr.bf16.mxu0 0
  %1258 = vmatmul.mubr.bf16.gmra.mxu0 %v264
  %v1259 = vpop.f32.mrf.mxu0
  %v1260 = vadd.f32 %v1207, %v1259
  %v1261 = vpop.f32.mrf.mxu0
  %v1262 = vadd.f32 %v1209, %v1261
  %v1263 = vpop.f32.mrf.mxu0
  %v1264 = vadd.f32 %v1211, %v1263
  %v1265 = vpop.f32.mrf.mxu0
  %v1266 = vadd.f32 %v1213, %v1265
  %1267 = vdwg.mxu0
  %v1268 = vmax.f32 %v1250, 0.0
  %v1269 = vmax.f32 %v1252, 0.0
  %v1270 = vmax.f32 %v1254, 0.0
  %v1271 = vmax.f32 %v1256, 0.0
  %v1272 = vmax.f32 %v1260, 0.0
  %v1273 = vmax.f32 %v1262, 0.0
  %v1274 = vmax.f32 %v1264, 0.0
  %v1275 = vmax.f32 %v1266, 0.0
  %v1276 = vpack.c.bf16 %v1270, %v1268
  %v1277 = vpack.c.bf16 %v1271, %v1269
  %v1278 = vpack.c.bf16 %v1274, %v1272
  %v1279 = vpack.c.bf16 %v1275, %v1273
  %v1284 = vunpack.c.l.b16 %v1276
  %v1285 = vunpack.c.l.b16 %v1277
  %v1286 = vunpack.c.h.b16 %v1276
  %v1287 = vunpack.c.h.b16 %v1277
  %v1288 = vunpack.c.l.b16 %v1278
  %v1289 = vunpack.c.l.b16 %v1279
  %v1290 = vunpack.c.h.b16 %v1278
  %v1291 = vunpack.c.h.b16 %v1279
  %v1292 = vpack.c.b16 %v1285, %v1284
  %v1293 = vpack.c.b16 %v1287, %v1286
  %v1294 = vpack.c.b16 %v1289, %v1288
  %v1295 = vpack.c.b16 %v1291, %v1290
  %1300 = vst [vmem:[%s3] sm:$0xff] %v1292
  %1301 = vst [vmem:[%s3 + $0x8] sm:$0xff] %v1293
  %1302 = vst [vmem:[%s3 + $0x10] sm:$0xff] %v1294
  %1303 = vst [vmem:[%s3 + $0x18] sm:$0xff] %v1295
  // Predicated region
  $region14: #{decoder_forward.7} parent=0 // pred_check
    _
  $region15: #{decoder_forward.7} parent=0 // pred_check_branch
    %1305 = sbr.rel (0) target = $region17
  $region16: #{decoder_forward.7} parent=0 // pred_region
    _
  $region17: #{decoder_forward.7} parent=0 // pred_fallthru
    _
  // Predicated region
  $region18: #{decoder_forward.7} parent=0 // pred_check
    _
  $region19: #{decoder_forward.7} parent=0 // pred_check_branch
    %1307 = sbr.rel (0) target = $region21
  $region20: #{decoder_forward.7} parent=0 // pred_region
    _
  $region21: #{decoder_forward.7} parent=0 // pred_fallthru
    _

// kernel: decoder_forward.8
$region0: #{decoder_forward.8}
  #allocation0 [shape = 'u32[]', space=smem, size = 0x4, offset = 0x4, fixed_abs, tag = 'smem constant byte address 0x4 - core index']
  #allocation1 [shape = 'u32[144,128]{1,0:T(1,128)}', space=vmem, size = 0x12000, scoped, tag = 'internal scratch']
  %s0 = inlined_call_operand.vmem [shape: bf16[128,640], index: 0, kind: input, shape index: {}]
  %s1 = inlined_call_operand.vmem [shape: bf16[640,128], index: 1, kind: input, shape index: {}]
  %s2 = inlined_call_operand.vmem [shape: f32[1,128], index: 2, kind: input, shape index: {}]
  %s3 = inlined_call_operand.vmem [shape: bf16[128,128], index: 3, kind: output, shape index: {}]
  %s4 = sld [smem:[#allocation0]]
  $region22: #{decoder_forward.8} parent=0
    _
  %s6 = ssub.s32 1, %s4
  %s7 = scalar_select 0, %s6, %s4
  // Predicated region
  $region2: #{decoder_forward.8} parent=0 // pred_check
    _
  $region3: #{decoder_forward.8} parent=0 // pred_check_branch
    %9 = sbr.rel (0) target = $region5
  $region4: #{decoder_forward.8} parent=0 // pred_region
    _
  $region5: #{decoder_forward.8} parent=0 // pred_fallthru
    _
  // Predicated region
  $region6: #{decoder_forward.8} parent=0 // pred_check
    _
  $region7: #{decoder_forward.8} parent=0 // pred_check_branch
    %11 = sbr.rel (0) target = $region9
  $region8: #{decoder_forward.8} parent=0 // pred_region
    _
  $region9: #{decoder_forward.8} parent=0 // pred_fallthru
    _
  // Predicated region
  $region10: #{decoder_forward.8} parent=0 // pred_check
    _
  $region11: #{decoder_forward.8} parent=0 // pred_check_branch
    %13 = sbr.rel (0) target = $region13
  $region12: #{decoder_forward.8} parent=0 // pred_region
    _
  $region13: #{decoder_forward.8} parent=0 // pred_fallthru
    _
  %v15 = vld [vmem:[%s0] sm:$0xff]
  %v16 = vld [vmem:[%s0 + $0x8] sm:$0xff]
  %v17 = vld [vmem:[%s0 + $0x10] sm:$0xf]
  %v18 = vld [vmem:[%s0 + $0x14] sm:$0xff]
  %v19 = vld [vmem:[%s0 + $0x1c] sm:$0xff]
  %v20 = vld [vmem:[%s0 + $0x24] sm:$0xf]
  %v21 = vld [vmem:[%s0 + $0x28] sm:$0xff]
  %v22 = vld [vmem:[%s0 + $0x30] sm:$0xff]
  %v23 = vld [vmem:[%s0 + $0x38] sm:$0xf]
  %v24 = vld [vmem:[%s0 + $0x3c] sm:$0xff]
  %v25 = vld [vmem:[%s0 + $0x44] sm:$0xff]
  %v26 = vld [vmem:[%s0 + $0x4c] sm:$0xf]
  %v27 = vld [vmem:[%s0 + $0x50] sm:$0xff]
  %v28 = vld [vmem:[%s0 + $0x58] sm:$0xff]
  %v29 = vld [vmem:[%s0 + $0x60] sm:$0xf]
  %v30 = vld [vmem:[%s0 + $0x64] sm:$0xff]
  %v31 = vld [vmem:[%s0 + $0x6c] sm:$0xff]
  %v32 = vld [vmem:[%s0 + $0x74] sm:$0xf]
  %v33 = vld [vmem:[%s0 + $0x78] sm:$0xff]
  %v34 = vld [vmem:[%s0 + $0x80] sm:$0xff]
  %v35 = vld [vmem:[%s0 + $0x88] sm:$0xf]
  %v36 = vld [vmem:[%s0 + $0x8c] sm:$0xff]
  %v37 = vld [vmem:[%s0 + $0x94] sm:$0xff]
  %v38 = vld [vmem:[%s0 + $0x9c] sm:$0xf]
  %v39 = vld [vmem:[%s0 + $0xa0] sm:$0xff]
  %v40 = vld [vmem:[%s0 + $0xa8] sm:$0xff]
  %v41 = vld [vmem:[%s0 + $0xb0] sm:$0xf]
  %v42 = vld [vmem:[%s0 + $0xb4] sm:$0xff]
  %v43 = vld [vmem:[%s0 + $0xbc] sm:$0xff]
  %v44 = vld [vmem:[%s0 + $0xc4] sm:$0xf]
  %v45 = vld [vmem:[%s0 + $0xc8] sm:$0xff]
  %v46 = vld [vmem:[%s0 + $0xd0] sm:$0xff]
  %v47 = vld [vmem:[%s0 + $0xd8] sm:$0xf]
  %v48 = vld [vmem:[%s0 + $0xdc] sm:$0xff]
  %v49 = vld [vmem:[%s0 + $0xe4] sm:$0xff]
  %v50 = vld [vmem:[%s0 + $0xec] sm:$0xf]
  %v51 = vld [vmem:[%s0 + $0xf0] sm:$0xff]
  %v52 = vld [vmem:[%s0 + $0xf8] sm:$0xff]
  %v53 = vld [vmem:[%s0 + $0x100] sm:$0xf]
  %v54 = vld [vmem:[%s0 + $0x104] sm:$0xff]
  %v55 = vld [vmem:[%s0 + $0x10c] sm:$0xff]
  %v56 = vld [vmem:[%s0 + $0x114] sm:$0xf]
  %v57 = vld [vmem:[%s0 + $0x118] sm:$0xff]
  %v58 = vld [vmem:[%s0 + $0x120] sm:$0xff]
  %v59 = vld [vmem:[%s0 + $0x128] sm:$0xf]
  %v60 = vld [vmem:[%s0 + $0x12c] sm:$0xff]
  %v61 = vld [vmem:[%s0 + $0x134] sm:$0xff]
  %v62 = vld [vmem:[%s0 + $0x13c] sm:$0xf]
  %v63 = vld [vmem:[%s1] sm:$0xf]
  %v64 = vld [vmem:[%s1 + $0x4] sm:$0xf]
  %v65 = vld [vmem:[%s1 + $0x8] sm:$0xf]
  %v66 = vld [vmem:[%s1 + $0xc] sm:$0xf]
  %v67 = vld [vmem:[%s1 + $0x10] sm:$0xf]
  %v68 = vld [vmem:[%s1 + $0x14] sm:$0xf]
  %v69 = vld [vmem:[%s1 + $0x18] sm:$0xf]
  %v70 = vld [vmem:[%s1 + $0x1c] sm:$0xf]
  %v71 = vld [vmem:[%s1 + $0x20] sm:$0xf]
  %v72 = vld [vmem:[%s1 + $0x24] sm:$0xf]
  %v73 = vld [vmem:[%s1 + $0x28] sm:$0xf]
  %v74 = vld [vmem:[%s1 + $0x2c] sm:$0xf]
  %v75 = vld [vmem:[%s1 + $0x30] sm:$0xf]
  %v76 = vld [vmem:[%s1 + $0x34] sm:$0xf]
  %v77 = vld [vmem:[%s1 + $0x38] sm:$0xf]
  %v78 = vld [vmem:[%s1 + $0x3c] sm:$0xf]
  %v79 = vld [vmem:[%s1 + $0x40] sm:$0xf]
  %v80 = vld [vmem:[%s1 + $0x44] sm:$0xf]
  %v81 = vld [vmem:[%s1 + $0x48] sm:$0xf]
  %v82 = vld [vmem:[%s1 + $0x4c] sm:$0xf]
  %v83 = vld [vmem:[%s1 + $0x50] sm:$0xf]
  %v84 = vld [vmem:[%s1 + $0x54] sm:$0xf]
  %v85 = vld [vmem:[%s1 + $0x58] sm:$0xf]
  %v86 = vld [vmem:[%s1 + $0x5c] sm:$0xf]
  %v87 = vld [vmem:[%s1 + $0x60] sm:$0xf]
  %v88 = vld [vmem:[%s1 + $0x64] sm:$0xf]
  %v89 = vld [vmem:[%s1 + $0x68] sm:$0xf]
  %v90 = vld [vmem:[%s1 + $0x6c] sm:$0xf]
  %v91 = vld [vmem:[%s1 + $0x70] sm:$0xf]
  %v92 = vld [vmem:[%s1 + $0x74] sm:$0xf]
  %v93 = vld [vmem:[%s1 + $0x78] sm:$0xf]
  %v94 = vld [vmem:[%s1 + $0x7c] sm:$0xf]
  %v95 = vld [vmem:[%s1 + $0x80] sm:$0xf]
  %v96 = vld [vmem:[%s1 + $0x84] sm:$0xf]
  %v97 = vld [vmem:[%s1 + $0x88] sm:$0xf]
  %v98 = vld [vmem:[%s1 + $0x8c] sm:$0xf]
  %v99 = vld [vmem:[%s1 + $0x90] sm:$0xf]
  %v100 = vld [vmem:[%s1 + $0x94] sm:$0xf]
  %v101 = vld [vmem:[%s1 + $0x98] sm:$0xf]
  %v102 = vld [vmem:[%s1 + $0x9c] sm:$0xf]
  %v103 = vld [vmem:[%s1 + $0xa0] sm:$0xf]
  %v104 = vld [vmem:[%s1 + $0xa4] sm:$0xf]
  %v105 = vld [vmem:[%s1 + $0xa8] sm:$0xf]
  %v106 = vld [vmem:[%s1 + $0xac] sm:$0xf]
  %v107 = vld [vmem:[%s1 + $0xb0] sm:$0xf]
  %v108 = vld [vmem:[%s1 + $0xb4] sm:$0xf]
  %v109 = vld [vmem:[%s1 + $0xb8] sm:$0xf]
  %v110 = vld [vmem:[%s1 + $0xbc] sm:$0xf]
  %v111 = vld [vmem:[%s1 + $0xc0] sm:$0xf]
  %v112 = vld [vmem:[%s1 + $0xc4] sm:$0xf]
  %v113 = vld [vmem:[%s1 + $0xc8] sm:$0xf]
  %v114 = vld [vmem:[%s1 + $0xcc] sm:$0xf]
  %v115 = vld [vmem:[%s1 + $0xd0] sm:$0xf]
  %v116 = vld [vmem:[%s1 + $0xd4] sm:$0xf]
  %v117 = vld [vmem:[%s1 + $0xd8] sm:$0xf]
  %v118 = vld [vmem:[%s1 + $0xdc] sm:$0xf]
  %v119 = vld [vmem:[%s1 + $0xe0] sm:$0xf]
  %v120 = vld [vmem:[%s1 + $0xe4] sm:$0xf]
  %v121 = vld [vmem:[%s1 + $0xe8] sm:$0xf]
  %v122 = vld [vmem:[%s1 + $0xec] sm:$0xf]
  %v123 = vld [vmem:[%s1 + $0xf0] sm:$0xf]
  %v124 = vld [vmem:[%s1 + $0xf4] sm:$0xf]
  %v125 = vld [vmem:[%s1 + $0xf8] sm:$0xf]
  %v126 = vld [vmem:[%s1 + $0xfc] sm:$0xf]
  %v127 = vld [vmem:[%s1 + $0x100] sm:$0xf]
  %v128 = vld [vmem:[%s1 + $0x104] sm:$0xf]
  %v129 = vld [vmem:[%s1 + $0x108] sm:$0xf]
  %v130 = vld [vmem:[%s1 + $0x10c] sm:$0xf]
  %v131 = vld [vmem:[%s1 + $0x110] sm:$0xf]
  %v132 = vld [vmem:[%s1 + $0x114] sm:$0xf]
  %v133 = vld [vmem:[%s1 + $0x118] sm:$0xf]
  %v134 = vld [vmem:[%s1 + $0x11c] sm:$0xf]
  %v135 = vld [vmem:[%s1 + $0x120] sm:$0xf]
  %v136 = vld [vmem:[%s1 + $0x124] sm:$0xf]
  %v137 = vld [vmem:[%s1 + $0x128] sm:$0xf]
  %v138 = vld [vmem:[%s1 + $0x12c] sm:$0xf]
  %v139 = vld [vmem:[%s1 + $0x130] sm:$0xf]
  %v140 = vld [vmem:[%s1 + $0x134] sm:$0xf]
  %v141 = vld [vmem:[%s1 + $0x138] sm:$0xf]
  %v142 = vld [vmem:[%s1 + $0x13c] sm:$0xf]
  %v143 = vld [vmem:[%s2] sm:$0x1]
  %v145 = vlaneseq
  %v146 = vshrl.u32 %v145, 7
  %v147 = vsub.s32 0, %v146
  %v148 = vrot.slane %v143, %v147
  %v198 = vunpack.c.l.b16 %v15
  %v199 = vunpack.c.h.b16 %v15
  %v200 = vunpack.c.l.b16 %v16
  %v201 = vunpack.c.h.b16 %v16
  %v202 = vunpack.c.l.b16 %v17
  %v203 = vunpack.c.l.b16 %v18
  %v204 = vunpack.c.h.b16 %v18
  %v205 = vunpack.c.l.b16 %v19
  %v206 = vunpack.c.h.b16 %v19
  %v207 = vunpack.c.l.b16 %v20
  %v208 = vunpack.c.l.b16 %v21
  %v209 = vunpack.c.h.b16 %v21
  %v210 = vunpack.c.l.b16 %v22
  %v211 = vunpack.c.h.b16 %v22
  %v212 = vunpack.c.l.b16 %v23
  %v213 = vunpack.c.l.b16 %v24
  %v214 = vunpack.c.h.b16 %v24
  %v215 = vunpack.c.l.b16 %v25
  %v216 = vunpack.c.h.b16 %v25
  %v217 = vunpack.c.l.b16 %v26
  %v218 = vunpack.c.l.b16 %v27
  %v219 = vunpack.c.h.b16 %v27
  %v220 = vunpack.c.l.b16 %v28
  %v221 = vunpack.c.h.b16 %v28
  %v222 = vunpack.c.l.b16 %v29
  %v223 = vunpack.c.l.b16 %v30
  %v224 = vunpack.c.h.b16 %v30
  %v225 = vunpack.c.l.b16 %v31
  %v226 = vunpack.c.h.b16 %v31
  %v227 = vunpack.c.l.b16 %v32
  %v228 = vunpack.c.l.b16 %v33
  %v229 = vunpack.c.h.b16 %v33
  %v230 = vunpack.c.l.b16 %v34
  %v231 = vunpack.c.h.b16 %v34
  %v232 = vunpack.c.l.b16 %v35
  %v233 = vunpack.c.l.b16 %v36
  %v234 = vunpack.c.h.b16 %v36
  %v235 = vunpack.c.l.b16 %v37
  %v236 = vunpack.c.h.b16 %v37
  %v237 = vunpack.c.l.b16 %v38
  %v238 = vunpack.c.l.b16 %v39
  %v239 = vunpack.c.h.b16 %v39
  %v240 = vunpack.c.l.b16 %v40
  %v241 = vunpack.c.h.b16 %v40
  %v242 = vunpack.c.l.b16 %v41
  %v243 = vunpack.c.l.b16 %v42
  %v244 = vunpack.c.h.b16 %v42
  %v245 = vunpack.c.l.b16 %v43
  %v246 = vunpack.c.h.b16 %v43
  %v247 = vunpack.c.l.b16 %v44
  %v248 = vunpack.c.l.b16 %v45
  %v249 = vunpack.c.h.b16 %v45
  %v250 = vunpack.c.l.b16 %v46
  %v251 = vunpack.c.h.b16 %v46
  %v252 = vunpack.c.l.b16 %v47
  %v253 = vunpack.c.l.b16 %v48
  %v254 = vunpack.c.h.b16 %v48
  %v255 = vunpack.c.l.b16 %v49
  %v256 = vunpack.c.h.b16 %v49
  %v257 = vunpack.c.l.b16 %v50
  %v258 = vunpack.c.l.b16 %v51
  %v259 = vunpack.c.h.b16 %v51
  %v260 = vunpack.c.l.b16 %v52
  %v261 = vunpack.c.h.b16 %v52
  %v262 = vunpack.c.l.b16 %v53
  %v263 = vunpack.c.l.b16 %v54
  %v264 = vunpack.c.h.b16 %v54
  %v265 = vunpack.c.l.b16 %v55
  %v266 = vunpack.c.h.b16 %v55
  %v267 = vunpack.c.l.b16 %v56
  %v268 = vunpack.c.l.b16 %v57
  %v269 = vunpack.c.h.b16 %v57
  %v270 = vunpack.c.l.b16 %v58
  %v271 = vunpack.c.h.b16 %v58
  %v272 = vunpack.c.l.b16 %v59
  %v273 = vunpack.c.l.b16 %v60
  %v274 = vunpack.c.h.b16 %v60
  %v275 = vunpack.c.l.b16 %v61
  %v276 = vunpack.c.h.b16 %v61
  %v277 = vunpack.c.l.b16 %v62
  %v278 = vpack.c.b16 %v203, %v198
  %v279 = vpack.c.b16 %v204, %v199
  %v280 = vpack.c.b16 %v205, %v200
  %v281 = vpack.c.b16 %v206, %v201
  %v282 = vpack.c.b16 %v207, %v202
  %v283 = vpack.c.b16 %v213, %v208
  %v284 = vpack.c.b16 %v214, %v209
  %v285 = vpack.c.b16 %v215, %v210
  %v286 = vpack.c.b16 %v216, %v211
  %v287 = vpack.c.b16 %v217, %v212
  %v288 = vpack.c.b16 %v223, %v218
  %v289 = vpack.c.b16 %v224, %v219
  %v290 = vpack.c.b16 %v225, %v220
  %v291 = vpack.c.b16 %v226, %v221
  %v292 = vpack.c.b16 %v227, %v222
  %v293 = vpack.c.b16 %v233, %v228
  %v294 = vpack.c.b16 %v234, %v229
  %v295 = vpack.c.b16 %v235, %v230
  %v296 = vpack.c.b16 %v236, %v231
  %v297 = vpack.c.b16 %v237, %v232
  %v298 = vpack.c.b16 %v243, %v238
  %v299 = vpack.c.b16 %v244, %v239
  %v300 = vpack.c.b16 %v245, %v240
  %v301 = vpack.c.b16 %v246, %v241
  %v302 = vpack.c.b16 %v247, %v242
  %v303 = vpack.c.b16 %v253, %v248
  %v304 = vpack.c.b16 %v254, %v249
  %v305 = vpack.c.b16 %v255, %v250
  %v306 = vpack.c.b16 %v256, %v251
  %v307 = vpack.c.b16 %v257, %v252
  %v308 = vpack.c.b16 %v263, %v258
  %v309 = vpack.c.b16 %v264, %v259
  %v310 = vpack.c.b16 %v265, %v260
  %v311 = vpack.c.b16 %v266, %v261
  %v312 = vpack.c.b16 %v267, %v262
  %v313 = vpack.c.b16 %v273, %v268
  %v314 = vpack.c.b16 %v274, %v269
  %v315 = vpack.c.b16 %v275, %v270
  %v316 = vpack.c.b16 %v276, %v271
  %v317 = vpack.c.b16 %v277, %v272
  %v438 = vunpack.c.l.b16 %v63
  %v439 = vunpack.c.l.b16 %v64
  %v440 = vunpack.c.l.b16 %v65
  %v441 = vunpack.c.l.b16 %v66
  %v442 = vunpack.c.l.b16 %v67
  %v443 = vunpack.c.l.b16 %v68
  %v444 = vunpack.c.l.b16 %v69
  %v445 = vunpack.c.l.b16 %v70
  %v446 = vunpack.c.l.b16 %v71
  %v447 = vunpack.c.l.b16 %v72
  %v448 = vunpack.c.l.b16 %v73
  %v449 = vunpack.c.l.b16 %v74
  %v450 = vunpack.c.l.b16 %v75
  %v451 = vunpack.c.l.b16 %v76
  %v452 = vunpack.c.l.b16 %v77
  %v453 = vunpack.c.l.b16 %v78
  %v454 = vunpack.c.l.b16 %v79
  %v455 = vunpack.c.l.b16 %v80
  %v456 = vunpack.c.l.b16 %v81
  %v457 = vunpack.c.l.b16 %v82
  %v458 = vunpack.c.l.b16 %v83
  %v459 = vunpack.c.l.b16 %v84
  %v460 = vunpack.c.l.b16 %v85
  %v461 = vunpack.c.l.b16 %v86
  %v462 = vunpack.c.l.b16 %v87
  %v463 = vunpack.c.l.b16 %v88
  %v464 = vunpack.c.l.b16 %v89
  %v465 = vunpack.c.l.b16 %v90
  %v466 = vunpack.c.l.b16 %v91
  %v467 = vunpack.c.l.b16 %v92
  %v468 = vunpack.c.l.b16 %v93
  %v469 = vunpack.c.l.b16 %v94
  %v470 = vunpack.c.l.b16 %v95
  %v471 = vunpack.c.l.b16 %v96
  %v472 = vunpack.c.l.b16 %v97
  %v473 = vunpack.c.l.b16 %v98
  %v474 = vunpack.c.l.b16 %v99
  %v475 = vunpack.c.l.b16 %v100
  %v476 = vunpack.c.l.b16 %v101
  %v477 = vunpack.c.l.b16 %v102
  %v478 = vunpack.c.l.b16 %v103
  %v479 = vunpack.c.l.b16 %v104
  %v480 = vunpack.c.l.b16 %v105
  %v481 = vunpack.c.l.b16 %v106
  %v482 = vunpack.c.l.b16 %v107
  %v483 = vunpack.c.l.b16 %v108
  %v484 = vunpack.c.l.b16 %v109
  %v485 = vunpack.c.l.b16 %v110
  %v486 = vunpack.c.l.b16 %v111
  %v487 = vunpack.c.l.b16 %v112
  %v488 = vunpack.c.l.b16 %v113
  %v489 = vunpack.c.l.b16 %v114
  %v490 = vunpack.c.l.b16 %v115
  %v491 = vunpack.c.l.b16 %v116
  %v492 = vunpack.c.l.b16 %v117
  %v493 = vunpack.c.l.b16 %v118
  %v494 = vunpack.c.l.b16 %v119
  %v495 = vunpack.c.l.b16 %v120
  %v496 = vunpack.c.l.b16 %v121
  %v497 = vunpack.c.l.b16 %v122
  %v498 = vunpack.c.l.b16 %v123
  %v499 = vunpack.c.l.b16 %v124
  %v500 = vunpack.c.l.b16 %v125
  %v501 = vunpack.c.l.b16 %v126
  %v502 = vunpack.c.l.b16 %v127
  %v503 = vunpack.c.l.b16 %v128
  %v504 = vunpack.c.l.b16 %v129
  %v505 = vunpack.c.l.b16 %v130
  %v506 = vunpack.c.l.b16 %v131
  %v507 = vunpack.c.l.b16 %v132
  %v508 = vunpack.c.l.b16 %v133
  %v509 = vunpack.c.l.b16 %v134
  %v510 = vunpack.c.l.b16 %v135
  %v511 = vunpack.c.l.b16 %v136
  %v512 = vunpack.c.l.b16 %v137
  %v513 = vunpack.c.l.b16 %v138
  %v514 = vunpack.c.l.b16 %v139
  %v515 = vunpack.c.l.b16 %v140
  %v516 = vunpack.c.l.b16 %v141
  %v517 = vunpack.c.l.b16 %v142
  %v518 = vpack.c.b16 %v439, %v438
  %v519 = vpack.c.b16 %v441, %v440
  %v520 = vpack.c.b16 %v443, %v442
  %v521 = vpack.c.b16 %v445, %v444
  %v522 = vpack.c.b16 %v447, %v446
  %v523 = vpack.c.b16 %v449, %v448
  %v524 = vpack.c.b16 %v451, %v450
  %v525 = vpack.c.b16 %v453, %v452
  %v526 = vpack.c.b16 %v455, %v454
  %v527 = vpack.c.b16 %v457, %v456
  %v528 = vpack.c.b16 %v459, %v458
  %v529 = vpack.c.b16 %v461, %v460
  %v530 = vpack.c.b16 %v463, %v462
  %v531 = vpack.c.b16 %v465, %v464
  %v532 = vpack.c.b16 %v467, %v466
  %v533 = vpack.c.b16 %v469, %v468
  %v534 = vpack.c.b16 %v471, %v470
  %v535 = vpack.c.b16 %v473, %v472
  %v536 = vpack.c.b16 %v475, %v474
  %v537 = vpack.c.b16 %v477, %v476
  %v538 = vpack.c.b16 %v479, %v478
  %v539 = vpack.c.b16 %v481, %v480
  %v540 = vpack.c.b16 %v483, %v482
  %v541 = vpack.c.b16 %v485, %v484
  %v542 = vpack.c.b16 %v487, %v486
  %v543 = vpack.c.b16 %v489, %v488
  %v544 = vpack.c.b16 %v491, %v490
  %v545 = vpack.c.b16 %v493, %v492
  %v546 = vpack.c.b16 %v495, %v494
  %v547 = vpack.c.b16 %v497, %v496
  %v548 = vpack.c.b16 %v499, %v498
  %v549 = vpack.c.b16 %v501, %v500
  %v550 = vpack.c.b16 %v503, %v502
  %v551 = vpack.c.b16 %v505, %v504
  %v552 = vpack.c.b16 %v507, %v506
  %v553 = vpack.c.b16 %v509, %v508
  %v554 = vpack.c.b16 %v511, %v510
  %v555 = vpack.c.b16 %v513, %v512
  %v556 = vpack.c.b16 %v515, %v514
  %v557 = vpack.c.b16 %v517, %v516
  %598 = vmatprep.subr.bf16.mxu0 0
  %599 = vmatpush1.bf16.msra.mxu0 %v525
  %600 = vmatprep.subr.bf16.mxu0 0
  %601 = vmatpush1.bf16.msra.mxu0 %v524
  %602 = vmatprep.subr.bf16.mxu0 0
  %603 = vmatpush1.bf16.msra.mxu0 %v523
  %604 = vmatprep.subr.bf16.mxu0 0
  %605 = vmatpush1.bf16.msra.mxu0 %v522
  %606 = vmatprep.subr.bf16.mxu0 0
  %607 = vmatpush1.bf16.msra.mxu0 %v521
  %608 = vmatprep.subr.bf16.mxu0 0
  %609 = vmatpush1.bf16.msra.mxu0 %v520
  %610 = vmatprep.subr.bf16.mxu0 0
  %611 = vmatpush1.bf16.msra.mxu0 %v519
  %612 = vmatprep.subr.bf16.mxu0 0
  %613 = vmatpush1.bf16.msra.mxu0 %v518
  %614 = vmatprep.subr.bf16.mxu0 0
  %615 = vmatpush2.bf16.msra.mxu0 %v533
  %616 = vmatprep.subr.bf16.mxu0 0
  %617 = vmatpush2.bf16.msra.mxu0 %v532
  %618 = vmatprep.subr.bf16.mxu0 0
  %619 = vmatpush2.bf16.msra.mxu0 %v531
  %620 = vmatprep.subr.bf16.mxu0 0
  %621 = vmatpush2.bf16.msra.mxu0 %v530
  %622 = vmatprep.subr.bf16.mxu0 0
  %623 = vmatpush2.bf16.msra.mxu0 %v529
  %624 = vmatprep.subr.bf16.mxu0 0
  %625 = vmatpush2.bf16.msra.mxu0 %v528
  %626 = vmatprep.subr.bf16.mxu0 0
  %627 = vmatpush2.bf16.msra.mxu0 %v527
  %628 = vmatprep.subr.bf16.mxu0 0
  %629 = vmatpush2.bf16.msra.mxu0 %v526
  %630 = vmatprep.mubr.bf16.mxu0 %v279
  %631 = vmatmul.mubr.bf16.gmra.mxu0 %v278
  %v632 = vpop.f32.mrf.mxu0
  %v633 = vadd.f32 %v148, %v632
  %v634 = vpop.f32.mrf.mxu0
  %v635 = vpop.f32.mrf.mxu0
  %v636 = vadd.f32 %v148, %v635
  %v637 = vpop.f32.mrf.mxu0
  %638 = vmatprep.mubr.bf16.mxu0 %v284
  %639 = vmatmul.mubr.bf16.gmra.mxu0 %v283
  %v640 = vpop.f32.mrf.mxu0
  %v641 = vadd.f32 %v148, %v640
  %v642 = vpop.f32.mrf.mxu0
  %v643 = vpop.f32.mrf.mxu0
  %v644 = vadd.f32 %v148, %v643
  %v645 = vpop.f32.mrf.mxu0
  %646 = vmatprep.mubr.bf16.mxu0 %v289
  %647 = vmatmul.mubr.bf16.gmra.mxu0 %v288
  %v648 = vpop.f32.mrf.mxu0
  %v649 = vadd.f32 %v148, %v648
  %v650 = vpop.f32.mrf.mxu0
  %v651 = vpop.f32.mrf.mxu0
  %v652 = vadd.f32 %v148, %v651
  %v653 = vpop.f32.mrf.mxu0
  %654 = vmatprep.mubr.bf16.mxu0 %v294
  %655 = vmatmul.mubr.bf16.gmra.mxu0 %v293
  %v656 = vpop.f32.mrf.mxu0
  %v657 = vadd.f32 %v148, %v656
  %v658 = vpop.f32.mrf.mxu0
  %v659 = vpop.f32.mrf.mxu0
  %v660 = vadd.f32 %v148, %v659
  %v661 = vpop.f32.mrf.mxu0
  %662 = vmatprep.mubr.bf16.mxu0 %v299
  %663 = vmatmul.mubr.bf16.gmra.mxu0 %v298
  %v664 = vpop.f32.mrf.mxu0
  %v665 = vadd.f32 %v148, %v664
  %v666 = vpop.f32.mrf.mxu0
  %v667 = vpop.f32.mrf.mxu0
  %v668 = vadd.f32 %v148, %v667
  %v669 = vpop.f32.mrf.mxu0
  %670 = vmatprep.mubr.bf16.mxu0 %v304
  %671 = vmatmul.mubr.bf16.gmra.mxu0 %v303
  %v672 = vpop.f32.mrf.mxu0
  %v673 = vadd.f32 %v148, %v672
  %v674 = vpop.f32.mrf.mxu0
  %v675 = vpop.f32.mrf.mxu0
  %v676 = vadd.f32 %v148, %v675
  %v677 = vpop.f32.mrf.mxu0
  %678 = vmatprep.mubr.bf16.mxu0 %v309
  %679 = vmatmul.mubr.bf16.gmra.mxu0 %v308
  %v680 = vpop.f32.mrf.mxu0
  %v681 = vadd.f32 %v148, %v680
  %v682 = vpop.f32.mrf.mxu0
  %v683 = vpop.f32.mrf.mxu0
  %v684 = vadd.f32 %v148, %v683
  %v685 = vpop.f32.mrf.mxu0
  %686 = vmatprep.mubr.bf16.mxu0 %v314
  %687 = vmatmul.mubr.bf16.gmra.mxu0 %v313
  %v688 = vpop.f32.mrf.mxu0
  %v689 = vadd.f32 %v148, %v688
  %v690 = vpop.f32.mrf.mxu0
  %v691 = vpop.f32.mrf.mxu0
  %v692 = vadd.f32 %v148, %v691
  %v693 = vpop.f32.mrf.mxu0
  %694 = vdwg.mxu0
  %695 = vmatprep.subr.bf16.mxu0 0
  %696 = vmatpush1.bf16.msra.mxu0 %v541
  %697 = vmatprep.subr.bf16.mxu0 0
  %698 = vmatpush1.bf16.msra.mxu0 %v540
  %699 = vmatprep.subr.bf16.mxu0 0
  %700 = vmatpush1.bf16.msra.mxu0 %v539
  %701 = vmatprep.subr.bf16.mxu0 0
  %702 = vmatpush1.bf16.msra.mxu0 %v538
  %703 = vmatprep.subr.bf16.mxu0 0
  %704 = vmatpush1.bf16.msra.mxu0 %v537
  %705 = vmatprep.subr.bf16.mxu0 0
  %706 = vmatpush1.bf16.msra.mxu0 %v536
  %707 = vmatprep.subr.bf16.mxu0 0
  %708 = vmatpush1.bf16.msra.mxu0 %v535
  %709 = vmatprep.subr.bf16.mxu0 0
  %710 = vmatpush1.bf16.msra.mxu0 %v534
  %711 = vmatprep.subr.bf16.mxu0 0
  %712 = vmatpush2.bf16.msra.mxu0 %v549
  %713 = vmatprep.subr.bf16.mxu0 0
  %714 = vmatpush2.bf16.msra.mxu0 %v548
  %715 = vmatprep.subr.bf16.mxu0 0
  %716 = vmatpush2.bf16.msra.mxu0 %v547
  %717 = vmatprep.subr.bf16.mxu0 0
  %718 = vmatpush2.bf16.msra.mxu0 %v546
  %719 = vmatprep.subr.bf16.mxu0 0
  %720 = vmatpush2.bf16.msra.mxu0 %v545
  %721 = vmatprep.subr.bf16.mxu0 0
  %722 = vmatpush2.bf16.msra.mxu0 %v544
  %723 = vmatprep.subr.bf16.mxu0 0
  %724 = vmatpush2.bf16.msra.mxu0 %v543
  %725 = vmatprep.subr.bf16.mxu0 0
  %726 = vmatpush2.bf16.msra.mxu0 %v542
  %727 = vmatprep.mubr.bf16.mxu0 %v281
  %728 = vmatmul.mubr.bf16.gmra.mxu0 %v280
  %v729 = vpop.f32.mrf.mxu0
  %v730 = vadd.f32 %v633, %v729
  %v731 = vpop.f32.mrf.mxu0
  %v732 = vpop.f32.mrf.mxu0
  %v733 = vadd.f32 %v636, %v732
  %v734 = vpop.f32.mrf.mxu0
  %735 = vmatprep.mubr.bf16.mxu0 %v286
  %736 = vmatmul.mubr.bf16.gmra.mxu0 %v285
  %v737 = vpop.f32.mrf.mxu0
  %v738 = vadd.f32 %v641, %v737
  %v739 = vpop.f32.mrf.mxu0
  %v740 = vpop.f32.mrf.mxu0
  %v741 = vadd.f32 %v644, %v740
  %v742 = vpop.f32.mrf.mxu0
  %743 = vmatprep.mubr.bf16.mxu0 %v291
  %744 = vmatmul.mubr.bf16.gmra.mxu0 %v290
  %v745 = vpop.f32.mrf.mxu0
  %v746 = vadd.f32 %v649, %v745
  %v747 = vpop.f32.mrf.mxu0
  %v748 = vpop.f32.mrf.mxu0
  %v749 = vadd.f32 %v652, %v748
  %v750 = vpop.f32.mrf.mxu0
  %751 = vmatprep.mubr.bf16.mxu0 %v296
  %752 = vmatmul.mubr.bf16.gmra.mxu0 %v295
  %v753 = vpop.f32.mrf.mxu0
  %v754 = vadd.f32 %v657, %v753
  %v755 = vpop.f32.mrf.mxu0
  %v756 = vpop.f32.mrf.mxu0
  %v757 = vadd.f32 %v660, %v756
  %v758 = vpop.f32.mrf.mxu0
  %759 = vmatprep.mubr.bf16.mxu0 %v301
  %760 = vmatmul.mubr.bf16.gmra.mxu0 %v300
  %v761 = vpop.f32.mrf.mxu0
  %v762 = vadd.f32 %v665, %v761
  %v763 = vpop.f32.mrf.mxu0
  %v764 = vpop.f32.mrf.mxu0
  %v765 = vadd.f32 %v668, %v764
  %v766 = vpop.f32.mrf.mxu0
  %767 = vmatprep.mubr.bf16.mxu0 %v306
  %768 = vmatmul.mubr.bf16.gmra.mxu0 %v305
  %v769 = vpop.f32.mrf.mxu0
  %v770 = vadd.f32 %v673, %v769
  %v771 = vpop.f32.mrf.mxu0
  %v772 = vpop.f32.mrf.mxu0
  %v773 = vadd.f32 %v676, %v772
  %v774 = vpop.f32.mrf.mxu0
  %775 = vmatprep.mubr.bf16.mxu0 %v311
  %776 = vmatmul.mubr.bf16.gmra.mxu0 %v310
  %v777 = vpop.f32.mrf.mxu0
  %v778 = vadd.f32 %v681, %v777
  %v779 = vpop.f32.mrf.mxu0
  %v780 = vpop.f32.mrf.mxu0
  %v781 = vadd.f32 %v684, %v780
  %v782 = vpop.f32.mrf.mxu0
  %783 = vmatprep.mubr.bf16.mxu0 %v316
  %784 = vmatmul.mubr.bf16.gmra.mxu0 %v315
  %v785 = vpop.f32.mrf.mxu0
  %v786 = vadd.f32 %v689, %v785
  %v787 = vpop.f32.mrf.mxu0
  %v788 = vpop.f32.mrf.mxu0
  %v789 = vadd.f32 %v692, %v788
  %v790 = vpop.f32.mrf.mxu0
  %791 = vdwg.mxu0
  %792 = vmatprep.subr.bf16.mxu0 0
  %793 = vmatpush1.bf16.msra.mxu0 %v557
  %794 = vmatprep.subr.bf16.mxu0 0
  %795 = vmatpush1.bf16.msra.mxu0 %v556
  %796 = vmatprep.subr.bf16.mxu0 0
  %797 = vmatpush1.bf16.msra.mxu0 %v555
  %798 = vmatprep.subr.bf16.mxu0 0
  %799 = vmatpush1.bf16.msra.mxu0 %v554
  %800 = vmatprep.subr.bf16.mxu0 0
  %801 = vmatpush1.bf16.msra.mxu0 %v553
  %802 = vmatprep.subr.bf16.mxu0 0
  %803 = vmatpush1.bf16.msra.mxu0 %v552
  %804 = vmatprep.subr.bf16.mxu0 0
  %805 = vmatpush1.bf16.msra.mxu0 %v551
  %806 = vmatprep.subr.bf16.mxu0 0
  %807 = vmatpush1.bf16.msra.mxu0 %v550
  %808 = vmatprep.subr.bf16.mxu0 0
  %809 = vmatpush2.bf16.msra.mxu0 0
  %810 = vmatprep.subr.bf16.mxu0 0
  %811 = vmatpush2.bf16.msra.mxu0 0
  %812 = vmatprep.subr.bf16.mxu0 0
  %813 = vmatpush2.bf16.msra.mxu0 0
  %814 = vmatprep.subr.bf16.mxu0 0
  %815 = vmatpush2.bf16.msra.mxu0 0
  %816 = vmatprep.subr.bf16.mxu0 0
  %817 = vmatpush2.bf16.msra.mxu0 0
  %818 = vmatprep.subr.bf16.mxu0 0
  %819 = vmatpush2.bf16.msra.mxu0 0
  %820 = vmatprep.subr.bf16.mxu0 0
  %821 = vmatpush2.bf16.msra.mxu0 0
  %822 = vmatprep.subr.bf16.mxu0 0
  %823 = vmatpush2.bf16.msra.mxu0 0
  %824 = vmatprep.mubr.bf16.mxu0 0
  %825 = vmatmul.mubr.bf16.gmra.mxu0 %v282
  %v826 = vpop.f32.mrf.mxu0
  %v827 = vadd.f32 %v730, %v826
  %v828 = vpop.f32.mrf.mxu0
  %v829 = vpop.f32.mrf.mxu0
  %v830 = vadd.f32 %v733, %v829
  %v831 = vpop.f32.mrf.mxu0
  %832 = vmatprep.mubr.bf16.mxu0 0
  %833 = vmatmul.mubr.bf16.gmra.mxu0 %v287
  %v834 = vpop.f32.mrf.mxu0
  %v835 = vadd.f32 %v738, %v834
  %v836 = vpop.f32.mrf.mxu0
  %v837 = vpop.f32.mrf.mxu0
  %v838 = vadd.f32 %v741, %v837
  %v839 = vpop.f32.mrf.mxu0
  %840 = vmatprep.mubr.bf16.mxu0 0
  %841 = vmatmul.mubr.bf16.gmra.mxu0 %v292
  %v842 = vpop.f32.mrf.mxu0
  %v843 = vadd.f32 %v746, %v842
  %v844 = vpop.f32.mrf.mxu0
  %v845 = vpop.f32.mrf.mxu0
  %v846 = vadd.f32 %v749, %v845
  %v847 = vpop.f32.mrf.mxu0
  %848 = vmatprep.mubr.bf16.mxu0 0
  %849 = vmatmul.mubr.bf16.gmra.mxu0 %v297
  %v850 = vpop.f32.mrf.mxu0
  %v851 = vadd.f32 %v754, %v850
  %v852 = vpop.f32.mrf.mxu0
  %v853 = vpop.f32.mrf.mxu0
  %v854 = vadd.f32 %v757, %v853
  %v855 = vpop.f32.mrf.mxu0
  %856 = vmatprep.mubr.bf16.mxu0 0
  %857 = vmatmul.mubr.bf16.gmra.mxu0 %v302
  %v858 = vpop.f32.mrf.mxu0
  %v859 = vadd.f32 %v762, %v858
  %v860 = vpop.f32.mrf.mxu0
  %v861 = vpop.f32.mrf.mxu0
  %v862 = vadd.f32 %v765, %v861
  %v863 = vpop.f32.mrf.mxu0
  %864 = vmatprep.mubr.bf16.mxu0 0
  %865 = vmatmul.mubr.bf16.gmra.mxu0 %v307
  %v866 = vpop.f32.mrf.mxu0
  %v867 = vadd.f32 %v770, %v866
  %v868 = vpop.f32.mrf.mxu0
  %v869 = vpop.f32.mrf.mxu0
  %v870 = vadd.f32 %v773, %v869
  %v871 = vpop.f32.mrf.mxu0
  %872 = vmatprep.mubr.bf16.mxu0 0
  %873 = vmatmul.mubr.bf16.gmra.mxu0 %v312
  %v874 = vpop.f32.mrf.mxu0
  %v875 = vadd.f32 %v778, %v874
  %v876 = vpop.f32.mrf.mxu0
  %v877 = vpop.f32.mrf.mxu0
  %v878 = vadd.f32 %v781, %v877
  %v879 = vpop.f32.mrf.mxu0
  %880 = vmatprep.mubr.bf16.mxu0 0
  %881 = vmatmul.mubr.bf16.gmra.mxu0 %v317
  %v882 = vpop.f32.mrf.mxu0
  %v883 = vadd.f32 %v786, %v882
  %v884 = vpop.f32.mrf.mxu0
  %v885 = vpop.f32.mrf.mxu0
  %v886 = vadd.f32 %v789, %v885
  %v887 = vpop.f32.mrf.mxu0
  %888 = vdwg.mxu0
  %v889 = vmax.f32 %v827, 0.0
  %v890 = vmax.f32 %v830, 0.0
  %v891 = vmax.f32 %v835, 0.0
  %v892 = vmax.f32 %v838, 0.0
  %v893 = vmax.f32 %v843, 0.0
  %v894 = vmax.f32 %v846, 0.0
  %v895 = vmax.f32 %v851, 0.0
  %v896 = vmax.f32 %v854, 0.0
  %v897 = vmax.f32 %v859, 0.0
  %v898 = vmax.f32 %v862, 0.0
  %v899 = vmax.f32 %v867, 0.0
  %v900 = vmax.f32 %v870, 0.0
  %v901 = vmax.f32 %v875, 0.0
  %v902 = vmax.f32 %v878, 0.0
  %v903 = vmax.f32 %v883, 0.0
  %v904 = vmax.f32 %v886, 0.0
  %v905 = vpack.c.bf16 %v890, %v889
  %v906 = vpack.c.bf16 %v892, %v891
  %v907 = vpack.c.bf16 %v894, %v893
  %v908 = vpack.c.bf16 %v896, %v895
  %v909 = vpack.c.bf16 %v898, %v897
  %v910 = vpack.c.bf16 %v900, %v899
  %v911 = vpack.c.bf16 %v902, %v901
  %v912 = vpack.c.bf16 %v904, %v903
  %v921 = vunpack.c.l.b16 %v905
  %v922 = vunpack.c.h.b16 %v905
  %v923 = vunpack.c.l.b16 %v906
  %v924 = vunpack.c.h.b16 %v906
  %v925 = vunpack.c.l.b16 %v907
  %v926 = vunpack.c.h.b16 %v907
  %v927 = vunpack.c.l.b16 %v908
  %v928 = vunpack.c.h.b16 %v908
  %v929 = vunpack.c.l.b16 %v909
  %v930 = vunpack.c.h.b16 %v909
  %v931 = vunpack.c.l.b16 %v910
  %v932 = vunpack.c.h.b16 %v910
  %v933 = vunpack.c.l.b16 %v911
  %v934 = vunpack.c.h.b16 %v911
  %v935 = vunpack.c.l.b16 %v912
  %v936 = vunpack.c.h.b16 %v912
  %v937 = vpack.c.b16 %v921, %v921
  %v938 = vpack.c.b16 %v922, %v922
  %v939 = vpack.c.b16 %v923, %v923
  %v940 = vpack.c.b16 %v924, %v924
  %v941 = vpack.c.b16 %v925, %v925
  %v942 = vpack.c.b16 %v926, %v926
  %v943 = vpack.c.b16 %v927, %v927
  %v944 = vpack.c.b16 %v928, %v928
  %v945 = vpack.c.b16 %v929, %v929
  %v946 = vpack.c.b16 %v930, %v930
  %v947 = vpack.c.b16 %v931, %v931
  %v948 = vpack.c.b16 %v932, %v932
  %v949 = vpack.c.b16 %v933, %v933
  %v950 = vpack.c.b16 %v934, %v934
  %v951 = vpack.c.b16 %v935, %v935
  %v952 = vpack.c.b16 %v936, %v936
  %969 = vst [vmem:[%s3] sm:$0xf] %v937
  %970 = vst [vmem:[%s3 + $0x4] sm:$0xf] %v938
  %971 = vst [vmem:[%s3 + $0x8] sm:$0xf] %v939
  %972 = vst [vmem:[%s3 + $0xc] sm:$0xf] %v940
  %973 = vst [vmem:[%s3 + $0x10] sm:$0xf] %v941
  %974 = vst [vmem:[%s3 + $0x14] sm:$0xf] %v942
  %975 = vst [vmem:[%s3 + $0x18] sm:$0xf] %v943
  %976 = vst [vmem:[%s3 + $0x1c] sm:$0xf] %v944
  %977 = vst [vmem:[%s3 + $0x20] sm:$0xf] %v945
  %978 = vst [vmem:[%s3 + $0x24] sm:$0xf] %v946
  %979 = vst [vmem:[%s3 + $0x28] sm:$0xf] %v947
  %980 = vst [vmem:[%s3 + $0x2c] sm:$0xf] %v948
  %981 = vst [vmem:[%s3 + $0x30] sm:$0xf] %v949
  %982 = vst [vmem:[%s3 + $0x34] sm:$0xf] %v950
  %983 = vst [vmem:[%s3 + $0x38] sm:$0xf] %v951
  %984 = vst [vmem:[%s3 + $0x3c] sm:$0xf] %v952
  // Predicated region
  $region14: #{decoder_forward.8} parent=0 // pred_check
    _
  $region15: #{decoder_forward.8} parent=0 // pred_check_branch
    %986 = sbr.rel (0) target = $region17
  $region16: #{decoder_forward.8} parent=0 // pred_region
    _
  $region17: #{decoder_forward.8} parent=0 // pred_fallthru
    _
  // Predicated region
  $region18: #{decoder_forward.8} parent=0 // pred_check
    _
  $region19: #{decoder_forward.8} parent=0 // pred_check_branch
    %988 = sbr.rel (0) target = $region21
  $region20: #{decoder_forward.8} parent=0 // pred_region
    _
  $region21: #{decoder_forward.8} parent=0 // pred_fallthru
    _

// kernel: decoder_forward.6
$region0: #{decoder_forward.6}
  #allocation0 [shape = 'u32[]', space=smem, size = 0x4, offset = 0x4, fixed_abs, tag = 'smem constant byte address 0x4 - core index']
  #allocation1 [shape = 'u32[144,128]{1,0:T(1,128)}', space=vmem, size = 0x12000, scoped, tag = 'internal scratch']
  %s0 = inlined_call_operand.vmem [shape: bf16[16,2304], index: 0, kind: input, shape index: {}]
  %s1 = inlined_call_operand.hbm [shape: bf16[2304,512], index: 1, kind: input, shape index: {}]
  %s2 = inlined_call_operand.hbm [shape: f32[1,512], index: 2, kind: input, shape index: {}]
  %s3 = inlined_call_operand.vmem [shape: bf16[16,512], index: 3, kind: output, shape index: {}]
  %s4 = sld [smem:[#allocation0]]
  $region30: #{decoder_forward.6} parent=0
    _
  %s6 = ssub.s32 1, %s4
  %s7 = scalar_select 0, %s6, %s4
  $region1: #{decoder_forward.6} parent=0
    #allocation2 [shape = 'u8[2359296]{0}', space=vmem, size = 0x240000, scoped, tag = 'input window, operand 1, single buffered']
    #allocation3 [shape = 's32[1]{0}', space=sflag, size = 0x4, scoped, tag = 'scoped memory for decoder_forward.6']
    #allocation4 [shape = 'u8[2048]{0}', space=vmem, size = 0x800, scoped, tag = 'input window, operand 2, single buffered']
    #allocation5 [shape = 's32[1]{0}', space=sflag, size = 0x4, scoped, tag = 'scoped memory for decoder_forward.6']
    %8 = vsyncpa [#allocation3], 0
    %9 = vsyncpa [#allocation5], 0
    // Predicated region
    $region2: #{decoder_forward.6} parent=1 // pred_check
      _
    $region3: #{decoder_forward.6} parent=1 // pred_check_branch
      %11 = sbr.rel (0) target = $region5
    $region4: #{decoder_forward.6} parent=1 // pred_region
      _
    $region5: #{decoder_forward.6} parent=1 // pred_fallthru
      _
    // Predicated region
    $region6: #{decoder_forward.6} parent=1 // pred_check
      _
    $region7: #{decoder_forward.6} parent=1 // pred_check_branch
      %13 = sbr.rel (0) target = $region9
    $region8: #{decoder_forward.6} parent=1 // pred_region
      %s15 = ssub.s32 73728, 73728
      %16 = vsyncadd [#allocation3], %s15
      %s17 = sshll.u32 [#allocation2], 4
      %s18 = int_to_ptr.vmem [resolvable:$true] %s17
      %23 = dma.hbm_to_vmem [thread:$0]  %s1, 73728, %s18, [#allocation3], 256, 256, 16
    $region9: #{decoder_forward.6} parent=1 // pred_fallthru
      _
    // Predicated region
    $region10: #{decoder_forward.6} parent=1 // pred_check
      _
    $region11: #{decoder_forward.6} parent=1 // pred_check_branch
      %25 = sbr.rel (0) target = $region13
    $region12: #{decoder_forward.6} parent=1 // pred_region
      %s27 = ssub.s32 64, 64
      %28 = vsyncadd [#allocation5], %s27
      %s30 = sshll.u32 [#allocation4], 4
      %s31 = int_to_ptr.vmem [resolvable:$true] %s30
      %33 = dma.hbm_to_vmem [thread:$0]  %s2, 64, %s31, [#allocation5]
    $region13: #{decoder_forward.6} parent=1 // pred_fallthru
      _
    // Predicated region
    $region14: #{decoder_forward.6} parent=1 // pred_check
      _
    $region15: #{decoder_forward.6} parent=1 // pred_check_branch
      %35 = sbr.rel (0) target = $region17
    $region16: #{decoder_forward.6} parent=1 // pred_region
      %36 = dma.done [#allocation3], 73728
    $region17: #{decoder_forward.6} parent=1 // pred_fallthru
      _
    // Predicated region
    $region18: #{decoder_forward.6} parent=1 // pred_check
      _
    $region19: #{decoder_forward.6} parent=1 // pred_check_branch
      %38 = sbr.rel (0) target = $region21
    $region20: #{decoder_forward.6} parent=1 // pred_region
      %39 = dma.done [#allocation5], 64
    $region21: #{decoder_forward.6} parent=1 // pred_fallthru
      _
    %v40 = vld [vmem:[%s0] sm:$0xff]
    %v41 = vld [vmem:[%s0 + $0x8] sm:$0xff]
    %v42 = vld [vmem:[%s0 + $0x10] sm:$0xff]
    %v43 = vld [vmem:[%s0 + $0x18] sm:$0xff]
    %v44 = vld [vmem:[%s0 + $0x20] sm:$0xff]
    %v45 = vld [vmem:[%s0 + $0x28] sm:$0xff]
    %v46 = vld [vmem:[%s0 + $0x30] sm:$0xff]
    %v47 = vld [vmem:[%s0 + $0x38] sm:$0xff]
    %v48 = vld [vmem:[%s0 + $0x40] sm:$0xff]
    %v49 = vld [vmem:[%s0 + $0x48] sm:$0xff]
    %v50 = vld [vmem:[%s0 + $0x50] sm:$0xff]
    %v51 = vld [vmem:[%s0 + $0x58] sm:$0xff]
    %v52 = vld [vmem:[%s0 + $0x60] sm:$0xff]
    %v53 = vld [vmem:[%s0 + $0x68] sm:$0xff]
    %v54 = vld [vmem:[%s0 + $0x70] sm:$0xff]
    %v55 = vld [vmem:[%s0 + $0x78] sm:$0xff]
    %v56 = vld [vmem:[%s0 + $0x80] sm:$0xff]
    %v57 = vld [vmem:[%s0 + $0x88] sm:$0xff]
    %v58 = vld [vmem:[#allocation2] sm:$0xff]
    %v59 = vld [vmem:[#allocation2 + $0x8] sm:$0xff]
    %v60 = vld [vmem:[#allocation2 + $0x10] sm:$0xff]
    %v61 = vld [vmem:[#allocation2 + $0x18] sm:$0xff]
    %v62 = vld [vmem:[#allocation2 + $0x20] sm:$0xff]
    %v63 = vld [vmem:[#allocation2 + $0x28] sm:$0xff]
    %v64 = vld [vmem:[#allocation2 + $0x30] sm:$0xff]
    %v65 = vld [vmem:[#allocation2 + $0x38] sm:$0xff]
    %v66 = vld [vmem:[#allocation2 + $0x40] sm:$0xff]
    %v67 = vld [vmem:[#allocation2 + $0x48] sm:$0xff]
    %v68 = vld [vmem:[#allocation2 + $0x50] sm:$0xff]
    %v69 = vld [vmem:[#allocation2 + $0x58] sm:$0xff]
    %v70 = vld [vmem:[#allocation2 + $0x60] sm:$0xff]
    %v71 = vld [vmem:[#allocation2 + $0x68] sm:$0xff]
    %v72 = vld [vmem:[#allocation2 + $0x70] sm:$0xff]
    %v73 = vld [vmem:[#allocation2 + $0x78] sm:$0xff]
    %v74 = vld [vmem:[#allocation2 + $0x80] sm:$0xff]
    %v75 = vld [vmem:[#allocation2 + $0x88] sm:$0xff]
    %v76 = vld [vmem:[#allocation2 + $0x90] sm:$0xff]
    %v77 = vld [vmem:[#allocation2 + $0x98] sm:$0xff]
    %v78 = vld [vmem:[#allocation2 + $0xa0] sm:$0xff]
    %v79 = vld [vmem:[#allocation2 + $0xa8] sm:$0xff]
    %v80 = vld [vmem:[#allocation2 + $0xb0] sm:$0xff]
    %v81 = vld [vmem:[#allocation2 + $0xb8] sm:$0xff]
    %v82 = vld [vmem:[#allocation2 + $0xc0] sm:$0xff]
    %v83 = vld [vmem:[#allocation2 + $0xc8] sm:$0xff]
    %v84 = vld [vmem:[#allocation2 + $0xd0] sm:$0xff]
    %v85 = vld [vmem:[#allocation2 + $0xd8] sm:$0xff]
    %v86 = vld [vmem:[#allocation2 + $0xe0] sm:$0xff]
    %v87 = vld [vmem:[#allocation2 + $0xe8] sm:$0xff]
    %v88 = vld [vmem:[#allocation2 + $0xf0] sm:$0xff]
    %v89 = vld [vmem:[#allocation2 + $0xf8] sm:$0xff]
    %v90 = vld [vmem:[#allocation2 + $0x100] sm:$0xff]
    %v91 = vld [vmem:[#allocation2 + $0x108] sm:$0xff]
    %v92 = vld [vmem:[#allocation2 + $0x110] sm:$0xff]
    %v93 = vld [vmem:[#allocation2 + $0x118] sm:$0xff]
    %v94 = vld [vmem:[#allocation2 + $0x120] sm:$0xff]
    %v95 = vld [vmem:[#allocation2 + $0x128] sm:$0xff]
    %v96 = vld [vmem:[#allocation2 + $0x130] sm:$0xff]
    %v97 = vld [vmem:[#allocation2 + $0x138] sm:$0xff]
    %v98 = vld [vmem:[#allocation2 + $0x140] sm:$0xff]
    %v99 = vld [vmem:[#allocation2 + $0x148] sm:$0xff]
    %v100 = vld [vmem:[#allocation2 + $0x150] sm:$0xff]
    %v101 = vld [vmem:[#allocation2 + $0x158] sm:$0xff]
    %v102 = vld [vmem:[#allocation2 + $0x160] sm:$0xff]
    %v103 = vld [vmem:[#allocation2 + $0x168] sm:$0xff]
    %v104 = vld [vmem:[#allocation2 + $0x170] sm:$0xff]
    %v105 = vld [vmem:[#allocation2 + $0x178] sm:$0xff]
    %v106 = vld [vmem:[#allocation2 + $0x180] sm:$0xff]
    %v107 = vld [vmem:[#allocation2 + $0x188] sm:$0xff]
    %v108 = vld [vmem:[#allocation2 + $0x190] sm:$0xff]
    %v109 = vld [vmem:[#allocation2 + $0x198] sm:$0xff]
    %v110 = vld [vmem:[#allocation2 + $0x1a0] sm:$0xff]
    %v111 = vld [vmem:[#allocation2 + $0x1a8] sm:$0xff]
    %v112 = vld [vmem:[#allocation2 + $0x1b0] sm:$0xff]
    %v113 = vld [vmem:[#allocation2 + $0x1b8] sm:$0xff]
    %v114 = vld [vmem:[#allocation2 + $0x1c0] sm:$0xff]
    %v115 = vld [vmem:[#allocation2 + $0x1c8] sm:$0xff]
    %v116 = vld [vmem:[#allocation2 + $0x1d0] sm:$0xff]
    %v117 = vld [vmem:[#allocation2 + $0x1d8] sm:$0xff]
    %v118 = vld [vmem:[#allocation2 + $0x1e0] sm:$0xff]
    %v119 = vld [vmem:[#allocation2 + $0x1e8] sm:$0xff]
    %v120 = vld [vmem:[#allocation2 + $0x1f0] sm:$0xff]
    %v121 = vld [vmem:[#allocation2 + $0x1f8] sm:$0xff]
    %v122 = vld [vmem:[#allocation2 + $0x200] sm:$0xff]
    %v123 = vld [vmem:[#allocation2 + $0x208] sm:$0xff]
    %v124 = vld [vmem:[#allocation2 + $0x210] sm:$0xff]
    %v125 = vld [vmem:[#allocation2 + $0x218] sm:$0xff]
    %v126 = vld [vmem:[#allocation2 + $0x220] sm:$0xff]
    %v127 = vld [vmem:[#allocation2 + $0x228] sm:$0xff]
    %v128 = vld [vmem:[#allocation2 + $0x230] sm:$0xff]
    %v129 = vld [vmem:[#allocation2 + $0x238] sm:$0xff]
    %v130 = vld [vmem:[#allocation2 + $0x240] sm:$0xff]
    %v131 = vld [vmem:[#allocation2 + $0x248] sm:$0xff]
    %v132 = vld [vmem:[#allocation2 + $0x250] sm:$0xff]
    %v133 = vld [vmem:[#allocation2 + $0x258] sm:$0xff]
    %v134 = vld [vmem:[#allocation2 + $0x260] sm:$0xff]
    %v135 = vld [vmem:[#allocation2 + $0x268] sm:$0xff]
    %v136 = vld [vmem:[#allocation2 + $0x270] sm:$0xff]
    %v137 = vld [vmem:[#allocation2 + $0x278] sm:$0xff]
    %v138 = vld [vmem:[#allocation2 + $0x280] sm:$0xff]
    %v139 = vld [vmem:[#allocation2 + $0x288] sm:$0xff]
    %v140 = vld [vmem:[#allocation2 + $0x290] sm:$0xff]
    %v141 = vld [vmem:[#allocation2 + $0x298] sm:$0xff]
    %v142 = vld [vmem:[#allocation2 + $0x2a0] sm:$0xff]
    %v143 = vld [vmem:[#allocation2 + $0x2a8] sm:$0xff]
    %v144 = vld [vmem:[#allocation2 + $0x2b0] sm:$0xff]
    %v145 = vld [vmem:[#allocation2 + $0x2b8] sm:$0xff]
    %v146 = vld [vmem:[#allocation2 + $0x2c0] sm:$0xff]
    %v147 = vld [vmem:[#allocation2 + $0x2c8] sm:$0xff]
    %v148 = vld [vmem:[#allocation2 + $0x2d0] sm:$0xff]
    %v149 = vld [vmem:[#allocation2 + $0x2d8] sm:$0xff]
    %v150 = vld [vmem:[#allocation2 + $0x2e0] sm:$0xff]
    %v151 = vld [vmem:[#allocation2 + $0x2e8] sm:$0xff]
    %v152 = vld [vmem:[#allocation2 + $0x2f0] sm:$0xff]
    %v153 = vld [vmem:[#allocation2 + $0x2f8] sm:$0xff]
    %v154 = vld [vmem:[#allocation2 + $0x300] sm:$0xff]
    %v155 = vld [vmem:[#allocation2 + $0x308] sm:$0xff]
    %v156 = vld [vmem:[#allocation2 + $0x310] sm:$0xff]
    %v157 = vld [vmem:[#allocation2 + $0x318] sm:$0xff]
    %v158 = vld [vmem:[#allocation2 + $0x320] sm:$0xff]
    %v159 = vld [vmem:[#allocation2 + $0x328] sm:$0xff]
    %v160 = vld [vmem:[#allocation2 + $0x330] sm:$0xff]
    %v161 = vld [vmem:[#allocation2 + $0x338] sm:$0xff]
    %v162 = vld [vmem:[#allocation2 + $0x340] sm:$0xff]
    %v163 = vld [vmem:[#allocation2 + $0x348] sm:$0xff]
    %v164 = vld [vmem:[#allocation2 + $0x350] sm:$0xff]
    %v165 = vld [vmem:[#allocation2 + $0x358] sm:$0xff]
    %v166 = vld [vmem:[#allocation2 + $0x360] sm:$0xff]
    %v167 = vld [vmem:[#allocation2 + $0x368] sm:$0xff]
    %v168 = vld [vmem:[#allocation2 + $0x370] sm:$0xff]
    %v169 = vld [vmem:[#allocation2 + $0x378] sm:$0xff]
    %v170 = vld [vmem:[#allocation2 + $0x380] sm:$0xff]
    %v171 = vld [vmem:[#allocation2 + $0x388] sm:$0xff]
    %v172 = vld [vmem:[#allocation2 + $0x390] sm:$0xff]
    %v173 = vld [vmem:[#allocation2 + $0x398] sm:$0xff]
    %v174 = vld [vmem:[#allocation2 + $0x3a0] sm:$0xff]
    %v175 = vld [vmem:[#allocation2 + $0x3a8] sm:$0xff]
    %v176 = vld [vmem:[#allocation2 + $0x3b0] sm:$0xff]
    %v177 = vld [vmem:[#allocation2 + $0x3b8] sm:$0xff]
    %v178 = vld [vmem:[#allocation2 + $0x3c0] sm:$0xff]
    %v179 = vld [vmem:[#allocation2 + $0x3c8] sm:$0xff]
    %v180 = vld [vmem:[#allocation2 + $0x3d0] sm:$0xff]
    %v181 = vld [vmem:[#allocation2 + $0x3d8] sm:$0xff]
    %v182 = vld [vmem:[#allocation2 + $0x3e0] sm:$0xff]
    %v183 = vld [vmem:[#allocation2 + $0x3e8] sm:$0xff]
    %v184 = vld [vmem:[#allocation2 + $0x3f0] sm:$0xff]
    %v185 = vld [vmem:[#allocation2 + $0x3f8] sm:$0xff]
    %v186 = vld [vmem:[#allocation2 + $0x400] sm:$0xff]
    %v187 = vld [vmem:[#allocation2 + $0x408] sm:$0xff]
    %v188 = vld [vmem:[#allocation2 + $0x410] sm:$0xff]
    %v189 = vld [vmem:[#allocation2 + $0x418] sm:$0xff]
    %v190 = vld [vmem:[#allocation2 + $0x420] sm:$0xff]
    %v191 = vld [vmem:[#allocation2 + $0x428] sm:$0xff]
    %v192 = vld [vmem:[#allocation2 + $0x430] sm:$0xff]
    %v193 = vld [vmem:[#allocation2 + $0x438] sm:$0xff]
    %v194 = vld [vmem:[#allocation2 + $0x440] sm:$0xff]
    %v195 = vld [vmem:[#allocation2 + $0x448] sm:$0xff]
    %v196 = vld [vmem:[#allocation2 + $0x450] sm:$0xff]
    %v197 = vld [vmem:[#allocation2 + $0x458] sm:$0xff]
    %v198 = vld [vmem:[#allocation2 + $0x460] sm:$0xff]
    %v199 = vld [vmem:[#allocation2 + $0x468] sm:$0xff]
    %v200 = vld [vmem:[#allocation2 + $0x470] sm:$0xff]
    %v201 = vld [vmem:[#allocation2 + $0x478] sm:$0xff]
    %v202 = vld [vmem:[#allocation2 + $0x480] sm:$0xff]
    %v203 = vld [vmem:[#allocation2 + $0x488] sm:$0xff]
    %v204 = vld [vmem:[#allocation2 + $0x490] sm:$0xff]
    %v205 = vld [vmem:[#allocation2 + $0x498] sm:$0xff]
    %v206 = vld [vmem:[#allocation2 + $0x4a0] sm:$0xff]
    %v207 = vld [vmem:[#allocation2 + $0x4a8] sm:$0xff]
    %v208 = vld [vmem:[#allocation2 + $0x4b0] sm:$0xff]
    %v209 = vld [vmem:[#allocation2 + $0x4b8] sm:$0xff]
    %v210 = vld [vmem:[#allocation2 + $0x4c0] sm:$0xff]
    %v211 = vld [vmem:[#allocation2 + $0x4c8] sm:$0xff]
    %v212 = vld [vmem:[#allocation2 + $0x4d0] sm:$0xff]
    %v213 = vld [vmem:[#allocation2 + $0x4d8] sm:$0xff]
    %v214 = vld [vmem:[#allocation2 + $0x4e0] sm:$0xff]
    %v215 = vld [vmem:[#allocation2 + $0x4e8] sm:$0xff]
    %v216 = vld [vmem:[#allocation2 + $0x4f0] sm:$0xff]
    %v217 = vld [vmem:[#allocation2 + $0x4f8] sm:$0xff]
    %v218 = vld [vmem:[#allocation2 + $0x500] sm:$0xff]
    %v219 = vld [vmem:[#allocation2 + $0x508] sm:$0xff]
    %v220 = vld [vmem:[#allocation2 + $0x510] sm:$0xff]
    %v221 = vld [vmem:[#allocation2 + $0x518] sm:$0xff]
    %v222 = vld [vmem:[#allocation2 + $0x520] sm:$0xff]
    %v223 = vld [vmem:[#allocation2 + $0x528] sm:$0xff]
    %v224 = vld [vmem:[#allocation2 + $0x530] sm:$0xff]
    %v225 = vld [vmem:[#allocation2 + $0x538] sm:$0xff]
    %v226 = vld [vmem:[#allocation2 + $0x540] sm:$0xff]
    %v227 = vld [vmem:[#allocation2 + $0x548] sm:$0xff]
    %v228 = vld [vmem:[#allocation2 + $0x550] sm:$0xff]
    %v229 = vld [vmem:[#allocation2 + $0x558] sm:$0xff]
    %v230 = vld [vmem:[#allocation2 + $0x560] sm:$0xff]
    %v231 = vld [vmem:[#allocation2 + $0x568] sm:$0xff]
    %v232 = vld [vmem:[#allocation2 + $0x570] sm:$0xff]
    %v233 = vld [vmem:[#allocation2 + $0x578] sm:$0xff]
    %v234 = vld [vmem:[#allocation2 + $0x580] sm:$0xff]
    %v235 = vld [vmem:[#allocation2 + $0x588] sm:$0xff]
    %v236 = vld [vmem:[#allocation2 + $0x590] sm:$0xff]
    %v237 = vld [vmem:[#allocation2 + $0x598] sm:$0xff]
    %v238 = vld [vmem:[#allocation2 + $0x5a0] sm:$0xff]
    %v239 = vld [vmem:[#allocation2 + $0x5a8] sm:$0xff]
    %v240 = vld [vmem:[#allocation2 + $0x5b0] sm:$0xff]
    %v241 = vld [vmem:[#allocation2 + $0x5b8] sm:$0xff]
    %v242 = vld [vmem:[#allocation2 + $0x5c0] sm:$0xff]
    %v243 = vld [vmem:[#allocation2 + $0x5c8] sm:$0xff]
    %v244 = vld [vmem:[#allocation2 + $0x5d0] sm:$0xff]
    %v245 = vld [vmem:[#allocation2 + $0x5d8] sm:$0xff]
    %v246 = vld [vmem:[#allocation2 + $0x5e0] sm:$0xff]
    %v247 = vld [vmem:[#allocation2 + $0x5e8] sm:$0xff]
    %v248 = vld [vmem:[#allocation2 + $0x5f0] sm:$0xff]
    %v249 = vld [vmem:[#allocation2 + $0x5f8] sm:$0xff]
    %v250 = vld [vmem:[#allocation2 + $0x600] sm:$0xff]
    %v251 = vld [vmem:[#allocation2 + $0x608] sm:$0xff]
    %v252 = vld [vmem:[#allocation2 + $0x610] sm:$0xff]
    %v253 = vld [vmem:[#allocation2 + $0x618] sm:$0xff]
    %v254 = vld [vmem:[#allocation2 + $0x620] sm:$0xff]
    %v255 = vld [vmem:[#allocation2 + $0x628] sm:$0xff]
    %v256 = vld [vmem:[#allocation2 + $0x630] sm:$0xff]
    %v257 = vld [vmem:[#allocation2 + $0x638] sm:$0xff]
    %v258 = vld [vmem:[#allocation2 + $0x640] sm:$0xff]
    %v259 = vld [vmem:[#allocation2 + $0x648] sm:$0xff]
    %v260 = vld [vmem:[#allocation2 + $0x650] sm:$0xff]
    %v261 = vld [vmem:[#allocation2 + $0x658] sm:$0xff]
    %v262 = vld [vmem:[#allocation2 + $0x660] sm:$0xff]
    %v263 = vld [vmem:[#allocation2 + $0x668] sm:$0xff]
    %v264 = vld [vmem:[#allocation2 + $0x670] sm:$0xff]
    %v265 = vld [vmem:[#allocation2 + $0x678] sm:$0xff]
    %v266 = vld [vmem:[#allocation2 + $0x680] sm:$0xff]
    %v267 = vld [vmem:[#allocation2 + $0x688] sm:$0xff]
    %v268 = vld [vmem:[#allocation2 + $0x690] sm:$0xff]
    %v269 = vld [vmem:[#allocation2 + $0x698] sm:$0xff]
    %v270 = vld [vmem:[#allocation2 + $0x6a0] sm:$0xff]
    %v271 = vld [vmem:[#allocation2 + $0x6a8] sm:$0xff]
    %v272 = vld [vmem:[#allocation2 + $0x6b0] sm:$0xff]
    %v273 = vld [vmem:[#allocation2 + $0x6b8] sm:$0xff]
    %v274 = vld [vmem:[#allocation2 + $0x6c0] sm:$0xff]
    %v275 = vld [vmem:[#allocation2 + $0x6c8] sm:$0xff]
    %v276 = vld [vmem:[#allocation2 + $0x6d0] sm:$0xff]
    %v277 = vld [vmem:[#allocation2 + $0x6d8] sm:$0xff]
    %v278 = vld [vmem:[#allocation2 + $0x6e0] sm:$0xff]
    %v279 = vld [vmem:[#allocation2 + $0x6e8] sm:$0xff]
    %v280 = vld [vmem:[#allocation2 + $0x6f0] sm:$0xff]
    %v281 = vld [vmem:[#allocation2 + $0x6f8] sm:$0xff]
    %v282 = vld [vmem:[#allocation2 + $0x700] sm:$0xff]
    %v283 = vld [vmem:[#allocation2 + $0x708] sm:$0xff]
    %v284 = vld [vmem:[#allocation2 + $0x710] sm:$0xff]
    %v285 = vld [vmem:[#allocation2 + $0x718] sm:$0xff]
    %v286 = vld [vmem:[#allocation2 + $0x720] sm:$0xff]
    %v287 = vld [vmem:[#allocation2 + $0x728] sm:$0xff]
    %v288 = vld [vmem:[#allocation2 + $0x730] sm:$0xff]
    %v289 = vld [vmem:[#allocation2 + $0x738] sm:$0xff]
    %v290 = vld [vmem:[#allocation2 + $0x740] sm:$0xff]
    %v291 = vld [vmem:[#allocation2 + $0x748] sm:$0xff]
    %v292 = vld [vmem:[#allocation2 + $0x750] sm:$0xff]
    %v293 = vld [vmem:[#allocation2 + $0x758] sm:$0xff]
    %v294 = vld [vmem:[#allocation2 + $0x760] sm:$0xff]
    %v295 = vld [vmem:[#allocation2 + $0x768] sm:$0xff]
    %v296 = vld [vmem:[#allocation2 + $0x770] sm:$0xff]
    %v297 = vld [vmem:[#allocation2 + $0x778] sm:$0xff]
    %v298 = vld [vmem:[#allocation2 + $0x780] sm:$0xff]
    %v299 = vld [vmem:[#allocation2 + $0x788] sm:$0xff]
    %v300 = vld [vmem:[#allocation2 + $0x790] sm:$0xff]
    %v301 = vld [vmem:[#allocation2 + $0x798] sm:$0xff]
    %v302 = vld [vmem:[#allocation2 + $0x7a0] sm:$0xff]
    %v303 = vld [vmem:[#allocation2 + $0x7a8] sm:$0xff]
    %v304 = vld [vmem:[#allocation2 + $0x7b0] sm:$0xff]
    %v305 = vld [vmem:[#allocation2 + $0x7b8] sm:$0xff]
    %v306 = vld [vmem:[#allocation2 + $0x7c0] sm:$0xff]
    %v307 = vld [vmem:[#allocation2 + $0x7c8] sm:$0xff]
    %v308 = vld [vmem:[#allocation2 + $0x7d0] sm:$0xff]
    %v309 = vld [vmem:[#allocation2 + $0x7d8] sm:$0xff]
    %v310 = vld [vmem:[#allocation2 + $0x7e0] sm:$0xff]
    %v311 = vld [vmem:[#allocation2 + $0x7e8] sm:$0xff]
    %v312 = vld [vmem:[#allocation2 + $0x7f0] sm:$0xff]
    %v313 = vld [vmem:[#allocation2 + $0x7f8] sm:$0xff]
    %v314 = vld [vmem:[#allocation2 + $0x800] sm:$0xff]
    %v315 = vld [vmem:[#allocation2 + $0x808] sm:$0xff]
    %v316 = vld [vmem:[#allocation2 + $0x810] sm:$0xff]
    %v317 = vld [vmem:[#allocation2 + $0x818] sm:$0xff]
    %v318 = vld [vmem:[#allocation2 + $0x820] sm:$0xff]
    %v319 = vld [vmem:[#allocation2 + $0x828] sm:$0xff]
    %v320 = vld [vmem:[#allocation2 + $0x830] sm:$0xff]
    %v321 = vld [vmem:[#allocation2 + $0x838] sm:$0xff]
    %v322 = vld [vmem:[#allocation2 + $0x840] sm:$0xff]
    %v323 = vld [vmem:[#allocation2 + $0x848] sm:$0xff]
    %v324 = vld [vmem:[#allocation2 + $0x850] sm:$0xff]
    %v325 = vld [vmem:[#allocation2 + $0x858] sm:$0xff]
    %v326 = vld [vmem:[#allocation2 + $0x860] sm:$0xff]
    %v327 = vld [vmem:[#allocation2 + $0x868] sm:$0xff]
    %v328 = vld [vmem:[#allocation2 + $0x870] sm:$0xff]
    %v329 = vld [vmem:[#allocation2 + $0x878] sm:$0xff]
    %v330 = vld [vmem:[#allocation2 + $0x880] sm:$0xff]
    %v331 = vld [vmem:[#allocation2 + $0x888] sm:$0xff]
    %v332 = vld [vmem:[#allocation2 + $0x890] sm:$0xff]
    %v333 = vld [vmem:[#allocation2 + $0x898] sm:$0xff]
    %v334 = vld [vmem:[#allocation2 + $0x8a0] sm:$0xff]
    %v335 = vld [vmem:[#allocation2 + $0x8a8] sm:$0xff]
    %v336 = vld [vmem:[#allocation2 + $0x8b0] sm:$0xff]
    %v337 = vld [vmem:[#allocation2 + $0x8b8] sm:$0xff]
    %v338 = vld [vmem:[#allocation2 + $0x8c0] sm:$0xff]
    %v339 = vld [vmem:[#allocation2 + $0x8c8] sm:$0xff]
    %v340 = vld [vmem:[#allocation2 + $0x8d0] sm:$0xff]
    %v341 = vld [vmem:[#allocation2 + $0x8d8] sm:$0xff]
    %v342 = vld [vmem:[#allocation2 + $0x8e0] sm:$0xff]
    %v343 = vld [vmem:[#allocation2 + $0x8e8] sm:$0xff]
    %v344 = vld [vmem:[#allocation2 + $0x8f0] sm:$0xff]
    %v345 = vld [vmem:[#allocation2 + $0x8f8] sm:$0xff]
    %v346 = vld [vmem:[#allocation2 + $0x900] sm:$0xff]
    %v347 = vld [vmem:[#allocation2 + $0x908] sm:$0xff]
    %v348 = vld [vmem:[#allocation2 + $0x910] sm:$0xff]
    %v349 = vld [vmem:[#allocation2 + $0x918] sm:$0xff]
    %v350 = vld [vmem:[#allocation2 + $0x920] sm:$0xff]
    %v351 = vld [vmem:[#allocation2 + $0x928] sm:$0xff]
    %v352 = vld [vmem:[#allocation2 + $0x930] sm:$0xff]
    %v353 = vld [vmem:[#allocation2 + $0x938] sm:$0xff]
    %v354 = vld [vmem:[#allocation2 + $0x940] sm:$0xff]
    %v355 = vld [vmem:[#allocation2 + $0x948] sm:$0xff]
    %v356 = vld [vmem:[#allocation2 + $0x950] sm:$0xff]
    %v357 = vld [vmem:[#allocation2 + $0x958] sm:$0xff]
    %v358 = vld [vmem:[#allocation2 + $0x960] sm:$0xff]
    %v359 = vld [vmem:[#allocation2 + $0x968] sm:$0xff]
    %v360 = vld [vmem:[#allocation2 + $0x970] sm:$0xff]
    %v361 = vld [vmem:[#allocation2 + $0x978] sm:$0xff]
    %v362 = vld [vmem:[#allocation2 + $0x980] sm:$0xff]
    %v363 = vld [vmem:[#allocation2 + $0x988] sm:$0xff]
    %v364 = vld [vmem:[#allocation2 + $0x990] sm:$0xff]
    %v365 = vld [vmem:[#allocation2 + $0x998] sm:$0xff]
    %v366 = vld [vmem:[#allocation2 + $0x9a0] sm:$0xff]
    %v367 = vld [vmem:[#allocation2 + $0x9a8] sm:$0xff]
    %v368 = vld [vmem:[#allocation2 + $0x9b0] sm:$0xff]
    %v369 = vld [vmem:[#allocation2 + $0x9b8] sm:$0xff]
    %v370 = vld [vmem:[#allocation2 + $0x9c0] sm:$0xff]
    %v371 = vld [vmem:[#allocation2 + $0x9c8] sm:$0xff]
    %v372 = vld [vmem:[#allocation2 + $0x9d0] sm:$0xff]
    %v373 = vld [vmem:[#allocation2 + $0x9d8] sm:$0xff]
    %v374 = vld [vmem:[#allocation2 + $0x9e0] sm:$0xff]
    %v375 = vld [vmem:[#allocation2 + $0x9e8] sm:$0xff]
    %v376 = vld [vmem:[#allocation2 + $0x9f0] sm:$0xff]
    %v377 = vld [vmem:[#allocation2 + $0x9f8] sm:$0xff]
    %v378 = vld [vmem:[#allocation2 + $0xa00] sm:$0xff]
    %v379 = vld [vmem:[#allocation2 + $0xa08] sm:$0xff]
    %v380 = vld [vmem:[#allocation2 + $0xa10] sm:$0xff]
    %v381 = vld [vmem:[#allocation2 + $0xa18] sm:$0xff]
    %v382 = vld [vmem:[#allocation2 + $0xa20] sm:$0xff]
    %v383 = vld [vmem:[#allocation2 + $0xa28] sm:$0xff]
    %v384 = vld [vmem:[#allocation2 + $0xa30] sm:$0xff]
    %v385 = vld [vmem:[#allocation2 + $0xa38] sm:$0xff]
    %v386 = vld [vmem:[#allocation2 + $0xa40] sm:$0xff]
    %v387 = vld [vmem:[#allocation2 + $0xa48] sm:$0xff]
    %v388 = vld [vmem:[#allocation2 + $0xa50] sm:$0xff]
    %v389 = vld [vmem:[#allocation2 + $0xa58] sm:$0xff]
    %v390 = vld [vmem:[#allocation2 + $0xa60] sm:$0xff]
    %v391 = vld [vmem:[#allocation2 + $0xa68] sm:$0xff]
    %v392 = vld [vmem:[#allocation2 + $0xa70] sm:$0xff]
    %v393 = vld [vmem:[#allocation2 + $0xa78] sm:$0xff]
    %v394 = vld [vmem:[#allocation2 + $0xa80] sm:$0xff]
    %v395 = vld [vmem:[#allocation2 + $0xa88] sm:$0xff]
    %v396 = vld [vmem:[#allocation2 + $0xa90] sm:$0xff]
    %v397 = vld [vmem:[#allocation2 + $0xa98] sm:$0xff]
    %v398 = vld [vmem:[#allocation2 + $0xaa0] sm:$0xff]
    %v399 = vld [vmem:[#allocation2 + $0xaa8] sm:$0xff]
    %v400 = vld [vmem:[#allocation2 + $0xab0] sm:$0xff]
    %v401 = vld [vmem:[#allocation2 + $0xab8] sm:$0xff]
    %v402 = vld [vmem:[#allocation2 + $0xac0] sm:$0xff]
    %v403 = vld [vmem:[#allocation2 + $0xac8] sm:$0xff]
    %v404 = vld [vmem:[#allocation2 + $0xad0] sm:$0xff]
    %v405 = vld [vmem:[#allocation2 + $0xad8] sm:$0xff]
    %v406 = vld [vmem:[#allocation2 + $0xae0] sm:$0xff]
    %v407 = vld [vmem:[#allocation2 + $0xae8] sm:$0xff]
    %v408 = vld [vmem:[#allocation2 + $0xaf0] sm:$0xff]
    %v409 = vld [vmem:[#allocation2 + $0xaf8] sm:$0xff]
    %v410 = vld [vmem:[#allocation2 + $0xb00] sm:$0xff]
    %v411 = vld [vmem:[#allocation2 + $0xb08] sm:$0xff]
    %v412 = vld [vmem:[#allocation2 + $0xb10] sm:$0xff]
    %v413 = vld [vmem:[#allocation2 + $0xb18] sm:$0xff]
    %v414 = vld [vmem:[#allocation2 + $0xb20] sm:$0xff]
    %v415 = vld [vmem:[#allocation2 + $0xb28] sm:$0xff]
    %v416 = vld [vmem:[#allocation2 + $0xb30] sm:$0xff]
    %v417 = vld [vmem:[#allocation2 + $0xb38] sm:$0xff]
    %v418 = vld [vmem:[#allocation2 + $0xb40] sm:$0xff]
    %v419 = vld [vmem:[#allocation2 + $0xb48] sm:$0xff]
    %v420 = vld [vmem:[#allocation2 + $0xb50] sm:$0xff]
    %v421 = vld [vmem:[#allocation2 + $0xb58] sm:$0xff]
    %v422 = vld [vmem:[#allocation2 + $0xb60] sm:$0xff]
    %v423 = vld [vmem:[#allocation2 + $0xb68] sm:$0xff]
    %v424 = vld [vmem:[#allocation2 + $0xb70] sm:$0xff]
    %v425 = vld [vmem:[#allocation2 + $0xb78] sm:$0xff]
    %v426 = vld [vmem:[#allocation2 + $0xb80] sm:$0xff]
    %v427 = vld [vmem:[#allocation2 + $0xb88] sm:$0xff]
    %v428 = vld [vmem:[#allocation2 + $0xb90] sm:$0xff]
    %v429 = vld [vmem:[#allocation2 + $0xb98] sm:$0xff]
    %v430 = vld [vmem:[#allocation2 + $0xba0] sm:$0xff]
    %v431 = vld [vmem:[#allocation2 + $0xba8] sm:$0xff]
    %v432 = vld [vmem:[#allocation2 + $0xbb0] sm:$0xff]
    %v433 = vld [vmem:[#allocation2 + $0xbb8] sm:$0xff]
    %v434 = vld [vmem:[#allocation2 + $0xbc0] sm:$0xff]
    %v435 = vld [vmem:[#allocation2 + $0xbc8] sm:$0xff]
    %v436 = vld [vmem:[#allocation2 + $0xbd0] sm:$0xff]
    %v437 = vld [vmem:[#allocation2 + $0xbd8] sm:$0xff]
    %v438 = vld [vmem:[#allocation2 + $0xbe0] sm:$0xff]
    %v439 = vld [vmem:[#allocation2 + $0xbe8] sm:$0xff]
    %v440 = vld [vmem:[#allocation2 + $0xbf0] sm:$0xff]
    %v441 = vld [vmem:[#allocation2 + $0xbf8] sm:$0xff]
    %v442 = vld [vmem:[#allocation2 + $0xc00] sm:$0xff]
    %v443 = vld [vmem:[#allocation2 + $0xc08] sm:$0xff]
    %v444 = vld [vmem:[#allocation2 + $0xc10] sm:$0xff]
    %v445 = vld [vmem:[#allocation2 + $0xc18] sm:$0xff]
    %v446 = vld [vmem:[#allocation2 + $0xc20] sm:$0xff]
    %v447 = vld [vmem:[#allocation2 + $0xc28] sm:$0xff]
    %v448 = vld [vmem:[#allocation2 + $0xc30] sm:$0xff]
    %v449 = vld [vmem:[#allocation2 + $0xc38] sm:$0xff]
    %v450 = vld [vmem:[#allocation2 + $0xc40] sm:$0xff]
    %v451 = vld [vmem:[#allocation2 + $0xc48] sm:$0xff]
    %v452 = vld [vmem:[#allocation2 + $0xc50] sm:$0xff]
    %v453 = vld [vmem:[#allocation2 + $0xc58] sm:$0xff]
    %v454 = vld [vmem:[#allocation2 + $0xc60] sm:$0xff]
    %v455 = vld [vmem:[#allocation2 + $0xc68] sm:$0xff]
    %v456 = vld [vmem:[#allocation2 + $0xc70] sm:$0xff]
    %v457 = vld [vmem:[#allocation2 + $0xc78] sm:$0xff]
    %v458 = vld [vmem:[#allocation2 + $0xc80] sm:$0xff]
    %v459 = vld [vmem:[#allocation2 + $0xc88] sm:$0xff]
    %v460 = vld [vmem:[#allocation2 + $0xc90] sm:$0xff]
    %v461 = vld [vmem:[#allocation2 + $0xc98] sm:$0xff]
    %v462 = vld [vmem:[#allocation2 + $0xca0] sm:$0xff]
    %v463 = vld [vmem:[#allocation2 + $0xca8] sm:$0xff]
    %v464 = vld [vmem:[#allocation2 + $0xcb0] sm:$0xff]
    %v465 = vld [vmem:[#allocation2 + $0xcb8] sm:$0xff]
    %v466 = vld [vmem:[#allocation2 + $0xcc0] sm:$0xff]
    %v467 = vld [vmem:[#allocation2 + $0xcc8] sm:$0xff]
    %v468 = vld [vmem:[#allocation2 + $0xcd0] sm:$0xff]
    %v469 = vld [vmem:[#allocation2 + $0xcd8] sm:$0xff]
    %v470 = vld [vmem:[#allocation2 + $0xce0] sm:$0xff]
    %v471 = vld [vmem:[#allocation2 + $0xce8] sm:$0xff]
    %v472 = vld [vmem:[#allocation2 + $0xcf0] sm:$0xff]
    %v473 = vld [vmem:[#allocation2 + $0xcf8] sm:$0xff]
    %v474 = vld [vmem:[#allocation2 + $0xd00] sm:$0xff]
    %v475 = vld [vmem:[#allocation2 + $0xd08] sm:$0xff]
    %v476 = vld [vmem:[#allocation2 + $0xd10] sm:$0xff]
    %v477 = vld [vmem:[#allocation2 + $0xd18] sm:$0xff]
    %v478 = vld [vmem:[#allocation2 + $0xd20] sm:$0xff]
    %v479 = vld [vmem:[#allocation2 + $0xd28] sm:$0xff]
    %v480 = vld [vmem:[#allocation2 + $0xd30] sm:$0xff]
    %v481 = vld [vmem:[#allocation2 + $0xd38] sm:$0xff]
    %v482 = vld [vmem:[#allocation2 + $0xd40] sm:$0xff]
    %v483 = vld [vmem:[#allocation2 + $0xd48] sm:$0xff]
    %v484 = vld [vmem:[#allocation2 + $0xd50] sm:$0xff]
    %v485 = vld [vmem:[#allocation2 + $0xd58] sm:$0xff]
    %v486 = vld [vmem:[#allocation2 + $0xd60] sm:$0xff]
    %v487 = vld [vmem:[#allocation2 + $0xd68] sm:$0xff]
    %v488 = vld [vmem:[#allocation2 + $0xd70] sm:$0xff]
    %v489 = vld [vmem:[#allocation2 + $0xd78] sm:$0xff]
    %v490 = vld [vmem:[#allocation2 + $0xd80] sm:$0xff]
    %v491 = vld [vmem:[#allocation2 + $0xd88] sm:$0xff]
    %v492 = vld [vmem:[#allocation2 + $0xd90] sm:$0xff]
    %v493 = vld [vmem:[#allocation2 + $0xd98] sm:$0xff]
    %v494 = vld [vmem:[#allocation2 + $0xda0] sm:$0xff]
    %v495 = vld [vmem:[#allocation2 + $0xda8] sm:$0xff]
    %v496 = vld [vmem:[#allocation2 + $0xdb0] sm:$0xff]
    %v497 = vld [vmem:[#allocation2 + $0xdb8] sm:$0xff]
    %v498 = vld [vmem:[#allocation2 + $0xdc0] sm:$0xff]
    %v499 = vld [vmem:[#allocation2 + $0xdc8] sm:$0xff]
    %v500 = vld [vmem:[#allocation2 + $0xdd0] sm:$0xff]
    %v501 = vld [vmem:[#allocation2 + $0xdd8] sm:$0xff]
    %v502 = vld [vmem:[#allocation2 + $0xde0] sm:$0xff]
    %v503 = vld [vmem:[#allocation2 + $0xde8] sm:$0xff]
    %v504 = vld [vmem:[#allocation2 + $0xdf0] sm:$0xff]
    %v505 = vld [vmem:[#allocation2 + $0xdf8] sm:$0xff]
    %v506 = vld [vmem:[#allocation2 + $0xe00] sm:$0xff]
    %v507 = vld [vmem:[#allocation2 + $0xe08] sm:$0xff]
    %v508 = vld [vmem:[#allocation2 + $0xe10] sm:$0xff]
    %v509 = vld [vmem:[#allocation2 + $0xe18] sm:$0xff]
    %v510 = vld [vmem:[#allocation2 + $0xe20] sm:$0xff]
    %v511 = vld [vmem:[#allocation2 + $0xe28] sm:$0xff]
    %v512 = vld [vmem:[#allocation2 + $0xe30] sm:$0xff]
    %v513 = vld [vmem:[#allocation2 + $0xe38] sm:$0xff]
    %v514 = vld [vmem:[#allocation2 + $0xe40] sm:$0xff]
    %v515 = vld [vmem:[#allocation2 + $0xe48] sm:$0xff]
    %v516 = vld [vmem:[#allocation2 + $0xe50] sm:$0xff]
    %v517 = vld [vmem:[#allocation2 + $0xe58] sm:$0xff]
    %v518 = vld [vmem:[#allocation2 + $0xe60] sm:$0xff]
    %v519 = vld [vmem:[#allocation2 + $0xe68] sm:$0xff]
    %v520 = vld [vmem:[#allocation2 + $0xe70] sm:$0xff]
    %v521 = vld [vmem:[#allocation2 + $0xe78] sm:$0xff]
    %v522 = vld [vmem:[#allocation2 + $0xe80] sm:$0xff]
    %v523 = vld [vmem:[#allocation2 + $0xe88] sm:$0xff]
    %v524 = vld [vmem:[#allocation2 + $0xe90] sm:$0xff]
    %v525 = vld [vmem:[#allocation2 + $0xe98] sm:$0xff]
    %v526 = vld [vmem:[#allocation2 + $0xea0] sm:$0xff]
    %v527 = vld [vmem:[#allocation2 + $0xea8] sm:$0xff]
    %v528 = vld [vmem:[#allocation2 + $0xeb0] sm:$0xff]
    %v529 = vld [vmem:[#allocation2 + $0xeb8] sm:$0xff]
    %v530 = vld [vmem:[#allocation2 + $0xec0] sm:$0xff]
    %v531 = vld [vmem:[#allocation2 + $0xec8] sm:$0xff]
    %v532 = vld [vmem:[#allocation2 + $0xed0] sm:$0xff]
    %v533 = vld [vmem:[#allocation2 + $0xed8] sm:$0xff]
    %v534 = vld [vmem:[#allocation2 + $0xee0] sm:$0xff]
    %v535 = vld [vmem:[#allocation2 + $0xee8] sm:$0xff]
    %v536 = vld [vmem:[#allocation2 + $0xef0] sm:$0xff]
    %v537 = vld [vmem:[#allocation2 + $0xef8] sm:$0xff]
    %v538 = vld [vmem:[#allocation2 + $0xf00] sm:$0xff]
    %v539 = vld [vmem:[#allocation2 + $0xf08] sm:$0xff]
    %v540 = vld [vmem:[#allocation2 + $0xf10] sm:$0xff]
    %v541 = vld [vmem:[#allocation2 + $0xf18] sm:$0xff]
    %v542 = vld [vmem:[#allocation2 + $0xf20] sm:$0xff]
    %v543 = vld [vmem:[#allocation2 + $0xf28] sm:$0xff]
    %v544 = vld [vmem:[#allocation2 + $0xf30] sm:$0xff]
    %v545 = vld [vmem:[#allocation2 + $0xf38] sm:$0xff]
    %v546 = vld [vmem:[#allocation2 + $0xf40] sm:$0xff]
    %v547 = vld [vmem:[#allocation2 + $0xf48] sm:$0xff]
    %v548 = vld [vmem:[#allocation2 + $0xf50] sm:$0xff]
    %v549 = vld [vmem:[#allocation2 + $0xf58] sm:$0xff]
    %v550 = vld [vmem:[#allocation2 + $0xf60] sm:$0xff]
    %v551 = vld [vmem:[#allocation2 + $0xf68] sm:$0xff]
    %v552 = vld [vmem:[#allocation2 + $0xf70] sm:$0xff]
    %v553 = vld [vmem:[#allocation2 + $0xf78] sm:$0xff]
    %v554 = vld [vmem:[#allocation2 + $0xf80] sm:$0xff]
    %v555 = vld [vmem:[#allocation2 + $0xf88] sm:$0xff]
    %v556 = vld [vmem:[#allocation2 + $0xf90] sm:$0xff]
    %v557 = vld [vmem:[#allocation2 + $0xf98] sm:$0xff]
    %v558 = vld [vmem:[#allocation2 + $0xfa0] sm:$0xff]
    %v559 = vld [vmem:[#allocation2 + $0xfa8] sm:$0xff]
    %v560 = vld [vmem:[#allocation2 + $0xfb0] sm:$0xff]
    %v561 = vld [vmem:[#allocation2 + $0xfb8] sm:$0xff]
    %v562 = vld [vmem:[#allocation2 + $0xfc0] sm:$0xff]
    %v563 = vld [vmem:[#allocation2 + $0xfc8] sm:$0xff]
    %v564 = vld [vmem:[#allocation2 + $0xfd0] sm:$0xff]
    %v565 = vld [vmem:[#allocation2 + $0xfd8] sm:$0xff]
    %v566 = vld [vmem:[#allocation2 + $0xfe0] sm:$0xff]
    %v567 = vld [vmem:[#allocation2 + $0xfe8] sm:$0xff]
    %v568 = vld [vmem:[#allocation2 + $0xff0] sm:$0xff]
    %v569 = vld [vmem:[#allocation2 + $0xff8] sm:$0xff]
    %v570 = vld [vmem:[#allocation2 + $0x1000] sm:$0xff]
    %v571 = vld [vmem:[#allocation2 + $0x1008] sm:$0xff]
    %v572 = vld [vmem:[#allocation2 + $0x1010] sm:$0xff]
    %v573 = vld [vmem:[#allocation2 + $0x1018] sm:$0xff]
    %v574 = vld [vmem:[#allocation2 + $0x1020] sm:$0xff]
    %v575 = vld [vmem:[#allocation2 + $0x1028] sm:$0xff]
    %v576 = vld [vmem:[#allocation2 + $0x1030] sm:$0xff]
    %v577 = vld [vmem:[#allocation2 + $0x1038] sm:$0xff]
    %v578 = vld [vmem:[#allocation2 + $0x1040] sm:$0xff]
    %v579 = vld [vmem:[#allocation2 + $0x1048] sm:$0xff]
    %v580 = vld [vmem:[#allocation2 + $0x1050] sm:$0xff]
    %v581 = vld [vmem:[#allocation2 + $0x1058] sm:$0xff]
    %v582 = vld [vmem:[#allocation2 + $0x1060] sm:$0xff]
    %v583 = vld [vmem:[#allocation2 + $0x1068] sm:$0xff]
    %v584 = vld [vmem:[#allocation2 + $0x1070] sm:$0xff]
    %v585 = vld [vmem:[#allocation2 + $0x1078] sm:$0xff]
    %v586 = vld [vmem:[#allocation2 + $0x1080] sm:$0xff]
    %v587 = vld [vmem:[#allocation2 + $0x1088] sm:$0xff]
    %v588 = vld [vmem:[#allocation2 + $0x1090] sm:$0xff]
    %v589 = vld [vmem:[#allocation2 + $0x1098] sm:$0xff]
    %v590 = vld [vmem:[#allocation2 + $0x10a0] sm:$0xff]
    %v591 = vld [vmem:[#allocation2 + $0x10a8] sm:$0xff]
    %v592 = vld [vmem:[#allocation2 + $0x10b0] sm:$0xff]
    %v593 = vld [vmem:[#allocation2 + $0x10b8] sm:$0xff]
    %v594 = vld [vmem:[#allocation2 + $0x10c0] sm:$0xff]
    %v595 = vld [vmem:[#allocation2 + $0x10c8] sm:$0xff]
    %v596 = vld [vmem:[#allocation2 + $0x10d0] sm:$0xff]
    %v597 = vld [vmem:[#allocation2 + $0x10d8] sm:$0xff]
    %v598 = vld [vmem:[#allocation2 + $0x10e0] sm:$0xff]
    %v599 = vld [vmem:[#allocation2 + $0x10e8] sm:$0xff]
    %v600 = vld [vmem:[#allocation2 + $0x10f0] sm:$0xff]
    %v601 = vld [vmem:[#allocation2 + $0x10f8] sm:$0xff]
    %v602 = vld [vmem:[#allocation2 + $0x1100] sm:$0xff]
    %v603 = vld [vmem:[#allocation2 + $0x1108] sm:$0xff]
    %v604 = vld [vmem:[#allocation2 + $0x1110] sm:$0xff]
    %v605 = vld [vmem:[#allocation2 + $0x1118] sm:$0xff]
    %v606 = vld [vmem:[#allocation2 + $0x1120] sm:$0xff]
    %v607 = vld [vmem:[#allocation2 + $0x1128] sm:$0xff]
    %v608 = vld [vmem:[#allocation2 + $0x1130] sm:$0xff]
    %v609 = vld [vmem:[#allocation2 + $0x1138] sm:$0xff]
    %v610 = vld [vmem:[#allocation2 + $0x1140] sm:$0xff]
    %v611 = vld [vmem:[#allocation2 + $0x1148] sm:$0xff]
    %v612 = vld [vmem:[#allocation2 + $0x1150] sm:$0xff]
    %v613 = vld [vmem:[#allocation2 + $0x1158] sm:$0xff]
    %v614 = vld [vmem:[#allocation2 + $0x1160] sm:$0xff]
    %v615 = vld [vmem:[#allocation2 + $0x1168] sm:$0xff]
    %v616 = vld [vmem:[#allocation2 + $0x1170] sm:$0xff]
    %v617 = vld [vmem:[#allocation2 + $0x1178] sm:$0xff]
    %v618 = vld [vmem:[#allocation2 + $0x1180] sm:$0xff]
    %v619 = vld [vmem:[#allocation2 + $0x1188] sm:$0xff]
    %v620 = vld [vmem:[#allocation2 + $0x1190] sm:$0xff]
    %v621 = vld [vmem:[#allocation2 + $0x1198] sm:$0xff]
    %v622 = vld [vmem:[#allocation2 + $0x11a0] sm:$0xff]
    %v623 = vld [vmem:[#allocation2 + $0x11a8] sm:$0xff]
    %v624 = vld [vmem:[#allocation2 + $0x11b0] sm:$0xff]
    %v625 = vld [vmem:[#allocation2 + $0x11b8] sm:$0xff]
    %v626 = vld [vmem:[#allocation2 + $0x11c0] sm:$0xff]
    %v627 = vld [vmem:[#allocation2 + $0x11c8] sm:$0xff]
    %v628 = vld [vmem:[#allocation2 + $0x11d0] sm:$0xff]
    %v629 = vld [vmem:[#allocation2 + $0x11d8] sm:$0xff]
    %v630 = vld [vmem:[#allocation2 + $0x11e0] sm:$0xff]
    %v631 = vld [vmem:[#allocation2 + $0x11e8] sm:$0xff]
    %v632 = vld [vmem:[#allocation2 + $0x11f0] sm:$0xff]
    %v633 = vld [vmem:[#allocation2 + $0x11f8] sm:$0xff]
    %v634 = vld [vmem:[#allocation4] sm:$0xf]
    %v636 = vlaneseq
    %v637 = vshrl.u32 %v636, 7
    %v638 = vsub.s32 0, %v637
    %v639 = vrot.slane %v634, %v638
    %v640 = vlaneseq
    %v641 = vshrl.u32 %v640, 7
    %v642 = vsub.s32 1, %v641
    %v643 = vrot.slane %v634, %v642
    %v644 = vlaneseq
    %v645 = vshrl.u32 %v644, 7
    %v646 = vsub.s32 2, %v645
    %v647 = vrot.slane %v634, %v646
    %v648 = vlaneseq
    %v649 = vshrl.u32 %v648, 7
    %v650 = vsub.s32 3, %v649
    %v651 = vrot.slane %v634, %v650
    %v674 = vunpack.c.l.b16 %v40
    %v675 = vunpack.c.h.b16 %v40
    %v676 = vunpack.c.l.b16 %v41
    %v677 = vunpack.c.h.b16 %v41
    %v678 = vunpack.c.l.b16 %v42
    %v679 = vunpack.c.h.b16 %v42
    %v680 = vunpack.c.l.b16 %v43
    %v681 = vunpack.c.h.b16 %v43
    %v682 = vunpack.c.l.b16 %v44
    %v683 = vunpack.c.h.b16 %v44
    %v684 = vunpack.c.l.b16 %v45
    %v685 = vunpack.c.h.b16 %v45
    %v686 = vunpack.c.l.b16 %v46
    %v687 = vunpack.c.h.b16 %v46
    %v688 = vunpack.c.l.b16 %v47
    %v689 = vunpack.c.h.b16 %v47
    %v690 = vunpack.c.l.b16 %v48
    %v691 = vunpack.c.h.b16 %v48
    %v692 = vunpack.c.l.b16 %v49
    %v693 = vunpack.c.h.b16 %v49
    %v694 = vunpack.c.l.b16 %v50
    %v695 = vunpack.c.h.b16 %v50
    %v696 = vunpack.c.l.b16 %v51
    %v697 = vunpack.c.h.b16 %v51
    %v698 = vunpack.c.l.b16 %v52
    %v699 = vunpack.c.h.b16 %v52
    %v700 = vunpack.c.l.b16 %v53
    %v701 = vunpack.c.h.b16 %v53
    %v702 = vunpack.c.l.b16 %v54
    %v703 = vunpack.c.h.b16 %v54
    %v704 = vunpack.c.l.b16 %v55
    %v705 = vunpack.c.h.b16 %v55
    %v706 = vunpack.c.l.b16 %v56
    %v707 = vunpack.c.h.b16 %v56
    %v708 = vunpack.c.l.b16 %v57
    %v709 = vunpack.c.h.b16 %v57
    %v710 = vpack.c.b16 %v692, %v674
    %v711 = vpack.c.b16 %v693, %v675
    %v712 = vpack.c.b16 %v694, %v676
    %v713 = vpack.c.b16 %v695, %v677
    %v714 = vpack.c.b16 %v696, %v678
    %v715 = vpack.c.b16 %v697, %v679
    %v716 = vpack.c.b16 %v698, %v680
    %v717 = vpack.c.b16 %v699, %v681
    %v718 = vpack.c.b16 %v700, %v682
    %v719 = vpack.c.b16 %v701, %v683
    %v720 = vpack.c.b16 %v702, %v684
    %v721 = vpack.c.b16 %v703, %v685
    %v722 = vpack.c.b16 %v704, %v686
    %v723 = vpack.c.b16 %v705, %v687
    %v724 = vpack.c.b16 %v706, %v688
    %v725 = vpack.c.b16 %v707, %v689
    %v726 = vpack.c.b16 %v708, %v690
    %v727 = vpack.c.b16 %v709, %v691
    %v1322 = vunpack.c.l.b16 %v58
    %v1323 = vunpack.c.h.b16 %v58
    %v1324 = vunpack.c.l.b16 %v59
    %v1325 = vunpack.c.h.b16 %v59
    %v1326 = vunpack.c.l.b16 %v60
    %v1327 = vunpack.c.h.b16 %v60
    %v1328 = vunpack.c.l.b16 %v61
    %v1329 = vunpack.c.h.b16 %v61
    %v1330 = vunpack.c.l.b16 %v62
    %v1331 = vunpack.c.h.b16 %v62
    %v1332 = vunpack.c.l.b16 %v63
    %v1333 = vunpack.c.h.b16 %v63
    %v1334 = vunpack.c.l.b16 %v64
    %v1335 = vunpack.c.h.b16 %v64
    %v1336 = vunpack.c.l.b16 %v65
    %v1337 = vunpack.c.h.b16 %v65
    %v1338 = vunpack.c.l.b16 %v66
    %v1339 = vunpack.c.h.b16 %v66
    %v1340 = vunpack.c.l.b16 %v67
    %v1341 = vunpack.c.h.b16 %v67
    %v1342 = vunpack.c.l.b16 %v68
    %v1343 = vunpack.c.h.b16 %v68
    %v1344 = vunpack.c.l.b16 %v69
    %v1345 = vunpack.c.h.b16 %v69
    %v1346 = vunpack.c.l.b16 %v70
    %v1347 = vunpack.c.h.b16 %v70
    %v1348 = vunpack.c.l.b16 %v71
    %v1349 = vunpack.c.h.b16 %v71
    %v1350 = vunpack.c.l.b16 %v72
    %v1351 = vunpack.c.h.b16 %v72
    %v1352 = vunpack.c.l.b16 %v73
    %v1353 = vunpack.c.h.b16 %v73
    %v1354 = vunpack.c.l.b16 %v74
    %v1355 = vunpack.c.h.b16 %v74
    %v1356 = vunpack.c.l.b16 %v75
    %v1357 = vunpack.c.h.b16 %v75
    %v1358 = vunpack.c.l.b16 %v76
    %v1359 = vunpack.c.h.b16 %v76
    %v1360 = vunpack.c.l.b16 %v77
    %v1361 = vunpack.c.h.b16 %v77
    %v1362 = vunpack.c.l.b16 %v78
    %v1363 = vunpack.c.h.b16 %v78
    %v1364 = vunpack.c.l.b16 %v79
    %v1365 = vunpack.c.h.b16 %v79
    %v1366 = vunpack.c.l.b16 %v80
    %v1367 = vunpack.c.h.b16 %v80
    %v1368 = vunpack.c.l.b16 %v81
    %v1369 = vunpack.c.h.b16 %v81
    %v1370 = vunpack.c.l.b16 %v82
    %v1371 = vunpack.c.h.b16 %v82
    %v1372 = vunpack.c.l.b16 %v83
    %v1373 = vunpack.c.h.b16 %v83
    %v1374 = vunpack.c.l.b16 %v84
    %v1375 = vunpack.c.h.b16 %v84
    %v1376 = vunpack.c.l.b16 %v85
    %v1377 = vunpack.c.h.b16 %v85
    %v1378 = vunpack.c.l.b16 %v86
    %v1379 = vunpack.c.h.b16 %v86
    %v1380 = vunpack.c.l.b16 %v87
    %v1381 = vunpack.c.h.b16 %v87
    %v1382 = vunpack.c.l.b16 %v88
    %v1383 = vunpack.c.h.b16 %v88
    %v1384 = vunpack.c.l.b16 %v89
    %v1385 = vunpack.c.h.b16 %v89
    %v1386 = vunpack.c.l.b16 %v90
    %v1387 = vunpack.c.h.b16 %v90
    %v1388 = vunpack.c.l.b16 %v91
    %v1389 = vunpack.c.h.b16 %v91
    %v1390 = vunpack.c.l.b16 %v92
    %v1391 = vunpack.c.h.b16 %v92
    %v1392 = vunpack.c.l.b16 %v93
    %v1393 = vunpack.c.h.b16 %v93
    %v1394 = vunpack.c.l.b16 %v94
    %v1395 = vunpack.c.h.b16 %v94
    %v1396 = vunpack.c.l.b16 %v95
    %v1397 = vunpack.c.h.b16 %v95
    %v1398 = vunpack.c.l.b16 %v96
    %v1399 = vunpack.c.h.b16 %v96
    %v1400 = vunpack.c.l.b16 %v97
    %v1401 = vunpack.c.h.b16 %v97
    %v1402 = vunpack.c.l.b16 %v98
    %v1403 = vunpack.c.h.b16 %v98
    %v1404 = vunpack.c.l.b16 %v99
    %v1405 = vunpack.c.h.b16 %v99
    %v1406 = vunpack.c.l.b16 %v100
    %v1407 = vunpack.c.h.b16 %v100
    %v1408 = vunpack.c.l.b16 %v101
    %v1409 = vunpack.c.h.b16 %v101
    %v1410 = vunpack.c.l.b16 %v102
    %v1411 = vunpack.c.h.b16 %v102
    %v1412 = vunpack.c.l.b16 %v103
    %v1413 = vunpack.c.h.b16 %v103
    %v1414 = vunpack.c.l.b16 %v104
    %v1415 = vunpack.c.h.b16 %v104
    %v1416 = vunpack.c.l.b16 %v105
    %v1417 = vunpack.c.h.b16 %v105
    %v1418 = vunpack.c.l.b16 %v106
    %v1419 = vunpack.c.h.b16 %v106
    %v1420 = vunpack.c.l.b16 %v107
    %v1421 = vunpack.c.h.b16 %v107
    %v1422 = vunpack.c.l.b16 %v108
    %v1423 = vunpack.c.h.b16 %v108
    %v1424 = vunpack.c.l.b16 %v109
    %v1425 = vunpack.c.h.b16 %v109
    %v1426 = vunpack.c.l.b16 %v110
    %v1427 = vunpack.c.h.b16 %v110
    %v1428 = vunpack.c.l.b16 %v111
    %v1429 = vunpack.c.h.b16 %v111
    %v1430 = vunpack.c.l.b16 %v112
    %v1431 = vunpack.c.h.b16 %v112
    %v1432 = vunpack.c.l.b16 %v113
    %v1433 = vunpack.c.h.b16 %v113
    %v1434 = vunpack.c.l.b16 %v114
    %v1435 = vunpack.c.h.b16 %v114
    %v1436 = vunpack.c.l.b16 %v115
    %v1437 = vunpack.c.h.b16 %v115
    %v1438 = vunpack.c.l.b16 %v116
    %v1439 = vunpack.c.h.b16 %v116
    %v1440 = vunpack.c.l.b16 %v117
    %v1441 = vunpack.c.h.b16 %v117
    %v1442 = vunpack.c.l.b16 %v118
    %v1443 = vunpack.c.h.b16 %v118
    %v1444 = vunpack.c.l.b16 %v119
    %v1445 = vunpack.c.h.b16 %v119
    %v1446 = vunpack.c.l.b16 %v120
    %v1447 = vunpack.c.h.b16 %v120
    %v1448 = vunpack.c.l.b16 %v121
    %v1449 = vunpack.c.h.b16 %v121
    %v1450 = vunpack.c.l.b16 %v122
    %v1451 = vunpack.c.h.b16 %v122
    %v1452 = vunpack.c.l.b16 %v123
    %v1453 = vunpack.c.h.b16 %v123
    %v1454 = vunpack.c.l.b16 %v124
    %v1455 = vunpack.c.h.b16 %v124
    %v1456 = vunpack.c.l.b16 %v125
    %v1457 = vunpack.c.h.b16 %v125
    %v1458 = vunpack.c.l.b16 %v126
    %v1459 = vunpack.c.h.b16 %v126
    %v1460 = vunpack.c.l.b16 %v127
    %v1461 = vunpack.c.h.b16 %v127
    %v1462 = vunpack.c.l.b16 %v128
    %v1463 = vunpack.c.h.b16 %v128
    %v1464 = vunpack.c.l.b16 %v129
    %v1465 = vunpack.c.h.b16 %v129
    %v1466 = vunpack.c.l.b16 %v130
    %v1467 = vunpack.c.h.b16 %v130
    %v1468 = vunpack.c.l.b16 %v131
    %v1469 = vunpack.c.h.b16 %v131
    %v1470 = vunpack.c.l.b16 %v132
    %v1471 = vunpack.c.h.b16 %v132
    %v1472 = vunpack.c.l.b16 %v133
    %v1473 = vunpack.c.h.b16 %v133
    %v1474 = vunpack.c.l.b16 %v134
    %v1475 = vunpack.c.h.b16 %v134
    %v1476 = vunpack.c.l.b16 %v135
    %v1477 = vunpack.c.h.b16 %v135
    %v1478 = vunpack.c.l.b16 %v136
    %v1479 = vunpack.c.h.b16 %v136
    %v1480 = vunpack.c.l.b16 %v137
    %v1481 = vunpack.c.h.b16 %v137
    %v1482 = vunpack.c.l.b16 %v138
    %v1483 = vunpack.c.h.b16 %v138
    %v1484 = vunpack.c.l.b16 %v139
    %v1485 = vunpack.c.h.b16 %v139
    %v1486 = vunpack.c.l.b16 %v140
    %v1487 = vunpack.c.h.b16 %v140
    %v1488 = vunpack.c.l.b16 %v141
    %v1489 = vunpack.c.h.b16 %v141
    %v1490 = vunpack.c.l.b16 %v142
    %v1491 = vunpack.c.h.b16 %v142
    %v1492 = vunpack.c.l.b16 %v143
    %v1493 = vunpack.c.h.b16 %v143
    %v1494 = vunpack.c.l.b16 %v144
    %v1495 = vunpack.c.h.b16 %v144
    %v1496 = vunpack.c.l.b16 %v145
    %v1497 = vunpack.c.h.b16 %v145
    %v1498 = vunpack.c.l.b16 %v146
    %v1499 = vunpack.c.h.b16 %v146
    %v1500 = vunpack.c.l.b16 %v147
    %v1501 = vunpack.c.h.b16 %v147
    %v1502 = vunpack.c.l.b16 %v148
    %v1503 = vunpack.c.h.b16 %v148
    %v1504 = vunpack.c.l.b16 %v149
    %v1505 = vunpack.c.h.b16 %v149
    %v1506 = vunpack.c.l.b16 %v150
    %v1507 = vunpack.c.h.b16 %v150
    %v1508 = vunpack.c.l.b16 %v151
    %v1509 = vunpack.c.h.b16 %v151
    %v1510 = vunpack.c.l.b16 %v152
    %v1511 = vunpack.c.h.b16 %v152
    %v1512 = vunpack.c.l.b16 %v153
    %v1513 = vunpack.c.h.b16 %v153
    %v1514 = vunpack.c.l.b16 %v154
    %v1515 = vunpack.c.h.b16 %v154
    %v1516 = vunpack.c.l.b16 %v155
    %v1517 = vunpack.c.h.b16 %v155
    %v1518 = vunpack.c.l.b16 %v156
    %v1519 = vunpack.c.h.b16 %v156
    %v1520 = vunpack.c.l.b16 %v157
    %v1521 = vunpack.c.h.b16 %v157
    %v1522 = vunpack.c.l.b16 %v158
    %v1523 = vunpack.c.h.b16 %v158
    %v1524 = vunpack.c.l.b16 %v159
    %v1525 = vunpack.c.h.b16 %v159
    %v1526 = vunpack.c.l.b16 %v160
    %v1527 = vunpack.c.h.b16 %v160
    %v1528 = vunpack.c.l.b16 %v161
    %v1529 = vunpack.c.h.b16 %v161
    %v1530 = vunpack.c.l.b16 %v162
    %v1531 = vunpack.c.h.b16 %v162
    %v1532 = vunpack.c.l.b16 %v163
    %v1533 = vunpack.c.h.b16 %v163
    %v1534 = vunpack.c.l.b16 %v164
    %v1535 = vunpack.c.h.b16 %v164
    %v1536 = vunpack.c.l.b16 %v165
    %v1537 = vunpack.c.h.b16 %v165
    %v1538 = vunpack.c.l.b16 %v166
    %v1539 = vunpack.c.h.b16 %v166
    %v1540 = vunpack.c.l.b16 %v167
    %v1541 = vunpack.c.h.b16 %v167
    %v1542 = vunpack.c.l.b16 %v168
    %v1543 = vunpack.c.h.b16 %v168
    %v1544 = vunpack.c.l.b16 %v169
    %v1545 = vunpack.c.h.b16 %v169
    %v1546 = vunpack.c.l.b16 %v170
    %v1547 = vunpack.c.h.b16 %v170
    %v1548 = vunpack.c.l.b16 %v171
    %v1549 = vunpack.c.h.b16 %v171
    %v1550 = vunpack.c.l.b16 %v172
    %v1551 = vunpack.c.h.b16 %v172
    %v1552 = vunpack.c.l.b16 %v173
    %v1553 = vunpack.c.h.b16 %v173
    %v1554 = vunpack.c.l.b16 %v174
    %v1555 = vunpack.c.h.b16 %v174
    %v1556 = vunpack.c.l.b16 %v175
    %v1557 = vunpack.c.h.b16 %v175
    %v1558 = vunpack.c.l.b16 %v176
    %v1559 = vunpack.c.h.b16 %v176
    %v1560 = vunpack.c.l.b16 %v177
    %v1561 = vunpack.c.h.b16 %v177
    %v1562 = vunpack.c.l.b16 %v178
    %v1563 = vunpack.c.h.b16 %v178
    %v1564 = vunpack.c.l.b16 %v179
    %v1565 = vunpack.c.h.b16 %v179
    %v1566 = vunpack.c.l.b16 %v180
    %v1567 = vunpack.c.h.b16 %v180
    %v1568 = vunpack.c.l.b16 %v181
    %v1569 = vunpack.c.h.b16 %v181
    %v1570 = vunpack.c.l.b16 %v182
    %v1571 = vunpack.c.h.b16 %v182
    %v1572 = vunpack.c.l.b16 %v183
    %v1573 = vunpack.c.h.b16 %v183
    %v1574 = vunpack.c.l.b16 %v184
    %v1575 = vunpack.c.h.b16 %v184
    %v1576 = vunpack.c.l.b16 %v185
    %v1577 = vunpack.c.h.b16 %v185
    %v1578 = vunpack.c.l.b16 %v186
    %v1579 = vunpack.c.h.b16 %v186
    %v1580 = vunpack.c.l.b16 %v187
    %v1581 = vunpack.c.h.b16 %v187
    %v1582 = vunpack.c.l.b16 %v188
    %v1583 = vunpack.c.h.b16 %v188
    %v1584 = vunpack.c.l.b16 %v189
    %v1585 = vunpack.c.h.b16 %v189
    %v1586 = vunpack.c.l.b16 %v190
    %v1587 = vunpack.c.h.b16 %v190
    %v1588 = vunpack.c.l.b16 %v191
    %v1589 = vunpack.c.h.b16 %v191
    %v1590 = vunpack.c.l.b16 %v192
    %v1591 = vunpack.c.h.b16 %v192
    %v1592 = vunpack.c.l.b16 %v193
    %v1593 = vunpack.c.h.b16 %v193
    %v1594 = vunpack.c.l.b16 %v194
    %v1595 = vunpack.c.h.b16 %v194
    %v1596 = vunpack.c.l.b16 %v195
    %v1597 = vunpack.c.h.b16 %v195
    %v1598 = vunpack.c.l.b16 %v196
    %v1599 = vunpack.c.h.b16 %v196
    %v1600 = vunpack.c.l.b16 %v197
    %v1601 = vunpack.c.h.b16 %v197
    %v1602 = vunpack.c.l.b16 %v198
    %v1603 = vunpack.c.h.b16 %v198
    %v1604 = vunpack.c.l.b16 %v199
    %v1605 = vunpack.c.h.b16 %v199
    %v1606 = vunpack.c.l.b16 %v200
    %v1607 = vunpack.c.h.b16 %v200
    %v1608 = vunpack.c.l.b16 %v201
    %v1609 = vunpack.c.h.b16 %v201
    %v1610 = vunpack.c.l.b16 %v202
    %v1611 = vunpack.c.h.b16 %v202
    %v1612 = vunpack.c.l.b16 %v203
    %v1613 = vunpack.c.h.b16 %v203
    %v1614 = vunpack.c.l.b16 %v204
    %v1615 = vunpack.c.h.b16 %v204
    %v1616 = vunpack.c.l.b16 %v205
    %v1617 = vunpack.c.h.b16 %v205
    %v1618 = vunpack.c.l.b16 %v206
    %v1619 = vunpack.c.h.b16 %v206
    %v1620 = vunpack.c.l.b16 %v207
    %v1621 = vunpack.c.h.b16 %v207
    %v1622 = vunpack.c.l.b16 %v208
    %v1623 = vunpack.c.h.b16 %v208
    %v1624 = vunpack.c.l.b16 %v209
    %v1625 = vunpack.c.h.b16 %v209
    %v1626 = vunpack.c.l.b16 %v210
    %v1627 = vunpack.c.h.b16 %v210
    %v1628 = vunpack.c.l.b16 %v211
    %v1629 = vunpack.c.h.b16 %v211
    %v1630 = vunpack.c.l.b16 %v212
    %v1631 = vunpack.c.h.b16 %v212
    %v1632 = vunpack.c.l.b16 %v213
    %v1633 = vunpack.c.h.b16 %v213
    %v1634 = vunpack.c.l.b16 %v214
    %v1635 = vunpack.c.h.b16 %v214
    %v1636 = vunpack.c.l.b16 %v215
    %v1637 = vunpack.c.h.b16 %v215
    %v1638 = vunpack.c.l.b16 %v216
    %v1639 = vunpack.c.h.b16 %v216
    %v1640 = vunpack.c.l.b16 %v217
    %v1641 = vunpack.c.h.b16 %v217
    %v1642 = vunpack.c.l.b16 %v218
    %v1643 = vunpack.c.h.b16 %v218
    %v1644 = vunpack.c.l.b16 %v219
    %v1645 = vunpack.c.h.b16 %v219
    %v1646 = vunpack.c.l.b16 %v220
    %v1647 = vunpack.c.h.b16 %v220
    %v1648 = vunpack.c.l.b16 %v221
    %v1649 = vunpack.c.h.b16 %v221
    %v1650 = vunpack.c.l.b16 %v222
    %v1651 = vunpack.c.h.b16 %v222
    %v1652 = vunpack.c.l.b16 %v223
    %v1653 = vunpack.c.h.b16 %v223
    %v1654 = vunpack.c.l.b16 %v224
    %v1655 = vunpack.c.h.b16 %v224
    %v1656 = vunpack.c.l.b16 %v225
    %v1657 = vunpack.c.h.b16 %v225
    %v1658 = vunpack.c.l.b16 %v226
    %v1659 = vunpack.c.h.b16 %v226
    %v1660 = vunpack.c.l.b16 %v227
    %v1661 = vunpack.c.h.b16 %v227
    %v1662 = vunpack.c.l.b16 %v228
    %v1663 = vunpack.c.h.b16 %v228
    %v1664 = vunpack.c.l.b16 %v229
    %v1665 = vunpack.c.h.b16 %v229
    %v1666 = vunpack.c.l.b16 %v230
    %v1667 = vunpack.c.h.b16 %v230
    %v1668 = vunpack.c.l.b16 %v231
    %v1669 = vunpack.c.h.b16 %v231
    %v1670 = vunpack.c.l.b16 %v232
    %v1671 = vunpack.c.h.b16 %v232
    %v1672 = vunpack.c.l.b16 %v233
    %v1673 = vunpack.c.h.b16 %v233
    %v1674 = vunpack.c.l.b16 %v234
    %v1675 = vunpack.c.h.b16 %v234
    %v1676 = vunpack.c.l.b16 %v235
    %v1677 = vunpack.c.h.b16 %v235
    %v1678 = vunpack.c.l.b16 %v236
    %v1679 = vunpack.c.h.b16 %v236
    %v1680 = vunpack.c.l.b16 %v237
    %v1681 = vunpack.c.h.b16 %v237
    %v1682 = vunpack.c.l.b16 %v238
    %v1683 = vunpack.c.h.b16 %v238
    %v1684 = vunpack.c.l.b16 %v239
    %v1685 = vunpack.c.h.b16 %v239
    %v1686 = vunpack.c.l.b16 %v240
    %v1687 = vunpack.c.h.b16 %v240
    %v1688 = vunpack.c.l.b16 %v241
    %v1689 = vunpack.c.h.b16 %v241
    %v1690 = vunpack.c.l.b16 %v242
    %v1691 = vunpack.c.h.b16 %v242
    %v1692 = vunpack.c.l.b16 %v243
    %v1693 = vunpack.c.h.b16 %v243
    %v1694 = vunpack.c.l.b16 %v244
    %v1695 = vunpack.c.h.b16 %v244
    %v1696 = vunpack.c.l.b16 %v245
    %v1697 = vunpack.c.h.b16 %v245
    %v1698 = vunpack.c.l.b16 %v246
    %v1699 = vunpack.c.h.b16 %v246
    %v1700 = vunpack.c.l.b16 %v247
    %v1701 = vunpack.c.h.b16 %v247
    %v1702 = vunpack.c.l.b16 %v248
    %v1703 = vunpack.c.h.b16 %v248
    %v1704 = vunpack.c.l.b16 %v249
    %v1705 = vunpack.c.h.b16 %v249
    %v1706 = vunpack.c.l.b16 %v250
    %v1707 = vunpack.c.h.b16 %v250
    %v1708 = vunpack.c.l.b16 %v251
    %v1709 = vunpack.c.h.b16 %v251
    %v1710 = vunpack.c.l.b16 %v252
    %v1711 = vunpack.c.h.b16 %v252
    %v1712 = vunpack.c.l.b16 %v253
    %v1713 = vunpack.c.h.b16 %v253
    %v1714 = vunpack.c.l.b16 %v254
    %v1715 = vunpack.c.h.b16 %v254
    %v1716 = vunpack.c.l.b16 %v255
    %v1717 = vunpack.c.h.b16 %v255
    %v1718 = vunpack.c.l.b16 %v256
    %v1719 = vunpack.c.h.b16 %v256
    %v1720 = vunpack.c.l.b16 %v257
    %v1721 = vunpack.c.h.b16 %v257
    %v1722 = vunpack.c.l.b16 %v258
    %v1723 = vunpack.c.h.b16 %v258
    %v1724 = vunpack.c.l.b16 %v259
    %v1725 = vunpack.c.h.b16 %v259
    %v1726 = vunpack.c.l.b16 %v260
    %v1727 = vunpack.c.h.b16 %v260
    %v1728 = vunpack.c.l.b16 %v261
    %v1729 = vunpack.c.h.b16 %v261
    %v1730 = vunpack.c.l.b16 %v262
    %v1731 = vunpack.c.h.b16 %v262
    %v1732 = vunpack.c.l.b16 %v263
    %v1733 = vunpack.c.h.b16 %v263
    %v1734 = vunpack.c.l.b16 %v264
    %v1735 = vunpack.c.h.b16 %v264
    %v1736 = vunpack.c.l.b16 %v265
    %v1737 = vunpack.c.h.b16 %v265
    %v1738 = vunpack.c.l.b16 %v266
    %v1739 = vunpack.c.h.b16 %v266
    %v1740 = vunpack.c.l.b16 %v267
    %v1741 = vunpack.c.h.b16 %v267
    %v1742 = vunpack.c.l.b16 %v268
    %v1743 = vunpack.c.h.b16 %v268
    %v1744 = vunpack.c.l.b16 %v269
    %v1745 = vunpack.c.h.b16 %v269
    %v1746 = vunpack.c.l.b16 %v270
    %v1747 = vunpack.c.h.b16 %v270
    %v1748 = vunpack.c.l.b16 %v271
    %v1749 = vunpack.c.h.b16 %v271
    %v1750 = vunpack.c.l.b16 %v272
    %v1751 = vunpack.c.h.b16 %v272
    %v1752 = vunpack.c.l.b16 %v273
    %v1753 = vunpack.c.h.b16 %v273
    %v1754 = vunpack.c.l.b16 %v274
    %v1755 = vunpack.c.h.b16 %v274
    %v1756 = vunpack.c.l.b16 %v275
    %v1757 = vunpack.c.h.b16 %v275
    %v1758 = vunpack.c.l.b16 %v276
    %v1759 = vunpack.c.h.b16 %v276
    %v1760 = vunpack.c.l.b16 %v277
    %v1761 = vunpack.c.h.b16 %v277
    %v1762 = vunpack.c.l.b16 %v278
    %v1763 = vunpack.c.h.b16 %v278
    %v1764 = vunpack.c.l.b16 %v279
    %v1765 = vunpack.c.h.b16 %v279
    %v1766 = vunpack.c.l.b16 %v280
    %v1767 = vunpack.c.h.b16 %v280
    %v1768 = vunpack.c.l.b16 %v281
    %v1769 = vunpack.c.h.b16 %v281
    %v1770 = vunpack.c.l.b16 %v282
    %v1771 = vunpack.c.h.b16 %v282
    %v1772 = vunpack.c.l.b16 %v283
    %v1773 = vunpack.c.h.b16 %v283
    %v1774 = vunpack.c.l.b16 %v284
    %v1775 = vunpack.c.h.b16 %v284
    %v1776 = vunpack.c.l.b16 %v285
    %v1777 = vunpack.c.h.b16 %v285
    %v1778 = vunpack.c.l.b16 %v286
    %v1779 = vunpack.c.h.b16 %v286
    %v1780 = vunpack.c.l.b16 %v287
    %v1781 = vunpack.c.h.b16 %v287
    %v1782 = vunpack.c.l.b16 %v288
    %v1783 = vunpack.c.h.b16 %v288
    %v1784 = vunpack.c.l.b16 %v289
    %v1785 = vunpack.c.h.b16 %v289
    %v1786 = vunpack.c.l.b16 %v290
    %v1787 = vunpack.c.h.b16 %v290
    %v1788 = vunpack.c.l.b16 %v291
    %v1789 = vunpack.c.h.b16 %v291
    %v1790 = vunpack.c.l.b16 %v292
    %v1791 = vunpack.c.h.b16 %v292
    %v1792 = vunpack.c.l.b16 %v293
    %v1793 = vunpack.c.h.b16 %v293
    %v1794 = vunpack.c.l.b16 %v294
    %v1795 = vunpack.c.h.b16 %v294
    %v1796 = vunpack.c.l.b16 %v295
    %v1797 = vunpack.c.h.b16 %v295
    %v1798 = vunpack.c.l.b16 %v296
    %v1799 = vunpack.c.h.b16 %v296
    %v1800 = vunpack.c.l.b16 %v297
    %v1801 = vunpack.c.h.b16 %v297
    %v1802 = vunpack.c.l.b16 %v298
    %v1803 = vunpack.c.h.b16 %v298
    %v1804 = vunpack.c.l.b16 %v299
    %v1805 = vunpack.c.h.b16 %v299
    %v1806 = vunpack.c.l.b16 %v300
    %v1807 = vunpack.c.h.b16 %v300
    %v1808 = vunpack.c.l.b16 %v301
    %v1809 = vunpack.c.h.b16 %v301
    %v1810 = vunpack.c.l.b16 %v302
    %v1811 = vunpack.c.h.b16 %v302
    %v1812 = vunpack.c.l.b16 %v303
    %v1813 = vunpack.c.h.b16 %v303
    %v1814 = vunpack.c.l.b16 %v304
    %v1815 = vunpack.c.h.b16 %v304
    %v1816 = vunpack.c.l.b16 %v305
    %v1817 = vunpack.c.h.b16 %v305
    %v1818 = vunpack.c.l.b16 %v306
    %v1819 = vunpack.c.h.b16 %v306
    %v1820 = vunpack.c.l.b16 %v307
    %v1821 = vunpack.c.h.b16 %v307
    %v1822 = vunpack.c.l.b16 %v308
    %v1823 = vunpack.c.h.b16 %v308
    %v1824 = vunpack.c.l.b16 %v309
    %v1825 = vunpack.c.h.b16 %v309
    %v1826 = vunpack.c.l.b16 %v310
    %v1827 = vunpack.c.h.b16 %v310
    %v1828 = vunpack.c.l.b16 %v311
    %v1829 = vunpack.c.h.b16 %v311
    %v1830 = vunpack.c.l.b16 %v312
    %v1831 = vunpack.c.h.b16 %v312
    %v1832 = vunpack.c.l.b16 %v313
    %v1833 = vunpack.c.h.b16 %v313
    %v1834 = vunpack.c.l.b16 %v314
    %v1835 = vunpack.c.h.b16 %v314
    %v1836 = vunpack.c.l.b16 %v315
    %v1837 = vunpack.c.h.b16 %v315
    %v1838 = vunpack.c.l.b16 %v316
    %v1839 = vunpack.c.h.b16 %v316
    %v1840 = vunpack.c.l.b16 %v317
    %v1841 = vunpack.c.h.b16 %v317
    %v1842 = vunpack.c.l.b16 %v318
    %v1843 = vunpack.c.h.b16 %v318
    %v1844 = vunpack.c.l.b16 %v319
    %v1845 = vunpack.c.h.b16 %v319
    %v1846 = vunpack.c.l.b16 %v320
    %v1847 = vunpack.c.h.b16 %v320
    %v1848 = vunpack.c.l.b16 %v321
    %v1849 = vunpack.c.h.b16 %v321
    %v1850 = vunpack.c.l.b16 %v322
    %v1851 = vunpack.c.h.b16 %v322
    %v1852 = vunpack.c.l.b16 %v323
    %v1853 = vunpack.c.h.b16 %v323
    %v1854 = vunpack.c.l.b16 %v324
    %v1855 = vunpack.c.h.b16 %v324
    %v1856 = vunpack.c.l.b16 %v325
    %v1857 = vunpack.c.h.b16 %v325
    %v1858 = vunpack.c.l.b16 %v326
    %v1859 = vunpack.c.h.b16 %v326
    %v1860 = vunpack.c.l.b16 %v327
    %v1861 = vunpack.c.h.b16 %v327
    %v1862 = vunpack.c.l.b16 %v328
    %v1863 = vunpack.c.h.b16 %v328
    %v1864 = vunpack.c.l.b16 %v329
    %v1865 = vunpack.c.h.b16 %v329
    %v1866 = vunpack.c.l.b16 %v330
    %v1867 = vunpack.c.h.b16 %v330
    %v1868 = vunpack.c.l.b16 %v331
    %v1869 = vunpack.c.h.b16 %v331
    %v1870 = vunpack.c.l.b16 %v332
    %v1871 = vunpack.c.h.b16 %v332
    %v1872 = vunpack.c.l.b16 %v333
    %v1873 = vunpack.c.h.b16 %v333
    %v1874 = vunpack.c.l.b16 %v334
    %v1875 = vunpack.c.h.b16 %v334
    %v1876 = vunpack.c.l.b16 %v335
    %v1877 = vunpack.c.h.b16 %v335
    %v1878 = vunpack.c.l.b16 %v336
    %v1879 = vunpack.c.h.b16 %v336
    %v1880 = vunpack.c.l.b16 %v337
    %v1881 = vunpack.c.h.b16 %v337
    %v1882 = vunpack.c.l.b16 %v338
    %v1883 = vunpack.c.h.b16 %v338
    %v1884 = vunpack.c.l.b16 %v339
    %v1885 = vunpack.c.h.b16 %v339
    %v1886 = vunpack.c.l.b16 %v340
    %v1887 = vunpack.c.h.b16 %v340
    %v1888 = vunpack.c.l.b16 %v341
    %v1889 = vunpack.c.h.b16 %v341
    %v1890 = vunpack.c.l.b16 %v342
    %v1891 = vunpack.c.h.b16 %v342
    %v1892 = vunpack.c.l.b16 %v343
    %v1893 = vunpack.c.h.b16 %v343
    %v1894 = vunpack.c.l.b16 %v344
    %v1895 = vunpack.c.h.b16 %v344
    %v1896 = vunpack.c.l.b16 %v345
    %v1897 = vunpack.c.h.b16 %v345
    %v1898 = vunpack.c.l.b16 %v346
    %v1899 = vunpack.c.h.b16 %v346
    %v1900 = vunpack.c.l.b16 %v347
    %v1901 = vunpack.c.h.b16 %v347
    %v1902 = vunpack.c.l.b16 %v348
    %v1903 = vunpack.c.h.b16 %v348
    %v1904 = vunpack.c.l.b16 %v349
    %v1905 = vunpack.c.h.b16 %v349
    %v1906 = vunpack.c.l.b16 %v350
    %v1907 = vunpack.c.h.b16 %v350
    %v1908 = vunpack.c.l.b16 %v351
    %v1909 = vunpack.c.h.b16 %v351
    %v1910 = vunpack.c.l.b16 %v352
    %v1911 = vunpack.c.h.b16 %v352
    %v1912 = vunpack.c.l.b16 %v353
    %v1913 = vunpack.c.h.b16 %v353
    %v1914 = vunpack.c.l.b16 %v354
    %v1915 = vunpack.c.h.b16 %v354
    %v1916 = vunpack.c.l.b16 %v355
    %v1917 = vunpack.c.h.b16 %v355
    %v1918 = vunpack.c.l.b16 %v356
    %v1919 = vunpack.c.h.b16 %v356
    %v1920 = vunpack.c.l.b16 %v357
    %v1921 = vunpack.c.h.b16 %v357
    %v1922 = vunpack.c.l.b16 %v358
    %v1923 = vunpack.c.h.b16 %v358
    %v1924 = vunpack.c.l.b16 %v359
    %v1925 = vunpack.c.h.b16 %v359
    %v1926 = vunpack.c.l.b16 %v360
    %v1927 = vunpack.c.h.b16 %v360
    %v1928 = vunpack.c.l.b16 %v361
    %v1929 = vunpack.c.h.b16 %v361
    %v1930 = vunpack.c.l.b16 %v362
    %v1931 = vunpack.c.h.b16 %v362
    %v1932 = vunpack.c.l.b16 %v363
    %v1933 = vunpack.c.h.b16 %v363
    %v1934 = vunpack.c.l.b16 %v364
    %v1935 = vunpack.c.h.b16 %v364
    %v1936 = vunpack.c.l.b16 %v365
    %v1937 = vunpack.c.h.b16 %v365
    %v1938 = vunpack.c.l.b16 %v366
    %v1939 = vunpack.c.h.b16 %v366
    %v1940 = vunpack.c.l.b16 %v367
    %v1941 = vunpack.c.h.b16 %v367
    %v1942 = vunpack.c.l.b16 %v368
    %v1943 = vunpack.c.h.b16 %v368
    %v1944 = vunpack.c.l.b16 %v369
    %v1945 = vunpack.c.h.b16 %v369
    %v1946 = vunpack.c.l.b16 %v370
    %v1947 = vunpack.c.h.b16 %v370
    %v1948 = vunpack.c.l.b16 %v371
    %v1949 = vunpack.c.h.b16 %v371
    %v1950 = vunpack.c.l.b16 %v372
    %v1951 = vunpack.c.h.b16 %v372
    %v1952 = vunpack.c.l.b16 %v373
    %v1953 = vunpack.c.h.b16 %v373
    %v1954 = vunpack.c.l.b16 %v374
    %v1955 = vunpack.c.h.b16 %v374
    %v1956 = vunpack.c.l.b16 %v375
    %v1957 = vunpack.c.h.b16 %v375
    %v1958 = vunpack.c.l.b16 %v376
    %v1959 = vunpack.c.h.b16 %v376
    %v1960 = vunpack.c.l.b16 %v377
    %v1961 = vunpack.c.h.b16 %v377
    %v1962 = vunpack.c.l.b16 %v378
    %v1963 = vunpack.c.h.b16 %v378
    %v1964 = vunpack.c.l.b16 %v379
    %v1965 = vunpack.c.h.b16 %v379
    %v1966 = vunpack.c.l.b16 %v380
    %v1967 = vunpack.c.h.b16 %v380
    %v1968 = vunpack.c.l.b16 %v381
    %v1969 = vunpack.c.h.b16 %v381
    %v1970 = vunpack.c.l.b16 %v382
    %v1971 = vunpack.c.h.b16 %v382
    %v1972 = vunpack.c.l.b16 %v383
    %v1973 = vunpack.c.h.b16 %v383
    %v1974 = vunpack.c.l.b16 %v384
    %v1975 = vunpack.c.h.b16 %v384
    %v1976 = vunpack.c.l.b16 %v385
    %v1977 = vunpack.c.h.b16 %v385
    %v1978 = vunpack.c.l.b16 %v386
    %v1979 = vunpack.c.h.b16 %v386
    %v1980 = vunpack.c.l.b16 %v387
    %v1981 = vunpack.c.h.b16 %v387
    %v1982 = vunpack.c.l.b16 %v388
    %v1983 = vunpack.c.h.b16 %v388
    %v1984 = vunpack.c.l.b16 %v389
    %v1985 = vunpack.c.h.b16 %v389
    %v1986 = vunpack.c.l.b16 %v390
    %v1987 = vunpack.c.h.b16 %v390
    %v1988 = vunpack.c.l.b16 %v391
    %v1989 = vunpack.c.h.b16 %v391
    %v1990 = vunpack.c.l.b16 %v392
    %v1991 = vunpack.c.h.b16 %v392
    %v1992 = vunpack.c.l.b16 %v393
    %v1993 = vunpack.c.h.b16 %v393
    %v1994 = vunpack.c.l.b16 %v394
    %v1995 = vunpack.c.h.b16 %v394
    %v1996 = vunpack.c.l.b16 %v395
    %v1997 = vunpack.c.h.b16 %v395
    %v1998 = vunpack.c.l.b16 %v396
    %v1999 = vunpack.c.h.b16 %v396
    %v2000 = vunpack.c.l.b16 %v397
    %v2001 = vunpack.c.h.b16 %v397
    %v2002 = vunpack.c.l.b16 %v398
    %v2003 = vunpack.c.h.b16 %v398
    %v2004 = vunpack.c.l.b16 %v399
    %v2005 = vunpack.c.h.b16 %v399
    %v2006 = vunpack.c.l.b16 %v400
    %v2007 = vunpack.c.h.b16 %v400
    %v2008 = vunpack.c.l.b16 %v401
    %v2009 = vunpack.c.h.b16 %v401
    %v2010 = vunpack.c.l.b16 %v402
    %v2011 = vunpack.c.h.b16 %v402
    %v2012 = vunpack.c.l.b16 %v403
    %v2013 = vunpack.c.h.b16 %v403
    %v2014 = vunpack.c.l.b16 %v404
    %v2015 = vunpack.c.h.b16 %v404
    %v2016 = vunpack.c.l.b16 %v405
    %v2017 = vunpack.c.h.b16 %v405
    %v2018 = vunpack.c.l.b16 %v406
    %v2019 = vunpack.c.h.b16 %v406
    %v2020 = vunpack.c.l.b16 %v407
    %v2021 = vunpack.c.h.b16 %v407
    %v2022 = vunpack.c.l.b16 %v408
    %v2023 = vunpack.c.h.b16 %v408
    %v2024 = vunpack.c.l.b16 %v409
    %v2025 = vunpack.c.h.b16 %v409
    %v2026 = vunpack.c.l.b16 %v410
    %v2027 = vunpack.c.h.b16 %v410
    %v2028 = vunpack.c.l.b16 %v411
    %v2029 = vunpack.c.h.b16 %v411
    %v2030 = vunpack.c.l.b16 %v412
    %v2031 = vunpack.c.h.b16 %v412
    %v2032 = vunpack.c.l.b16 %v413
    %v2033 = vunpack.c.h.b16 %v413
    %v2034 = vunpack.c.l.b16 %v414
    %v2035 = vunpack.c.h.b16 %v414
    %v2036 = vunpack.c.l.b16 %v415
    %v2037 = vunpack.c.h.b16 %v415
    %v2038 = vunpack.c.l.b16 %v416
    %v2039 = vunpack.c.h.b16 %v416
    %v2040 = vunpack.c.l.b16 %v417
    %v2041 = vunpack.c.h.b16 %v417
    %v2042 = vunpack.c.l.b16 %v418
    %v2043 = vunpack.c.h.b16 %v418
    %v2044 = vunpack.c.l.b16 %v419
    %v2045 = vunpack.c.h.b16 %v419
    %v2046 = vunpack.c.l.b16 %v420
    %v2047 = vunpack.c.h.b16 %v420
    %v2048 = vunpack.c.l.b16 %v421
    %v2049 = vunpack.c.h.b16 %v421
    %v2050 = vunpack.c.l.b16 %v422
    %v2051 = vunpack.c.h.b16 %v422
    %v2052 = vunpack.c.l.b16 %v423
    %v2053 = vunpack.c.h.b16 %v423
    %v2054 = vunpack.c.l.b16 %v424
    %v2055 = vunpack.c.h.b16 %v424
    %v2056 = vunpack.c.l.b16 %v425
    %v2057 = vunpack.c.h.b16 %v425
    %v2058 = vunpack.c.l.b16 %v426
    %v2059 = vunpack.c.h.b16 %v426
    %v2060 = vunpack.c.l.b16 %v427
    %v2061 = vunpack.c.h.b16 %v427
    %v2062 = vunpack.c.l.b16 %v428
    %v2063 = vunpack.c.h.b16 %v428
    %v2064 = vunpack.c.l.b16 %v429
    %v2065 = vunpack.c.h.b16 %v429
    %v2066 = vunpack.c.l.b16 %v430
    %v2067 = vunpack.c.h.b16 %v430
    %v2068 = vunpack.c.l.b16 %v431
    %v2069 = vunpack.c.h.b16 %v431
    %v2070 = vunpack.c.l.b16 %v432
    %v2071 = vunpack.c.h.b16 %v432
    %v2072 = vunpack.c.l.b16 %v433
    %v2073 = vunpack.c.h.b16 %v433
    %v2074 = vunpack.c.l.b16 %v434
    %v2075 = vunpack.c.h.b16 %v434
    %v2076 = vunpack.c.l.b16 %v435
    %v2077 = vunpack.c.h.b16 %v435
    %v2078 = vunpack.c.l.b16 %v436
    %v2079 = vunpack.c.h.b16 %v436
    %v2080 = vunpack.c.l.b16 %v437
    %v2081 = vunpack.c.h.b16 %v437
    %v2082 = vunpack.c.l.b16 %v438
    %v2083 = vunpack.c.h.b16 %v438
    %v2084 = vunpack.c.l.b16 %v439
    %v2085 = vunpack.c.h.b16 %v439
    %v2086 = vunpack.c.l.b16 %v440
    %v2087 = vunpack.c.h.b16 %v440
    %v2088 = vunpack.c.l.b16 %v441
    %v2089 = vunpack.c.h.b16 %v441
    %v2090 = vunpack.c.l.b16 %v442
    %v2091 = vunpack.c.h.b16 %v442
    %v2092 = vunpack.c.l.b16 %v443
    %v2093 = vunpack.c.h.b16 %v443
    %v2094 = vunpack.c.l.b16 %v444
    %v2095 = vunpack.c.h.b16 %v444
    %v2096 = vunpack.c.l.b16 %v445
    %v2097 = vunpack.c.h.b16 %v445
    %v2098 = vunpack.c.l.b16 %v446
    %v2099 = vunpack.c.h.b16 %v446
    %v2100 = vunpack.c.l.b16 %v447
    %v2101 = vunpack.c.h.b16 %v447
    %v2102 = vunpack.c.l.b16 %v448
    %v2103 = vunpack.c.h.b16 %v448
    %v2104 = vunpack.c.l.b16 %v449
    %v2105 = vunpack.c.h.b16 %v449
    %v2106 = vunpack.c.l.b16 %v450
    %v2107 = vunpack.c.h.b16 %v450
    %v2108 = vunpack.c.l.b16 %v451
    %v2109 = vunpack.c.h.b16 %v451
    %v2110 = vunpack.c.l.b16 %v452
    %v2111 = vunpack.c.h.b16 %v452
    %v2112 = vunpack.c.l.b16 %v453
    %v2113 = vunpack.c.h.b16 %v453
    %v2114 = vunpack.c.l.b16 %v454
    %v2115 = vunpack.c.h.b16 %v454
    %v2116 = vunpack.c.l.b16 %v455
    %v2117 = vunpack.c.h.b16 %v455
    %v2118 = vunpack.c.l.b16 %v456
    %v2119 = vunpack.c.h.b16 %v456
    %v2120 = vunpack.c.l.b16 %v457
    %v2121 = vunpack.c.h.b16 %v457
    %v2122 = vunpack.c.l.b16 %v458
    %v2123 = vunpack.c.h.b16 %v458
    %v2124 = vunpack.c.l.b16 %v459
    %v2125 = vunpack.c.h.b16 %v459
    %v2126 = vunpack.c.l.b16 %v460
    %v2127 = vunpack.c.h.b16 %v460
    %v2128 = vunpack.c.l.b16 %v461
    %v2129 = vunpack.c.h.b16 %v461
    %v2130 = vunpack.c.l.b16 %v462
    %v2131 = vunpack.c.h.b16 %v462
    %v2132 = vunpack.c.l.b16 %v463
    %v2133 = vunpack.c.h.b16 %v463
    %v2134 = vunpack.c.l.b16 %v464
    %v2135 = vunpack.c.h.b16 %v464
    %v2136 = vunpack.c.l.b16 %v465
    %v2137 = vunpack.c.h.b16 %v465
    %v2138 = vunpack.c.l.b16 %v466
    %v2139 = vunpack.c.h.b16 %v466
    %v2140 = vunpack.c.l.b16 %v467
    %v2141 = vunpack.c.h.b16 %v467
    %v2142 = vunpack.c.l.b16 %v468
    %v2143 = vunpack.c.h.b16 %v468
    %v2144 = vunpack.c.l.b16 %v469
    %v2145 = vunpack.c.h.b16 %v469
    %v2146 = vunpack.c.l.b16 %v470
    %v2147 = vunpack.c.h.b16 %v470
    %v2148 = vunpack.c.l.b16 %v471
    %v2149 = vunpack.c.h.b16 %v471
    %v2150 = vunpack.c.l.b16 %v472
    %v2151 = vunpack.c.h.b16 %v472
    %v2152 = vunpack.c.l.b16 %v473
    %v2153 = vunpack.c.h.b16 %v473
    %v2154 = vunpack.c.l.b16 %v474
    %v2155 = vunpack.c.h.b16 %v474
    %v2156 = vunpack.c.l.b16 %v475
    %v2157 = vunpack.c.h.b16 %v475
    %v2158 = vunpack.c.l.b16 %v476
    %v2159 = vunpack.c.h.b16 %v476
    %v2160 = vunpack.c.l.b16 %v477
    %v2161 = vunpack.c.h.b16 %v477
    %v2162 = vunpack.c.l.b16 %v478
    %v2163 = vunpack.c.h.b16 %v478
    %v2164 = vunpack.c.l.b16 %v479
    %v2165 = vunpack.c.h.b16 %v479
    %v2166 = vunpack.c.l.b16 %v480
    %v2167 = vunpack.c.h.b16 %v480
    %v2168 = vunpack.c.l.b16 %v481
    %v2169 = vunpack.c.h.b16 %v481
    %v2170 = vunpack.c.l.b16 %v482
    %v2171 = vunpack.c.h.b16 %v482
    %v2172 = vunpack.c.l.b16 %v483
    %v2173 = vunpack.c.h.b16 %v483
    %v2174 = vunpack.c.l.b16 %v484
    %v2175 = vunpack.c.h.b16 %v484
    %v2176 = vunpack.c.l.b16 %v485
    %v2177 = vunpack.c.h.b16 %v485
    %v2178 = vunpack.c.l.b16 %v486
    %v2179 = vunpack.c.h.b16 %v486
    %v2180 = vunpack.c.l.b16 %v487
    %v2181 = vunpack.c.h.b16 %v487
    %v2182 = vunpack.c.l.b16 %v488
    %v2183 = vunpack.c.h.b16 %v488
    %v2184 = vunpack.c.l.b16 %v489
    %v2185 = vunpack.c.h.b16 %v489
    %v2186 = vunpack.c.l.b16 %v490
    %v2187 = vunpack.c.h.b16 %v490
    %v2188 = vunpack.c.l.b16 %v491
    %v2189 = vunpack.c.h.b16 %v491
    %v2190 = vunpack.c.l.b16 %v492
    %v2191 = vunpack.c.h.b16 %v492
    %v2192 = vunpack.c.l.b16 %v493
    %v2193 = vunpack.c.h.b16 %v493
    %v2194 = vunpack.c.l.b16 %v494
    %v2195 = vunpack.c.h.b16 %v494
    %v2196 = vunpack.c.l.b16 %v495
    %v2197 = vunpack.c.h.b16 %v495
    %v2198 = vunpack.c.l.b16 %v496
    %v2199 = vunpack.c.h.b16 %v496
    %v2200 = vunpack.c.l.b16 %v497
    %v2201 = vunpack.c.h.b16 %v497
    %v2202 = vunpack.c.l.b16 %v498
    %v2203 = vunpack.c.h.b16 %v498
    %v2204 = vunpack.c.l.b16 %v499
    %v2205 = vunpack.c.h.b16 %v499
    %v2206 = vunpack.c.l.b16 %v500
    %v2207 = vunpack.c.h.b16 %v500
    %v2208 = vunpack.c.l.b16 %v501
    %v2209 = vunpack.c.h.b16 %v501
    %v2210 = vunpack.c.l.b16 %v502
    %v2211 = vunpack.c.h.b16 %v502
    %v2212 = vunpack.c.l.b16 %v503
    %v2213 = vunpack.c.h.b16 %v503
    %v2214 = vunpack.c.l.b16 %v504
    %v2215 = vunpack.c.h.b16 %v504
    %v2216 = vunpack.c.l.b16 %v505
    %v2217 = vunpack.c.h.b16 %v505
    %v2218 = vunpack.c.l.b16 %v506
    %v2219 = vunpack.c.h.b16 %v506
    %v2220 = vunpack.c.l.b16 %v507
    %v2221 = vunpack.c.h.b16 %v507
    %v2222 = vunpack.c.l.b16 %v508
    %v2223 = vunpack.c.h.b16 %v508
    %v2224 = vunpack.c.l.b16 %v509
    %v2225 = vunpack.c.h.b16 %v509
    %v2226 = vunpack.c.l.b16 %v510
    %v2227 = vunpack.c.h.b16 %v510
    %v2228 = vunpack.c.l.b16 %v511
    %v2229 = vunpack.c.h.b16 %v511
    %v2230 = vunpack.c.l.b16 %v512
    %v2231 = vunpack.c.h.b16 %v512
    %v2232 = vunpack.c.l.b16 %v513
    %v2233 = vunpack.c.h.b16 %v513
    %v2234 = vunpack.c.l.b16 %v514
    %v2235 = vunpack.c.h.b16 %v514
    %v2236 = vunpack.c.l.b16 %v515
    %v2237 = vunpack.c.h.b16 %v515
    %v2238 = vunpack.c.l.b16 %v516
    %v2239 = vunpack.c.h.b16 %v516
    %v2240 = vunpack.c.l.b16 %v517
    %v2241 = vunpack.c.h.b16 %v517
    %v2242 = vunpack.c.l.b16 %v518
    %v2243 = vunpack.c.h.b16 %v518
    %v2244 = vunpack.c.l.b16 %v519
    %v2245 = vunpack.c.h.b16 %v519
    %v2246 = vunpack.c.l.b16 %v520
    %v2247 = vunpack.c.h.b16 %v520
    %v2248 = vunpack.c.l.b16 %v521
    %v2249 = vunpack.c.h.b16 %v521
    %v2250 = vunpack.c.l.b16 %v522
    %v2251 = vunpack.c.h.b16 %v522
    %v2252 = vunpack.c.l.b16 %v523
    %v2253 = vunpack.c.h.b16 %v523
    %v2254 = vunpack.c.l.b16 %v524
    %v2255 = vunpack.c.h.b16 %v524
    %v2256 = vunpack.c.l.b16 %v525
    %v2257 = vunpack.c.h.b16 %v525
    %v2258 = vunpack.c.l.b16 %v526
    %v2259 = vunpack.c.h.b16 %v526
    %v2260 = vunpack.c.l.b16 %v527
    %v2261 = vunpack.c.h.b16 %v527
    %v2262 = vunpack.c.l.b16 %v528
    %v2263 = vunpack.c.h.b16 %v528
    %v2264 = vunpack.c.l.b16 %v529
    %v2265 = vunpack.c.h.b16 %v529
    %v2266 = vunpack.c.l.b16 %v530
    %v2267 = vunpack.c.h.b16 %v530
    %v2268 = vunpack.c.l.b16 %v531
    %v2269 = vunpack.c.h.b16 %v531
    %v2270 = vunpack.c.l.b16 %v532
    %v2271 = vunpack.c.h.b16 %v532
    %v2272 = vunpack.c.l.b16 %v533
    %v2273 = vunpack.c.h.b16 %v533
    %v2274 = vunpack.c.l.b16 %v534
    %v2275 = vunpack.c.h.b16 %v534
    %v2276 = vunpack.c.l.b16 %v535
    %v2277 = vunpack.c.h.b16 %v535
    %v2278 = vunpack.c.l.b16 %v536
    %v2279 = vunpack.c.h.b16 %v536
    %v2280 = vunpack.c.l.b16 %v537
    %v2281 = vunpack.c.h.b16 %v537
    %v2282 = vunpack.c.l.b16 %v538
    %v2283 = vunpack.c.h.b16 %v538
    %v2284 = vunpack.c.l.b16 %v539
    %v2285 = vunpack.c.h.b16 %v539
    %v2286 = vunpack.c.l.b16 %v540
    %v2287 = vunpack.c.h.b16 %v540
    %v2288 = vunpack.c.l.b16 %v541
    %v2289 = vunpack.c.h.b16 %v541
    %v2290 = vunpack.c.l.b16 %v542
    %v2291 = vunpack.c.h.b16 %v542
    %v2292 = vunpack.c.l.b16 %v543
    %v2293 = vunpack.c.h.b16 %v543
    %v2294 = vunpack.c.l.b16 %v544
    %v2295 = vunpack.c.h.b16 %v544
    %v2296 = vunpack.c.l.b16 %v545
    %v2297 = vunpack.c.h.b16 %v545
    %v2298 = vunpack.c.l.b16 %v546
    %v2299 = vunpack.c.h.b16 %v546
    %v2300 = vunpack.c.l.b16 %v547
    %v2301 = vunpack.c.h.b16 %v547
    %v2302 = vunpack.c.l.b16 %v548
    %v2303 = vunpack.c.h.b16 %v548
    %v2304 = vunpack.c.l.b16 %v549
    %v2305 = vunpack.c.h.b16 %v549
    %v2306 = vunpack.c.l.b16 %v550
    %v2307 = vunpack.c.h.b16 %v550
    %v2308 = vunpack.c.l.b16 %v551
    %v2309 = vunpack.c.h.b16 %v551
    %v2310 = vunpack.c.l.b16 %v552
    %v2311 = vunpack.c.h.b16 %v552
    %v2312 = vunpack.c.l.b16 %v553
    %v2313 = vunpack.c.h.b16 %v553
    %v2314 = vunpack.c.l.b16 %v554
    %v2315 = vunpack.c.h.b16 %v554
    %v2316 = vunpack.c.l.b16 %v555
    %v2317 = vunpack.c.h.b16 %v555
    %v2318 = vunpack.c.l.b16 %v556
    %v2319 = vunpack.c.h.b16 %v556
    %v2320 = vunpack.c.l.b16 %v557
    %v2321 = vunpack.c.h.b16 %v557
    %v2322 = vunpack.c.l.b16 %v558
    %v2323 = vunpack.c.h.b16 %v558
    %v2324 = vunpack.c.l.b16 %v559
    %v2325 = vunpack.c.h.b16 %v559
    %v2326 = vunpack.c.l.b16 %v560
    %v2327 = vunpack.c.h.b16 %v560
    %v2328 = vunpack.c.l.b16 %v561
    %v2329 = vunpack.c.h.b16 %v561
    %v2330 = vunpack.c.l.b16 %v562
    %v2331 = vunpack.c.h.b16 %v562
    %v2332 = vunpack.c.l.b16 %v563
    %v2333 = vunpack.c.h.b16 %v563
    %v2334 = vunpack.c.l.b16 %v564
    %v2335 = vunpack.c.h.b16 %v564
    %v2336 = vunpack.c.l.b16 %v565
    %v2337 = vunpack.c.h.b16 %v565
    %v2338 = vunpack.c.l.b16 %v566
    %v2339 = vunpack.c.h.b16 %v566
    %v2340 = vunpack.c.l.b16 %v567
    %v2341 = vunpack.c.h.b16 %v567
    %v2342 = vunpack.c.l.b16 %v568
    %v2343 = vunpack.c.h.b16 %v568
    %v2344 = vunpack.c.l.b16 %v569
    %v2345 = vunpack.c.h.b16 %v569
    %v2346 = vunpack.c.l.b16 %v570
    %v2347 = vunpack.c.h.b16 %v570
    %v2348 = vunpack.c.l.b16 %v571
    %v2349 = vunpack.c.h.b16 %v571
    %v2350 = vunpack.c.l.b16 %v572
    %v2351 = vunpack.c.h.b16 %v572
    %v2352 = vunpack.c.l.b16 %v573
    %v2353 = vunpack.c.h.b16 %v573
    %v2354 = vunpack.c.l.b16 %v574
    %v2355 = vunpack.c.h.b16 %v574
    %v2356 = vunpack.c.l.b16 %v575
    %v2357 = vunpack.c.h.b16 %v575
    %v2358 = vunpack.c.l.b16 %v576
    %v2359 = vunpack.c.h.b16 %v576
    %v2360 = vunpack.c.l.b16 %v577
    %v2361 = vunpack.c.h.b16 %v577
    %v2362 = vunpack.c.l.b16 %v578
    %v2363 = vunpack.c.h.b16 %v578
    %v2364 = vunpack.c.l.b16 %v579
    %v2365 = vunpack.c.h.b16 %v579
    %v2366 = vunpack.c.l.b16 %v580
    %v2367 = vunpack.c.h.b16 %v580
    %v2368 = vunpack.c.l.b16 %v581
    %v2369 = vunpack.c.h.b16 %v581
    %v2370 = vunpack.c.l.b16 %v582
    %v2371 = vunpack.c.h.b16 %v582
    %v2372 = vunpack.c.l.b16 %v583
    %v2373 = vunpack.c.h.b16 %v583
    %v2374 = vunpack.c.l.b16 %v584
    %v2375 = vunpack.c.h.b16 %v584
    %v2376 = vunpack.c.l.b16 %v585
    %v2377 = vunpack.c.h.b16 %v585
    %v2378 = vunpack.c.l.b16 %v586
    %v2379 = vunpack.c.h.b16 %v586
    %v2380 = vunpack.c.l.b16 %v587
    %v2381 = vunpack.c.h.b16 %v587
    %v2382 = vunpack.c.l.b16 %v588
    %v2383 = vunpack.c.h.b16 %v588
    %v2384 = vunpack.c.l.b16 %v589
    %v2385 = vunpack.c.h.b16 %v589
    %v2386 = vunpack.c.l.b16 %v590
    %v2387 = vunpack.c.h.b16 %v590
    %v2388 = vunpack.c.l.b16 %v591
    %v2389 = vunpack.c.h.b16 %v591
    %v2390 = vunpack.c.l.b16 %v592
    %v2391 = vunpack.c.h.b16 %v592
    %v2392 = vunpack.c.l.b16 %v593
    %v2393 = vunpack.c.h.b16 %v593
    %v2394 = vunpack.c.l.b16 %v594
    %v2395 = vunpack.c.h.b16 %v594
    %v2396 = vunpack.c.l.b16 %v595
    %v2397 = vunpack.c.h.b16 %v595
    %v2398 = vunpack.c.l.b16 %v596
    %v2399 = vunpack.c.h.b16 %v596
    %v2400 = vunpack.c.l.b16 %v597
    %v2401 = vunpack.c.h.b16 %v597
    %v2402 = vunpack.c.l.b16 %v598
    %v2403 = vunpack.c.h.b16 %v598
    %v2404 = vunpack.c.l.b16 %v599
    %v2405 = vunpack.c.h.b16 %v599
    %v2406 = vunpack.c.l.b16 %v600
    %v2407 = vunpack.c.h.b16 %v600
    %v2408 = vunpack.c.l.b16 %v601
    %v2409 = vunpack.c.h.b16 %v601
    %v2410 = vunpack.c.l.b16 %v602
    %v2411 = vunpack.c.h.b16 %v602
    %v2412 = vunpack.c.l.b16 %v603
    %v2413 = vunpack.c.h.b16 %v603
    %v2414 = vunpack.c.l.b16 %v604
    %v2415 = vunpack.c.h.b16 %v604
    %v2416 = vunpack.c.l.b16 %v605
    %v2417 = vunpack.c.h.b16 %v605
    %v2418 = vunpack.c.l.b16 %v606
    %v2419 = vunpack.c.h.b16 %v606
    %v2420 = vunpack.c.l.b16 %v607
    %v2421 = vunpack.c.h.b16 %v607
    %v2422 = vunpack.c.l.b16 %v608
    %v2423 = vunpack.c.h.b16 %v608
    %v2424 = vunpack.c.l.b16 %v609
    %v2425 = vunpack.c.h.b16 %v609
    %v2426 = vunpack.c.l.b16 %v610
    %v2427 = vunpack.c.h.b16 %v610
    %v2428 = vunpack.c.l.b16 %v611
    %v2429 = vunpack.c.h.b16 %v611
    %v2430 = vunpack.c.l.b16 %v612
    %v2431 = vunpack.c.h.b16 %v612
    %v2432 = vunpack.c.l.b16 %v613
    %v2433 = vunpack.c.h.b16 %v613
    %v2434 = vunpack.c.l.b16 %v614
    %v2435 = vunpack.c.h.b16 %v614
    %v2436 = vunpack.c.l.b16 %v615
    %v2437 = vunpack.c.h.b16 %v615
    %v2438 = vunpack.c.l.b16 %v616
    %v2439 = vunpack.c.h.b16 %v616
    %v2440 = vunpack.c.l.b16 %v617
    %v2441 = vunpack.c.h.b16 %v617
    %v2442 = vunpack.c.l.b16 %v618
    %v2443 = vunpack.c.h.b16 %v618
    %v2444 = vunpack.c.l.b16 %v619
    %v2445 = vunpack.c.h.b16 %v619
    %v2446 = vunpack.c.l.b16 %v620
    %v2447 = vunpack.c.h.b16 %v620
    %v2448 = vunpack.c.l.b16 %v621
    %v2449 = vunpack.c.h.b16 %v621
    %v2450 = vunpack.c.l.b16 %v622
    %v2451 = vunpack.c.h.b16 %v622
    %v2452 = vunpack.c.l.b16 %v623
    %v2453 = vunpack.c.h.b16 %v623
    %v2454 = vunpack.c.l.b16 %v624
    %v2455 = vunpack.c.h.b16 %v624
    %v2456 = vunpack.c.l.b16 %v625
    %v2457 = vunpack.c.h.b16 %v625
    %v2458 = vunpack.c.l.b16 %v626
    %v2459 = vunpack.c.h.b16 %v626
    %v2460 = vunpack.c.l.b16 %v627
    %v2461 = vunpack.c.h.b16 %v627
    %v2462 = vunpack.c.l.b16 %v628
    %v2463 = vunpack.c.h.b16 %v628
    %v2464 = vunpack.c.l.b16 %v629
    %v2465 = vunpack.c.h.b16 %v629
    %v2466 = vunpack.c.l.b16 %v630
    %v2467 = vunpack.c.h.b16 %v630
    %v2468 = vunpack.c.l.b16 %v631
    %v2469 = vunpack.c.h.b16 %v631
    %v2470 = vunpack.c.l.b16 %v632
    %v2471 = vunpack.c.h.b16 %v632
    %v2472 = vunpack.c.l.b16 %v633
    %v2473 = vunpack.c.h.b16 %v633
    %v2474 = vpack.c.b16 %v1326, %v1322
    %v2475 = vpack.c.b16 %v1327, %v1323
    %v2476 = vpack.c.b16 %v1328, %v1324
    %v2477 = vpack.c.b16 %v1329, %v1325
    %v2478 = vpack.c.b16 %v1334, %v1330
    %v2479 = vpack.c.b16 %v1335, %v1331
    %v2480 = vpack.c.b16 %v1336, %v1332
    %v2481 = vpack.c.b16 %v1337, %v1333
    %v2482 = vpack.c.b16 %v1342, %v1338
    %v2483 = vpack.c.b16 %v1343, %v1339
    %v2484 = vpack.c.b16 %v1344, %v1340
    %v2485 = vpack.c.b16 %v1345, %v1341
    %v2486 = vpack.c.b16 %v1350, %v1346
    %v2487 = vpack.c.b16 %v1351, %v1347
    %v2488 = vpack.c.b16 %v1352, %v1348
    %v2489 = vpack.c.b16 %v1353, %v1349
    %v2490 = vpack.c.b16 %v1358, %v1354
    %v2491 = vpack.c.b16 %v1359, %v1355
    %v2492 = vpack.c.b16 %v1360, %v1356
    %v2493 = vpack.c.b16 %v1361, %v1357
    %v2494 = vpack.c.b16 %v1366, %v1362
    %v2495 = vpack.c.b16 %v1367, %v1363
    %v2496 = vpack.c.b16 %v1368, %v1364
    %v2497 = vpack.c.b16 %v1369, %v1365
    %v2498 = vpack.c.b16 %v1374, %v1370
    %v2499 = vpack.c.b16 %v1375, %v1371
    %v2500 = vpack.c.b16 %v1376, %v1372
    %v2501 = vpack.c.b16 %v1377, %v1373
    %v2502 = vpack.c.b16 %v1382, %v1378
    %v2503 = vpack.c.b16 %v1383, %v1379
    %v2504 = vpack.c.b16 %v1384, %v1380
    %v2505 = vpack.c.b16 %v1385, %v1381
    %v2506 = vpack.c.b16 %v1390, %v1386
    %v2507 = vpack.c.b16 %v1391, %v1387
    %v2508 = vpack.c.b16 %v1392, %v1388
    %v2509 = vpack.c.b16 %v1393, %v1389
    %v2510 = vpack.c.b16 %v1398, %v1394
    %v2511 = vpack.c.b16 %v1399, %v1395
    %v2512 = vpack.c.b16 %v1400, %v1396
    %v2513 = vpack.c.b16 %v1401, %v1397
    %v2514 = vpack.c.b16 %v1406, %v1402
    %v2515 = vpack.c.b16 %v1407, %v1403
    %v2516 = vpack.c.b16 %v1408, %v1404
    %v2517 = vpack.c.b16 %v1409, %v1405
    %v2518 = vpack.c.b16 %v1414, %v1410
    %v2519 = vpack.c.b16 %v1415, %v1411
    %v2520 = vpack.c.b16 %v1416, %v1412
    %v2521 = vpack.c.b16 %v1417, %v1413
    %v2522 = vpack.c.b16 %v1422, %v1418
    %v2523 = vpack.c.b16 %v1423, %v1419
    %v2524 = vpack.c.b16 %v1424, %v1420
    %v2525 = vpack.c.b16 %v1425, %v1421
    %v2526 = vpack.c.b16 %v1430, %v1426
    %v2527 = vpack.c.b16 %v1431, %v1427
    %v2528 = vpack.c.b16 %v1432, %v1428
    %v2529 = vpack.c.b16 %v1433, %v1429
    %v2530 = vpack.c.b16 %v1438, %v1434
    %v2531 = vpack.c.b16 %v1439, %v1435
    %v2532 = vpack.c.b16 %v1440, %v1436
    %v2533 = vpack.c.b16 %v1441, %v1437
    %v2534 = vpack.c.b16 %v1446, %v1442
    %v2535 = vpack.c.b16 %v1447, %v1443
    %v2536 = vpack.c.b16 %v1448, %v1444
    %v2537 = vpack.c.b16 %v1449, %v1445
    %v2538 = vpack.c.b16 %v1454, %v1450
    %v2539 = vpack.c.b16 %v1455, %v1451
    %v2540 = vpack.c.b16 %v1456, %v1452
    %v2541 = vpack.c.b16 %v1457, %v1453
    %v2542 = vpack.c.b16 %v1462, %v1458
    %v2543 = vpack.c.b16 %v1463, %v1459
    %v2544 = vpack.c.b16 %v1464, %v1460
    %v2545 = vpack.c.b16 %v1465, %v1461
    %v2546 = vpack.c.b16 %v1470, %v1466
    %v2547 = vpack.c.b16 %v1471, %v1467
    %v2548 = vpack.c.b16 %v1472, %v1468
    %v2549 = vpack.c.b16 %v1473, %v1469
    %v2550 = vpack.c.b16 %v1478, %v1474
    %v2551 = vpack.c.b16 %v1479, %v1475
    %v2552 = vpack.c.b16 %v1480, %v1476
    %v2553 = vpack.c.b16 %v1481, %v1477
    %v2554 = vpack.c.b16 %v1486, %v1482
    %v2555 = vpack.c.b16 %v1487, %v1483
    %v2556 = vpack.c.b16 %v1488, %v1484
    %v2557 = vpack.c.b16 %v1489, %v1485
    %v2558 = vpack.c.b16 %v1494, %v1490
    %v2559 = vpack.c.b16 %v1495, %v1491
    %v2560 = vpack.c.b16 %v1496, %v1492
    %v2561 = vpack.c.b16 %v1497, %v1493
    %v2562 = vpack.c.b16 %v1502, %v1498
    %v2563 = vpack.c.b16 %v1503, %v1499
    %v2564 = vpack.c.b16 %v1504, %v1500
    %v2565 = vpack.c.b16 %v1505, %v1501
    %v2566 = vpack.c.b16 %v1510, %v1506
    %v2567 = vpack.c.b16 %v1511, %v1507
    %v2568 = vpack.c.b16 %v1512, %v1508
    %v2569 = vpack.c.b16 %v1513, %v1509
    %v2570 = vpack.c.b16 %v1518, %v1514
    %v2571 = vpack.c.b16 %v1519, %v1515
    %v2572 = vpack.c.b16 %v1520, %v1516
    %v2573 = vpack.c.b16 %v1521, %v1517
    %v2574 = vpack.c.b16 %v1526, %v1522
    %v2575 = vpack.c.b16 %v1527, %v1523
    %v2576 = vpack.c.b16 %v1528, %v1524
    %v2577 = vpack.c.b16 %v1529, %v1525
    %v2578 = vpack.c.b16 %v1534, %v1530
    %v2579 = vpack.c.b16 %v1535, %v1531
    %v2580 = vpack.c.b16 %v1536, %v1532
    %v2581 = vpack.c.b16 %v1537, %v1533
    %v2582 = vpack.c.b16 %v1542, %v1538
    %v2583 = vpack.c.b16 %v1543, %v1539
    %v2584 = vpack.c.b16 %v1544, %v1540
    %v2585 = vpack.c.b16 %v1545, %v1541
    %v2586 = vpack.c.b16 %v1550, %v1546
    %v2587 = vpack.c.b16 %v1551, %v1547
    %v2588 = vpack.c.b16 %v1552, %v1548
    %v2589 = vpack.c.b16 %v1553, %v1549
    %v2590 = vpack.c.b16 %v1558, %v1554
    %v2591 = vpack.c.b16 %v1559, %v1555
    %v2592 = vpack.c.b16 %v1560, %v1556
    %v2593 = vpack.c.b16 %v1561, %v1557
    %v2594 = vpack.c.b16 %v1566, %v1562
    %v2595 = vpack.c.b16 %v1567, %v1563
    %v2596 = vpack.c.b16 %v1568, %v1564
    %v2597 = vpack.c.b16 %v1569, %v1565
    %v2598 = vpack.c.b16 %v1574, %v1570
    %v2599 = vpack.c.b16 %v1575, %v1571
    %v2600 = vpack.c.b16 %v1576, %v1572
    %v2601 = vpack.c.b16 %v1577, %v1573
    %v2602 = vpack.c.b16 %v1582, %v1578
    %v2603 = vpack.c.b16 %v1583, %v1579
    %v2604 = vpack.c.b16 %v1584, %v1580
    %v2605 = vpack.c.b16 %v1585, %v1581
    %v2606 = vpack.c.b16 %v1590, %v1586
    %v2607 = vpack.c.b16 %v1591, %v1587
    %v2608 = vpack.c.b16 %v1592, %v1588
    %v2609 = vpack.c.b16 %v1593, %v1589
    %v2610 = vpack.c.b16 %v1598, %v1594
    %v2611 = vpack.c.b16 %v1599, %v1595
    %v2612 = vpack.c.b16 %v1600, %v1596
    %v2613 = vpack.c.b16 %v1601, %v1597
    %v2614 = vpack.c.b16 %v1606, %v1602
    %v2615 = vpack.c.b16 %v1607, %v1603
    %v2616 = vpack.c.b16 %v1608, %v1604
    %v2617 = vpack.c.b16 %v1609, %v1605
    %v2618 = vpack.c.b16 %v1614, %v1610
    %v2619 = vpack.c.b16 %v1615, %v1611
    %v2620 = vpack.c.b16 %v1616, %v1612
    %v2621 = vpack.c.b16 %v1617, %v1613
    %v2622 = vpack.c.b16 %v1622, %v1618
    %v2623 = vpack.c.b16 %v1623, %v1619
    %v2624 = vpack.c.b16 %v1624, %v1620
    %v2625 = vpack.c.b16 %v1625, %v1621
    %v2626 = vpack.c.b16 %v1630, %v1626
    %v2627 = vpack.c.b16 %v1631, %v1627
    %v2628 = vpack.c.b16 %v1632, %v1628
    %v2629 = vpack.c.b16 %v1633, %v1629
    %v2630 = vpack.c.b16 %v1638, %v1634
    %v2631 = vpack.c.b16 %v1639, %v1635
    %v2632 = vpack.c.b16 %v1640, %v1636
    %v2633 = vpack.c.b16 %v1641, %v1637
    %v2634 = vpack.c.b16 %v1646, %v1642
    %v2635 = vpack.c.b16 %v1647, %v1643
    %v2636 = vpack.c.b16 %v1648, %v1644
    %v2637 = vpack.c.b16 %v1649, %v1645
    %v2638 = vpack.c.b16 %v1654, %v1650
    %v2639 = vpack.c.b16 %v1655, %v1651
    %v2640 = vpack.c.b16 %v1656, %v1652
    %v2641 = vpack.c.b16 %v1657, %v1653
    %v2642 = vpack.c.b16 %v1662, %v1658
    %v2643 = vpack.c.b16 %v1663, %v1659
    %v2644 = vpack.c.b16 %v1664, %v1660
    %v2645 = vpack.c.b16 %v1665, %v1661
    %v2646 = vpack.c.b16 %v1670, %v1666
    %v2647 = vpack.c.b16 %v1671, %v1667
    %v2648 = vpack.c.b16 %v1672, %v1668
    %v2649 = vpack.c.b16 %v1673, %v1669
    %v2650 = vpack.c.b16 %v1678, %v1674
    %v2651 = vpack.c.b16 %v1679, %v1675
    %v2652 = vpack.c.b16 %v1680, %v1676
    %v2653 = vpack.c.b16 %v1681, %v1677
    %v2654 = vpack.c.b16 %v1686, %v1682
    %v2655 = vpack.c.b16 %v1687, %v1683
    %v2656 = vpack.c.b16 %v1688, %v1684
    %v2657 = vpack.c.b16 %v1689, %v1685
    %v2658 = vpack.c.b16 %v1694, %v1690
    %v2659 = vpack.c.b16 %v1695, %v1691
    %v2660 = vpack.c.b16 %v1696, %v1692
    %v2661 = vpack.c.b16 %v1697, %v1693
    %v2662 = vpack.c.b16 %v1702, %v1698
    %v2663 = vpack.c.b16 %v1703, %v1699
    %v2664 = vpack.c.b16 %v1704, %v1700
    %v2665 = vpack.c.b16 %v1705, %v1701
    %v2666 = vpack.c.b16 %v1710, %v1706
    %v2667 = vpack.c.b16 %v1711, %v1707
    %v2668 = vpack.c.b16 %v1712, %v1708
    %v2669 = vpack.c.b16 %v1713, %v1709
    %v2670 = vpack.c.b16 %v1718, %v1714
    %v2671 = vpack.c.b16 %v1719, %v1715
    %v2672 = vpack.c.b16 %v1720, %v1716
    %v2673 = vpack.c.b16 %v1721, %v1717
    %v2674 = vpack.c.b16 %v1726, %v1722
    %v2675 = vpack.c.b16 %v1727, %v1723
    %v2676 = vpack.c.b16 %v1728, %v1724
    %v2677 = vpack.c.b16 %v1729, %v1725
    %v2678 = vpack.c.b16 %v1734, %v1730
    %v2679 = vpack.c.b16 %v1735, %v1731
    %v2680 = vpack.c.b16 %v1736, %v1732
    %v2681 = vpack.c.b16 %v1737, %v1733
    %v2682 = vpack.c.b16 %v1742, %v1738
    %v2683 = vpack.c.b16 %v1743, %v1739
    %v2684 = vpack.c.b16 %v1744, %v1740
    %v2685 = vpack.c.b16 %v1745, %v1741
    %v2686 = vpack.c.b16 %v1750, %v1746
    %v2687 = vpack.c.b16 %v1751, %v1747
    %v2688 = vpack.c.b16 %v1752, %v1748
    %v2689 = vpack.c.b16 %v1753, %v1749
    %v2690 = vpack.c.b16 %v1758, %v1754
    %v2691 = vpack.c.b16 %v1759, %v1755
    %v2692 = vpack.c.b16 %v1760, %v1756
    %v2693 = vpack.c.b16 %v1761, %v1757
    %v2694 = vpack.c.b16 %v1766, %v1762
    %v2695 = vpack.c.b16 %v1767, %v1763
    %v2696 = vpack.c.b16 %v1768, %v1764
    %v2697 = vpack.c.b16 %v1769, %v1765
    %v2698 = vpack.c.b16 %v1774, %v1770
    %v2699 = vpack.c.b16 %v1775, %v1771
    %v2700 = vpack.c.b16 %v1776, %v1772
    %v2701 = vpack.c.b16 %v1777, %v1773
    %v2702 = vpack.c.b16 %v1782, %v1778
    %v2703 = vpack.c.b16 %v1783, %v1779
    %v2704 = vpack.c.b16 %v1784, %v1780
    %v2705 = vpack.c.b16 %v1785, %v1781
    %v2706 = vpack.c.b16 %v1790, %v1786
    %v2707 = vpack.c.b16 %v1791, %v1787
    %v2708 = vpack.c.b16 %v1792, %v1788
    %v2709 = vpack.c.b16 %v1793, %v1789
    %v2710 = vpack.c.b16 %v1798, %v1794
    %v2711 = vpack.c.b16 %v1799, %v1795
    %v2712 = vpack.c.b16 %v1800, %v1796
    %v2713 = vpack.c.b16 %v1801, %v1797
    %v2714 = vpack.c.b16 %v1806, %v1802
    %v2715 = vpack.c.b16 %v1807, %v1803
    %v2716 = vpack.c.b16 %v1808, %v1804
    %v2717 = vpack.c.b16 %v1809, %v1805
    %v2718 = vpack.c.b16 %v1814, %v1810
    %v2719 = vpack.c.b16 %v1815, %v1811
    %v2720 = vpack.c.b16 %v1816, %v1812
    %v2721 = vpack.c.b16 %v1817, %v1813
    %v2722 = vpack.c.b16 %v1822, %v1818
    %v2723 = vpack.c.b16 %v1823, %v1819
    %v2724 = vpack.c.b16 %v1824, %v1820
    %v2725 = vpack.c.b16 %v1825, %v1821
    %v2726 = vpack.c.b16 %v1830, %v1826
    %v2727 = vpack.c.b16 %v1831, %v1827
    %v2728 = vpack.c.b16 %v1832, %v1828
    %v2729 = vpack.c.b16 %v1833, %v1829
    %v2730 = vpack.c.b16 %v1838, %v1834
    %v2731 = vpack.c.b16 %v1839, %v1835
    %v2732 = vpack.c.b16 %v1840, %v1836
    %v2733 = vpack.c.b16 %v1841, %v1837
    %v2734 = vpack.c.b16 %v1846, %v1842
    %v2735 = vpack.c.b16 %v1847, %v1843
    %v2736 = vpack.c.b16 %v1848, %v1844
    %v2737 = vpack.c.b16 %v1849, %v1845
    %v2738 = vpack.c.b16 %v1854, %v1850
    %v2739 = vpack.c.b16 %v1855, %v1851
    %v2740 = vpack.c.b16 %v1856, %v1852
    %v2741 = vpack.c.b16 %v1857, %v1853
    %v2742 = vpack.c.b16 %v1862, %v1858
    %v2743 = vpack.c.b16 %v1863, %v1859
    %v2744 = vpack.c.b16 %v1864, %v1860
    %v2745 = vpack.c.b16 %v1865, %v1861
    %v2746 = vpack.c.b16 %v1870, %v1866
    %v2747 = vpack.c.b16 %v1871, %v1867
    %v2748 = vpack.c.b16 %v1872, %v1868
    %v2749 = vpack.c.b16 %v1873, %v1869
    %v2750 = vpack.c.b16 %v1878, %v1874
    %v2751 = vpack.c.b16 %v1879, %v1875
    %v2752 = vpack.c.b16 %v1880, %v1876
    %v2753 = vpack.c.b16 %v1881, %v1877
    %v2754 = vpack.c.b16 %v1886, %v1882
    %v2755 = vpack.c.b16 %v1887, %v1883
    %v2756 = vpack.c.b16 %v1888, %v1884
    %v2757 = vpack.c.b16 %v1889, %v1885
    %v2758 = vpack.c.b16 %v1894, %v1890
    %v2759 = vpack.c.b16 %v1895, %v1891
    %v2760 = vpack.c.b16 %v1896, %v1892
    %v2761 = vpack.c.b16 %v1897, %v1893
    %v2762 = vpack.c.b16 %v1902, %v1898
    %v2763 = vpack.c.b16 %v1903, %v1899
    %v2764 = vpack.c.b16 %v1904, %v1900
    %v2765 = vpack.c.b16 %v1905, %v1901
    %v2766 = vpack.c.b16 %v1910, %v1906
    %v2767 = vpack.c.b16 %v1911, %v1907
    %v2768 = vpack.c.b16 %v1912, %v1908
    %v2769 = vpack.c.b16 %v1913, %v1909
    %v2770 = vpack.c.b16 %v1918, %v1914
    %v2771 = vpack.c.b16 %v1919, %v1915
    %v2772 = vpack.c.b16 %v1920, %v1916
    %v2773 = vpack.c.b16 %v1921, %v1917
    %v2774 = vpack.c.b16 %v1926, %v1922
    %v2775 = vpack.c.b16 %v1927, %v1923
    %v2776 = vpack.c.b16 %v1928, %v1924
    %v2777 = vpack.c.b16 %v1929, %v1925
    %v2778 = vpack.c.b16 %v1934, %v1930
    %v2779 = vpack.c.b16 %v1935, %v1931
    %v2780 = vpack.c.b16 %v1936, %v1932
    %v2781 = vpack.c.b16 %v1937, %v1933
    %v2782 = vpack.c.b16 %v1942, %v1938
    %v2783 = vpack.c.b16 %v1943, %v1939
    %v2784 = vpack.c.b16 %v1944, %v1940
    %v2785 = vpack.c.b16 %v1945, %v1941
    %v2786 = vpack.c.b16 %v1950, %v1946
    %v2787 = vpack.c.b16 %v1951, %v1947
    %v2788 = vpack.c.b16 %v1952, %v1948
    %v2789 = vpack.c.b16 %v1953, %v1949
    %v2790 = vpack.c.b16 %v1958, %v1954
    %v2791 = vpack.c.b16 %v1959, %v1955
    %v2792 = vpack.c.b16 %v1960, %v1956
    %v2793 = vpack.c.b16 %v1961, %v1957
    %v2794 = vpack.c.b16 %v1966, %v1962
    %v2795 = vpack.c.b16 %v1967, %v1963
    %v2796 = vpack.c.b16 %v1968, %v1964
    %v2797 = vpack.c.b16 %v1969, %v1965
    %v2798 = vpack.c.b16 %v1974, %v1970
    %v2799 = vpack.c.b16 %v1975, %v1971
    %v2800 = vpack.c.b16 %v1976, %v1972
    %v2801 = vpack.c.b16 %v1977, %v1973
    %v2802 = vpack.c.b16 %v1982, %v1978
    %v2803 = vpack.c.b16 %v1983, %v1979
    %v2804 = vpack.c.b16 %v1984, %v1980
    %v2805 = vpack.c.b16 %v1985, %v1981
    %v2806 = vpack.c.b16 %v1990, %v1986
    %v2807 = vpack.c.b16 %v1991, %v1987
    %v2808 = vpack.c.b16 %v1992, %v1988
    %v2809 = vpack.c.b16 %v1993, %v1989
    %v2810 = vpack.c.b16 %v1998, %v1994
    %v2811 = vpack.c.b16 %v1999, %v1995
    %v2812 = vpack.c.b16 %v2000, %v1996
    %v2813 = vpack.c.b16 %v2001, %v1997
    %v2814 = vpack.c.b16 %v2006, %v2002
    %v2815 = vpack.c.b16 %v2007, %v2003
    %v2816 = vpack.c.b16 %v2008, %v2004
    %v2817 = vpack.c.b16 %v2009, %v2005
    %v2818 = vpack.c.b16 %v2014, %v2010
    %v2819 = vpack.c.b16 %v2015, %v2011
    %v2820 = vpack.c.b16 %v2016, %v2012
    %v2821 = vpack.c.b16 %v2017, %v2013
    %v2822 = vpack.c.b16 %v2022, %v2018
    %v2823 = vpack.c.b16 %v2023, %v2019
    %v2824 = vpack.c.b16 %v2024, %v2020
    %v2825 = vpack.c.b16 %v2025, %v2021
    %v2826 = vpack.c.b16 %v2030, %v2026
    %v2827 = vpack.c.b16 %v2031, %v2027
    %v2828 = vpack.c.b16 %v2032, %v2028
    %v2829 = vpack.c.b16 %v2033, %v2029
    %v2830 = vpack.c.b16 %v2038, %v2034
    %v2831 = vpack.c.b16 %v2039, %v2035
    %v2832 = vpack.c.b16 %v2040, %v2036
    %v2833 = vpack.c.b16 %v2041, %v2037
    %v2834 = vpack.c.b16 %v2046, %v2042
    %v2835 = vpack.c.b16 %v2047, %v2043
    %v2836 = vpack.c.b16 %v2048, %v2044
    %v2837 = vpack.c.b16 %v2049, %v2045
    %v2838 = vpack.c.b16 %v2054, %v2050
    %v2839 = vpack.c.b16 %v2055, %v2051
    %v2840 = vpack.c.b16 %v2056, %v2052
    %v2841 = vpack.c.b16 %v2057, %v2053
    %v2842 = vpack.c.b16 %v2062, %v2058
    %v2843 = vpack.c.b16 %v2063, %v2059
    %v2844 = vpack.c.b16 %v2064, %v2060
    %v2845 = vpack.c.b16 %v2065, %v2061
    %v2846 = vpack.c.b16 %v2070, %v2066
    %v2847 = vpack.c.b16 %v2071, %v2067
    %v2848 = vpack.c.b16 %v2072, %v2068
    %v2849 = vpack.c.b16 %v2073, %v2069
    %v2850 = vpack.c.b16 %v2078, %v2074
    %v2851 = vpack.c.b16 %v2079, %v2075
    %v2852 = vpack.c.b16 %v2080, %v2076
    %v2853 = vpack.c.b16 %v2081, %v2077
    %v2854 = vpack.c.b16 %v2086, %v2082
    %v2855 = vpack.c.b16 %v2087, %v2083
    %v2856 = vpack.c.b16 %v2088, %v2084
    %v2857 = vpack.c.b16 %v2089, %v2085
    %v2858 = vpack.c.b16 %v2094, %v2090
    %v2859 = vpack.c.b16 %v2095, %v2091
    %v2860 = vpack.c.b16 %v2096, %v2092
    %v2861 = vpack.c.b16 %v2097, %v2093
    %v2862 = vpack.c.b16 %v2102, %v2098
    %v2863 = vpack.c.b16 %v2103, %v2099
    %v2864 = vpack.c.b16 %v2104, %v2100
    %v2865 = vpack.c.b16 %v2105, %v2101
    %v2866 = vpack.c.b16 %v2110, %v2106
    %v2867 = vpack.c.b16 %v2111, %v2107
    %v2868 = vpack.c.b16 %v2112, %v2108
    %v2869 = vpack.c.b16 %v2113, %v2109
    %v2870 = vpack.c.b16 %v2118, %v2114
    %v2871 = vpack.c.b16 %v2119, %v2115
    %v2872 = vpack.c.b16 %v2120, %v2116
    %v2873 = vpack.c.b16 %v2121, %v2117
    %v2874 = vpack.c.b16 %v2126, %v2122
    %v2875 = vpack.c.b16 %v2127, %v2123
    %v2876 = vpack.c.b16 %v2128, %v2124
    %v2877 = vpack.c.b16 %v2129, %v2125
    %v2878 = vpack.c.b16 %v2134, %v2130
    %v2879 = vpack.c.b16 %v2135, %v2131
    %v2880 = vpack.c.b16 %v2136, %v2132
    %v2881 = vpack.c.b16 %v2137, %v2133
    %v2882 = vpack.c.b16 %v2142, %v2138
    %v2883 = vpack.c.b16 %v2143, %v2139
    %v2884 = vpack.c.b16 %v2144, %v2140
    %v2885 = vpack.c.b16 %v2145, %v2141
    %v2886 = vpack.c.b16 %v2150, %v2146
    %v2887 = vpack.c.b16 %v2151, %v2147
    %v2888 = vpack.c.b16 %v2152, %v2148
    %v2889 = vpack.c.b16 %v2153, %v2149
    %v2890 = vpack.c.b16 %v2158, %v2154
    %v2891 = vpack.c.b16 %v2159, %v2155
    %v2892 = vpack.c.b16 %v2160, %v2156
    %v2893 = vpack.c.b16 %v2161, %v2157
    %v2894 = vpack.c.b16 %v2166, %v2162
    %v2895 = vpack.c.b16 %v2167, %v2163
    %v2896 = vpack.c.b16 %v2168, %v2164
    %v2897 = vpack.c.b16 %v2169, %v2165
    %v2898 = vpack.c.b16 %v2174, %v2170
    %v2899 = vpack.c.b16 %v2175, %v2171
    %v2900 = vpack.c.b16 %v2176, %v2172
    %v2901 = vpack.c.b16 %v2177, %v2173
    %v2902 = vpack.c.b16 %v2182, %v2178
    %v2903 = vpack.c.b16 %v2183, %v2179
    %v2904 = vpack.c.b16 %v2184, %v2180
    %v2905 = vpack.c.b16 %v2185, %v2181
    %v2906 = vpack.c.b16 %v2190, %v2186
    %v2907 = vpack.c.b16 %v2191, %v2187
    %v2908 = vpack.c.b16 %v2192, %v2188
    %v2909 = vpack.c.b16 %v2193, %v2189
    %v2910 = vpack.c.b16 %v2198, %v2194
    %v2911 = vpack.c.b16 %v2199, %v2195
    %v2912 = vpack.c.b16 %v2200, %v2196
    %v2913 = vpack.c.b16 %v2201, %v2197
    %v2914 = vpack.c.b16 %v2206, %v2202
    %v2915 = vpack.c.b16 %v2207, %v2203
    %v2916 = vpack.c.b16 %v2208, %v2204
    %v2917 = vpack.c.b16 %v2209, %v2205
    %v2918 = vpack.c.b16 %v2214, %v2210
    %v2919 = vpack.c.b16 %v2215, %v2211
    %v2920 = vpack.c.b16 %v2216, %v2212
    %v2921 = vpack.c.b16 %v2217, %v2213
    %v2922 = vpack.c.b16 %v2222, %v2218
    %v2923 = vpack.c.b16 %v2223, %v2219
    %v2924 = vpack.c.b16 %v2224, %v2220
    %v2925 = vpack.c.b16 %v2225, %v2221
    %v2926 = vpack.c.b16 %v2230, %v2226
    %v2927 = vpack.c.b16 %v2231, %v2227
    %v2928 = vpack.c.b16 %v2232, %v2228
    %v2929 = vpack.c.b16 %v2233, %v2229
    %v2930 = vpack.c.b16 %v2238, %v2234
    %v2931 = vpack.c.b16 %v2239, %v2235
    %v2932 = vpack.c.b16 %v2240, %v2236
    %v2933 = vpack.c.b16 %v2241, %v2237
    %v2934 = vpack.c.b16 %v2246, %v2242
    %v2935 = vpack.c.b16 %v2247, %v2243
    %v2936 = vpack.c.b16 %v2248, %v2244
    %v2937 = vpack.c.b16 %v2249, %v2245
    %v2938 = vpack.c.b16 %v2254, %v2250
    %v2939 = vpack.c.b16 %v2255, %v2251
    %v2940 = vpack.c.b16 %v2256, %v2252
    %v2941 = vpack.c.b16 %v2257, %v2253
    %v2942 = vpack.c.b16 %v2262, %v2258
    %v2943 = vpack.c.b16 %v2263, %v2259
    %v2944 = vpack.c.b16 %v2264, %v2260
    %v2945 = vpack.c.b16 %v2265, %v2261
    %v2946 = vpack.c.b16 %v2270, %v2266
    %v2947 = vpack.c.b16 %v2271, %v2267
    %v2948 = vpack.c.b16 %v2272, %v2268
    %v2949 = vpack.c.b16 %v2273, %v2269
    %v2950 = vpack.c.b16 %v2278, %v2274
    %v2951 = vpack.c.b16 %v2279, %v2275
    %v2952 = vpack.c.b16 %v2280, %v2276
    %v2953 = vpack.c.b16 %v2281, %v2277
    %v2954 = vpack.c.b16 %v2286, %v2282
    %v2955 = vpack.c.b16 %v2287, %v2283
    %v2956 = vpack.c.b16 %v2288, %v2284
    %v2957 = vpack.c.b16 %v2289, %v2285
    %v2958 = vpack.c.b16 %v2294, %v2290
    %v2959 = vpack.c.b16 %v2295, %v2291
    %v2960 = vpack.c.b16 %v2296, %v2292
    %v2961 = vpack.c.b16 %v2297, %v2293
    %v2962 = vpack.c.b16 %v2302, %v2298
    %v2963 = vpack.c.b16 %v2303, %v2299
    %v2964 = vpack.c.b16 %v2304, %v2300
    %v2965 = vpack.c.b16 %v2305, %v2301
    %v2966 = vpack.c.b16 %v2310, %v2306
    %v2967 = vpack.c.b16 %v2311, %v2307
    %v2968 = vpack.c.b16 %v2312, %v2308
    %v2969 = vpack.c.b16 %v2313, %v2309
    %v2970 = vpack.c.b16 %v2318, %v2314
    %v2971 = vpack.c.b16 %v2319, %v2315
    %v2972 = vpack.c.b16 %v2320, %v2316
    %v2973 = vpack.c.b16 %v2321, %v2317
    %v2974 = vpack.c.b16 %v2326, %v2322
    %v2975 = vpack.c.b16 %v2327, %v2323
    %v2976 = vpack.c.b16 %v2328, %v2324
    %v2977 = vpack.c.b16 %v2329, %v2325
    %v2978 = vpack.c.b16 %v2334, %v2330
    %v2979 = vpack.c.b16 %v2335, %v2331
    %v2980 = vpack.c.b16 %v2336, %v2332
    %v2981 = vpack.c.b16 %v2337, %v2333
    %v2982 = vpack.c.b16 %v2342, %v2338
    %v2983 = vpack.c.b16 %v2343, %v2339
    %v2984 = vpack.c.b16 %v2344, %v2340
    %v2985 = vpack.c.b16 %v2345, %v2341
    %v2986 = vpack.c.b16 %v2350, %v2346
    %v2987 = vpack.c.b16 %v2351, %v2347
    %v2988 = vpack.c.b16 %v2352, %v2348
    %v2989 = vpack.c.b16 %v2353, %v2349
    %v2990 = vpack.c.b16 %v2358, %v2354
    %v2991 = vpack.c.b16 %v2359, %v2355
    %v2992 = vpack.c.b16 %v2360, %v2356
    %v2993 = vpack.c.b16 %v2361, %v2357
    %v2994 = vpack.c.b16 %v2366, %v2362
    %v2995 = vpack.c.b16 %v2367, %v2363
    %v2996 = vpack.c.b16 %v2368, %v2364
    %v2997 = vpack.c.b16 %v2369, %v2365
    %v2998 = vpack.c.b16 %v2374, %v2370
    %v2999 = vpack.c.b16 %v2375, %v2371
    %v3000 = vpack.c.b16 %v2376, %v2372
    %v3001 = vpack.c.b16 %v2377, %v2373
    %v3002 = vpack.c.b16 %v2382, %v2378
    %v3003 = vpack.c.b16 %v2383, %v2379
    %v3004 = vpack.c.b16 %v2384, %v2380
    %v3005 = vpack.c.b16 %v2385, %v2381
    %v3006 = vpack.c.b16 %v2390, %v2386
    %v3007 = vpack.c.b16 %v2391, %v2387
    %v3008 = vpack.c.b16 %v2392, %v2388
    %v3009 = vpack.c.b16 %v2393, %v2389
    %v3010 = vpack.c.b16 %v2398, %v2394
    %v3011 = vpack.c.b16 %v2399, %v2395
    %v3012 = vpack.c.b16 %v2400, %v2396
    %v3013 = vpack.c.b16 %v2401, %v2397
    %v3014 = vpack.c.b16 %v2406, %v2402
    %v3015 = vpack.c.b16 %v2407, %v2403
    %v3016 = vpack.c.b16 %v2408, %v2404
    %v3017 = vpack.c.b16 %v2409, %v2405
    %v3018 = vpack.c.b16 %v2414, %v2410
    %v3019 = vpack.c.b16 %v2415, %v2411
    %v3020 = vpack.c.b16 %v2416, %v2412
    %v3021 = vpack.c.b16 %v2417, %v2413
    %v3022 = vpack.c.b16 %v2422, %v2418
    %v3023 = vpack.c.b16 %v2423, %v2419
    %v3024 = vpack.c.b16 %v2424, %v2420
    %v3025 = vpack.c.b16 %v2425, %v2421
    %v3026 = vpack.c.b16 %v2430, %v2426
    %v3027 = vpack.c.b16 %v2431, %v2427
    %v3028 = vpack.c.b16 %v2432, %v2428
    %v3029 = vpack.c.b16 %v2433, %v2429
    %v3030 = vpack.c.b16 %v2438, %v2434
    %v3031 = vpack.c.b16 %v2439, %v2435
    %v3032 = vpack.c.b16 %v2440, %v2436
    %v3033 = vpack.c.b16 %v2441, %v2437
    %v3034 = vpack.c.b16 %v2446, %v2442
    %v3035 = vpack.c.b16 %v2447, %v2443
    %v3036 = vpack.c.b16 %v2448, %v2444
    %v3037 = vpack.c.b16 %v2449, %v2445
    %v3038 = vpack.c.b16 %v2454, %v2450
    %v3039 = vpack.c.b16 %v2455, %v2451
    %v3040 = vpack.c.b16 %v2456, %v2452
    %v3041 = vpack.c.b16 %v2457, %v2453
    %v3042 = vpack.c.b16 %v2462, %v2458
    %v3043 = vpack.c.b16 %v2463, %v2459
    %v3044 = vpack.c.b16 %v2464, %v2460
    %v3045 = vpack.c.b16 %v2465, %v2461
    %v3046 = vpack.c.b16 %v2470, %v2466
    %v3047 = vpack.c.b16 %v2471, %v2467
    %v3048 = vpack.c.b16 %v2472, %v2468
    %v3049 = vpack.c.b16 %v2473, %v2469
    %3626 = vmatprep.subr.bf16.mxu0 %v2503
    %3627 = vmatpush1.bf16.msra.mxu0 %v2502
    %3628 = vmatprep.subr.bf16.mxu0 %v2499
    %3629 = vmatpush1.bf16.msra.mxu0 %v2498
    %3630 = vmatprep.subr.bf16.mxu0 %v2495
    %3631 = vmatpush1.bf16.msra.mxu0 %v2494
    %3632 = vmatprep.subr.bf16.mxu0 %v2491
    %3633 = vmatpush1.bf16.msra.mxu0 %v2490
    %3634 = vmatprep.subr.bf16.mxu0 %v2487
    %3635 = vmatpush1.bf16.msra.mxu0 %v2486
    %3636 = vmatprep.subr.bf16.mxu0 %v2483
    %3637 = vmatpush1.bf16.msra.mxu0 %v2482
    %3638 = vmatprep.subr.bf16.mxu0 %v2479
    %3639 = vmatpush1.bf16.msra.mxu0 %v2478
    %3640 = vmatprep.subr.bf16.mxu0 %v2475
    %3641 = vmatpush1.bf16.msra.mxu0 %v2474
    %3642 = vmatprep.subr.bf16.mxu0 %v2535
    %3643 = vmatpush2.bf16.msra.mxu0 %v2534
    %3644 = vmatprep.subr.bf16.mxu0 %v2531
    %3645 = vmatpush2.bf16.msra.mxu0 %v2530
    %3646 = vmatprep.subr.bf16.mxu0 %v2527
    %3647 = vmatpush2.bf16.msra.mxu0 %v2526
    %3648 = vmatprep.subr.bf16.mxu0 %v2523
    %3649 = vmatpush2.bf16.msra.mxu0 %v2522
    %3650 = vmatprep.subr.bf16.mxu0 %v2519
    %3651 = vmatpush2.bf16.msra.mxu0 %v2518
    %3652 = vmatprep.subr.bf16.mxu0 %v2515
    %3653 = vmatpush2.bf16.msra.mxu0 %v2514
    %3654 = vmatprep.subr.bf16.mxu0 %v2511
    %3655 = vmatpush2.bf16.msra.mxu0 %v2510
    %3656 = vmatprep.subr.bf16.mxu0 %v2507
    %3657 = vmatpush2.bf16.msra.mxu0 %v2506
    %3658 = vmatprep.mubr.bf16.mxu0 %v711
    %3659 = vmatmul.mubr.bf16.gmra.mxu0 %v710
    %v3660 = vpop.f32.mrf.mxu0
    %v3661 = vadd.f32 %v639, %v3660
    %v3662 = vpop.f32.mrf.mxu0
    %v3663 = vadd.f32 %v643, %v3662
    %v3664 = vpop.f32.mrf.mxu0
    %v3665 = vadd.f32 %v639, %v3664
    %v3666 = vpop.f32.mrf.mxu0
    %v3667 = vadd.f32 %v643, %v3666
    %3668 = vdwg.mxu0
    %3669 = vmatprep.subr.bf16.mxu0 %v2567
    %3670 = vmatpush1.bf16.msra.mxu0 %v2566
    %3671 = vmatprep.subr.bf16.mxu0 %v2563
    %3672 = vmatpush1.bf16.msra.mxu0 %v2562
    %3673 = vmatprep.subr.bf16.mxu0 %v2559
    %3674 = vmatpush1.bf16.msra.mxu0 %v2558
    %3675 = vmatprep.subr.bf16.mxu0 %v2555
    %3676 = vmatpush1.bf16.msra.mxu0 %v2554
    %3677 = vmatprep.subr.bf16.mxu0 %v2551
    %3678 = vmatpush1.bf16.msra.mxu0 %v2550
    %3679 = vmatprep.subr.bf16.mxu0 %v2547
    %3680 = vmatpush1.bf16.msra.mxu0 %v2546
    %3681 = vmatprep.subr.bf16.mxu0 %v2543
    %3682 = vmatpush1.bf16.msra.mxu0 %v2542
    %3683 = vmatprep.subr.bf16.mxu0 %v2539
    %3684 = vmatpush1.bf16.msra.mxu0 %v2538
    %3685 = vmatprep.subr.bf16.mxu0 %v2599
    %3686 = vmatpush2.bf16.msra.mxu0 %v2598
    %3687 = vmatprep.subr.bf16.mxu0 %v2595
    %3688 = vmatpush2.bf16.msra.mxu0 %v2594
    %3689 = vmatprep.subr.bf16.mxu0 %v2591
    %3690 = vmatpush2.bf16.msra.mxu0 %v2590
    %3691 = vmatprep.subr.bf16.mxu0 %v2587
    %3692 = vmatpush2.bf16.msra.mxu0 %v2586
    %3693 = vmatprep.subr.bf16.mxu0 %v2583
    %3694 = vmatpush2.bf16.msra.mxu0 %v2582
    %3695 = vmatprep.subr.bf16.mxu0 %v2579
    %3696 = vmatpush2.bf16.msra.mxu0 %v2578
    %3697 = vmatprep.subr.bf16.mxu0 %v2575
    %3698 = vmatpush2.bf16.msra.mxu0 %v2574
    %3699 = vmatprep.subr.bf16.mxu0 %v2571
    %3700 = vmatpush2.bf16.msra.mxu0 %v2570
    %3701 = vmatprep.mubr.bf16.mxu0 %v713
    %3702 = vmatmul.mubr.bf16.gmra.mxu0 %v712
    %v3703 = vpop.f32.mrf.mxu0
    %v3704 = vadd.f32 %v3661, %v3703
    %v3705 = vpop.f32.mrf.mxu0
    %v3706 = vadd.f32 %v3663, %v3705
    %v3707 = vpop.f32.mrf.mxu0
    %v3708 = vadd.f32 %v3665, %v3707
    %v3709 = vpop.f32.mrf.mxu0
    %v3710 = vadd.f32 %v3667, %v3709
    %3711 = vdwg.mxu0
    %3712 = vmatprep.subr.bf16.mxu0 %v2631
    %3713 = vmatpush1.bf16.msra.mxu0 %v2630
    %3714 = vmatprep.subr.bf16.mxu0 %v2627
    %3715 = vmatpush1.bf16.msra.mxu0 %v2626
    %3716 = vmatprep.subr.bf16.mxu0 %v2623
    %3717 = vmatpush1.bf16.msra.mxu0 %v2622
    %3718 = vmatprep.subr.bf16.mxu0 %v2619
    %3719 = vmatpush1.bf16.msra.mxu0 %v2618
    %3720 = vmatprep.subr.bf16.mxu0 %v2615
    %3721 = vmatpush1.bf16.msra.mxu0 %v2614
    %3722 = vmatprep.subr.bf16.mxu0 %v2611
    %3723 = vmatpush1.bf16.msra.mxu0 %v2610
    %3724 = vmatprep.subr.bf16.mxu0 %v2607
    %3725 = vmatpush1.bf16.msra.mxu0 %v2606
    %3726 = vmatprep.subr.bf16.mxu0 %v2603
    %3727 = vmatpush1.bf16.msra.mxu0 %v2602
    %3728 = vmatprep.subr.bf16.mxu0 %v2663
    %3729 = vmatpush2.bf16.msra.mxu0 %v2662
    %3730 = vmatprep.subr.bf16.mxu0 %v2659
    %3731 = vmatpush2.bf16.msra.mxu0 %v2658
    %3732 = vmatprep.subr.bf16.mxu0 %v2655
    %3733 = vmatpush2.bf16.msra.mxu0 %v2654
    %3734 = vmatprep.subr.bf16.mxu0 %v2651
    %3735 = vmatpush2.bf16.msra.mxu0 %v2650
    %3736 = vmatprep.subr.bf16.mxu0 %v2647
    %3737 = vmatpush2.bf16.msra.mxu0 %v2646
    %3738 = vmatprep.subr.bf16.mxu0 %v2643
    %3739 = vmatpush2.bf16.msra.mxu0 %v2642
    %3740 = vmatprep.subr.bf16.mxu0 %v2639
    %3741 = vmatpush2.bf16.msra.mxu0 %v2638
    %3742 = vmatprep.subr.bf16.mxu0 %v2635
    %3743 = vmatpush2.bf16.msra.mxu0 %v2634
    %3744 = vmatprep.mubr.bf16.mxu0 %v715
    %3745 = vmatmul.mubr.bf16.gmra.mxu0 %v714
    %v3746 = vpop.f32.mrf.mxu0
    %v3747 = vadd.f32 %v3704, %v3746
    %v3748 = vpop.f32.mrf.mxu0
    %v3749 = vadd.f32 %v3706, %v3748
    %v3750 = vpop.f32.mrf.mxu0
    %v3751 = vadd.f32 %v3708, %v3750
    %v3752 = vpop.f32.mrf.mxu0
    %v3753 = vadd.f32 %v3710, %v3752
    %3754 = vdwg.mxu0
    %3755 = vmatprep.subr.bf16.mxu0 %v2695
    %3756 = vmatpush1.bf16.msra.mxu0 %v2694
    %3757 = vmatprep.subr.bf16.mxu0 %v2691
    %3758 = vmatpush1.bf16.msra.mxu0 %v2690
    %3759 = vmatprep.subr.bf16.mxu0 %v2687
    %3760 = vmatpush1.bf16.msra.mxu0 %v2686
    %3761 = vmatprep.subr.bf16.mxu0 %v2683
    %3762 = vmatpush1.bf16.msra.mxu0 %v2682
    %3763 = vmatprep.subr.bf16.mxu0 %v2679
    %3764 = vmatpush1.bf16.msra.mxu0 %v2678
    %3765 = vmatprep.subr.bf16.mxu0 %v2675
    %3766 = vmatpush1.bf16.msra.mxu0 %v2674
    %3767 = vmatprep.subr.bf16.mxu0 %v2671
    %3768 = vmatpush1.bf16.msra.mxu0 %v2670
    %3769 = vmatprep.subr.bf16.mxu0 %v2667
    %3770 = vmatpush1.bf16.msra.mxu0 %v2666
    %3771 = vmatprep.subr.bf16.mxu0 %v2727
    %3772 = vmatpush2.bf16.msra.mxu0 %v2726
    %3773 = vmatprep.subr.bf16.mxu0 %v2723
    %3774 = vmatpush2.bf16.msra.mxu0 %v2722
    %3775 = vmatprep.subr.bf16.mxu0 %v2719
    %3776 = vmatpush2.bf16.msra.mxu0 %v2718
    %3777 = vmatprep.subr.bf16.mxu0 %v2715
    %3778 = vmatpush2.bf16.msra.mxu0 %v2714
    %3779 = vmatprep.subr.bf16.mxu0 %v2711
    %3780 = vmatpush2.bf16.msra.mxu0 %v2710
    %3781 = vmatprep.subr.bf16.mxu0 %v2707
    %3782 = vmatpush2.bf16.msra.mxu0 %v2706
    %3783 = vmatprep.subr.bf16.mxu0 %v2703
    %3784 = vmatpush2.bf16.msra.mxu0 %v2702
    %3785 = vmatprep.subr.bf16.mxu0 %v2699
    %3786 = vmatpush2.bf16.msra.mxu0 %v2698
    %3787 = vmatprep.mubr.bf16.mxu0 %v717
    %3788 = vmatmul.mubr.bf16.gmra.mxu0 %v716
    %v3789 = vpop.f32.mrf.mxu0
    %v3790 = vadd.f32 %v3747, %v3789
    %v3791 = vpop.f32.mrf.mxu0
    %v3792 = vadd.f32 %v3749, %v3791
    %v3793 = vpop.f32.mrf.mxu0
    %v3794 = vadd.f32 %v3751, %v3793
    %v3795 = vpop.f32.mrf.mxu0
    %v3796 = vadd.f32 %v3753, %v3795
    %3797 = vdwg.mxu0
    %3798 = vmatprep.subr.bf16.mxu0 %v2759
    %3799 = vmatpush1.bf16.msra.mxu0 %v2758
    %3800 = vmatprep.subr.bf16.mxu0 %v2755
    %3801 = vmatpush1.bf16.msra.mxu0 %v2754
    %3802 = vmatprep.subr.bf16.mxu0 %v2751
    %3803 = vmatpush1.bf16.msra.mxu0 %v2750
    %3804 = vmatprep.subr.bf16.mxu0 %v2747
    %3805 = vmatpush1.bf16.msra.mxu0 %v2746
    %3806 = vmatprep.subr.bf16.mxu0 %v2743
    %3807 = vmatpush1.bf16.msra.mxu0 %v2742
    %3808 = vmatprep.subr.bf16.mxu0 %v2739
    %3809 = vmatpush1.bf16.msra.mxu0 %v2738
    %3810 = vmatprep.subr.bf16.mxu0 %v2735
    %3811 = vmatpush1.bf16.msra.mxu0 %v2734
    %3812 = vmatprep.subr.bf16.mxu0 %v2731
    %3813 = vmatpush1.bf16.msra.mxu0 %v2730
    %3814 = vmatprep.subr.bf16.mxu0 %v2791
    %3815 = vmatpush2.bf16.msra.mxu0 %v2790
    %3816 = vmatprep.subr.bf16.mxu0 %v2787
    %3817 = vmatpush2.bf16.msra.mxu0 %v2786
    %3818 = vmatprep.subr.bf16.mxu0 %v2783
    %3819 = vmatpush2.bf16.msra.mxu0 %v2782
    %3820 = vmatprep.subr.bf16.mxu0 %v2779
    %3821 = vmatpush2.bf16.msra.mxu0 %v2778
    %3822 = vmatprep.subr.bf16.mxu0 %v2775
    %3823 = vmatpush2.bf16.msra.mxu0 %v2774
    %3824 = vmatprep.subr.bf16.mxu0 %v2771
    %3825 = vmatpush2.bf16.msra.mxu0 %v2770
    %3826 = vmatprep.subr.bf16.mxu0 %v2767
    %3827 = vmatpush2.bf16.msra.mxu0 %v2766
    %3828 = vmatprep.subr.bf16.mxu0 %v2763
    %3829 = vmatpush2.bf16.msra.mxu0 %v2762
    %3830 = vmatprep.mubr.bf16.mxu0 %v719
    %3831 = vmatmul.mubr.bf16.gmra.mxu0 %v718
    %v3832 = vpop.f32.mrf.mxu0
    %v3833 = vadd.f32 %v3790, %v3832
    %v3834 = vpop.f32.mrf.mxu0
    %v3835 = vadd.f32 %v3792, %v3834
    %v3836 = vpop.f32.mrf.mxu0
    %v3837 = vadd.f32 %v3794, %v3836
    %v3838 = vpop.f32.mrf.mxu0
    %v3839 = vadd.f32 %v3796, %v3838
    %3840 = vdwg.mxu0
    %3841 = vmatprep.subr.bf16.mxu0 %v2823
    %3842 = vmatpush1.bf16.msra.mxu0 %v2822
    %3843 = vmatprep.subr.bf16.mxu0 %v2819
    %3844 = vmatpush1.bf16.msra.mxu0 %v2818
    %3845 = vmatprep.subr.bf16.mxu0 %v2815
    %3846 = vmatpush1.bf16.msra.mxu0 %v2814
    %3847 = vmatprep.subr.bf16.mxu0 %v2811
    %3848 = vmatpush1.bf16.msra.mxu0 %v2810
    %3849 = vmatprep.subr.bf16.mxu0 %v2807
    %3850 = vmatpush1.bf16.msra.mxu0 %v2806
    %3851 = vmatprep.subr.bf16.mxu0 %v2803
    %3852 = vmatpush1.bf16.msra.mxu0 %v2802
    %3853 = vmatprep.subr.bf16.mxu0 %v2799
    %3854 = vmatpush1.bf16.msra.mxu0 %v2798
    %3855 = vmatprep.subr.bf16.mxu0 %v2795
    %3856 = vmatpush1.bf16.msra.mxu0 %v2794
    %3857 = vmatprep.subr.bf16.mxu0 %v2855
    %3858 = vmatpush2.bf16.msra.mxu0 %v2854
    %3859 = vmatprep.subr.bf16.mxu0 %v2851
    %3860 = vmatpush2.bf16.msra.mxu0 %v2850
    %3861 = vmatprep.subr.bf16.mxu0 %v2847
    %3862 = vmatpush2.bf16.msra.mxu0 %v2846
    %3863 = vmatprep.subr.bf16.mxu0 %v2843
    %3864 = vmatpush2.bf16.msra.mxu0 %v2842
    %3865 = vmatprep.subr.bf16.mxu0 %v2839
    %3866 = vmatpush2.bf16.msra.mxu0 %v2838
    %3867 = vmatprep.subr.bf16.mxu0 %v2835
    %3868 = vmatpush2.bf16.msra.mxu0 %v2834
    %3869 = vmatprep.subr.bf16.mxu0 %v2831
    %3870 = vmatpush2.bf16.msra.mxu0 %v2830
    %3871 = vmatprep.subr.bf16.mxu0 %v2827
    %3872 = vmatpush2.bf16.msra.mxu0 %v2826
    %3873 = vmatprep.mubr.bf16.mxu0 %v721
    %3874 = vmatmul.mubr.bf16.gmra.mxu0 %v720
    %v3875 = vpop.f32.mrf.mxu0
    %v3876 = vadd.f32 %v3833, %v3875
    %v3877 = vpop.f32.mrf.mxu0
    %v3878 = vadd.f32 %v3835, %v3877
    %v3879 = vpop.f32.mrf.mxu0
    %v3880 = vadd.f32 %v3837, %v3879
    %v3881 = vpop.f32.mrf.mxu0
    %v3882 = vadd.f32 %v3839, %v3881
    %3883 = vdwg.mxu0
    %3884 = vmatprep.subr.bf16.mxu0 %v2887
    %3885 = vmatpush1.bf16.msra.mxu0 %v2886
    %3886 = vmatprep.subr.bf16.mxu0 %v2883
    %3887 = vmatpush1.bf16.msra.mxu0 %v2882
    %3888 = vmatprep.subr.bf16.mxu0 %v2879
    %3889 = vmatpush1.bf16.msra.mxu0 %v2878
    %3890 = vmatprep.subr.bf16.mxu0 %v2875
    %3891 = vmatpush1.bf16.msra.mxu0 %v2874
    %3892 = vmatprep.subr.bf16.mxu0 %v2871
    %3893 = vmatpush1.bf16.msra.mxu0 %v2870
    %3894 = vmatprep.subr.bf16.mxu0 %v2867
    %3895 = vmatpush1.bf16.msra.mxu0 %v2866
    %3896 = vmatprep.subr.bf16.mxu0 %v2863
    %3897 = vmatpush1.bf16.msra.mxu0 %v2862
    %3898 = vmatprep.subr.bf16.mxu0 %v2859
    %3899 = vmatpush1.bf16.msra.mxu0 %v2858
    %3900 = vmatprep.subr.bf16.mxu0 %v2919
    %3901 = vmatpush2.bf16.msra.mxu0 %v2918
    %3902 = vmatprep.subr.bf16.mxu0 %v2915
    %3903 = vmatpush2.bf16.msra.mxu0 %v2914
    %3904 = vmatprep.subr.bf16.mxu0 %v2911
    %3905 = vmatpush2.bf16.msra.mxu0 %v2910
    %3906 = vmatprep.subr.bf16.mxu0 %v2907
    %3907 = vmatpush2.bf16.msra.mxu0 %v2906
    %3908 = vmatprep.subr.bf16.mxu0 %v2903
    %3909 = vmatpush2.bf16.msra.mxu0 %v2902
    %3910 = vmatprep.subr.bf16.mxu0 %v2899
    %3911 = vmatpush2.bf16.msra.mxu0 %v2898
    %3912 = vmatprep.subr.bf16.mxu0 %v2895
    %3913 = vmatpush2.bf16.msra.mxu0 %v2894
    %3914 = vmatprep.subr.bf16.mxu0 %v2891
    %3915 = vmatpush2.bf16.msra.mxu0 %v2890
    %3916 = vmatprep.mubr.bf16.mxu0 %v723
    %3917 = vmatmul.mubr.bf16.gmra.mxu0 %v722
    %v3918 = vpop.f32.mrf.mxu0
    %v3919 = vadd.f32 %v3876, %v3918
    %v3920 = vpop.f32.mrf.mxu0
    %v3921 = vadd.f32 %v3878, %v3920
    %v3922 = vpop.f32.mrf.mxu0
    %v3923 = vadd.f32 %v3880, %v3922
    %v3924 = vpop.f32.mrf.mxu0
    %v3925 = vadd.f32 %v3882, %v3924
    %3926 = vdwg.mxu0
    %3927 = vmatprep.subr.bf16.mxu0 %v2951
    %3928 = vmatpush1.bf16.msra.mxu0 %v2950
    %3929 = vmatprep.subr.bf16.mxu0 %v2947
    %3930 = vmatpush1.bf16.msra.mxu0 %v2946
    %3931 = vmatprep.subr.bf16.mxu0 %v2943
    %3932 = vmatpush1.bf16.msra.mxu0 %v2942
    %3933 = vmatprep.subr.bf16.mxu0 %v2939
    %3934 = vmatpush1.bf16.msra.mxu0 %v2938
    %3935 = vmatprep.subr.bf16.mxu0 %v2935
    %3936 = vmatpush1.bf16.msra.mxu0 %v2934
    %3937 = vmatprep.subr.bf16.mxu0 %v2931
    %3938 = vmatpush1.bf16.msra.mxu0 %v2930
    %3939 = vmatprep.subr.bf16.mxu0 %v2927
    %3940 = vmatpush1.bf16.msra.mxu0 %v2926
    %3941 = vmatprep.subr.bf16.mxu0 %v2923
    %3942 = vmatpush1.bf16.msra.mxu0 %v2922
    %3943 = vmatprep.subr.bf16.mxu0 %v2983
    %3944 = vmatpush2.bf16.msra.mxu0 %v2982
    %3945 = vmatprep.subr.bf16.mxu0 %v2979
    %3946 = vmatpush2.bf16.msra.mxu0 %v2978
    %3947 = vmatprep.subr.bf16.mxu0 %v2975
    %3948 = vmatpush2.bf16.msra.mxu0 %v2974
    %3949 = vmatprep.subr.bf16.mxu0 %v2971
    %3950 = vmatpush2.bf16.msra.mxu0 %v2970
    %3951 = vmatprep.subr.bf16.mxu0 %v2967
    %3952 = vmatpush2.bf16.msra.mxu0 %v2966
    %3953 = vmatprep.subr.bf16.mxu0 %v2963
    %3954 = vmatpush2.bf16.msra.mxu0 %v2962
    %3955 = vmatprep.subr.bf16.mxu0 %v2959
    %3956 = vmatpush2.bf16.msra.mxu0 %v2958
    %3957 = vmatprep.subr.bf16.mxu0 %v2955
    %3958 = vmatpush2.bf16.msra.mxu0 %v2954
    %3959 = vmatprep.mubr.bf16.mxu0 %v725
    %3960 = vmatmul.mubr.bf16.gmra.mxu0 %v724
    %v3961 = vpop.f32.mrf.mxu0
    %v3962 = vadd.f32 %v3919, %v3961
    %v3963 = vpop.f32.mrf.mxu0
    %v3964 = vadd.f32 %v3921, %v3963
    %v3965 = vpop.f32.mrf.mxu0
    %v3966 = vadd.f32 %v3923, %v3965
    %v3967 = vpop.f32.mrf.mxu0
    %v3968 = vadd.f32 %v3925, %v3967
    %3969 = vdwg.mxu0
    %3970 = vmatprep.subr.bf16.mxu0 %v3015
    %3971 = vmatpush1.bf16.msra.mxu0 %v3014
    %3972 = vmatprep.subr.bf16.mxu0 %v3011
    %3973 = vmatpush1.bf16.msra.mxu0 %v3010
    %3974 = vmatprep.subr.bf16.mxu0 %v3007
    %3975 = vmatpush1.bf16.msra.mxu0 %v3006
    %3976 = vmatprep.subr.bf16.mxu0 %v3003
    %3977 = vmatpush1.bf16.msra.mxu0 %v3002
    %3978 = vmatprep.subr.bf16.mxu0 %v2999
    %3979 = vmatpush1.bf16.msra.mxu0 %v2998
    %3980 = vmatprep.subr.bf16.mxu0 %v2995
    %3981 = vmatpush1.bf16.msra.mxu0 %v2994
    %3982 = vmatprep.subr.bf16.mxu0 %v2991
    %3983 = vmatpush1.bf16.msra.mxu0 %v2990
    %3984 = vmatprep.subr.bf16.mxu0 %v2987
    %3985 = vmatpush1.bf16.msra.mxu0 %v2986
    %3986 = vmatprep.subr.bf16.mxu0 %v3047
    %3987 = vmatpush2.bf16.msra.mxu0 %v3046
    %3988 = vmatprep.subr.bf16.mxu0 %v3043
    %3989 = vmatpush2.bf16.msra.mxu0 %v3042
    %3990 = vmatprep.subr.bf16.mxu0 %v3039
    %3991 = vmatpush2.bf16.msra.mxu0 %v3038
    %3992 = vmatprep.subr.bf16.mxu0 %v3035
    %3993 = vmatpush2.bf16.msra.mxu0 %v3034
    %3994 = vmatprep.subr.bf16.mxu0 %v3031
    %3995 = vmatpush2.bf16.msra.mxu0 %v3030
    %3996 = vmatprep.subr.bf16.mxu0 %v3027
    %3997 = vmatpush2.bf16.msra.mxu0 %v3026
    %3998 = vmatprep.subr.bf16.mxu0 %v3023
    %3999 = vmatpush2.bf16.msra.mxu0 %v3022
    %4000 = vmatprep.subr.bf16.mxu0 %v3019
    %4001 = vmatpush2.bf16.msra.mxu0 %v3018
    %4002 = vmatprep.mubr.bf16.mxu0 %v727
    %4003 = vmatmul.mubr.bf16.gmra.mxu0 %v726
    %v4004 = vpop.f32.mrf.mxu0
    %v4005 = vadd.f32 %v3962, %v4004
    %v4006 = vpop.f32.mrf.mxu0
    %v4007 = vadd.f32 %v3964, %v4006
    %v4008 = vpop.f32.mrf.mxu0
    %v4009 = vadd.f32 %v3966, %v4008
    %v4010 = vpop.f32.mrf.mxu0
    %v4011 = vadd.f32 %v3968, %v4010
    %4012 = vdwg.mxu0
    %4013 = vmatprep.subr.bf16.mxu0 %v2505
    %4014 = vmatpush1.bf16.msra.mxu0 %v2504
    %4015 = vmatprep.subr.bf16.mxu0 %v2501
    %4016 = vmatpush1.bf16.msra.mxu0 %v2500
    %4017 = vmatprep.subr.bf16.mxu0 %v2497
    %4018 = vmatpush1.bf16.msra.mxu0 %v2496
    %4019 = vmatprep.subr.bf16.mxu0 %v2493
    %4020 = vmatpush1.bf16.msra.mxu0 %v2492
    %4021 = vmatprep.subr.bf16.mxu0 %v2489
    %4022 = vmatpush1.bf16.msra.mxu0 %v2488
    %4023 = vmatprep.subr.bf16.mxu0 %v2485
    %4024 = vmatpush1.bf16.msra.mxu0 %v2484
    %4025 = vmatprep.subr.bf16.mxu0 %v2481
    %4026 = vmatpush1.bf16.msra.mxu0 %v2480
    %4027 = vmatprep.subr.bf16.mxu0 %v2477
    %4028 = vmatpush1.bf16.msra.mxu0 %v2476
    %4029 = vmatprep.subr.bf16.mxu0 %v2537
    %4030 = vmatpush2.bf16.msra.mxu0 %v2536
    %4031 = vmatprep.subr.bf16.mxu0 %v2533
    %4032 = vmatpush2.bf16.msra.mxu0 %v2532
    %4033 = vmatprep.subr.bf16.mxu0 %v2529
    %4034 = vmatpush2.bf16.msra.mxu0 %v2528
    %4035 = vmatprep.subr.bf16.mxu0 %v2525
    %4036 = vmatpush2.bf16.msra.mxu0 %v2524
    %4037 = vmatprep.subr.bf16.mxu0 %v2521
    %4038 = vmatpush2.bf16.msra.mxu0 %v2520
    %4039 = vmatprep.subr.bf16.mxu0 %v2517
    %4040 = vmatpush2.bf16.msra.mxu0 %v2516
    %4041 = vmatprep.subr.bf16.mxu0 %v2513
    %4042 = vmatpush2.bf16.msra.mxu0 %v2512
    %4043 = vmatprep.subr.bf16.mxu0 %v2509
    %4044 = vmatpush2.bf16.msra.mxu0 %v2508
    %4045 = vmatprep.mubr.bf16.mxu0 %v711
    %4046 = vmatmul.mubr.bf16.gmra.mxu0 %v710
    %v4047 = vpop.f32.mrf.mxu0
    %v4048 = vadd.f32 %v647, %v4047
    %v4049 = vpop.f32.mrf.mxu0
    %v4050 = vadd.f32 %v651, %v4049
    %v4051 = vpop.f32.mrf.mxu0
    %v4052 = vadd.f32 %v647, %v4051
    %v4053 = vpop.f32.mrf.mxu0
    %v4054 = vadd.f32 %v651, %v4053
    %4055 = vdwg.mxu0
    %4056 = vmatprep.subr.bf16.mxu0 %v2569
    %4057 = vmatpush1.bf16.msra.mxu0 %v2568
    %4058 = vmatprep.subr.bf16.mxu0 %v2565
    %4059 = vmatpush1.bf16.msra.mxu0 %v2564
    %4060 = vmatprep.subr.bf16.mxu0 %v2561
    %4061 = vmatpush1.bf16.msra.mxu0 %v2560
    %4062 = vmatprep.subr.bf16.mxu0 %v2557
    %4063 = vmatpush1.bf16.msra.mxu0 %v2556
    %4064 = vmatprep.subr.bf16.mxu0 %v2553
    %4065 = vmatpush1.bf16.msra.mxu0 %v2552
    %4066 = vmatprep.subr.bf16.mxu0 %v2549
    %4067 = vmatpush1.bf16.msra.mxu0 %v2548
    %4068 = vmatprep.subr.bf16.mxu0 %v2545
    %4069 = vmatpush1.bf16.msra.mxu0 %v2544
    %4070 = vmatprep.subr.bf16.mxu0 %v2541
    %4071 = vmatpush1.bf16.msra.mxu0 %v2540
    %4072 = vmatprep.subr.bf16.mxu0 %v2601
    %4073 = vmatpush2.bf16.msra.mxu0 %v2600
    %4074 = vmatprep.subr.bf16.mxu0 %v2597
    %4075 = vmatpush2.bf16.msra.mxu0 %v2596
    %4076 = vmatprep.subr.bf16.mxu0 %v2593
    %4077 = vmatpush2.bf16.msra.mxu0 %v2592
    %4078 = vmatprep.subr.bf16.mxu0 %v2589
    %4079 = vmatpush2.bf16.msra.mxu0 %v2588
    %4080 = vmatprep.subr.bf16.mxu0 %v2585
    %4081 = vmatpush2.bf16.msra.mxu0 %v2584
    %4082 = vmatprep.subr.bf16.mxu0 %v2581
    %4083 = vmatpush2.bf16.msra.mxu0 %v2580
    %4084 = vmatprep.subr.bf16.mxu0 %v2577
    %4085 = vmatpush2.bf16.msra.mxu0 %v2576
    %4086 = vmatprep.subr.bf16.mxu0 %v2573
    %4087 = vmatpush2.bf16.msra.mxu0 %v2572
    %4088 = vmatprep.mubr.bf16.mxu0 %v713
    %4089 = vmatmul.mubr.bf16.gmra.mxu0 %v712
    %v4090 = vpop.f32.mrf.mxu0
    %v4091 = vadd.f32 %v4048, %v4090
    %v4092 = vpop.f32.mrf.mxu0
    %v4093 = vadd.f32 %v4050, %v4092
    %v4094 = vpop.f32.mrf.mxu0
    %v4095 = vadd.f32 %v4052, %v4094
    %v4096 = vpop.f32.mrf.mxu0
    %v4097 = vadd.f32 %v4054, %v4096
    %4098 = vdwg.mxu0
    %4099 = vmatprep.subr.bf16.mxu0 %v2633
    %4100 = vmatpush1.bf16.msra.mxu0 %v2632
    %4101 = vmatprep.subr.bf16.mxu0 %v2629
    %4102 = vmatpush1.bf16.msra.mxu0 %v2628
    %4103 = vmatprep.subr.bf16.mxu0 %v2625
    %4104 = vmatpush1.bf16.msra.mxu0 %v2624
    %4105 = vmatprep.subr.bf16.mxu0 %v2621
    %4106 = vmatpush1.bf16.msra.mxu0 %v2620
    %4107 = vmatprep.subr.bf16.mxu0 %v2617
    %4108 = vmatpush1.bf16.msra.mxu0 %v2616
    %4109 = vmatprep.subr.bf16.mxu0 %v2613
    %4110 = vmatpush1.bf16.msra.mxu0 %v2612
    %4111 = vmatprep.subr.bf16.mxu0 %v2609
    %4112 = vmatpush1.bf16.msra.mxu0 %v2608
    %4113 = vmatprep.subr.bf16.mxu0 %v2605
    %4114 = vmatpush1.bf16.msra.mxu0 %v2604
    %4115 = vmatprep.subr.bf16.mxu0 %v2665
    %4116 = vmatpush2.bf16.msra.mxu0 %v2664
    %4117 = vmatprep.subr.bf16.mxu0 %v2661
    %4118 = vmatpush2.bf16.msra.mxu0 %v2660
    %4119 = vmatprep.subr.bf16.mxu0 %v2657
    %4120 = vmatpush2.bf16.msra.mxu0 %v2656
    %4121 = vmatprep.subr.bf16.mxu0 %v2653
    %4122 = vmatpush2.bf16.msra.mxu0 %v2652
    %4123 = vmatprep.subr.bf16.mxu0 %v2649
    %4124 = vmatpush2.bf16.msra.mxu0 %v2648
    %4125 = vmatprep.subr.bf16.mxu0 %v2645
    %4126 = vmatpush2.bf16.msra.mxu0 %v2644
    %4127 = vmatprep.subr.bf16.mxu0 %v2641
    %4128 = vmatpush2.bf16.msra.mxu0 %v2640
    %4129 = vmatprep.subr.bf16.mxu0 %v2637
    %4130 = vmatpush2.bf16.msra.mxu0 %v2636
    %4131 = vmatprep.mubr.bf16.mxu0 %v715
    %4132 = vmatmul.mubr.bf16.gmra.mxu0 %v714
    %v4133 = vpop.f32.mrf.mxu0
    %v4134 = vadd.f32 %v4091, %v4133
    %v4135 = vpop.f32.mrf.mxu0
    %v4136 = vadd.f32 %v4093, %v4135
    %v4137 = vpop.f32.mrf.mxu0
    %v4138 = vadd.f32 %v4095, %v4137
    %v4139 = vpop.f32.mrf.mxu0
    %v4140 = vadd.f32 %v4097, %v4139
    %4141 = vdwg.mxu0
    %4142 = vmatprep.subr.bf16.mxu0 %v2697
    %4143 = vmatpush1.bf16.msra.mxu0 %v2696
    %4144 = vmatprep.subr.bf16.mxu0 %v2693
    %4145 = vmatpush1.bf16.msra.mxu0 %v2692
    %4146 = vmatprep.subr.bf16.mxu0 %v2689
    %4147 = vmatpush1.bf16.msra.mxu0 %v2688
    %4148 = vmatprep.subr.bf16.mxu0 %v2685
    %4149 = vmatpush1.bf16.msra.mxu0 %v2684
    %4150 = vmatprep.subr.bf16.mxu0 %v2681
    %4151 = vmatpush1.bf16.msra.mxu0 %v2680
    %4152 = vmatprep.subr.bf16.mxu0 %v2677
    %4153 = vmatpush1.bf16.msra.mxu0 %v2676
    %4154 = vmatprep.subr.bf16.mxu0 %v2673
    %4155 = vmatpush1.bf16.msra.mxu0 %v2672
    %4156 = vmatprep.subr.bf16.mxu0 %v2669
    %4157 = vmatpush1.bf16.msra.mxu0 %v2668
    %4158 = vmatprep.subr.bf16.mxu0 %v2729
    %4159 = vmatpush2.bf16.msra.mxu0 %v2728
    %4160 = vmatprep.subr.bf16.mxu0 %v2725
    %4161 = vmatpush2.bf16.msra.mxu0 %v2724
    %4162 = vmatprep.subr.bf16.mxu0 %v2721
    %4163 = vmatpush2.bf16.msra.mxu0 %v2720
    %4164 = vmatprep.subr.bf16.mxu0 %v2717
    %4165 = vmatpush2.bf16.msra.mxu0 %v2716
    %4166 = vmatprep.subr.bf16.mxu0 %v2713
    %4167 = vmatpush2.bf16.msra.mxu0 %v2712
    %4168 = vmatprep.subr.bf16.mxu0 %v2709
    %4169 = vmatpush2.bf16.msra.mxu0 %v2708
    %4170 = vmatprep.subr.bf16.mxu0 %v2705
    %4171 = vmatpush2.bf16.msra.mxu0 %v2704
    %4172 = vmatprep.subr.bf16.mxu0 %v2701
    %4173 = vmatpush2.bf16.msra.mxu0 %v2700
    %4174 = vmatprep.mubr.bf16.mxu0 %v717
    %4175 = vmatmul.mubr.bf16.gmra.mxu0 %v716
    %v4176 = vpop.f32.mrf.mxu0
    %v4177 = vadd.f32 %v4134, %v4176
    %v4178 = vpop.f32.mrf.mxu0
    %v4179 = vadd.f32 %v4136, %v4178
    %v4180 = vpop.f32.mrf.mxu0
    %v4181 = vadd.f32 %v4138, %v4180
    %v4182 = vpop.f32.mrf.mxu0
    %v4183 = vadd.f32 %v4140, %v4182
    %4184 = vdwg.mxu0
    %4185 = vmatprep.subr.bf16.mxu0 %v2761
    %4186 = vmatpush1.bf16.msra.mxu0 %v2760
    %4187 = vmatprep.subr.bf16.mxu0 %v2757
    %4188 = vmatpush1.bf16.msra.mxu0 %v2756
    %4189 = vmatprep.subr.bf16.mxu0 %v2753
    %4190 = vmatpush1.bf16.msra.mxu0 %v2752
    %4191 = vmatprep.subr.bf16.mxu0 %v2749
    %4192 = vmatpush1.bf16.msra.mxu0 %v2748
    %4193 = vmatprep.subr.bf16.mxu0 %v2745
    %4194 = vmatpush1.bf16.msra.mxu0 %v2744
    %4195 = vmatprep.subr.bf16.mxu0 %v2741
    %4196 = vmatpush1.bf16.msra.mxu0 %v2740
    %4197 = vmatprep.subr.bf16.mxu0 %v2737
    %4198 = vmatpush1.bf16.msra.mxu0 %v2736
    %4199 = vmatprep.subr.bf16.mxu0 %v2733
    %4200 = vmatpush1.bf16.msra.mxu0 %v2732
    %4201 = vmatprep.subr.bf16.mxu0 %v2793
    %4202 = vmatpush2.bf16.msra.mxu0 %v2792
    %4203 = vmatprep.subr.bf16.mxu0 %v2789
    %4204 = vmatpush2.bf16.msra.mxu0 %v2788
    %4205 = vmatprep.subr.bf16.mxu0 %v2785
    %4206 = vmatpush2.bf16.msra.mxu0 %v2784
    %4207 = vmatprep.subr.bf16.mxu0 %v2781
    %4208 = vmatpush2.bf16.msra.mxu0 %v2780
    %4209 = vmatprep.subr.bf16.mxu0 %v2777
    %4210 = vmatpush2.bf16.msra.mxu0 %v2776
    %4211 = vmatprep.subr.bf16.mxu0 %v2773
    %4212 = vmatpush2.bf16.msra.mxu0 %v2772
    %4213 = vmatprep.subr.bf16.mxu0 %v2769
    %4214 = vmatpush2.bf16.msra.mxu0 %v2768
    %4215 = vmatprep.subr.bf16.mxu0 %v2765
    %4216 = vmatpush2.bf16.msra.mxu0 %v2764
    %4217 = vmatprep.mubr.bf16.mxu0 %v719
    %4218 = vmatmul.mubr.bf16.gmra.mxu0 %v718
    %v4219 = vpop.f32.mrf.mxu0
    %v4220 = vadd.f32 %v4177, %v4219
    %v4221 = vpop.f32.mrf.mxu0
    %v4222 = vadd.f32 %v4179, %v4221
    %v4223 = vpop.f32.mrf.mxu0
    %v4224 = vadd.f32 %v4181, %v4223
    %v4225 = vpop.f32.mrf.mxu0
    %v4226 = vadd.f32 %v4183, %v4225
    %4227 = vdwg.mxu0
    %4228 = vmatprep.subr.bf16.mxu0 %v2825
    %4229 = vmatpush1.bf16.msra.mxu0 %v2824
    %4230 = vmatprep.subr.bf16.mxu0 %v2821
    %4231 = vmatpush1.bf16.msra.mxu0 %v2820
    %4232 = vmatprep.subr.bf16.mxu0 %v2817
    %4233 = vmatpush1.bf16.msra.mxu0 %v2816
    %4234 = vmatprep.subr.bf16.mxu0 %v2813
    %4235 = vmatpush1.bf16.msra.mxu0 %v2812
    %4236 = vmatprep.subr.bf16.mxu0 %v2809
    %4237 = vmatpush1.bf16.msra.mxu0 %v2808
    %4238 = vmatprep.subr.bf16.mxu0 %v2805
    %4239 = vmatpush1.bf16.msra.mxu0 %v2804
    %4240 = vmatprep.subr.bf16.mxu0 %v2801
    %4241 = vmatpush1.bf16.msra.mxu0 %v2800
    %4242 = vmatprep.subr.bf16.mxu0 %v2797
    %4243 = vmatpush1.bf16.msra.mxu0 %v2796
    %4244 = vmatprep.subr.bf16.mxu0 %v2857
    %4245 = vmatpush2.bf16.msra.mxu0 %v2856
    %4246 = vmatprep.subr.bf16.mxu0 %v2853
    %4247 = vmatpush2.bf16.msra.mxu0 %v2852
    %4248 = vmatprep.subr.bf16.mxu0 %v2849
    %4249 = vmatpush2.bf16.msra.mxu0 %v2848
    %4250 = vmatprep.subr.bf16.mxu0 %v2845
    %4251 = vmatpush2.bf16.msra.mxu0 %v2844
    %4252 = vmatprep.subr.bf16.mxu0 %v2841
    %4253 = vmatpush2.bf16.msra.mxu0 %v2840
    %4254 = vmatprep.subr.bf16.mxu0 %v2837
    %4255 = vmatpush2.bf16.msra.mxu0 %v2836
    %4256 = vmatprep.subr.bf16.mxu0 %v2833
    %4257 = vmatpush2.bf16.msra.mxu0 %v2832
    %4258 = vmatprep.subr.bf16.mxu0 %v2829
    %4259 = vmatpush2.bf16.msra.mxu0 %v2828
    %4260 = vmatprep.mubr.bf16.mxu0 %v721
    %4261 = vmatmul.mubr.bf16.gmra.mxu0 %v720
    %v4262 = vpop.f32.mrf.mxu0
    %v4263 = vadd.f32 %v4220, %v4262
    %v4264 = vpop.f32.mrf.mxu0
    %v4265 = vadd.f32 %v4222, %v4264
    %v4266 = vpop.f32.mrf.mxu0
    %v4267 = vadd.f32 %v4224, %v4266
    %v4268 = vpop.f32.mrf.mxu0
    %v4269 = vadd.f32 %v4226, %v4268
    %4270 = vdwg.mxu0
    %4271 = vmatprep.subr.bf16.mxu0 %v2889
    %4272 = vmatpush1.bf16.msra.mxu0 %v2888
    %4273 = vmatprep.subr.bf16.mxu0 %v2885
    %4274 = vmatpush1.bf16.msra.mxu0 %v2884
    %4275 = vmatprep.subr.bf16.mxu0 %v2881
    %4276 = vmatpush1.bf16.msra.mxu0 %v2880
    %4277 = vmatprep.subr.bf16.mxu0 %v2877
    %4278 = vmatpush1.bf16.msra.mxu0 %v2876
    %4279 = vmatprep.subr.bf16.mxu0 %v2873
    %4280 = vmatpush1.bf16.msra.mxu0 %v2872
    %4281 = vmatprep.subr.bf16.mxu0 %v2869
    %4282 = vmatpush1.bf16.msra.mxu0 %v2868
    %4283 = vmatprep.subr.bf16.mxu0 %v2865
    %4284 = vmatpush1.bf16.msra.mxu0 %v2864
    %4285 = vmatprep.subr.bf16.mxu0 %v2861
    %4286 = vmatpush1.bf16.msra.mxu0 %v2860
    %4287 = vmatprep.subr.bf16.mxu0 %v2921
    %4288 = vmatpush2.bf16.msra.mxu0 %v2920
    %4289 = vmatprep.subr.bf16.mxu0 %v2917
    %4290 = vmatpush2.bf16.msra.mxu0 %v2916
    %4291 = vmatprep.subr.bf16.mxu0 %v2913
    %4292 = vmatpush2.bf16.msra.mxu0 %v2912
    %4293 = vmatprep.subr.bf16.mxu0 %v2909
    %4294 = vmatpush2.bf16.msra.mxu0 %v2908
    %4295 = vmatprep.subr.bf16.mxu0 %v2905
    %4296 = vmatpush2.bf16.msra.mxu0 %v2904
    %4297 = vmatprep.subr.bf16.mxu0 %v2901
    %4298 = vmatpush2.bf16.msra.mxu0 %v2900
    %4299 = vmatprep.subr.bf16.mxu0 %v2897
    %4300 = vmatpush2.bf16.msra.mxu0 %v2896
    %4301 = vmatprep.subr.bf16.mxu0 %v2893
    %4302 = vmatpush2.bf16.msra.mxu0 %v2892
    %4303 = vmatprep.mubr.bf16.mxu0 %v723
    %4304 = vmatmul.mubr.bf16.gmra.mxu0 %v722
    %v4305 = vpop.f32.mrf.mxu0
    %v4306 = vadd.f32 %v4263, %v4305
    %v4307 = vpop.f32.mrf.mxu0
    %v4308 = vadd.f32 %v4265, %v4307
    %v4309 = vpop.f32.mrf.mxu0
    %v4310 = vadd.f32 %v4267, %v4309
    %v4311 = vpop.f32.mrf.mxu0
    %v4312 = vadd.f32 %v4269, %v4311
    %4313 = vdwg.mxu0
    %4314 = vmatprep.subr.bf16.mxu0 %v2953
    %4315 = vmatpush1.bf16.msra.mxu0 %v2952
    %4316 = vmatprep.subr.bf16.mxu0 %v2949
    %4317 = vmatpush1.bf16.msra.mxu0 %v2948
    %4318 = vmatprep.subr.bf16.mxu0 %v2945
    %4319 = vmatpush1.bf16.msra.mxu0 %v2944
    %4320 = vmatprep.subr.bf16.mxu0 %v2941
    %4321 = vmatpush1.bf16.msra.mxu0 %v2940
    %4322 = vmatprep.subr.bf16.mxu0 %v2937
    %4323 = vmatpush1.bf16.msra.mxu0 %v2936
    %4324 = vmatprep.subr.bf16.mxu0 %v2933
    %4325 = vmatpush1.bf16.msra.mxu0 %v2932
    %4326 = vmatprep.subr.bf16.mxu0 %v2929
    %4327 = vmatpush1.bf16.msra.mxu0 %v2928
    %4328 = vmatprep.subr.bf16.mxu0 %v2925
    %4329 = vmatpush1.bf16.msra.mxu0 %v2924
    %4330 = vmatprep.subr.bf16.mxu0 %v2985
    %4331 = vmatpush2.bf16.msra.mxu0 %v2984
    %4332 = vmatprep.subr.bf16.mxu0 %v2981
    %4333 = vmatpush2.bf16.msra.mxu0 %v2980
    %4334 = vmatprep.subr.bf16.mxu0 %v2977
    %4335 = vmatpush2.bf16.msra.mxu0 %v2976
    %4336 = vmatprep.subr.bf16.mxu0 %v2973
    %4337 = vmatpush2.bf16.msra.mxu0 %v2972
    %4338 = vmatprep.subr.bf16.mxu0 %v2969
    %4339 = vmatpush2.bf16.msra.mxu0 %v2968
    %4340 = vmatprep.subr.bf16.mxu0 %v2965
    %4341 = vmatpush2.bf16.msra.mxu0 %v2964
    %4342 = vmatprep.subr.bf16.mxu0 %v2961
    %4343 = vmatpush2.bf16.msra.mxu0 %v2960
    %4344 = vmatprep.subr.bf16.mxu0 %v2957
    %4345 = vmatpush2.bf16.msra.mxu0 %v2956
    %4346 = vmatprep.mubr.bf16.mxu0 %v725
    %4347 = vmatmul.mubr.bf16.gmra.mxu0 %v724
    %v4348 = vpop.f32.mrf.mxu0
    %v4349 = vadd.f32 %v4306, %v4348
    %v4350 = vpop.f32.mrf.mxu0
    %v4351 = vadd.f32 %v4308, %v4350
    %v4352 = vpop.f32.mrf.mxu0
    %v4353 = vadd.f32 %v4310, %v4352
    %v4354 = vpop.f32.mrf.mxu0
    %v4355 = vadd.f32 %v4312, %v4354
    %4356 = vdwg.mxu0
    %4357 = vmatprep.subr.bf16.mxu0 %v3017
    %4358 = vmatpush1.bf16.msra.mxu0 %v3016
    %4359 = vmatprep.subr.bf16.mxu0 %v3013
    %4360 = vmatpush1.bf16.msra.mxu0 %v3012
    %4361 = vmatprep.subr.bf16.mxu0 %v3009
    %4362 = vmatpush1.bf16.msra.mxu0 %v3008
    %4363 = vmatprep.subr.bf16.mxu0 %v3005
    %4364 = vmatpush1.bf16.msra.mxu0 %v3004
    %4365 = vmatprep.subr.bf16.mxu0 %v3001
    %4366 = vmatpush1.bf16.msra.mxu0 %v3000
    %4367 = vmatprep.subr.bf16.mxu0 %v2997
    %4368 = vmatpush1.bf16.msra.mxu0 %v2996
    %4369 = vmatprep.subr.bf16.mxu0 %v2993
    %4370 = vmatpush1.bf16.msra.mxu0 %v2992
    %4371 = vmatprep.subr.bf16.mxu0 %v2989
    %4372 = vmatpush1.bf16.msra.mxu0 %v2988
    %4373 = vmatprep.subr.bf16.mxu0 %v3049
    %4374 = vmatpush2.bf16.msra.mxu0 %v3048
    %4375 = vmatprep.subr.bf16.mxu0 %v3045
    %4376 = vmatpush2.bf16.msra.mxu0 %v3044
    %4377 = vmatprep.subr.bf16.mxu0 %v3041
    %4378 = vmatpush2.bf16.msra.mxu0 %v3040
    %4379 = vmatprep.subr.bf16.mxu0 %v3037
    %4380 = vmatpush2.bf16.msra.mxu0 %v3036
    %4381 = vmatprep.subr.bf16.mxu0 %v3033
    %4382 = vmatpush2.bf16.msra.mxu0 %v3032
    %4383 = vmatprep.subr.bf16.mxu0 %v3029
    %4384 = vmatpush2.bf16.msra.mxu0 %v3028
    %4385 = vmatprep.subr.bf16.mxu0 %v3025
    %4386 = vmatpush2.bf16.msra.mxu0 %v3024
    %4387 = vmatprep.subr.bf16.mxu0 %v3021
    %4388 = vmatpush2.bf16.msra.mxu0 %v3020
    %4389 = vmatprep.mubr.bf16.mxu0 %v727
    %4390 = vmatmul.mubr.bf16.gmra.mxu0 %v726
    %v4391 = vpop.f32.mrf.mxu0
    %v4392 = vadd.f32 %v4349, %v4391
    %v4393 = vpop.f32.mrf.mxu0
    %v4394 = vadd.f32 %v4351, %v4393
    %v4395 = vpop.f32.mrf.mxu0
    %v4396 = vadd.f32 %v4353, %v4395
    %v4397 = vpop.f32.mrf.mxu0
    %v4398 = vadd.f32 %v4355, %v4397
    %4399 = vdwg.mxu0
    %v4400 = vmax.f32 %v4005, 0.0
    %v4401 = vmax.f32 %v4007, 0.0
    %v4402 = vmax.f32 %v4392, 0.0
    %v4403 = vmax.f32 %v4394, 0.0
    %v4404 = vmax.f32 %v4009, 0.0
    %v4405 = vmax.f32 %v4011, 0.0
    %v4406 = vmax.f32 %v4396, 0.0
    %v4407 = vmax.f32 %v4398, 0.0
    %v4408 = vpack.c.bf16 %v4404, %v4400
    %v4409 = vpack.c.bf16 %v4405, %v4401
    %v4410 = vpack.c.bf16 %v4406, %v4402
    %v4411 = vpack.c.bf16 %v4407, %v4403
    %v4416 = vunpack.c.l.b16 %v4408
    %v4417 = vunpack.c.l.b16 %v4409
    %v4418 = vunpack.c.l.b16 %v4410
    %v4419 = vunpack.c.l.b16 %v4411
    %v4420 = vunpack.c.h.b16 %v4408
    %v4421 = vunpack.c.h.b16 %v4409
    %v4422 = vunpack.c.h.b16 %v4410
    %v4423 = vunpack.c.h.b16 %v4411
    %v4424 = vpack.c.b16 %v4417, %v4416
    %v4425 = vpack.c.b16 %v4419, %v4418
    %v4426 = vpack.c.b16 %v4421, %v4420
    %v4427 = vpack.c.b16 %v4423, %v4422
    %4432 = vst [vmem:[%s3] sm:$0xff] %v4424
    %4433 = vst [vmem:[%s3 + $0x8] sm:$0xff] %v4425
    %4434 = vst [vmem:[%s3 + $0x10] sm:$0xff] %v4426
    %4435 = vst [vmem:[%s3 + $0x18] sm:$0xff] %v4427
    // Predicated region
    $region22: #{decoder_forward.6} parent=1 // pred_check
      _
    $region23: #{decoder_forward.6} parent=1 // pred_check_branch
      %4437 = sbr.rel (0) target = $region25
    $region24: #{decoder_forward.6} parent=1 // pred_region
      _
    $region25: #{decoder_forward.6} parent=1 // pred_fallthru
      _
    // Predicated region
    $region26: #{decoder_forward.6} parent=1 // pred_check
      _
    $region27: #{decoder_forward.6} parent=1 // pred_check_branch
      %4439 = sbr.rel (0) target = $region29
    $region28: #{decoder_forward.6} parent=1 // pred_region
      _
    $region29: #{decoder_forward.6} parent=1 // pred_fallthru
      _
    %4440 = vsyncpa [#allocation3], 1
    %4441 = vsyncpa [#allocation5], 1

// kernel: decoder_forward.9
$region0: #{decoder_forward.9}
  #allocation0 [shape = 'u32[]', space=smem, size = 0x4, offset = 0x4, fixed_abs, tag = 'smem constant byte address 0x4 - core index']
  #allocation1 [shape = 'u32[144,128]{1,0:T(1,128)}', space=vmem, size = 0x12000, scoped, tag = 'internal scratch']
  %s0 = inlined_call_operand.vmem [shape: bf16[512,384], index: 0, kind: input, shape index: {}]
  %s1 = inlined_call_operand.vmem [shape: bf16[384,128], index: 1, kind: input, shape index: {}]
  %s2 = inlined_call_operand.vmem [shape: f32[1,128], index: 2, kind: input, shape index: {}]
  %s3 = inlined_call_operand.vmem [shape: f32[512,128], index: 3, kind: output, shape index: {}]
  %s4 = sld [smem:[#allocation0]]
  $region22: #{decoder_forward.9} parent=0
    _
  %s6 = ssub.s32 1, %s4
  %s7 = scalar_select 0, %s6, %s4
  // Predicated region
  $region2: #{decoder_forward.9} parent=0 // pred_check
    _
  $region3: #{decoder_forward.9} parent=0 // pred_check_branch
    %9 = sbr.rel (0) target = $region5
  $region4: #{decoder_forward.9} parent=0 // pred_region
    _
  $region5: #{decoder_forward.9} parent=0 // pred_fallthru
    _
  // Predicated region
  $region6: #{decoder_forward.9} parent=0 // pred_check
    _
  $region7: #{decoder_forward.9} parent=0 // pred_check_branch
    %11 = sbr.rel (0) target = $region9
  $region8: #{decoder_forward.9} parent=0 // pred_region
    _
  $region9: #{decoder_forward.9} parent=0 // pred_fallthru
    _
  // Predicated region
  $region10: #{decoder_forward.9} parent=0 // pred_check
    _
  $region11: #{decoder_forward.9} parent=0 // pred_check_branch
    %13 = sbr.rel (0) target = $region13
  $region12: #{decoder_forward.9} parent=0 // pred_region
    _
  $region13: #{decoder_forward.9} parent=0 // pred_fallthru
    _
  %v15 = vld [vmem:[%s0] sm:$0xff]
  %v16 = vld [vmem:[%s0 + $0x8] sm:$0xf]
  %v17 = vld [vmem:[%s0 + $0xc] sm:$0xff]
  %v18 = vld [vmem:[%s0 + $0x14] sm:$0xf]
  %v19 = vld [vmem:[%s0 + $0x18] sm:$0xff]
  %v20 = vld [vmem:[%s0 + $0x20] sm:$0xf]
  %v21 = vld [vmem:[%s0 + $0x24] sm:$0xff]
  %v22 = vld [vmem:[%s0 + $0x2c] sm:$0xf]
  %v23 = vld [vmem:[%s0 + $0x30] sm:$0xff]
  %v24 = vld [vmem:[%s0 + $0x38] sm:$0xf]
  %v25 = vld [vmem:[%s0 + $0x3c] sm:$0xff]
  %v26 = vld [vmem:[%s0 + $0x44] sm:$0xf]
  %v27 = vld [vmem:[%s0 + $0x48] sm:$0xff]
  %v28 = vld [vmem:[%s0 + $0x50] sm:$0xf]
  %v29 = vld [vmem:[%s0 + $0x54] sm:$0xff]
  %v30 = vld [vmem:[%s0 + $0x5c] sm:$0xf]
  %v31 = vld [vmem:[%s0 + $0x60] sm:$0xff]
  %v32 = vld [vmem:[%s0 + $0x68] sm:$0xf]
  %v33 = vld [vmem:[%s0 + $0x6c] sm:$0xff]
  %v34 = vld [vmem:[%s0 + $0x74] sm:$0xf]
  %v35 = vld [vmem:[%s0 + $0x78] sm:$0xff]
  %v36 = vld [vmem:[%s0 + $0x80] sm:$0xf]
  %v37 = vld [vmem:[%s0 + $0x84] sm:$0xff]
  %v38 = vld [vmem:[%s0 + $0x8c] sm:$0xf]
  %v39 = vld [vmem:[%s0 + $0x90] sm:$0xff]
  %v40 = vld [vmem:[%s0 + $0x98] sm:$0xf]
  %v41 = vld [vmem:[%s0 + $0x9c] sm:$0xff]
  %v42 = vld [vmem:[%s0 + $0xa4] sm:$0xf]
  %v43 = vld [vmem:[%s0 + $0xa8] sm:$0xff]
  %v44 = vld [vmem:[%s0 + $0xb0] sm:$0xf]
  %v45 = vld [vmem:[%s0 + $0xb4] sm:$0xff]
  %v46 = vld [vmem:[%s0 + $0xbc] sm:$0xf]
  %v47 = vld [vmem:[%s0 + $0xc0] sm:$0xff]
  %v48 = vld [vmem:[%s0 + $0xc8] sm:$0xf]
  %v49 = vld [vmem:[%s0 + $0xcc] sm:$0xff]
  %v50 = vld [vmem:[%s0 + $0xd4] sm:$0xf]
  %v51 = vld [vmem:[%s0 + $0xd8] sm:$0xff]
  %v52 = vld [vmem:[%s0 + $0xe0] sm:$0xf]
  %v53 = vld [vmem:[%s0 + $0xe4] sm:$0xff]
  %v54 = vld [vmem:[%s0 + $0xec] sm:$0xf]
  %v55 = vld [vmem:[%s0 + $0xf0] sm:$0xff]
  %v56 = vld [vmem:[%s0 + $0xf8] sm:$0xf]
  %v57 = vld [vmem:[%s0 + $0xfc] sm:$0xff]
  %v58 = vld [vmem:[%s0 + $0x104] sm:$0xf]
  %v59 = vld [vmem:[%s0 + $0x108] sm:$0xff]
  %v60 = vld [vmem:[%s0 + $0x110] sm:$0xf]
  %v61 = vld [vmem:[%s0 + $0x114] sm:$0xff]
  %v62 = vld [vmem:[%s0 + $0x11c] sm:$0xf]
  %v63 = vld [vmem:[%s0 + $0x120] sm:$0xff]
  %v64 = vld [vmem:[%s0 + $0x128] sm:$0xf]
  %v65 = vld [vmem:[%s0 + $0x12c] sm:$0xff]
  %v66 = vld [vmem:[%s0 + $0x134] sm:$0xf]
  %v67 = vld [vmem:[%s0 + $0x138] sm:$0xff]
  %v68 = vld [vmem:[%s0 + $0x140] sm:$0xf]
  %v69 = vld [vmem:[%s0 + $0x144] sm:$0xff]
  %v70 = vld [vmem:[%s0 + $0x14c] sm:$0xf]
  %v71 = vld [vmem:[%s0 + $0x150] sm:$0xff]
  %v72 = vld [vmem:[%s0 + $0x158] sm:$0xf]
  %v73 = vld [vmem:[%s0 + $0x15c] sm:$0xff]
  %v74 = vld [vmem:[%s0 + $0x164] sm:$0xf]
  %v75 = vld [vmem:[%s0 + $0x168] sm:$0xff]
  %v76 = vld [vmem:[%s0 + $0x170] sm:$0xf]
  %v77 = vld [vmem:[%s0 + $0x174] sm:$0xff]
  %v78 = vld [vmem:[%s0 + $0x17c] sm:$0xf]
  %v79 = vld [vmem:[%s0 + $0x180] sm:$0xff]
  %v80 = vld [vmem:[%s0 + $0x188] sm:$0xf]
  %v81 = vld [vmem:[%s0 + $0x18c] sm:$0xff]
  %v82 = vld [vmem:[%s0 + $0x194] sm:$0xf]
  %v83 = vld [vmem:[%s0 + $0x198] sm:$0xff]
  %v84 = vld [vmem:[%s0 + $0x1a0] sm:$0xf]
  %v85 = vld [vmem:[%s0 + $0x1a4] sm:$0xff]
  %v86 = vld [vmem:[%s0 + $0x1ac] sm:$0xf]
  %v87 = vld [vmem:[%s0 + $0x1b0] sm:$0xff]
  %v88 = vld [vmem:[%s0 + $0x1b8] sm:$0xf]
  %v89 = vld [vmem:[%s0 + $0x1bc] sm:$0xff]
  %v90 = vld [vmem:[%s0 + $0x1c4] sm:$0xf]
  %v91 = vld [vmem:[%s0 + $0x1c8] sm:$0xff]
  %v92 = vld [vmem:[%s0 + $0x1d0] sm:$0xf]
  %v93 = vld [vmem:[%s0 + $0x1d4] sm:$0xff]
  %v94 = vld [vmem:[%s0 + $0x1dc] sm:$0xf]
  %v95 = vld [vmem:[%s0 + $0x1e0] sm:$0xff]
  %v96 = vld [vmem:[%s0 + $0x1e8] sm:$0xf]
  %v97 = vld [vmem:[%s0 + $0x1ec] sm:$0xff]
  %v98 = vld [vmem:[%s0 + $0x1f4] sm:$0xf]
  %v99 = vld [vmem:[%s0 + $0x1f8] sm:$0xff]
  %v100 = vld [vmem:[%s0 + $0x200] sm:$0xf]
  %v101 = vld [vmem:[%s0 + $0x204] sm:$0xff]
  %v102 = vld [vmem:[%s0 + $0x20c] sm:$0xf]
  %v103 = vld [vmem:[%s0 + $0x210] sm:$0xff]
  %v104 = vld [vmem:[%s0 + $0x218] sm:$0xf]
  %v105 = vld [vmem:[%s0 + $0x21c] sm:$0xff]
  %v106 = vld [vmem:[%s0 + $0x224] sm:$0xf]
  %v107 = vld [vmem:[%s0 + $0x228] sm:$0xff]
  %v108 = vld [vmem:[%s0 + $0x230] sm:$0xf]
  %v109 = vld [vmem:[%s0 + $0x234] sm:$0xff]
  %v110 = vld [vmem:[%s0 + $0x23c] sm:$0xf]
  %v111 = vld [vmem:[%s0 + $0x240] sm:$0xff]
  %v112 = vld [vmem:[%s0 + $0x248] sm:$0xf]
  %v113 = vld [vmem:[%s0 + $0x24c] sm:$0xff]
  %v114 = vld [vmem:[%s0 + $0x254] sm:$0xf]
  %v115 = vld [vmem:[%s0 + $0x258] sm:$0xff]
  %v116 = vld [vmem:[%s0 + $0x260] sm:$0xf]
  %v117 = vld [vmem:[%s0 + $0x264] sm:$0xff]
  %v118 = vld [vmem:[%s0 + $0x26c] sm:$0xf]
  %v119 = vld [vmem:[%s0 + $0x270] sm:$0xff]
  %v120 = vld [vmem:[%s0 + $0x278] sm:$0xf]
  %v121 = vld [vmem:[%s0 + $0x27c] sm:$0xff]
  %v122 = vld [vmem:[%s0 + $0x284] sm:$0xf]
  %v123 = vld [vmem:[%s0 + $0x288] sm:$0xff]
  %v124 = vld [vmem:[%s0 + $0x290] sm:$0xf]
  %v125 = vld [vmem:[%s0 + $0x294] sm:$0xff]
  %v126 = vld [vmem:[%s0 + $0x29c] sm:$0xf]
  %v127 = vld [vmem:[%s0 + $0x2a0] sm:$0xff]
  %v128 = vld [vmem:[%s0 + $0x2a8] sm:$0xf]
  %v129 = vld [vmem:[%s0 + $0x2ac] sm:$0xff]
  %v130 = vld [vmem:[%s0 + $0x2b4] sm:$0xf]
  %v131 = vld [vmem:[%s0 + $0x2b8] sm:$0xff]
  %v132 = vld [vmem:[%s0 + $0x2c0] sm:$0xf]
  %v133 = vld [vmem:[%s0 + $0x2c4] sm:$0xff]
  %v134 = vld [vmem:[%s0 + $0x2cc] sm:$0xf]
  %v135 = vld [vmem:[%s0 + $0x2d0] sm:$0xff]
  %v136 = vld [vmem:[%s0 + $0x2d8] sm:$0xf]
  %v137 = vld [vmem:[%s0 + $0x2dc] sm:$0xff]
  %v138 = vld [vmem:[%s0 + $0x2e4] sm:$0xf]
  %v139 = vld [vmem:[%s0 + $0x2e8] sm:$0xff]
  %v140 = vld [vmem:[%s0 + $0x2f0] sm:$0xf]
  %v141 = vld [vmem:[%s0 + $0x2f4] sm:$0xff]
  %v142 = vld [vmem:[%s0 + $0x2fc] sm:$0xf]
  %v143 = vld [vmem:[%s1] sm:$0xf]
  %v144 = vld [vmem:[%s1 + $0x4] sm:$0xf]
  %v145 = vld [vmem:[%s1 + $0x8] sm:$0xf]
  %v146 = vld [vmem:[%s1 + $0xc] sm:$0xf]
  %v147 = vld [vmem:[%s1 + $0x10] sm:$0xf]
  %v148 = vld [vmem:[%s1 + $0x14] sm:$0xf]
  %v149 = vld [vmem:[%s1 + $0x18] sm:$0xf]
  %v150 = vld [vmem:[%s1 + $0x1c] sm:$0xf]
  %v151 = vld [vmem:[%s1 + $0x20] sm:$0xf]
  %v152 = vld [vmem:[%s1 + $0x24] sm:$0xf]
  %v153 = vld [vmem:[%s1 + $0x28] sm:$0xf]
  %v154 = vld [vmem:[%s1 + $0x2c] sm:$0xf]
  %v155 = vld [vmem:[%s1 + $0x30] sm:$0xf]
  %v156 = vld [vmem:[%s1 + $0x34] sm:$0xf]
  %v157 = vld [vmem:[%s1 + $0x38] sm:$0xf]
  %v158 = vld [vmem:[%s1 + $0x3c] sm:$0xf]
  %v159 = vld [vmem:[%s1 + $0x40] sm:$0xf]
  %v160 = vld [vmem:[%s1 + $0x44] sm:$0xf]
  %v161 = vld [vmem:[%s1 + $0x48] sm:$0xf]
  %v162 = vld [vmem:[%s1 + $0x4c] sm:$0xf]
  %v163 = vld [vmem:[%s1 + $0x50] sm:$0xf]
  %v164 = vld [vmem:[%s1 + $0x54] sm:$0xf]
  %v165 = vld [vmem:[%s1 + $0x58] sm:$0xf]
  %v166 = vld [vmem:[%s1 + $0x5c] sm:$0xf]
  %v167 = vld [vmem:[%s1 + $0x60] sm:$0xf]
  %v168 = vld [vmem:[%s1 + $0x64] sm:$0xf]
  %v169 = vld [vmem:[%s1 + $0x68] sm:$0xf]
  %v170 = vld [vmem:[%s1 + $0x6c] sm:$0xf]
  %v171 = vld [vmem:[%s1 + $0x70] sm:$0xf]
  %v172 = vld [vmem:[%s1 + $0x74] sm:$0xf]
  %v173 = vld [vmem:[%s1 + $0x78] sm:$0xf]
  %v174 = vld [vmem:[%s1 + $0x7c] sm:$0xf]
  %v175 = vld [vmem:[%s1 + $0x80] sm:$0xf]
  %v176 = vld [vmem:[%s1 + $0x84] sm:$0xf]
  %v177 = vld [vmem:[%s1 + $0x88] sm:$0xf]
  %v178 = vld [vmem:[%s1 + $0x8c] sm:$0xf]
  %v179 = vld [vmem:[%s1 + $0x90] sm:$0xf]
  %v180 = vld [vmem:[%s1 + $0x94] sm:$0xf]
  %v181 = vld [vmem:[%s1 + $0x98] sm:$0xf]
  %v182 = vld [vmem:[%s1 + $0x9c] sm:$0xf]
  %v183 = vld [vmem:[%s1 + $0xa0] sm:$0xf]
  %v184 = vld [vmem:[%s1 + $0xa4] sm:$0xf]
  %v185 = vld [vmem:[%s1 + $0xa8] sm:$0xf]
  %v186 = vld [vmem:[%s1 + $0xac] sm:$0xf]
  %v187 = vld [vmem:[%s1 + $0xb0] sm:$0xf]
  %v188 = vld [vmem:[%s1 + $0xb4] sm:$0xf]
  %v189 = vld [vmem:[%s1 + $0xb8] sm:$0xf]
  %v190 = vld [vmem:[%s1 + $0xbc] sm:$0xf]
  %v191 = vld [vmem:[%s2] sm:$0x1]
  %v193 = vlaneseq
  %v194 = vshrl.u32 %v193, 7
  %v195 = vsub.s32 0, %v194
  %v196 = vrot.slane %v191, %v195
  %v326 = vunpack.c.l.b16 %v15
  %v327 = vunpack.c.h.b16 %v15
  %v328 = vunpack.c.l.b16 %v16
  %v329 = vunpack.c.l.b16 %v17
  %v330 = vunpack.c.h.b16 %v17
  %v331 = vunpack.c.l.b16 %v18
  %v332 = vunpack.c.l.b16 %v19
  %v333 = vunpack.c.h.b16 %v19
  %v334 = vunpack.c.l.b16 %v20
  %v335 = vunpack.c.l.b16 %v21
  %v336 = vunpack.c.h.b16 %v21
  %v337 = vunpack.c.l.b16 %v22
  %v338 = vunpack.c.l.b16 %v23
  %v339 = vunpack.c.h.b16 %v23
  %v340 = vunpack.c.l.b16 %v24
  %v341 = vunpack.c.l.b16 %v25
  %v342 = vunpack.c.h.b16 %v25
  %v343 = vunpack.c.l.b16 %v26
  %v344 = vunpack.c.l.b16 %v27
  %v345 = vunpack.c.h.b16 %v27
  %v346 = vunpack.c.l.b16 %v28
  %v347 = vunpack.c.l.b16 %v29
  %v348 = vunpack.c.h.b16 %v29
  %v349 = vunpack.c.l.b16 %v30
  %v350 = vunpack.c.l.b16 %v31
  %v351 = vunpack.c.h.b16 %v31
  %v352 = vunpack.c.l.b16 %v32
  %v353 = vunpack.c.l.b16 %v33
  %v354 = vunpack.c.h.b16 %v33
  %v355 = vunpack.c.l.b16 %v34
  %v356 = vunpack.c.l.b16 %v35
  %v357 = vunpack.c.h.b16 %v35
  %v358 = vunpack.c.l.b16 %v36
  %v359 = vunpack.c.l.b16 %v37
  %v360 = vunpack.c.h.b16 %v37
  %v361 = vunpack.c.l.b16 %v38
  %v362 = vunpack.c.l.b16 %v39
  %v363 = vunpack.c.h.b16 %v39
  %v364 = vunpack.c.l.b16 %v40
  %v365 = vunpack.c.l.b16 %v41
  %v366 = vunpack.c.h.b16 %v41
  %v367 = vunpack.c.l.b16 %v42
  %v368 = vunpack.c.l.b16 %v43
  %v369 = vunpack.c.h.b16 %v43
  %v370 = vunpack.c.l.b16 %v44
  %v371 = vunpack.c.l.b16 %v45
  %v372 = vunpack.c.h.b16 %v45
  %v373 = vunpack.c.l.b16 %v46
  %v374 = vunpack.c.l.b16 %v47
  %v375 = vunpack.c.h.b16 %v47
  %v376 = vunpack.c.l.b16 %v48
  %v377 = vunpack.c.l.b16 %v49
  %v378 = vunpack.c.h.b16 %v49
  %v379 = vunpack.c.l.b16 %v50
  %v380 = vunpack.c.l.b16 %v51
  %v381 = vunpack.c.h.b16 %v51
  %v382 = vunpack.c.l.b16 %v52
  %v383 = vunpack.c.l.b16 %v53
  %v384 = vunpack.c.h.b16 %v53
  %v385 = vunpack.c.l.b16 %v54
  %v386 = vunpack.c.l.b16 %v55
  %v387 = vunpack.c.h.b16 %v55
  %v388 = vunpack.c.l.b16 %v56
  %v389 = vunpack.c.l.b16 %v57
  %v390 = vunpack.c.h.b16 %v57
  %v391 = vunpack.c.l.b16 %v58
  %v392 = vunpack.c.l.b16 %v59
  %v393 = vunpack.c.h.b16 %v59
  %v394 = vunpack.c.l.b16 %v60
  %v395 = vunpack.c.l.b16 %v61
  %v396 = vunpack.c.h.b16 %v61
  %v397 = vunpack.c.l.b16 %v62
  %v398 = vunpack.c.l.b16 %v63
  %v399 = vunpack.c.h.b16 %v63
  %v400 = vunpack.c.l.b16 %v64
  %v401 = vunpack.c.l.b16 %v65
  %v402 = vunpack.c.h.b16 %v65
  %v403 = vunpack.c.l.b16 %v66
  %v404 = vunpack.c.l.b16 %v67
  %v405 = vunpack.c.h.b16 %v67
  %v406 = vunpack.c.l.b16 %v68
  %v407 = vunpack.c.l.b16 %v69
  %v408 = vunpack.c.h.b16 %v69
  %v409 = vunpack.c.l.b16 %v70
  %v410 = vunpack.c.l.b16 %v71
  %v411 = vunpack.c.h.b16 %v71
  %v412 = vunpack.c.l.b16 %v72
  %v413 = vunpack.c.l.b16 %v73
  %v414 = vunpack.c.h.b16 %v73
  %v415 = vunpack.c.l.b16 %v74
  %v416 = vunpack.c.l.b16 %v75
  %v417 = vunpack.c.h.b16 %v75
  %v418 = vunpack.c.l.b16 %v76
  %v419 = vunpack.c.l.b16 %v77
  %v420 = vunpack.c.h.b16 %v77
  %v421 = vunpack.c.l.b16 %v78
  %v422 = vunpack.c.l.b16 %v79
  %v423 = vunpack.c.h.b16 %v79
  %v424 = vunpack.c.l.b16 %v80
  %v425 = vunpack.c.l.b16 %v81
  %v426 = vunpack.c.h.b16 %v81
  %v427 = vunpack.c.l.b16 %v82
  %v428 = vunpack.c.l.b16 %v83
  %v429 = vunpack.c.h.b16 %v83
  %v430 = vunpack.c.l.b16 %v84
  %v431 = vunpack.c.l.b16 %v85
  %v432 = vunpack.c.h.b16 %v85
  %v433 = vunpack.c.l.b16 %v86
  %v434 = vunpack.c.l.b16 %v87
  %v435 = vunpack.c.h.b16 %v87
  %v436 = vunpack.c.l.b16 %v88
  %v437 = vunpack.c.l.b16 %v89
  %v438 = vunpack.c.h.b16 %v89
  %v439 = vunpack.c.l.b16 %v90
  %v440 = vunpack.c.l.b16 %v91
  %v441 = vunpack.c.h.b16 %v91
  %v442 = vunpack.c.l.b16 %v92
  %v443 = vunpack.c.l.b16 %v93
  %v444 = vunpack.c.h.b16 %v93
  %v445 = vunpack.c.l.b16 %v94
  %v446 = vunpack.c.l.b16 %v95
  %v447 = vunpack.c.h.b16 %v95
  %v448 = vunpack.c.l.b16 %v96
  %v449 = vunpack.c.l.b16 %v97
  %v450 = vunpack.c.h.b16 %v97
  %v451 = vunpack.c.l.b16 %v98
  %v452 = vunpack.c.l.b16 %v99
  %v453 = vunpack.c.h.b16 %v99
  %v454 = vunpack.c.l.b16 %v100
  %v455 = vunpack.c.l.b16 %v101
  %v456 = vunpack.c.h.b16 %v101
  %v457 = vunpack.c.l.b16 %v102
  %v458 = vunpack.c.l.b16 %v103
  %v459 = vunpack.c.h.b16 %v103
  %v460 = vunpack.c.l.b16 %v104
  %v461 = vunpack.c.l.b16 %v105
  %v462 = vunpack.c.h.b16 %v105
  %v463 = vunpack.c.l.b16 %v106
  %v464 = vunpack.c.l.b16 %v107
  %v465 = vunpack.c.h.b16 %v107
  %v466 = vunpack.c.l.b16 %v108
  %v467 = vunpack.c.l.b16 %v109
  %v468 = vunpack.c.h.b16 %v109
  %v469 = vunpack.c.l.b16 %v110
  %v470 = vunpack.c.l.b16 %v111
  %v471 = vunpack.c.h.b16 %v111
  %v472 = vunpack.c.l.b16 %v112
  %v473 = vunpack.c.l.b16 %v113
  %v474 = vunpack.c.h.b16 %v113
  %v475 = vunpack.c.l.b16 %v114
  %v476 = vunpack.c.l.b16 %v115
  %v477 = vunpack.c.h.b16 %v115
  %v478 = vunpack.c.l.b16 %v116
  %v479 = vunpack.c.l.b16 %v117
  %v480 = vunpack.c.h.b16 %v117
  %v481 = vunpack.c.l.b16 %v118
  %v482 = vunpack.c.l.b16 %v119
  %v483 = vunpack.c.h.b16 %v119
  %v484 = vunpack.c.l.b16 %v120
  %v485 = vunpack.c.l.b16 %v121
  %v486 = vunpack.c.h.b16 %v121
  %v487 = vunpack.c.l.b16 %v122
  %v488 = vunpack.c.l.b16 %v123
  %v489 = vunpack.c.h.b16 %v123
  %v490 = vunpack.c.l.b16 %v124
  %v491 = vunpack.c.l.b16 %v125
  %v492 = vunpack.c.h.b16 %v125
  %v493 = vunpack.c.l.b16 %v126
  %v494 = vunpack.c.l.b16 %v127
  %v495 = vunpack.c.h.b16 %v127
  %v496 = vunpack.c.l.b16 %v128
  %v497 = vunpack.c.l.b16 %v129
  %v498 = vunpack.c.h.b16 %v129
  %v499 = vunpack.c.l.b16 %v130
  %v500 = vunpack.c.l.b16 %v131
  %v501 = vunpack.c.h.b16 %v131
  %v502 = vunpack.c.l.b16 %v132
  %v503 = vunpack.c.l.b16 %v133
  %v504 = vunpack.c.h.b16 %v133
  %v505 = vunpack.c.l.b16 %v134
  %v506 = vunpack.c.l.b16 %v135
  %v507 = vunpack.c.h.b16 %v135
  %v508 = vunpack.c.l.b16 %v136
  %v509 = vunpack.c.l.b16 %v137
  %v510 = vunpack.c.h.b16 %v137
  %v511 = vunpack.c.l.b16 %v138
  %v512 = vunpack.c.l.b16 %v139
  %v513 = vunpack.c.h.b16 %v139
  %v514 = vunpack.c.l.b16 %v140
  %v515 = vunpack.c.l.b16 %v141
  %v516 = vunpack.c.h.b16 %v141
  %v517 = vunpack.c.l.b16 %v142
  %v518 = vpack.c.b16 %v329, %v326
  %v519 = vpack.c.b16 %v330, %v327
  %v520 = vpack.c.b16 %v331, %v328
  %v521 = vpack.c.b16 %v335, %v332
  %v522 = vpack.c.b16 %v336, %v333
  %v523 = vpack.c.b16 %v337, %v334
  %v524 = vpack.c.b16 %v341, %v338
  %v525 = vpack.c.b16 %v342, %v339
  %v526 = vpack.c.b16 %v343, %v340
  %v527 = vpack.c.b16 %v347, %v344
  %v528 = vpack.c.b16 %v348, %v345
  %v529 = vpack.c.b16 %v349, %v346
  %v530 = vpack.c.b16 %v353, %v350
  %v531 = vpack.c.b16 %v354, %v351
  %v532 = vpack.c.b16 %v355, %v352
  %v533 = vpack.c.b16 %v359, %v356
  %v534 = vpack.c.b16 %v360, %v357
  %v535 = vpack.c.b16 %v361, %v358
  %v536 = vpack.c.b16 %v365, %v362
  %v537 = vpack.c.b16 %v366, %v363
  %v538 = vpack.c.b16 %v367, %v364
  %v539 = vpack.c.b16 %v371, %v368
  %v540 = vpack.c.b16 %v372, %v369
  %v541 = vpack.c.b16 %v373, %v370
  %v542 = vpack.c.b16 %v377, %v374
  %v543 = vpack.c.b16 %v378, %v375
  %v544 = vpack.c.b16 %v379, %v376
  %v545 = vpack.c.b16 %v383, %v380
  %v546 = vpack.c.b16 %v384, %v381
  %v547 = vpack.c.b16 %v385, %v382
  %v548 = vpack.c.b16 %v389, %v386
  %v549 = vpack.c.b16 %v390, %v387
  %v550 = vpack.c.b16 %v391, %v388
  %v551 = vpack.c.b16 %v395, %v392
  %v552 = vpack.c.b16 %v396, %v393
  %v553 = vpack.c.b16 %v397, %v394
  %v554 = vpack.c.b16 %v401, %v398
  %v555 = vpack.c.b16 %v402, %v399
  %v556 = vpack.c.b16 %v403, %v400
  %v557 = vpack.c.b16 %v407, %v404
  %v558 = vpack.c.b16 %v408, %v405
  %v559 = vpack.c.b16 %v409, %v406
  %v560 = vpack.c.b16 %v413, %v410
  %v561 = vpack.c.b16 %v414, %v411
  %v562 = vpack.c.b16 %v415, %v412
  %v563 = vpack.c.b16 %v419, %v416
  %v564 = vpack.c.b16 %v420, %v417
  %v565 = vpack.c.b16 %v421, %v418
  %v566 = vpack.c.b16 %v425, %v422
  %v567 = vpack.c.b16 %v426, %v423
  %v568 = vpack.c.b16 %v427, %v424
  %v569 = vpack.c.b16 %v431, %v428
  %v570 = vpack.c.b16 %v432, %v429
  %v571 = vpack.c.b16 %v433, %v430
  %v572 = vpack.c.b16 %v437, %v434
  %v573 = vpack.c.b16 %v438, %v435
  %v574 = vpack.c.b16 %v439, %v436
  %v575 = vpack.c.b16 %v443, %v440
  %v576 = vpack.c.b16 %v444, %v441
  %v577 = vpack.c.b16 %v445, %v442
  %v578 = vpack.c.b16 %v449, %v446
  %v579 = vpack.c.b16 %v450, %v447
  %v580 = vpack.c.b16 %v451, %v448
  %v581 = vpack.c.b16 %v455, %v452
  %v582 = vpack.c.b16 %v456, %v453
  %v583 = vpack.c.b16 %v457, %v454
  %v584 = vpack.c.b16 %v461, %v458
  %v585 = vpack.c.b16 %v462, %v459
  %v586 = vpack.c.b16 %v463, %v460
  %v587 = vpack.c.b16 %v467, %v464
  %v588 = vpack.c.b16 %v468, %v465
  %v589 = vpack.c.b16 %v469, %v466
  %v590 = vpack.c.b16 %v473, %v470
  %v591 = vpack.c.b16 %v474, %v471
  %v592 = vpack.c.b16 %v475, %v472
  %v593 = vpack.c.b16 %v479, %v476
  %v594 = vpack.c.b16 %v480, %v477
  %v595 = vpack.c.b16 %v481, %v478
  %v596 = vpack.c.b16 %v485, %v482
  %v597 = vpack.c.b16 %v486, %v483
  %v598 = vpack.c.b16 %v487, %v484
  %v599 = vpack.c.b16 %v491, %v488
  %v600 = vpack.c.b16 %v492, %v489
  %v601 = vpack.c.b16 %v493, %v490
  %v602 = vpack.c.b16 %v497, %v494
  %v603 = vpack.c.b16 %v498, %v495
  %v604 = vpack.c.b16 %v499, %v496
  %v605 = vpack.c.b16 %v503, %v500
  %v606 = vpack.c.b16 %v504, %v501
  %v607 = vpack.c.b16 %v505, %v502
  %v608 = vpack.c.b16 %v509, %v506
  %v609 = vpack.c.b16 %v510, %v507
  %v610 = vpack.c.b16 %v511, %v508
  %v611 = vpack.c.b16 %v515, %v512
  %v612 = vpack.c.b16 %v516, %v513
  %v613 = vpack.c.b16 %v517, %v514
  %v758 = vunpack.c.l.b16 %v143
  %v759 = vunpack.c.l.b16 %v144
  %v760 = vunpack.c.l.b16 %v145
  %v761 = vunpack.c.l.b16 %v146
  %v762 = vunpack.c.l.b16 %v147
  %v763 = vunpack.c.l.b16 %v148
  %v764 = vunpack.c.l.b16 %v149
  %v765 = vunpack.c.l.b16 %v150
  %v766 = vunpack.c.l.b16 %v151
  %v767 = vunpack.c.l.b16 %v152
  %v768 = vunpack.c.l.b16 %v153
  %v769 = vunpack.c.l.b16 %v154
  %v770 = vunpack.c.l.b16 %v155
  %v771 = vunpack.c.l.b16 %v156
  %v772 = vunpack.c.l.b16 %v157
  %v773 = vunpack.c.l.b16 %v158
  %v774 = vunpack.c.l.b16 %v159
  %v775 = vunpack.c.l.b16 %v160
  %v776 = vunpack.c.l.b16 %v161
  %v777 = vunpack.c.l.b16 %v162
  %v778 = vunpack.c.l.b16 %v163
  %v779 = vunpack.c.l.b16 %v164
  %v780 = vunpack.c.l.b16 %v165
  %v781 = vunpack.c.l.b16 %v166
  %v782 = vunpack.c.l.b16 %v167
  %v783 = vunpack.c.l.b16 %v168
  %v784 = vunpack.c.l.b16 %v169
  %v785 = vunpack.c.l.b16 %v170
  %v786 = vunpack.c.l.b16 %v171
  %v787 = vunpack.c.l.b16 %v172
  %v788 = vunpack.c.l.b16 %v173
  %v789 = vunpack.c.l.b16 %v174
  %v790 = vunpack.c.l.b16 %v175
  %v791 = vunpack.c.l.b16 %v176
  %v792 = vunpack.c.l.b16 %v177
  %v793 = vunpack.c.l.b16 %v178
  %v794 = vunpack.c.l.b16 %v179
  %v795 = vunpack.c.l.b16 %v180
  %v796 = vunpack.c.l.b16 %v181
  %v797 = vunpack.c.l.b16 %v182
  %v798 = vunpack.c.l.b16 %v183
  %v799 = vunpack.c.l.b16 %v184
  %v800 = vunpack.c.l.b16 %v185
  %v801 = vunpack.c.l.b16 %v186
  %v802 = vunpack.c.l.b16 %v187
  %v803 = vunpack.c.l.b16 %v188
  %v804 = vunpack.c.l.b16 %v189
  %v805 = vunpack.c.l.b16 %v190
  %v806 = vpack.c.b16 %v759, %v758
  %v807 = vpack.c.b16 %v761, %v760
  %v808 = vpack.c.b16 %v763, %v762
  %v809 = vpack.c.b16 %v765, %v764
  %v810 = vpack.c.b16 %v767, %v766
  %v811 = vpack.c.b16 %v769, %v768
  %v812 = vpack.c.b16 %v771, %v770
  %v813 = vpack.c.b16 %v773, %v772
  %v814 = vpack.c.b16 %v775, %v774
  %v815 = vpack.c.b16 %v777, %v776
  %v816 = vpack.c.b16 %v779, %v778
  %v817 = vpack.c.b16 %v781, %v780
  %v818 = vpack.c.b16 %v783, %v782
  %v819 = vpack.c.b16 %v785, %v784
  %v820 = vpack.c.b16 %v787, %v786
  %v821 = vpack.c.b16 %v789, %v788
  %v822 = vpack.c.b16 %v791, %v790
  %v823 = vpack.c.b16 %v793, %v792
  %v824 = vpack.c.b16 %v795, %v794
  %v825 = vpack.c.b16 %v797, %v796
  %v826 = vpack.c.b16 %v799, %v798
  %v827 = vpack.c.b16 %v801, %v800
  %v828 = vpack.c.b16 %v803, %v802
  %v829 = vpack.c.b16 %v805, %v804
  %854 = vmatprep.subr.bf16.mxu0 0
  %855 = vmatpush1.bf16.msra.mxu0 %v813
  %856 = vmatprep.subr.bf16.mxu0 0
  %857 = vmatpush1.bf16.msra.mxu0 %v812
  %858 = vmatprep.subr.bf16.mxu0 0
  %859 = vmatpush1.bf16.msra.mxu0 %v811
  %860 = vmatprep.subr.bf16.mxu0 0
  %861 = vmatpush1.bf16.msra.mxu0 %v810
  %862 = vmatprep.subr.bf16.mxu0 0
  %863 = vmatpush1.bf16.msra.mxu0 %v809
  %864 = vmatprep.subr.bf16.mxu0 0
  %865 = vmatpush1.bf16.msra.mxu0 %v808
  %866 = vmatprep.subr.bf16.mxu0 0
  %867 = vmatpush1.bf16.msra.mxu0 %v807
  %868 = vmatprep.subr.bf16.mxu0 0
  %869 = vmatpush1.bf16.msra.mxu0 %v806
  %870 = vmatprep.subr.bf16.mxu0 0
  %871 = vmatpush2.bf16.msra.mxu0 %v821
  %872 = vmatprep.subr.bf16.mxu0 0
  %873 = vmatpush2.bf16.msra.mxu0 %v820
  %874 = vmatprep.subr.bf16.mxu0 0
  %875 = vmatpush2.bf16.msra.mxu0 %v819
  %876 = vmatprep.subr.bf16.mxu0 0
  %877 = vmatpush2.bf16.msra.mxu0 %v818
  %878 = vmatprep.subr.bf16.mxu0 0
  %879 = vmatpush2.bf16.msra.mxu0 %v817
  %880 = vmatprep.subr.bf16.mxu0 0
  %881 = vmatpush2.bf16.msra.mxu0 %v816
  %882 = vmatprep.subr.bf16.mxu0 0
  %883 = vmatpush2.bf16.msra.mxu0 %v815
  %884 = vmatprep.subr.bf16.mxu0 0
  %885 = vmatpush2.bf16.msra.mxu0 %v814
  %886 = vmatprep.mubr.bf16.mxu0 %v519
  %887 = vmatmul.mubr.bf16.gmra.mxu0 %v518
  %v888 = vpop.f32.mrf.mxu0
  %v889 = vadd.f32 %v196, %v888
  %v890 = vpop.f32.mrf.mxu0
  %v891 = vpop.f32.mrf.mxu0
  %v892 = vadd.f32 %v196, %v891
  %v893 = vpop.f32.mrf.mxu0
  %894 = vmatprep.mubr.bf16.mxu0 %v522
  %895 = vmatmul.mubr.bf16.gmra.mxu0 %v521
  %v896 = vpop.f32.mrf.mxu0
  %v897 = vadd.f32 %v196, %v896
  %v898 = vpop.f32.mrf.mxu0
  %v899 = vpop.f32.mrf.mxu0
  %v900 = vadd.f32 %v196, %v899
  %v901 = vpop.f32.mrf.mxu0
  %902 = vmatprep.mubr.bf16.mxu0 %v525
  %903 = vmatmul.mubr.bf16.gmra.mxu0 %v524
  %v904 = vpop.f32.mrf.mxu0
  %v905 = vadd.f32 %v196, %v904
  %v906 = vpop.f32.mrf.mxu0
  %v907 = vpop.f32.mrf.mxu0
  %v908 = vadd.f32 %v196, %v907
  %v909 = vpop.f32.mrf.mxu0
  %910 = vmatprep.mubr.bf16.mxu0 %v528
  %911 = vmatmul.mubr.bf16.gmra.mxu0 %v527
  %v912 = vpop.f32.mrf.mxu0
  %v913 = vadd.f32 %v196, %v912
  %v914 = vpop.f32.mrf.mxu0
  %v915 = vpop.f32.mrf.mxu0
  %v916 = vadd.f32 %v196, %v915
  %v917 = vpop.f32.mrf.mxu0
  %918 = vmatprep.mubr.bf16.mxu0 %v531
  %919 = vmatmul.mubr.bf16.gmra.mxu0 %v530
  %v920 = vpop.f32.mrf.mxu0
  %v921 = vadd.f32 %v196, %v920
  %v922 = vpop.f32.mrf.mxu0
  %v923 = vpop.f32.mrf.mxu0
  %v924 = vadd.f32 %v196, %v923
  %v925 = vpop.f32.mrf.mxu0
  %926 = vmatprep.mubr.bf16.mxu0 %v534
  %927 = vmatmul.mubr.bf16.gmra.mxu0 %v533
  %v928 = vpop.f32.mrf.mxu0
  %v929 = vadd.f32 %v196, %v928
  %v930 = vpop.f32.mrf.mxu0
  %v931 = vpop.f32.mrf.mxu0
  %v932 = vadd.f32 %v196, %v931
  %v933 = vpop.f32.mrf.mxu0
  %934 = vmatprep.mubr.bf16.mxu0 %v537
  %935 = vmatmul.mubr.bf16.gmra.mxu0 %v536
  %v936 = vpop.f32.mrf.mxu0
  %v937 = vadd.f32 %v196, %v936
  %v938 = vpop.f32.mrf.mxu0
  %v939 = vpop.f32.mrf.mxu0
  %v940 = vadd.f32 %v196, %v939
  %v941 = vpop.f32.mrf.mxu0
  %942 = vmatprep.mubr.bf16.mxu0 %v540
  %943 = vmatmul.mubr.bf16.gmra.mxu0 %v539
  %v944 = vpop.f32.mrf.mxu0
  %v945 = vadd.f32 %v196, %v944
  %v946 = vpop.f32.mrf.mxu0
  %v947 = vpop.f32.mrf.mxu0
  %v948 = vadd.f32 %v196, %v947
  %v949 = vpop.f32.mrf.mxu0
  %950 = vmatprep.mubr.bf16.mxu0 %v543
  %951 = vmatmul.mubr.bf16.gmra.mxu0 %v542
  %v952 = vpop.f32.mrf.mxu0
  %v953 = vadd.f32 %v196, %v952
  %v954 = vpop.f32.mrf.mxu0
  %v955 = vpop.f32.mrf.mxu0
  %v956 = vadd.f32 %v196, %v955
  %v957 = vpop.f32.mrf.mxu0
  %958 = vmatprep.mubr.bf16.mxu0 %v546
  %959 = vmatmul.mubr.bf16.gmra.mxu0 %v545
  %v960 = vpop.f32.mrf.mxu0
  %v961 = vadd.f32 %v196, %v960
  %v962 = vpop.f32.mrf.mxu0
  %v963 = vpop.f32.mrf.mxu0
  %v964 = vadd.f32 %v196, %v963
  %v965 = vpop.f32.mrf.mxu0
  %966 = vmatprep.mubr.bf16.mxu0 %v549
  %967 = vmatmul.mubr.bf16.gmra.mxu0 %v548
  %v968 = vpop.f32.mrf.mxu0
  %v969 = vadd.f32 %v196, %v968
  %v970 = vpop.f32.mrf.mxu0
  %v971 = vpop.f32.mrf.mxu0
  %v972 = vadd.f32 %v196, %v971
  %v973 = vpop.f32.mrf.mxu0
  %974 = vmatprep.mubr.bf16.mxu0 %v552
  %975 = vmatmul.mubr.bf16.gmra.mxu0 %v551
  %v976 = vpop.f32.mrf.mxu0
  %v977 = vadd.f32 %v196, %v976
  %v978 = vpop.f32.mrf.mxu0
  %v979 = vpop.f32.mrf.mxu0
  %v980 = vadd.f32 %v196, %v979
  %v981 = vpop.f32.mrf.mxu0
  %982 = vmatprep.mubr.bf16.mxu0 %v555
  %983 = vmatmul.mubr.bf16.gmra.mxu0 %v554
  %v984 = vpop.f32.mrf.mxu0
  %v985 = vadd.f32 %v196, %v984
  %v986 = vpop.f32.mrf.mxu0
  %v987 = vpop.f32.mrf.mxu0
  %v988 = vadd.f32 %v196, %v987
  %v989 = vpop.f32.mrf.mxu0
  %990 = vmatprep.mubr.bf16.mxu0 %v558
  %991 = vmatmul.mubr.bf16.gmra.mxu0 %v557
  %v992 = vpop.f32.mrf.mxu0
  %v993 = vadd.f32 %v196, %v992
  %v994 = vpop.f32.mrf.mxu0
  %v995 = vpop.f32.mrf.mxu0
  %v996 = vadd.f32 %v196, %v995
  %v997 = vpop.f32.mrf.mxu0
  %998 = vmatprep.mubr.bf16.mxu0 %v561
  %999 = vmatmul.mubr.bf16.gmra.mxu0 %v560
  %v1000 = vpop.f32.mrf.mxu0
  %v1001 = vadd.f32 %v196, %v1000
  %v1002 = vpop.f32.mrf.mxu0
  %v1003 = vpop.f32.mrf.mxu0
  %v1004 = vadd.f32 %v196, %v1003
  %v1005 = vpop.f32.mrf.mxu0
  %1006 = vmatprep.mubr.bf16.mxu0 %v564
  %1007 = vmatmul.mubr.bf16.gmra.mxu0 %v563
  %v1008 = vpop.f32.mrf.mxu0
  %v1009 = vadd.f32 %v196, %v1008
  %v1010 = vpop.f32.mrf.mxu0
  %v1011 = vpop.f32.mrf.mxu0
  %v1012 = vadd.f32 %v196, %v1011
  %v1013 = vpop.f32.mrf.mxu0
  %1014 = vmatprep.mubr.bf16.mxu0 %v567
  %1015 = vmatmul.mubr.bf16.gmra.mxu0 %v566
  %v1016 = vpop.f32.mrf.mxu0
  %v1017 = vadd.f32 %v196, %v1016
  %v1018 = vpop.f32.mrf.mxu0
  %v1019 = vpop.f32.mrf.mxu0
  %v1020 = vadd.f32 %v196, %v1019
  %v1021 = vpop.f32.mrf.mxu0
  %1022 = vmatprep.mubr.bf16.mxu0 %v570
  %1023 = vmatmul.mubr.bf16.gmra.mxu0 %v569
  %v1024 = vpop.f32.mrf.mxu0
  %v1025 = vadd.f32 %v196, %v1024
  %v1026 = vpop.f32.mrf.mxu0
  %v1027 = vpop.f32.mrf.mxu0
  %v1028 = vadd.f32 %v196, %v1027
  %v1029 = vpop.f32.mrf.mxu0
  %1030 = vmatprep.mubr.bf16.mxu0 %v573
  %1031 = vmatmul.mubr.bf16.gmra.mxu0 %v572
  %v1032 = vpop.f32.mrf.mxu0
  %v1033 = vadd.f32 %v196, %v1032
  %v1034 = vpop.f32.mrf.mxu0
  %v1035 = vpop.f32.mrf.mxu0
  %v1036 = vadd.f32 %v196, %v1035
  %v1037 = vpop.f32.mrf.mxu0
  %1038 = vmatprep.mubr.bf16.mxu0 %v576
  %1039 = vmatmul.mubr.bf16.gmra.mxu0 %v575
  %v1040 = vpop.f32.mrf.mxu0
  %v1041 = vadd.f32 %v196, %v1040
  %v1042 = vpop.f32.mrf.mxu0
  %v1043 = vpop.f32.mrf.mxu0
  %v1044 = vadd.f32 %v196, %v1043
  %v1045 = vpop.f32.mrf.mxu0
  %1046 = vmatprep.mubr.bf16.mxu0 %v579
  %1047 = vmatmul.mubr.bf16.gmra.mxu0 %v578
  %v1048 = vpop.f32.mrf.mxu0
  %v1049 = vadd.f32 %v196, %v1048
  %v1050 = vpop.f32.mrf.mxu0
  %v1051 = vpop.f32.mrf.mxu0
  %v1052 = vadd.f32 %v196, %v1051
  %v1053 = vpop.f32.mrf.mxu0
  %1054 = vmatprep.mubr.bf16.mxu0 %v582
  %1055 = vmatmul.mubr.bf16.gmra.mxu0 %v581
  %v1056 = vpop.f32.mrf.mxu0
  %v1057 = vadd.f32 %v196, %v1056
  %v1058 = vpop.f32.mrf.mxu0
  %v1059 = vpop.f32.mrf.mxu0
  %v1060 = vadd.f32 %v196, %v1059
  %v1061 = vpop.f32.mrf.mxu0
  %1062 = vmatprep.mubr.bf16.mxu0 %v585
  %1063 = vmatmul.mubr.bf16.gmra.mxu0 %v584
  %v1064 = vpop.f32.mrf.mxu0
  %v1065 = vadd.f32 %v196, %v1064
  %v1066 = vpop.f32.mrf.mxu0
  %v1067 = vpop.f32.mrf.mxu0
  %v1068 = vadd.f32 %v196, %v1067
  %v1069 = vpop.f32.mrf.mxu0
  %1070 = vmatprep.mubr.bf16.mxu0 %v588
  %1071 = vmatmul.mubr.bf16.gmra.mxu0 %v587
  %v1072 = vpop.f32.mrf.mxu0
  %v1073 = vadd.f32 %v196, %v1072
  %v1074 = vpop.f32.mrf.mxu0
  %v1075 = vpop.f32.mrf.mxu0
  %v1076 = vadd.f32 %v196, %v1075
  %v1077 = vpop.f32.mrf.mxu0
  %1078 = vmatprep.mubr.bf16.mxu0 %v591
  %1079 = vmatmul.mubr.bf16.gmra.mxu0 %v590
  %v1080 = vpop.f32.mrf.mxu0
  %v1081 = vadd.f32 %v196, %v1080
  %v1082 = vpop.f32.mrf.mxu0
  %v1083 = vpop.f32.mrf.mxu0
  %v1084 = vadd.f32 %v196, %v1083
  %v1085 = vpop.f32.mrf.mxu0
  %1086 = vmatprep.mubr.bf16.mxu0 %v594
  %1087 = vmatmul.mubr.bf16.gmra.mxu0 %v593
  %v1088 = vpop.f32.mrf.mxu0
  %v1089 = vadd.f32 %v196, %v1088
  %v1090 = vpop.f32.mrf.mxu0
  %v1091 = vpop.f32.mrf.mxu0
  %v1092 = vadd.f32 %v196, %v1091
  %v1093 = vpop.f32.mrf.mxu0
  %1094 = vmatprep.mubr.bf16.mxu0 %v597
  %1095 = vmatmul.mubr.bf16.gmra.mxu0 %v596
  %v1096 = vpop.f32.mrf.mxu0
  %v1097 = vadd.f32 %v196, %v1096
  %v1098 = vpop.f32.mrf.mxu0
  %v1099 = vpop.f32.mrf.mxu0
  %v1100 = vadd.f32 %v196, %v1099
  %v1101 = vpop.f32.mrf.mxu0
  %1102 = vmatprep.mubr.bf16.mxu0 %v600
  %1103 = vmatmul.mubr.bf16.gmra.mxu0 %v599
  %v1104 = vpop.f32.mrf.mxu0
  %v1105 = vadd.f32 %v196, %v1104
  %v1106 = vpop.f32.mrf.mxu0
  %v1107 = vpop.f32.mrf.mxu0
  %v1108 = vadd.f32 %v196, %v1107
  %v1109 = vpop.f32.mrf.mxu0
  %1110 = vmatprep.mubr.bf16.mxu0 %v603
  %1111 = vmatmul.mubr.bf16.gmra.mxu0 %v602
  %v1112 = vpop.f32.mrf.mxu0
  %v1113 = vadd.f32 %v196, %v1112
  %v1114 = vpop.f32.mrf.mxu0
  %v1115 = vpop.f32.mrf.mxu0
  %v1116 = vadd.f32 %v196, %v1115
  %v1117 = vpop.f32.mrf.mxu0
  %1118 = vmatprep.mubr.bf16.mxu0 %v606
  %1119 = vmatmul.mubr.bf16.gmra.mxu0 %v605
  %v1120 = vpop.f32.mrf.mxu0
  %v1121 = vadd.f32 %v196, %v1120
  %v1122 = vpop.f32.mrf.mxu0
  %v1123 = vpop.f32.mrf.mxu0
  %v1124 = vadd.f32 %v196, %v1123
  %v1125 = vpop.f32.mrf.mxu0
  %1126 = vmatprep.mubr.bf16.mxu0 %v609
  %1127 = vmatmul.mubr.bf16.gmra.mxu0 %v608
  %v1128 = vpop.f32.mrf.mxu0
  %v1129 = vadd.f32 %v196, %v1128
  %v1130 = vpop.f32.mrf.mxu0
  %v1131 = vpop.f32.mrf.mxu0
  %v1132 = vadd.f32 %v196, %v1131
  %v1133 = vpop.f32.mrf.mxu0
  %1134 = vmatprep.mubr.bf16.mxu0 %v612
  %1135 = vmatmul.mubr.bf16.gmra.mxu0 %v611
  %v1136 = vpop.f32.mrf.mxu0
  %v1137 = vadd.f32 %v196, %v1136
  %v1138 = vpop.f32.mrf.mxu0
  %v1139 = vpop.f32.mrf.mxu0
  %v1140 = vadd.f32 %v196, %v1139
  %v1141 = vpop.f32.mrf.mxu0
  %1142 = vdwg.mxu0
  %1143 = vmatprep.subr.bf16.mxu0 0
  %1144 = vmatpush1.bf16.msra.mxu0 %v829
  %1145 = vmatprep.subr.bf16.mxu0 0
  %1146 = vmatpush1.bf16.msra.mxu0 %v828
  %1147 = vmatprep.subr.bf16.mxu0 0
  %1148 = vmatpush1.bf16.msra.mxu0 %v827
  %1149 = vmatprep.subr.bf16.mxu0 0
  %1150 = vmatpush1.bf16.msra.mxu0 %v826
  %1151 = vmatprep.subr.bf16.mxu0 0
  %1152 = vmatpush1.bf16.msra.mxu0 %v825
  %1153 = vmatprep.subr.bf16.mxu0 0
  %1154 = vmatpush1.bf16.msra.mxu0 %v824
  %1155 = vmatprep.subr.bf16.mxu0 0
  %1156 = vmatpush1.bf16.msra.mxu0 %v823
  %1157 = vmatprep.subr.bf16.mxu0 0
  %1158 = vmatpush1.bf16.msra.mxu0 %v822
  %1159 = vmatprep.subr.bf16.mxu0 0
  %1160 = vmatpush2.bf16.msra.mxu0 0
  %1161 = vmatprep.subr.bf16.mxu0 0
  %1162 = vmatpush2.bf16.msra.mxu0 0
  %1163 = vmatprep.subr.bf16.mxu0 0
  %1164 = vmatpush2.bf16.msra.mxu0 0
  %1165 = vmatprep.subr.bf16.mxu0 0
  %1166 = vmatpush2.bf16.msra.mxu0 0
  %1167 = vmatprep.subr.bf16.mxu0 0
  %1168 = vmatpush2.bf16.msra.mxu0 0
  %1169 = vmatprep.subr.bf16.mxu0 0
  %1170 = vmatpush2.bf16.msra.mxu0 0
  %1171 = vmatprep.subr.bf16.mxu0 0
  %1172 = vmatpush2.bf16.msra.mxu0 0
  %1173 = vmatprep.subr.bf16.mxu0 0
  %1174 = vmatpush2.bf16.msra.mxu0 0
  %1175 = vmatprep.mubr.bf16.mxu0 0
  %1176 = vmatmul.mubr.bf16.gmra.mxu0 %v520
  %v1177 = vpop.f32.mrf.mxu0
  %v1178 = vadd.f32 %v889, %v1177
  %v1179 = vpop.f32.mrf.mxu0
  %v1180 = vpop.f32.mrf.mxu0
  %v1181 = vadd.f32 %v892, %v1180
  %v1182 = vpop.f32.mrf.mxu0
  %1183 = vmatprep.mubr.bf16.mxu0 0
  %1184 = vmatmul.mubr.bf16.gmra.mxu0 %v523
  %v1185 = vpop.f32.mrf.mxu0
  %v1186 = vadd.f32 %v897, %v1185
  %v1187 = vpop.f32.mrf.mxu0
  %v1188 = vpop.f32.mrf.mxu0
  %v1189 = vadd.f32 %v900, %v1188
  %v1190 = vpop.f32.mrf.mxu0
  %1191 = vmatprep.mubr.bf16.mxu0 0
  %1192 = vmatmul.mubr.bf16.gmra.mxu0 %v526
  %v1193 = vpop.f32.mrf.mxu0
  %v1194 = vadd.f32 %v905, %v1193
  %v1195 = vpop.f32.mrf.mxu0
  %v1196 = vpop.f32.mrf.mxu0
  %v1197 = vadd.f32 %v908, %v1196
  %v1198 = vpop.f32.mrf.mxu0
  %1199 = vmatprep.mubr.bf16.mxu0 0
  %1200 = vmatmul.mubr.bf16.gmra.mxu0 %v529
  %v1201 = vpop.f32.mrf.mxu0
  %v1202 = vadd.f32 %v913, %v1201
  %v1203 = vpop.f32.mrf.mxu0
  %v1204 = vpop.f32.mrf.mxu0
  %v1205 = vadd.f32 %v916, %v1204
  %v1206 = vpop.f32.mrf.mxu0
  %1207 = vmatprep.mubr.bf16.mxu0 0
  %1208 = vmatmul.mubr.bf16.gmra.mxu0 %v532
  %v1209 = vpop.f32.mrf.mxu0
  %v1210 = vadd.f32 %v921, %v1209
  %v1211 = vpop.f32.mrf.mxu0
  %v1212 = vpop.f32.mrf.mxu0
  %v1213 = vadd.f32 %v924, %v1212
  %v1214 = vpop.f32.mrf.mxu0
  %1215 = vmatprep.mubr.bf16.mxu0 0
  %1216 = vmatmul.mubr.bf16.gmra.mxu0 %v535
  %v1217 = vpop.f32.mrf.mxu0
  %v1218 = vadd.f32 %v929, %v1217
  %v1219 = vpop.f32.mrf.mxu0
  %v1220 = vpop.f32.mrf.mxu0
  %v1221 = vadd.f32 %v932, %v1220
  %v1222 = vpop.f32.mrf.mxu0
  %1223 = vmatprep.mubr.bf16.mxu0 0
  %1224 = vmatmul.mubr.bf16.gmra.mxu0 %v538
  %v1225 = vpop.f32.mrf.mxu0
  %v1226 = vadd.f32 %v937, %v1225
  %v1227 = vpop.f32.mrf.mxu0
  %v1228 = vpop.f32.mrf.mxu0
  %v1229 = vadd.f32 %v940, %v1228
  %v1230 = vpop.f32.mrf.mxu0
  %1231 = vmatprep.mubr.bf16.mxu0 0
  %1232 = vmatmul.mubr.bf16.gmra.mxu0 %v541
  %v1233 = vpop.f32.mrf.mxu0
  %v1234 = vadd.f32 %v945, %v1233
  %v1235 = vpop.f32.mrf.mxu0
  %v1236 = vpop.f32.mrf.mxu0
  %v1237 = vadd.f32 %v948, %v1236
  %v1238 = vpop.f32.mrf.mxu0
  %1239 = vmatprep.mubr.bf16.mxu0 0
  %1240 = vmatmul.mubr.bf16.gmra.mxu0 %v544
  %v1241 = vpop.f32.mrf.mxu0
  %v1242 = vadd.f32 %v953, %v1241
  %v1243 = vpop.f32.mrf.mxu0
  %v1244 = vpop.f32.mrf.mxu0
  %v1245 = vadd.f32 %v956, %v1244
  %v1246 = vpop.f32.mrf.mxu0
  %1247 = vmatprep.mubr.bf16.mxu0 0
  %1248 = vmatmul.mubr.bf16.gmra.mxu0 %v547
  %v1249 = vpop.f32.mrf.mxu0
  %v1250 = vadd.f32 %v961, %v1249
  %v1251 = vpop.f32.mrf.mxu0
  %v1252 = vpop.f32.mrf.mxu0
  %v1253 = vadd.f32 %v964, %v1252
  %v1254 = vpop.f32.mrf.mxu0
  %1255 = vmatprep.mubr.bf16.mxu0 0
  %1256 = vmatmul.mubr.bf16.gmra.mxu0 %v550
  %v1257 = vpop.f32.mrf.mxu0
  %v1258 = vadd.f32 %v969, %v1257
  %v1259 = vpop.f32.mrf.mxu0
  %v1260 = vpop.f32.mrf.mxu0
  %v1261 = vadd.f32 %v972, %v1260
  %v1262 = vpop.f32.mrf.mxu0
  %1263 = vmatprep.mubr.bf16.mxu0 0
  %1264 = vmatmul.mubr.bf16.gmra.mxu0 %v553
  %v1265 = vpop.f32.mrf.mxu0
  %v1266 = vadd.f32 %v977, %v1265
  %v1267 = vpop.f32.mrf.mxu0
  %v1268 = vpop.f32.mrf.mxu0
  %v1269 = vadd.f32 %v980, %v1268
  %v1270 = vpop.f32.mrf.mxu0
  %1271 = vmatprep.mubr.bf16.mxu0 0
  %1272 = vmatmul.mubr.bf16.gmra.mxu0 %v556
  %v1273 = vpop.f32.mrf.mxu0
  %v1274 = vadd.f32 %v985, %v1273
  %v1275 = vpop.f32.mrf.mxu0
  %v1276 = vpop.f32.mrf.mxu0
  %v1277 = vadd.f32 %v988, %v1276
  %v1278 = vpop.f32.mrf.mxu0
  %1279 = vmatprep.mubr.bf16.mxu0 0
  %1280 = vmatmul.mubr.bf16.gmra.mxu0 %v559
  %v1281 = vpop.f32.mrf.mxu0
  %v1282 = vadd.f32 %v993, %v1281
  %v1283 = vpop.f32.mrf.mxu0
  %v1284 = vpop.f32.mrf.mxu0
  %v1285 = vadd.f32 %v996, %v1284
  %v1286 = vpop.f32.mrf.mxu0
  %1287 = vmatprep.mubr.bf16.mxu0 0
  %1288 = vmatmul.mubr.bf16.gmra.mxu0 %v562
  %v1289 = vpop.f32.mrf.mxu0
  %v1290 = vadd.f32 %v1001, %v1289
  %v1291 = vpop.f32.mrf.mxu0
  %v1292 = vpop.f32.mrf.mxu0
  %v1293 = vadd.f32 %v1004, %v1292
  %v1294 = vpop.f32.mrf.mxu0
  %1295 = vmatprep.mubr.bf16.mxu0 0
  %1296 = vmatmul.mubr.bf16.gmra.mxu0 %v565
  %v1297 = vpop.f32.mrf.mxu0
  %v1298 = vadd.f32 %v1009, %v1297
  %v1299 = vpop.f32.mrf.mxu0
  %v1300 = vpop.f32.mrf.mxu0
  %v1301 = vadd.f32 %v1012, %v1300
  %v1302 = vpop.f32.mrf.mxu0
  %1303 = vmatprep.mubr.bf16.mxu0 0
  %1304 = vmatmul.mubr.bf16.gmra.mxu0 %v568
  %v1305 = vpop.f32.mrf.mxu0
  %v1306 = vadd.f32 %v1017, %v1305
  %v1307 = vpop.f32.mrf.mxu0
  %v1308 = vpop.f32.mrf.mxu0
  %v1309 = vadd.f32 %v1020, %v1308
  %v1310 = vpop.f32.mrf.mxu0
  %1311 = vmatprep.mubr.bf16.mxu0 0
  %1312 = vmatmul.mubr.bf16.gmra.mxu0 %v571
  %v1313 = vpop.f32.mrf.mxu0
  %v1314 = vadd.f32 %v1025, %v1313
  %v1315 = vpop.f32.mrf.mxu0
  %v1316 = vpop.f32.mrf.mxu0
  %v1317 = vadd.f32 %v1028, %v1316
  %v1318 = vpop.f32.mrf.mxu0
  %1319 = vmatprep.mubr.bf16.mxu0 0
  %1320 = vmatmul.mubr.bf16.gmra.mxu0 %v574
  %v1321 = vpop.f32.mrf.mxu0
  %v1322 = vadd.f32 %v1033, %v1321
  %v1323 = vpop.f32.mrf.mxu0
  %v1324 = vpop.f32.mrf.mxu0
  %v1325 = vadd.f32 %v1036, %v1324
  %v1326 = vpop.f32.mrf.mxu0
  %1327 = vmatprep.mubr.bf16.mxu0 0
  %1328 = vmatmul.mubr.bf16.gmra.mxu0 %v577
  %v1329 = vpop.f32.mrf.mxu0
  %v1330 = vadd.f32 %v1041, %v1329
  %v1331 = vpop.f32.mrf.mxu0
  %v1332 = vpop.f32.mrf.mxu0
  %v1333 = vadd.f32 %v1044, %v1332
  %v1334 = vpop.f32.mrf.mxu0
  %1335 = vmatprep.mubr.bf16.mxu0 0
  %1336 = vmatmul.mubr.bf16.gmra.mxu0 %v580
  %v1337 = vpop.f32.mrf.mxu0
  %v1338 = vadd.f32 %v1049, %v1337
  %v1339 = vpop.f32.mrf.mxu0
  %v1340 = vpop.f32.mrf.mxu0
  %v1341 = vadd.f32 %v1052, %v1340
  %v1342 = vpop.f32.mrf.mxu0
  %1343 = vmatprep.mubr.bf16.mxu0 0
  %1344 = vmatmul.mubr.bf16.gmra.mxu0 %v583
  %v1345 = vpop.f32.mrf.mxu0
  %v1346 = vadd.f32 %v1057, %v1345
  %v1347 = vpop.f32.mrf.mxu0
  %v1348 = vpop.f32.mrf.mxu0
  %v1349 = vadd.f32 %v1060, %v1348
  %v1350 = vpop.f32.mrf.mxu0
  %1351 = vmatprep.mubr.bf16.mxu0 0
  %1352 = vmatmul.mubr.bf16.gmra.mxu0 %v586
  %v1353 = vpop.f32.mrf.mxu0
  %v1354 = vadd.f32 %v1065, %v1353
  %v1355 = vpop.f32.mrf.mxu0
  %v1356 = vpop.f32.mrf.mxu0
  %v1357 = vadd.f32 %v1068, %v1356
  %v1358 = vpop.f32.mrf.mxu0
  %1359 = vmatprep.mubr.bf16.mxu0 0
  %1360 = vmatmul.mubr.bf16.gmra.mxu0 %v589
  %v1361 = vpop.f32.mrf.mxu0
  %v1362 = vadd.f32 %v1073, %v1361
  %v1363 = vpop.f32.mrf.mxu0
  %v1364 = vpop.f32.mrf.mxu0
  %v1365 = vadd.f32 %v1076, %v1364
  %v1366 = vpop.f32.mrf.mxu0
  %1367 = vmatprep.mubr.bf16.mxu0 0
  %1368 = vmatmul.mubr.bf16.gmra.mxu0 %v592
  %v1369 = vpop.f32.mrf.mxu0
  %v1370 = vadd.f32 %v1081, %v1369
  %v1371 = vpop.f32.mrf.mxu0
  %v1372 = vpop.f32.mrf.mxu0
  %v1373 = vadd.f32 %v1084, %v1372
  %v1374 = vpop.f32.mrf.mxu0
  %1375 = vmatprep.mubr.bf16.mxu0 0
  %1376 = vmatmul.mubr.bf16.gmra.mxu0 %v595
  %v1377 = vpop.f32.mrf.mxu0
  %v1378 = vadd.f32 %v1089, %v1377
  %v1379 = vpop.f32.mrf.mxu0
  %v1380 = vpop.f32.mrf.mxu0
  %v1381 = vadd.f32 %v1092, %v1380
  %v1382 = vpop.f32.mrf.mxu0
  %1383 = vmatprep.mubr.bf16.mxu0 0
  %1384 = vmatmul.mubr.bf16.gmra.mxu0 %v598
  %v1385 = vpop.f32.mrf.mxu0
  %v1386 = vadd.f32 %v1097, %v1385
  %v1387 = vpop.f32.mrf.mxu0
  %v1388 = vpop.f32.mrf.mxu0
  %v1389 = vadd.f32 %v1100, %v1388
  %v1390 = vpop.f32.mrf.mxu0
  %1391 = vmatprep.mubr.bf16.mxu0 0
  %1392 = vmatmul.mubr.bf16.gmra.mxu0 %v601
  %v1393 = vpop.f32.mrf.mxu0
  %v1394 = vadd.f32 %v1105, %v1393
  %v1395 = vpop.f32.mrf.mxu0
  %v1396 = vpop.f32.mrf.mxu0
  %v1397 = vadd.f32 %v1108, %v1396
  %v1398 = vpop.f32.mrf.mxu0
  %1399 = vmatprep.mubr.bf16.mxu0 0
  %1400 = vmatmul.mubr.bf16.gmra.mxu0 %v604
  %v1401 = vpop.f32.mrf.mxu0
  %v1402 = vadd.f32 %v1113, %v1401
  %v1403 = vpop.f32.mrf.mxu0
  %v1404 = vpop.f32.mrf.mxu0
  %v1405 = vadd.f32 %v1116, %v1404
  %v1406 = vpop.f32.mrf.mxu0
  %1407 = vmatprep.mubr.bf16.mxu0 0
  %1408 = vmatmul.mubr.bf16.gmra.mxu0 %v607
  %v1409 = vpop.f32.mrf.mxu0
  %v1410 = vadd.f32 %v1121, %v1409
  %v1411 = vpop.f32.mrf.mxu0
  %v1412 = vpop.f32.mrf.mxu0
  %v1413 = vadd.f32 %v1124, %v1412
  %v1414 = vpop.f32.mrf.mxu0
  %1415 = vmatprep.mubr.bf16.mxu0 0
  %1416 = vmatmul.mubr.bf16.gmra.mxu0 %v610
  %v1417 = vpop.f32.mrf.mxu0
  %v1418 = vadd.f32 %v1129, %v1417
  %v1419 = vpop.f32.mrf.mxu0
  %v1420 = vpop.f32.mrf.mxu0
  %v1421 = vadd.f32 %v1132, %v1420
  %v1422 = vpop.f32.mrf.mxu0
  %1423 = vmatprep.mubr.bf16.mxu0 0
  %1424 = vmatmul.mubr.bf16.gmra.mxu0 %v613
  %v1425 = vpop.f32.mrf.mxu0
  %v1426 = vadd.f32 %v1137, %v1425
  %v1427 = vpop.f32.mrf.mxu0
  %v1428 = vpop.f32.mrf.mxu0
  %v1429 = vadd.f32 %v1140, %v1428
  %v1430 = vpop.f32.mrf.mxu0
  %1431 = vdwg.mxu0
  %1432 = vst [vmem:[%s3] sm:$0xff] %v1178
  %1433 = vst [vmem:[%s3 + $0x8] sm:$0xff] %v1181
  %1434 = vst [vmem:[%s3 + $0x10] sm:$0xff] %v1186
  %1435 = vst [vmem:[%s3 + $0x18] sm:$0xff] %v1189
  %1436 = vst [vmem:[%s3 + $0x20] sm:$0xff] %v1194
  %1437 = vst [vmem:[%s3 + $0x28] sm:$0xff] %v1197
  %1438 = vst [vmem:[%s3 + $0x30] sm:$0xff] %v1202
  %1439 = vst [vmem:[%s3 + $0x38] sm:$0xff] %v1205
  %1440 = vst [vmem:[%s3 + $0x40] sm:$0xff] %v1210
  %1441 = vst [vmem:[%s3 + $0x48] sm:$0xff] %v1213
  %1442 = vst [vmem:[%s3 + $0x50] sm:$0xff] %v1218
  %1443 = vst [vmem:[%s3 + $0x58] sm:$0xff] %v1221
  %1444 = vst [vmem:[%s3 + $0x60] sm:$0xff] %v1226
  %1445 = vst [vmem:[%s3 + $0x68] sm:$0xff] %v1229
  %1446 = vst [vmem:[%s3 + $0x70] sm:$0xff] %v1234
  %1447 = vst [vmem:[%s3 + $0x78] sm:$0xff] %v1237
  %1448 = vst [vmem:[%s3 + $0x80] sm:$0xff] %v1242
  %1449 = vst [vmem:[%s3 + $0x88] sm:$0xff] %v1245
  %1450 = vst [vmem:[%s3 + $0x90] sm:$0xff] %v1250
  %1451 = vst [vmem:[%s3 + $0x98] sm:$0xff] %v1253
  %1452 = vst [vmem:[%s3 + $0xa0] sm:$0xff] %v1258
  %1453 = vst [vmem:[%s3 + $0xa8] sm:$0xff] %v1261
  %1454 = vst [vmem:[%s3 + $0xb0] sm:$0xff] %v1266
  %1455 = vst [vmem:[%s3 + $0xb8] sm:$0xff] %v1269
  %1456 = vst [vmem:[%s3 + $0xc0] sm:$0xff] %v1274
  %1457 = vst [vmem:[%s3 + $0xc8] sm:$0xff] %v1277
  %1458 = vst [vmem:[%s3 + $0xd0] sm:$0xff] %v1282
  %1459 = vst [vmem:[%s3 + $0xd8] sm:$0xff] %v1285
  %1460 = vst [vmem:[%s3 + $0xe0] sm:$0xff] %v1290
  %1461 = vst [vmem:[%s3 + $0xe8] sm:$0xff] %v1293
  %1462 = vst [vmem:[%s3 + $0xf0] sm:$0xff] %v1298
  %1463 = vst [vmem:[%s3 + $0xf8] sm:$0xff] %v1301
  %1464 = vst [vmem:[%s3 + $0x100] sm:$0xff] %v1306
  %1465 = vst [vmem:[%s3 + $0x108] sm:$0xff] %v1309
  %1466 = vst [vmem:[%s3 + $0x110] sm:$0xff] %v1314
  %1467 = vst [vmem:[%s3 + $0x118] sm:$0xff] %v1317
  %1468 = vst [vmem:[%s3 + $0x120] sm:$0xff] %v1322
  %1469 = vst [vmem:[%s3 + $0x128] sm:$0xff] %v1325
  %1470 = vst [vmem:[%s3 + $0x130] sm:$0xff] %v1330
  %1471 = vst [vmem:[%s3 + $0x138] sm:$0xff] %v1333
  %1472 = vst [vmem:[%s3 + $0x140] sm:$0xff] %v1338
  %1473 = vst [vmem:[%s3 + $0x148] sm:$0xff] %v1341
  %1474 = vst [vmem:[%s3 + $0x150] sm:$0xff] %v1346
  %1475 = vst [vmem:[%s3 + $0x158] sm:$0xff] %v1349
  %1476 = vst [vmem:[%s3 + $0x160] sm:$0xff] %v1354
  %1477 = vst [vmem:[%s3 + $0x168] sm:$0xff] %v1357
  %1478 = vst [vmem:[%s3 + $0x170] sm:$0xff] %v1362
  %1479 = vst [vmem:[%s3 + $0x178] sm:$0xff] %v1365
  %1480 = vst [vmem:[%s3 + $0x180] sm:$0xff] %v1370
  %1481 = vst [vmem:[%s3 + $0x188] sm:$0xff] %v1373
  %1482 = vst [vmem:[%s3 + $0x190] sm:$0xff] %v1378
  %1483 = vst [vmem:[%s3 + $0x198] sm:$0xff] %v1381
  %1484 = vst [vmem:[%s3 + $0x1a0] sm:$0xff] %v1386
  %1485 = vst [vmem:[%s3 + $0x1a8] sm:$0xff] %v1389
  %1486 = vst [vmem:[%s3 + $0x1b0] sm:$0xff] %v1394
  %1487 = vst [vmem:[%s3 + $0x1b8] sm:$0xff] %v1397
  %1488 = vst [vmem:[%s3 + $0x1c0] sm:$0xff] %v1402
  %1489 = vst [vmem:[%s3 + $0x1c8] sm:$0xff] %v1405
  %1490 = vst [vmem:[%s3 + $0x1d0] sm:$0xff] %v1410
  %1491 = vst [vmem:[%s3 + $0x1d8] sm:$0xff] %v1413
  %1492 = vst [vmem:[%s3 + $0x1e0] sm:$0xff] %v1418
  %1493 = vst [vmem:[%s3 + $0x1e8] sm:$0xff] %v1421
  %1494 = vst [vmem:[%s3 + $0x1f0] sm:$0xff] %v1426
  %1495 = vst [vmem:[%s3 + $0x1f8] sm:$0xff] %v1429
  // Predicated region
  $region14: #{decoder_forward.9} parent=0 // pred_check
    _
  $region15: #{decoder_forward.9} parent=0 // pred_check_branch
    %1497 = sbr.rel (0) target = $region17
  $region16: #{decoder_forward.9} parent=0 // pred_region
    _
  $region17: #{decoder_forward.9} parent=0 // pred_fallthru
    _
  // Predicated region
  $region18: #{decoder_forward.9} parent=0 // pred_check
    _
  $region19: #{decoder_forward.9} parent=0 // pred_check_branch
    %1499 = sbr.rel (0) target = $region21
  $region20: #{decoder_forward.9} parent=0 // pred_region
    _
  $region21: #{decoder_forward.9} parent=0 // pred_fallthru
    _

</llo_original>
